<compile_context>
chip_gen: v7x
topology: tpu7x:2x2x1
jax: 0.10.0
libtpu: 0.0.40
codegen_flags: <defaults>
</compile_context>

<pallas_src>
from functools import partial

import jax
import jax.numpy as jnp
from jax.experimental import pallas as pl
from jax.experimental.pallas import tpu as pltpu

HIDDEN = 128          # mlp hidden_dim is hard-coded to 128 in the reference module
ROW_ALIGN = 128       # M-dim alignment (128 fills the v5e MXU; use 256 on v6e/v7x
                      # for big graphs — pass row_align=256 to gnn_forward)
BF16 = jnp.bfloat16
F32 = jnp.float32


def _prelu(x, a):
    return jnp.where(x >= 0, x, a * x)


def _round_up(n, m):
    return ((n + m - 1) // m) * m


# --------------------------------------------------------------------- fused kernel
def make_gnn_kernel(mp_num, n_nodes_real):
    """Build the fused forward-pass kernel.  `n_nodes_real` (static) is the
    un-padded node count used to mask GraphNorm statistics."""

    def kernel(*refs):
        out_ref = refs[-1]
        it = iter(refs[:-1])
        take = lambda n: tuple(next(it) for _ in range(n))

        x_ref, ea_ref, idx_ref, alphas_ref = take(4)
        enc_node = take(6)
        enc_edge = take(6)
        enc_far = take(6)
        dec = take(6)
        layers = []
        for _ in range(mp_num):
            gn = take(3)      # GraphNorm weight, bias, mean_scale
            msg = take(7)     # msg mlp: w0a, w0b, b0, w1, w2, w3, b3
            outm = take(6)    # out mlp: w0, b0, w1, w2, w3, b3
            layers.append((gn, msg, outm))

        n_pad = x_ref.shape[0]      # padded node count
        e_pad = ea_ref.shape[0]     # padded edge count

        def dense(h, w_ref):
            # bf16 MXU matmul, f32 accumulation.
            return jnp.dot(h.astype(BF16), w_ref[...], preferred_element_type=F32)

        def run_mlp(h, p, aidx):
            w0, b0, w1, w2, w3, b3 = p
            a0 = alphas_ref[3 * aidx + 0]
            a1 = alphas_ref[3 * aidx + 1]
            a2 = alphas_ref[3 * aidx + 2]
            h = _prelu(dense(h, w0) + b0[...], a0)
            h = _prelu(dense(h, w1), a1)          # Dropout(0.1) == identity (eval)
            h = _prelu(dense(h, w2), a2)
            return dense(h, w3) + b3[...]

        def run_msg_mlp(prod, e_bf, p, aidx):
            w0a, w0b, b0, w1, w2, w3, b3 = p
            a0 = alphas_ref[3 * aidx + 0]
            a1 = alphas_ref[3 * aidx + 1]
            a2 = alphas_ref[3 * aidx + 2]
            # mlp(cat([v_i*v_j, e], -1)): concat folded into the split first-layer weight.
            h = (dense(prod, w0a)
                 + jnp.dot(e_bf, w0b[...], preferred_element_type=F32)
                 + b0[...])
            h = _prelu(h, a0)
            h = _prelu(dense(h, w1), a1)
            h = _prelu(dense(h, w2), a2)
            return dense(h, w3) + b3[...]

        # Mask that zeroes padded node rows out of GraphNorm statistics.
        inv_n = 1.0 / float(n_nodes_real)
        node_mask = (jax.lax.broadcasted_iota(jnp.int32, (n_pad, 1), 0)
                     < n_nodes_real).astype(F32)

        def run_graphnorm(h, p):
            w, b, ms = p
            mean = jnp.sum(h * node_mask, axis=0, keepdims=True) * inv_n
            cen = h - ms[...] * mean
            var = jnp.sum(cen * cen * node_mask, axis=0, keepdims=True) * inv_n
            return cen * jax.lax.rsqrt(var + 1e-5) * w[...] + b[...]

        x = x_ref[...]
        ea = ea_ref[...]

        # ---- encoders (alpha bases: node=0, edge=1, far=2, decoder=3) --------------
        v = run_mlp(x, enc_node, 0)          # (Np, D)
        e = run_mlp(ea, enc_edge, 1)         # (Ep, D)
        far_e = run_mlp(ea, enc_far, 2)      # (Ep, D); far w0 zero-padded, so the
                                             # edge_attr[:, 3:] slice is implicit
        e_bf = e.astype(BF16)
        far_bf = far_e.astype(BF16)

        # ---- fused gather/scatter one-hots, built ONCE ------------------------------
        # idx = [dst (v_i) ; src (v_j)]: rows [0,Ep) select v_i, rows [Ep,2Ep) select
        # v_j.  Padded edges carry index -1 -> all-zero rows -> gather 0, scatter 0.
        iota = jax.lax.broadcasted_iota(jnp.int32, (2 * e_pad, n_pad), 1)
        hit = (iota == idx_ref[...]).astype(F32)            # (2Ep, Np) single compare pass
        ST = hit.astype(BF16)                               # fused v_i/v_j gather
        Tt = jnp.transpose(hit[:e_pad]).astype(BF16)        # (Np, Ep) scatter-sum
        # TODO(synk): when the one-hot footprint exceeds the per-generation VMEM
        # budget (see guard in the wrapper), switch to a scalar-prefetched
        # (PrefetchScalarGridSpec) index gather with an E-tiled "arbitrary"
        # accumulation grid and "parallel" node tiles for v7x's two TensorCores.

        # ---- message-passing layers -------------------------------------------------
        for l, (gn, msgp, outp) in enumerate(layers):
            vn = run_graphnorm(v, gn)                               # GraphNorm
            vb = vn.astype(BF16)
            vij = jnp.dot(ST, vb, preferred_element_type=F32)       # one (2Ep,Np)x(Np,D)
            prod = vij[:e_pad] * vij[e_pad:]                        # v_i * v_j
            msg = run_msg_mlp(prod, e_bf if l == 0 else far_bf, msgp, 4 + 2 * l)
            agg = jnp.dot(Tt, msg.astype(BF16), preferred_element_type=F32)  # (Np, D)
            mp_out = run_mlp(agg, outp, 5 + 2 * l)
            v = mp_out if l == 0 else vn + mp_out                   # residual w/ normed v

        # ---- decoder (lane-dense 128-wide slab; wrapper slices to out_dim) ----------
        out_ref[...] = run_mlp(v, dec, 3).astype(out_ref.dtype)

    return kernel


# ---------------------------------------------------------------------- cost estimate
def _cost_estimate(n_pad, e_pad, node_dim, edge_dim, emb, out_cols, mp_num, args):
    H = HIDDEN

    def mlp_flops(rows, din, dout):
        return 2 * rows * (din * H + 2 * H * H + H * dout)

    flops = (mlp_flops(n_pad, node_dim, emb)
             + 2 * mlp_flops(e_pad, edge_dim, emb)
             + mlp_flops(n_pad, emb, out_cols))
    for _ in range(mp_num):
        flops += 3 * 2 * e_pad * n_pad * emb        # fused gather (2E rows) + scatter-sum
        flops += mlp_flops(e_pad, 2 * emb, emb)     # message mlp
        flops += mlp_flops(n_pad, emb, emb)         # out mlp
    transcendentals = mp_num * emb                  # rsqrt per GraphNorm feature
    bytes_accessed = n_pad * out_cols * 4
    bytes_accessed += sum(int(a.size) * int(a.dtype.itemsize) for a in args)
    return pl.CostEstimate(flops=int(flops), transcendentals=int(transcendentals),
                           bytes_accessed=int(bytes_accessed))


# -------------------------------------------------------------------------- helpers
def _pad_rows(a, rows):
    pad = rows - a.shape[0]
    if pad == 0:
        return a
    return jnp.concatenate([a, jnp.zeros((pad,) + a.shape[1:], a.dtype)], axis=0)


def _pad_idx(v, rows):
    pad = rows - v.shape[0]
    if pad == 0:
        return v
    return jnp.concatenate([v, jnp.full((pad,), -1, v.dtype)])


def _mlp_flat(p, w0=None, w3=None, b3=None):
    w0 = p["w0"] if w0 is None else w0
    w3 = p["w3"] if w3 is None else w3
    b3 = p["b3"] if b3 is None else b3
    return [w0.astype(BF16), p["b0"], p["w1"].astype(BF16),
            p["w2"].astype(BF16), w3.astype(BF16), b3]


def _mlp_alphas(p):
    return [p["a0"], p["a1"], p["a2"]]


def _vmem_capacity_bytes():
    try:
        return int(pltpu.get_tpu_info().vmem_capacity_bytes)
    except Exception:
        return 64 * 1024 * 1024   # conservative fallback (v7x per-TC capacity)


# -------------------------------------------------------------------------- forward
@partial(jax.jit, static_argnames=("row_align",))
def gnn_forward(x, edge_attr, edge_index, params, row_align=ROW_ALIGN):
    mp_num = len(params["mp_layers"])
    emb = params["node_encoder"]["w3"].shape[1]
    out_dim = params["decoder"]["w3"].shape[1]
    n_nodes, n_edges = x.shape[0], edge_attr.shape[0]

    # Row-batching / padding so MLP matmul M-dims feed the MXU and stores are
    # lane-dense.  Padded edges: index -1 (no-op); padded nodes: masked in GraphNorm.
    n_pad = _round_up(max(n_nodes, 8), row_align)
    e_pad = _round_up(max(n_edges, 8), row_align)
    out_cols = _round_up(out_dim, 128)       # lane-dense final store; sliced below

    x_p = _pad_rows(x, n_pad)
    ea_p = _pad_rows(edge_attr, e_pad)
    dst = edge_index[1].astype(jnp.int32)    # v_i / aggregation target
    src = edge_index[0].astype(jnp.int32)    # v_j
    idx = jnp.concatenate([_pad_idx(dst, e_pad), _pad_idx(src, e_pad)]).reshape(-1, 1)

    # far_edge_encoder consumes edge_attr[:, 3:]; fold the slice into a zero-padded w0.
    far = params["far_edge_encoder"]
    far_w0 = jnp.concatenate([jnp.zeros((3, far["w0"].shape[1]), F32), far["w0"]], axis=0)

    # Decoder last layer padded to a lane-dense 128-column output slab.
    dec = params["decoder"]
    dec_w3 = jnp.concatenate([dec["w3"], jnp.zeros((HIDDEN, out_cols - out_dim), F32)], axis=1)
    dec_b3 = jnp.concatenate([dec["b3"], jnp.zeros((1, out_cols - out_dim), F32)], axis=1)

    args = [x_p, ea_p, idx, None]            # slot 3 = flat PReLU alpha vector (SMEM)
    alphas = []
    for p in (params["node_encoder"], params["edge_encoder"]):
        args += _mlp_flat(p)
        alphas += _mlp_alphas(p)
    args += _mlp_flat(far, w0=far_w0)
    alphas += _mlp_alphas(far)
    args += _mlp_flat(dec, w3=dec_w3, b3=dec_b3)
    alphas += _mlp_alphas(dec)
    for mp in params["mp_layers"]:
        gn = mp["gn"]
        args += [gn["weight"], gn["bias"], gn["mean_scale"]]
        m = mp["msg_mlp"]
        args += [m["w0"][:emb].astype(BF16), m["w0"][emb:].astype(BF16), m["b0"],
                 m["w1"].astype(BF16), m["w2"].astype(BF16), m["w3"].astype(BF16), m["b3"]]
        alphas += _mlp_alphas(m)
        args += _mlp_flat(mp["out_mlp"])
        alphas += _mlp_alphas(mp["out_mlp"])
    args[3] = jnp.stack(alphas).astype(F32)

    # ---- per-generation VMEM budget + size guard -------------------------------
    arg_bytes = sum(int(a.size) * int(a.dtype.itemsize) for a in args)
    onehot_bytes = 2 * e_pad * n_pad * 4 + 3 * e_pad * n_pad * 2   # compare temp + ST/Tt
    act_bytes = (4 * n_pad + 6 * e_pad) * HIDDEN * 4               # resident activations
    out_bytes = n_pad * out_cols * 4
    resident = arg_bytes + onehot_bytes + act_bytes + out_bytes
    cap = _vmem_capacity_bytes()
    headroom = 16 * 1024 * 1024
    if resident > cap - headroom:
        # TODO(synk): scalar-prefetched, E-tiled grid implementation for graphs
        # whose one-hot footprint no longer fits in per-TC VMEM.
        raise NotImplementedError(
            f"graph too large for fully fused kernel: ~{resident >> 20} MiB resident "
            f"vs {cap >> 20} MiB VMEM; E-tiled path not implemented yet")
    vmem_limit = int(min(cap - headroom, max(32 * 1024 * 1024, 2 * resident)))

    vmem = pl.BlockSpec(memory_space=pltpu.MemorySpace.VMEM)
    smem = pl.BlockSpec(memory_space=pltpu.MemorySpace.SMEM)
    in_specs = [vmem] * len(args)
    in_specs[3] = smem

    cost = _cost_estimate(n_pad, e_pad, x.shape[1], edge_attr.shape[1],
                          emb, out_cols, mp_num, args)

    out = pl.pallas_call(
        make_gnn_kernel(mp_num, n_nodes),
        out_shape=jax.ShapeDtypeStruct((n_pad, out_cols), F32),
        in_specs=in_specs,
        out_specs=vmem,
        compiler_params=pltpu.CompilerParams(vmem_limit_bytes=vmem_limit),
        cost_estimate=cost,
    )(*args)
    return out[:n_nodes, :out_dim]


# ----------------------------------------------------------------- parameter setup
def init_mlp_params(key, in_dim, out_dim, hidden=HIDDEN):
    ks = jax.random.split(key, 6)

    def xavier(k, fan_in, fan_out):
        lim = (6.0 / (fan_in + fan_out)) ** 0.5
        return jax.random.uniform(k, (fan_in, fan_out), jnp.float32, -lim, lim)

    return dict(
        w0=xavier(ks[0], in_dim, hidden),
        b0=jax.random.uniform(ks[1], (1, hidden), jnp.float32, -0.1, 0.1),
        a0=jnp.asarray(0.25, jnp.float32),
        w1=xavier(ks[2], hidden, hidden),
        a1=jnp.asarray(0.25, jnp.float32),
        w2=xavier(ks[3], hidden, hidden),
        a2=jnp.asarray(0.25, jnp.float32),
        w3=xavier(ks[4], hidden, out_dim),
        b3=jax.random.uniform(ks[5], (1, out_dim), jnp.float32, -0.1, 0.1),
    )


def init_graphnorm_params(dim):
    return dict(
        weight=jnp.ones((1, dim), jnp.float32),
        bias=jnp.zeros((1, dim), jnp.float32),
        mean_scale=jnp.ones((1, dim), jnp.float32),
    )


def init_gnn_params(key, node_dim, edge_dim, out_dim, embedding_dim=128, mp_num=3):
    keys = jax.random.split(key, 4 + 2 * mp_num)
    params = dict(
        node_encoder=init_mlp_params(keys[0], node_dim, embedding_dim),
        edge_encoder=init_mlp_params(keys[1], edge_dim, embedding_dim),
        far_edge_encoder=init_mlp_params(keys[2], edge_dim - 3, embedding_dim),
        decoder=init_mlp_params(keys[3], embedding_dim, out_dim),
        mp_layers=[],
    )
    for i in range(mp_num):
        params["mp_layers"].append(dict(
            gn=init_graphnorm_params(embedding_dim),
            msg_mlp=init_mlp_params(keys[4 + 2 * i], 2 * embedding_dim, embedding_dim),
            out_mlp=init_mlp_params(keys[5 + 2 * i], embedding_dim, embedding_dim),
        ))
    return params


if __name__ == "__main__":
    key = jax.random.PRNGKey(0)
    N, E = 16, 48
    node_dim, edge_dim, out_dim, embedding_dim = 8, 8, 3, 128   # 128 = module default

    k_x, k_e, k_idx, k_p = jax.random.split(key, 4)
    x = jax.random.normal(k_x, (N, node_dim), jnp.float32)
    edge_attr = jax.random.normal(k_e, (E, edge_dim), jnp.float32)
    edge_index = jax.random.randint(k_idx, (2, E), 0, N, jnp.int32)

    params = init_gnn_params(k_p, node_dim, edge_dim, out_dim, embedding_dim, mp_num=3)

    out = gnn_forward(x, edge_attr, edge_index, params)
    jax.block_until_ready(out)
    assert out.shape == (N, out_dim) and out.dtype == jnp.float32
    assert bool(jnp.all(jnp.isfinite(out)))
    print("KERNEL_OK")
</pallas_src>

<mosaic_0001>
module attributes {stable_mosaic.version = 11 : i64} {
  func.func @kernel(%arg0: memref<128x8xf32, #tpu.memory_space<vmem>>, %arg1: memref<128x8xf32, #tpu.memory_space<vmem>>, %arg2: memref<256x1xi32, #tpu.memory_space<vmem>>, %arg3: memref<30xf32, #tpu.memory_space<smem>>, %arg4: memref<8x128xbf16, #tpu.memory_space<vmem>>, %arg5: memref<1x128xf32, #tpu.memory_space<vmem>>, %arg6: memref<128x128xbf16, #tpu.memory_space<vmem>>, %arg7: memref<128x128xbf16, #tpu.memory_space<vmem>>, %arg8: memref<128x128xbf16, #tpu.memory_space<vmem>>, %arg9: memref<1x128xf32, #tpu.memory_space<vmem>>, %arg10: memref<8x128xbf16, #tpu.memory_space<vmem>>, %arg11: memref<1x128xf32, #tpu.memory_space<vmem>>, %arg12: memref<128x128xbf16, #tpu.memory_space<vmem>>, %arg13: memref<128x128xbf16, #tpu.memory_space<vmem>>, %arg14: memref<128x128xbf16, #tpu.memory_space<vmem>>, %arg15: memref<1x128xf32, #tpu.memory_space<vmem>>, %arg16: memref<8x128xbf16, #tpu.memory_space<vmem>>, %arg17: memref<1x128xf32, #tpu.memory_space<vmem>>, %arg18: memref<128x128xbf16, #tpu.memory_space<vmem>>, %arg19: memref<128x128xbf16, #tpu.memory_space<vmem>>, %arg20: memref<128x128xbf16, #tpu.memory_space<vmem>>, %arg21: memref<1x128xf32, #tpu.memory_space<vmem>>, %arg22: memref<128x128xbf16, #tpu.memory_space<vmem>>, %arg23: memref<1x128xf32, #tpu.memory_space<vmem>>, %arg24: memref<128x128xbf16, #tpu.memory_space<vmem>>, %arg25: memref<128x128xbf16, #tpu.memory_space<vmem>>, %arg26: memref<128x128xbf16, #tpu.memory_space<vmem>>, %arg27: memref<1x128xf32, #tpu.memory_space<vmem>>, %arg28: memref<1x128xf32, #tpu.memory_space<vmem>>, %arg29: memref<1x128xf32, #tpu.memory_space<vmem>>, %arg30: memref<1x128xf32, #tpu.memory_space<vmem>>, %arg31: memref<128x128xbf16, #tpu.memory_space<vmem>>, %arg32: memref<128x128xbf16, #tpu.memory_space<vmem>>, %arg33: memref<1x128xf32, #tpu.memory_space<vmem>>, %arg34: memref<128x128xbf16, #tpu.memory_space<vmem>>, %arg35: memref<128x128xbf16, #tpu.memory_space<vmem>>, %arg36: memref<128x128xbf16, #tpu.memory_space<vmem>>, %arg37: memref<1x128xf32, #tpu.memory_space<vmem>>, %arg38: memref<128x128xbf16, #tpu.memory_space<vmem>>, %arg39: memref<1x128xf32, #tpu.memory_space<vmem>>, %arg40: memref<128x128xbf16, #tpu.memory_space<vmem>>, %arg41: memref<128x128xbf16, #tpu.memory_space<vmem>>, %arg42: memref<128x128xbf16, #tpu.memory_space<vmem>>, %arg43: memref<1x128xf32, #tpu.memory_space<vmem>>, %arg44: memref<1x128xf32, #tpu.memory_space<vmem>>, %arg45: memref<1x128xf32, #tpu.memory_space<vmem>>, %arg46: memref<1x128xf32, #tpu.memory_space<vmem>>, %arg47: memref<128x128xbf16, #tpu.memory_space<vmem>>, %arg48: memref<128x128xbf16, #tpu.memory_space<vmem>>, %arg49: memref<1x128xf32, #tpu.memory_space<vmem>>, %arg50: memref<128x128xbf16, #tpu.memory_space<vmem>>, %arg51: memref<128x128xbf16, #tpu.memory_space<vmem>>, %arg52: memref<128x128xbf16, #tpu.memory_space<vmem>>, %arg53: memref<1x128xf32, #tpu.memory_space<vmem>>, %arg54: memref<128x128xbf16, #tpu.memory_space<vmem>>, %arg55: memref<1x128xf32, #tpu.memory_space<vmem>>, %arg56: memref<128x128xbf16, #tpu.memory_space<vmem>>, %arg57: memref<128x128xbf16, #tpu.memory_space<vmem>>, %arg58: memref<128x128xbf16, #tpu.memory_space<vmem>>, %arg59: memref<1x128xf32, #tpu.memory_space<vmem>>, %arg60: memref<1x128xf32, #tpu.memory_space<vmem>>, %arg61: memref<1x128xf32, #tpu.memory_space<vmem>>, %arg62: memref<1x128xf32, #tpu.memory_space<vmem>>, %arg63: memref<128x128xbf16, #tpu.memory_space<vmem>>, %arg64: memref<128x128xbf16, #tpu.memory_space<vmem>>, %arg65: memref<1x128xf32, #tpu.memory_space<vmem>>, %arg66: memref<128x128xbf16, #tpu.memory_space<vmem>>, %arg67: memref<128x128xbf16, #tpu.memory_space<vmem>>, %arg68: memref<128x128xbf16, #tpu.memory_space<vmem>>, %arg69: memref<1x128xf32, #tpu.memory_space<vmem>>, %arg70: memref<128x128xbf16, #tpu.memory_space<vmem>>, %arg71: memref<1x128xf32, #tpu.memory_space<vmem>>, %arg72: memref<128x128xbf16, #tpu.memory_space<vmem>>, %arg73: memref<128x128xbf16, #tpu.memory_space<vmem>>, %arg74: memref<128x128xbf16, #tpu.memory_space<vmem>>, %arg75: memref<1x128xf32, #tpu.memory_space<vmem>>, %arg76: memref<128x128xf32, #tpu.memory_space<vmem>>) attributes {dimension_semantics = [], scalar_prefetch = 0 : i64, scratch_operands = 0 : i64, tpu.core_type = #tpu.core_type<tc>} {
    %0 = tpu.iota {dimensions = array<i32: 0>} : vector<128x1xi32>
    %c16_i32 = arith.constant 16 : i32
    %1 = vector.broadcast %c16_i32 : i32 to vector<128x1xi32>
    %2 = arith.cmpi slt, %0, %1 : vector<128x1xi32>
    %3 = arith.extui %2 : vector<128x1xi1> to vector<128x1xi32>
    %4 = arith.sitofp %3 : vector<128x1xi32> to vector<128x1xf32>
    %c0 = arith.constant 0 : index
    %c0_0 = arith.constant 0 : index
    %5 = vector.load %arg0[%c0, %c0_0] : memref<128x8xf32, #tpu.memory_space<vmem>>, vector<128x8xf32>
    %c0_1 = arith.constant 0 : index
    %c0_2 = arith.constant 0 : index
    %6 = vector.load %arg1[%c0_1, %c0_2] : memref<128x8xf32, #tpu.memory_space<vmem>>, vector<128x8xf32>
    %c0_3 = arith.constant 0 : index
    %7 = memref.load %arg3[%c0_3] : memref<30xf32, #tpu.memory_space<smem>>
    %c1 = arith.constant 1 : index
    %8 = memref.load %arg3[%c1] : memref<30xf32, #tpu.memory_space<smem>>
    %c2 = arith.constant 2 : index
    %9 = memref.load %arg3[%c2] : memref<30xf32, #tpu.memory_space<smem>>
    %10 = arith.truncf %5 : vector<128x8xf32> to vector<128x8xbf16>
    %c0_4 = arith.constant 0 : index
    %c0_5 = arith.constant 0 : index
    %11 = vector.load %arg4[%c0_4, %c0_5] : memref<8x128xbf16, #tpu.memory_space<vmem>>, vector<8x128xbf16>
    %cst = arith.constant dense<0.000000e+00> : vector<128x128xf32>
    %12 = tpu.matmul %10, %11, %cst {dimension_numbers = #tpu.dot_dimension_numbers<[1], [0], [0], [1], [0, 0, 1, 1], [], []>} : vector<128x8xbf16>, vector<8x128xbf16>, vector<128x128xf32> -> vector<128x128xf32>
    %c0_6 = arith.constant 0 : index
    %c0_7 = arith.constant 0 : index
    %13 = vector.load %arg5[%c0_6, %c0_7] : memref<1x128xf32, #tpu.memory_space<vmem>>, vector<1x128xf32>
    %14 = vector.broadcast %13 : vector<1x128xf32> to vector<128x128xf32>
    %15 = arith.addf %12, %14 : vector<128x128xf32>
    %cst_8 = arith.constant 0.000000e+00 : f32
    %16 = vector.broadcast %cst_8 : f32 to vector<128x128xf32>
    %17 = arith.cmpf oge, %15, %16 : vector<128x128xf32>
    %18 = vector.broadcast %7 : f32 to vector<128x128xf32>
    %19 = arith.mulf %18, %15 : vector<128x128xf32>
    %20 = arith.select %17, %15, %19 : vector<128x128xi1>, vector<128x128xf32>
    %21 = arith.truncf %20 : vector<128x128xf32> to vector<128x128xbf16>
    %c0_9 = arith.constant 0 : index
    %c0_10 = arith.constant 0 : index
    %22 = vector.load %arg6[%c0_9, %c0_10] : memref<128x128xbf16, #tpu.memory_space<vmem>>, vector<128x128xbf16>
    %cst_11 = arith.constant dense<0.000000e+00> : vector<128x128xf32>
    %23 = tpu.matmul %21, %22, %cst_11 {dimension_numbers = #tpu.dot_dimension_numbers<[1], [0], [0], [1], [0, 0, 1, 1], [], []>} : vector<128x128xbf16>, vector<128x128xbf16>, vector<128x128xf32> -> vector<128x128xf32>
    %cst_12 = arith.constant 0.000000e+00 : f32
    %24 = vector.broadcast %cst_12 : f32 to vector<128x128xf32>
    %25 = arith.cmpf oge, %23, %24 : vector<128x128xf32>
    %26 = vector.broadcast %8 : f32 to vector<128x128xf32>
    %27 = arith.mulf %26, %23 : vector<128x128xf32>
    %28 = arith.select %25, %23, %27 : vector<128x128xi1>, vector<128x128xf32>
    %29 = arith.truncf %28 : vector<128x128xf32> to vector<128x128xbf16>
    %c0_13 = arith.constant 0 : index
    %c0_14 = arith.constant 0 : index
    %30 = vector.load %arg7[%c0_13, %c0_14] : memref<128x128xbf16, #tpu.memory_space<vmem>>, vector<128x128xbf16>
    %cst_15 = arith.constant dense<0.000000e+00> : vector<128x128xf32>
    %31 = tpu.matmul %29, %30, %cst_15 {dimension_numbers = #tpu.dot_dimension_numbers<[1], [0], [0], [1], [0, 0, 1, 1], [], []>} : vector<128x128xbf16>, vector<128x128xbf16>, vector<128x128xf32> -> vector<128x128xf32>
    %cst_16 = arith.constant 0.000000e+00 : f32
    %32 = vector.broadcast %cst_16 : f32 to vector<128x128xf32>
    %33 = arith.cmpf oge, %31, %32 : vector<128x128xf32>
    %34 = vector.broadcast %9 : f32 to vector<128x128xf32>
    %35 = arith.mulf %34, %31 : vector<128x128xf32>
    %36 = arith.select %33, %31, %35 : vector<128x128xi1>, vector<128x128xf32>
    %37 = arith.truncf %36 : vector<128x128xf32> to vector<128x128xbf16>
    %c0_17 = arith.constant 0 : index
    %c0_18 = arith.constant 0 : index
    %38 = vector.load %arg8[%c0_17, %c0_18] : memref<128x128xbf16, #tpu.memory_space<vmem>>, vector<128x128xbf16>
    %cst_19 = arith.constant dense<0.000000e+00> : vector<128x128xf32>
    %39 = tpu.matmul %37, %38, %cst_19 {dimension_numbers = #tpu.dot_dimension_numbers<[1], [0], [0], [1], [0, 0, 1, 1], [], []>} : vector<128x128xbf16>, vector<128x128xbf16>, vector<128x128xf32> -> vector<128x128xf32>
    %c0_20 = arith.constant 0 : index
    %c0_21 = arith.constant 0 : index
    %40 = vector.load %arg9[%c0_20, %c0_21] : memref<1x128xf32, #tpu.memory_space<vmem>>, vector<1x128xf32>
    %41 = vector.broadcast %40 : vector<1x128xf32> to vector<128x128xf32>
    %42 = arith.addf %39, %41 : vector<128x128xf32>
    %c3 = arith.constant 3 : index
    %43 = memref.load %arg3[%c3] : memref<30xf32, #tpu.memory_space<smem>>
    %c4 = arith.constant 4 : index
    %44 = memref.load %arg3[%c4] : memref<30xf32, #tpu.memory_space<smem>>
    %c5 = arith.constant 5 : index
    %45 = memref.load %arg3[%c5] : memref<30xf32, #tpu.memory_space<smem>>
    %46 = arith.truncf %6 : vector<128x8xf32> to vector<128x8xbf16>
    %c0_22 = arith.constant 0 : index
    %c0_23 = arith.constant 0 : index
    %47 = vector.load %arg10[%c0_22, %c0_23] : memref<8x128xbf16, #tpu.memory_space<vmem>>, vector<8x128xbf16>
    %cst_24 = arith.constant dense<0.000000e+00> : vector<128x128xf32>
    %48 = tpu.matmul %46, %47, %cst_24 {dimension_numbers = #tpu.dot_dimension_numbers<[1], [0], [0], [1], [0, 0, 1, 1], [], []>} : vector<128x8xbf16>, vector<8x128xbf16>, vector<128x128xf32> -> vector<128x128xf32>
    %c0_25 = arith.constant 0 : index
    %c0_26 = arith.constant 0 : index
    %49 = vector.load %arg11[%c0_25, %c0_26] : memref<1x128xf32, #tpu.memory_space<vmem>>, vector<1x128xf32>
    %50 = vector.broadcast %49 : vector<1x128xf32> to vector<128x128xf32>
    %51 = arith.addf %48, %50 : vector<128x128xf32>
    %cst_27 = arith.constant 0.000000e+00 : f32
    %52 = vector.broadcast %cst_27 : f32 to vector<128x128xf32>
    %53 = arith.cmpf oge, %51, %52 : vector<128x128xf32>
    %54 = vector.broadcast %43 : f32 to vector<128x128xf32>
    %55 = arith.mulf %54, %51 : vector<128x128xf32>
    %56 = arith.select %53, %51, %55 : vector<128x128xi1>, vector<128x128xf32>
    %57 = arith.truncf %56 : vector<128x128xf32> to vector<128x128xbf16>
    %c0_28 = arith.constant 0 : index
    %c0_29 = arith.constant 0 : index
    %58 = vector.load %arg12[%c0_28, %c0_29] : memref<128x128xbf16, #tpu.memory_space<vmem>>, vector<128x128xbf16>
    %cst_30 = arith.constant dense<0.000000e+00> : vector<128x128xf32>
    %59 = tpu.matmul %57, %58, %cst_30 {dimension_numbers = #tpu.dot_dimension_numbers<[1], [0], [0], [1], [0, 0, 1, 1], [], []>} : vector<128x128xbf16>, vector<128x128xbf16>, vector<128x128xf32> -> vector<128x128xf32>
    %cst_31 = arith.constant 0.000000e+00 : f32
    %60 = vector.broadcast %cst_31 : f32 to vector<128x128xf32>
    %61 = arith.cmpf oge, %59, %60 : vector<128x128xf32>
    %62 = vector.broadcast %44 : f32 to vector<128x128xf32>
    %63 = arith.mulf %62, %59 : vector<128x128xf32>
    %64 = arith.select %61, %59, %63 : vector<128x128xi1>, vector<128x128xf32>
    %65 = arith.truncf %64 : vector<128x128xf32> to vector<128x128xbf16>
    %c0_32 = arith.constant 0 : index
    %c0_33 = arith.constant 0 : index
    %66 = vector.load %arg13[%c0_32, %c0_33] : memref<128x128xbf16, #tpu.memory_space<vmem>>, vector<128x128xbf16>
    %cst_34 = arith.constant dense<0.000000e+00> : vector<128x128xf32>
    %67 = tpu.matmul %65, %66, %cst_34 {dimension_numbers = #tpu.dot_dimension_numbers<[1], [0], [0], [1], [0, 0, 1, 1], [], []>} : vector<128x128xbf16>, vector<128x128xbf16>, vector<128x128xf32> -> vector<128x128xf32>
    %cst_35 = arith.constant 0.000000e+00 : f32
    %68 = vector.broadcast %cst_35 : f32 to vector<128x128xf32>
    %69 = arith.cmpf oge, %67, %68 : vector<128x128xf32>
    %70 = vector.broadcast %45 : f32 to vector<128x128xf32>
    %71 = arith.mulf %70, %67 : vector<128x128xf32>
    %72 = arith.select %69, %67, %71 : vector<128x128xi1>, vector<128x128xf32>
    %73 = arith.truncf %72 : vector<128x128xf32> to vector<128x128xbf16>
    %c0_36 = arith.constant 0 : index
    %c0_37 = arith.constant 0 : index
    %74 = vector.load %arg14[%c0_36, %c0_37] : memref<128x128xbf16, #tpu.memory_space<vmem>>, vector<128x128xbf16>
    %cst_38 = arith.constant dense<0.000000e+00> : vector<128x128xf32>
    %75 = tpu.matmul %73, %74, %cst_38 {dimension_numbers = #tpu.dot_dimension_numbers<[1], [0], [0], [1], [0, 0, 1, 1], [], []>} : vector<128x128xbf16>, vector<128x128xbf16>, vector<128x128xf32> -> vector<128x128xf32>
    %c0_39 = arith.constant 0 : index
    %c0_40 = arith.constant 0 : index
    %76 = vector.load %arg15[%c0_39, %c0_40] : memref<1x128xf32, #tpu.memory_space<vmem>>, vector<1x128xf32>
    %77 = vector.broadcast %76 : vector<1x128xf32> to vector<128x128xf32>
    %78 = arith.addf %75, %77 : vector<128x128xf32>
    %c6 = arith.constant 6 : index
    %79 = memref.load %arg3[%c6] : memref<30xf32, #tpu.memory_space<smem>>
    %c7 = arith.constant 7 : index
    %80 = memref.load %arg3[%c7] : memref<30xf32, #tpu.memory_space<smem>>
    %c8 = arith.constant 8 : index
    %81 = memref.load %arg3[%c8] : memref<30xf32, #tpu.memory_space<smem>>
    %82 = arith.truncf %6 : vector<128x8xf32> to vector<128x8xbf16>
    %c0_41 = arith.constant 0 : index
    %c0_42 = arith.constant 0 : index
    %83 = vector.load %arg16[%c0_41, %c0_42] : memref<8x128xbf16, #tpu.memory_space<vmem>>, vector<8x128xbf16>
    %cst_43 = arith.constant dense<0.000000e+00> : vector<128x128xf32>
    %84 = tpu.matmul %82, %83, %cst_43 {dimension_numbers = #tpu.dot_dimension_numbers<[1], [0], [0], [1], [0, 0, 1, 1], [], []>} : vector<128x8xbf16>, vector<8x128xbf16>, vector<128x128xf32> -> vector<128x128xf32>
    %c0_44 = arith.constant 0 : index
    %c0_45 = arith.constant 0 : index
    %85 = vector.load %arg17[%c0_44, %c0_45] : memref<1x128xf32, #tpu.memory_space<vmem>>, vector<1x128xf32>
    %86 = vector.broadcast %85 : vector<1x128xf32> to vector<128x128xf32>
    %87 = arith.addf %84, %86 : vector<128x128xf32>
    %cst_46 = arith.constant 0.000000e+00 : f32
    %88 = vector.broadcast %cst_46 : f32 to vector<128x128xf32>
    %89 = arith.cmpf oge, %87, %88 : vector<128x128xf32>
    %90 = vector.broadcast %79 : f32 to vector<128x128xf32>
    %91 = arith.mulf %90, %87 : vector<128x128xf32>
    %92 = arith.select %89, %87, %91 : vector<128x128xi1>, vector<128x128xf32>
    %93 = arith.truncf %92 : vector<128x128xf32> to vector<128x128xbf16>
    %c0_47 = arith.constant 0 : index
    %c0_48 = arith.constant 0 : index
    %94 = vector.load %arg18[%c0_47, %c0_48] : memref<128x128xbf16, #tpu.memory_space<vmem>>, vector<128x128xbf16>
    %cst_49 = arith.constant dense<0.000000e+00> : vector<128x128xf32>
    %95 = tpu.matmul %93, %94, %cst_49 {dimension_numbers = #tpu.dot_dimension_numbers<[1], [0], [0], [1], [0, 0, 1, 1], [], []>} : vector<128x128xbf16>, vector<128x128xbf16>, vector<128x128xf32> -> vector<128x128xf32>
    %cst_50 = arith.constant 0.000000e+00 : f32
    %96 = vector.broadcast %cst_50 : f32 to vector<128x128xf32>
    %97 = arith.cmpf oge, %95, %96 : vector<128x128xf32>
    %98 = vector.broadcast %80 : f32 to vector<128x128xf32>
    %99 = arith.mulf %98, %95 : vector<128x128xf32>
    %100 = arith.select %97, %95, %99 : vector<128x128xi1>, vector<128x128xf32>
    %101 = arith.truncf %100 : vector<128x128xf32> to vector<128x128xbf16>
    %c0_51 = arith.constant 0 : index
    %c0_52 = arith.constant 0 : index
    %102 = vector.load %arg19[%c0_51, %c0_52] : memref<128x128xbf16, #tpu.memory_space<vmem>>, vector<128x128xbf16>
    %cst_53 = arith.constant dense<0.000000e+00> : vector<128x128xf32>
    %103 = tpu.matmul %101, %102, %cst_53 {dimension_numbers = #tpu.dot_dimension_numbers<[1], [0], [0], [1], [0, 0, 1, 1], [], []>} : vector<128x128xbf16>, vector<128x128xbf16>, vector<128x128xf32> -> vector<128x128xf32>
    %cst_54 = arith.constant 0.000000e+00 : f32
    %104 = vector.broadcast %cst_54 : f32 to vector<128x128xf32>
    %105 = arith.cmpf oge, %103, %104 : vector<128x128xf32>
    %106 = vector.broadcast %81 : f32 to vector<128x128xf32>
    %107 = arith.mulf %106, %103 : vector<128x128xf32>
    %108 = arith.select %105, %103, %107 : vector<128x128xi1>, vector<128x128xf32>
    %109 = arith.truncf %108 : vector<128x128xf32> to vector<128x128xbf16>
    %c0_55 = arith.constant 0 : index
    %c0_56 = arith.constant 0 : index
    %110 = vector.load %arg20[%c0_55, %c0_56] : memref<128x128xbf16, #tpu.memory_space<vmem>>, vector<128x128xbf16>
    %cst_57 = arith.constant dense<0.000000e+00> : vector<128x128xf32>
    %111 = tpu.matmul %109, %110, %cst_57 {dimension_numbers = #tpu.dot_dimension_numbers<[1], [0], [0], [1], [0, 0, 1, 1], [], []>} : vector<128x128xbf16>, vector<128x128xbf16>, vector<128x128xf32> -> vector<128x128xf32>
    %c0_58 = arith.constant 0 : index
    %c0_59 = arith.constant 0 : index
    %112 = vector.load %arg21[%c0_58, %c0_59] : memref<1x128xf32, #tpu.memory_space<vmem>>, vector<1x128xf32>
    %113 = vector.broadcast %112 : vector<1x128xf32> to vector<128x128xf32>
    %114 = arith.addf %111, %113 : vector<128x128xf32>
    %115 = arith.truncf %78 : vector<128x128xf32> to vector<128x128xbf16>
    %116 = arith.truncf %114 : vector<128x128xf32> to vector<128x128xbf16>
    %117 = tpu.iota {dimensions = array<i32: 1>} : vector<256x128xi32>
    %c0_60 = arith.constant 0 : index
    %c0_61 = arith.constant 0 : index
    %118 = vector.load %arg2[%c0_60, %c0_61] : memref<256x1xi32, #tpu.memory_space<vmem>>, vector<256x1xi32>
    %119 = vector.broadcast %118 : vector<256x1xi32> to vector<256x128xi32>
    %120 = arith.cmpi eq, %117, %119 : vector<256x128xi32>
    %121 = arith.extui %120 : vector<256x128xi1> to vector<256x128xi32>
    %122 = arith.sitofp %121 : vector<256x128xi32> to vector<256x128xf32>
    %123 = arith.truncf %122 : vector<256x128xf32> to vector<256x128xbf16>
    %124 = vector.extract_strided_slice %122 {offsets = [0, 0], sizes = [128, 128], strides = [1, 1]} : vector<256x128xf32> to vector<128x128xf32>
    %125 = tpu.transpose %124, [1, 0] : vector<128x128xf32> -> vector<128x128xf32>
    %126 = arith.truncf %125 : vector<128x128xf32> to vector<128x128xbf16>
    %127 = vector.broadcast %4 : vector<128x1xf32> to vector<128x128xf32>
    %128 = arith.mulf %42, %127 : vector<128x128xf32>
    %cst_62 = arith.constant dense<0.000000e+00> : vector<128xf32>
    %129 = vector.multi_reduction <add>, %128, %cst_62 [0] : vector<128x128xf32> to vector<128xf32>
    %130 = vector.shape_cast %129 : vector<128xf32> to vector<1x128xf32>
    %cst_63 = arith.constant 6.250000e-02 : f32
    %131 = vector.broadcast %cst_63 : f32 to vector<1x128xf32>
    %132 = arith.mulf %130, %131 : vector<1x128xf32>
    %c0_64 = arith.constant 0 : index
    %c0_65 = arith.constant 0 : index
    %133 = vector.load %arg30[%c0_64, %c0_65] : memref<1x128xf32, #tpu.memory_space<vmem>>, vector<1x128xf32>
    %134 = arith.mulf %133, %132 : vector<1x128xf32>
    %135 = vector.broadcast %134 : vector<1x128xf32> to vector<128x128xf32>
    %136 = arith.subf %42, %135 : vector<128x128xf32>
    %137 = arith.mulf %136, %136 : vector<128x128xf32>
    %138 = vector.broadcast %4 : vector<128x1xf32> to vector<128x128xf32>
    %139 = arith.mulf %137, %138 : vector<128x128xf32>
    %cst_66 = arith.constant dense<0.000000e+00> : vector<128xf32>
    %140 = vector.multi_reduction <add>, %139, %cst_66 [0] : vector<128x128xf32> to vector<128xf32>
    %141 = vector.shape_cast %140 : vector<128xf32> to vector<1x128xf32>
    %cst_67 = arith.constant 6.250000e-02 : f32
    %142 = vector.broadcast %cst_67 : f32 to vector<1x128xf32>
    %143 = arith.mulf %141, %142 : vector<1x128xf32>
    %cst_68 = arith.constant 9.99999974E-6 : f32
    %144 = vector.broadcast %cst_68 : f32 to vector<1x128xf32>
    %145 = arith.addf %143, %144 : vector<1x128xf32>
    %146 = math.rsqrt %145 : vector<1x128xf32>
    %147 = vector.broadcast %146 : vector<1x128xf32> to vector<128x128xf32>
    %148 = arith.mulf %136, %147 : vector<128x128xf32>
    %c0_69 = arith.constant 0 : index
    %c0_70 = arith.constant 0 : index
    %149 = vector.load %arg28[%c0_69, %c0_70] : memref<1x128xf32, #tpu.memory_space<vmem>>, vector<1x128xf32>
    %150 = vector.broadcast %149 : vector<1x128xf32> to vector<128x128xf32>
    %151 = arith.mulf %148, %150 : vector<128x128xf32>
    %c0_71 = arith.constant 0 : index
    %c0_72 = arith.constant 0 : index
    %152 = vector.load %arg29[%c0_71, %c0_72] : memref<1x128xf32, #tpu.memory_space<vmem>>, vector<1x128xf32>
    %153 = vector.broadcast %152 : vector<1x128xf32> to vector<128x128xf32>
    %154 = arith.addf %151, %153 : vector<128x128xf32>
    %155 = arith.truncf %154 : vector<128x128xf32> to vector<128x128xbf16>
    %cst_73 = arith.constant dense<0.000000e+00> : vector<256x128xf32>
    %156 = tpu.matmul %123, %155, %cst_73 {dimension_numbers = #tpu.dot_dimension_numbers<[1], [0], [0], [1], [0, 0, 1, 1], [], []>} : vector<256x128xbf16>, vector<128x128xbf16>, vector<256x128xf32> -> vector<256x128xf32>
    %157 = vector.extract_strided_slice %156 {offsets = [0, 0], sizes = [128, 128], strides = [1, 1]} : vector<256x128xf32> to vector<128x128xf32>
    %158 = vector.extract_strided_slice %156 {offsets = [128, 0], sizes = [128, 128], strides = [1, 1]} : vector<256x128xf32> to vector<128x128xf32>
    %159 = arith.mulf %157, %158 : vector<128x128xf32>
    %c12 = arith.constant 12 : index
    %160 = memref.load %arg3[%c12] : memref<30xf32, #tpu.memory_space<smem>>
    %c13 = arith.constant 13 : index
    %161 = memref.load %arg3[%c13] : memref<30xf32, #tpu.memory_space<smem>>
    %c14 = arith.constant 14 : index
    %162 = memref.load %arg3[%c14] : memref<30xf32, #tpu.memory_space<smem>>
    %163 = arith.truncf %159 : vector<128x128xf32> to vector<128x128xbf16>
    %c0_74 = arith.constant 0 : index
    %c0_75 = arith.constant 0 : index
    %164 = vector.load %arg31[%c0_74, %c0_75] : memref<128x128xbf16, #tpu.memory_space<vmem>>, vector<128x128xbf16>
    %cst_76 = arith.constant dense<0.000000e+00> : vector<128x128xf32>
    %165 = tpu.matmul %163, %164, %cst_76 {dimension_numbers = #tpu.dot_dimension_numbers<[1], [0], [0], [1], [0, 0, 1, 1], [], []>} : vector<128x128xbf16>, vector<128x128xbf16>, vector<128x128xf32> -> vector<128x128xf32>
    %c0_77 = arith.constant 0 : index
    %c0_78 = arith.constant 0 : index
    %166 = vector.load %arg32[%c0_77, %c0_78] : memref<128x128xbf16, #tpu.memory_space<vmem>>, vector<128x128xbf16>
    %cst_79 = arith.constant dense<0.000000e+00> : vector<128x128xf32>
    %167 = tpu.matmul %115, %166, %cst_79 {dimension_numbers = #tpu.dot_dimension_numbers<[1], [0], [0], [1], [0, 0, 1, 1], [], []>} : vector<128x128xbf16>, vector<128x128xbf16>, vector<128x128xf32> -> vector<128x128xf32>
    %168 = arith.addf %165, %167 : vector<128x128xf32>
    %c0_80 = arith.constant 0 : index
    %c0_81 = arith.constant 0 : index
    %169 = vector.load %arg33[%c0_80, %c0_81] : memref<1x128xf32, #tpu.memory_space<vmem>>, vector<1x128xf32>
    %170 = vector.broadcast %169 : vector<1x128xf32> to vector<128x128xf32>
    %171 = arith.addf %168, %170 : vector<128x128xf32>
    %cst_82 = arith.constant 0.000000e+00 : f32
    %172 = vector.broadcast %cst_82 : f32 to vector<128x128xf32>
    %173 = arith.cmpf oge, %171, %172 : vector<128x128xf32>
    %174 = vector.broadcast %160 : f32 to vector<128x128xf32>
    %175 = arith.mulf %174, %171 : vector<128x128xf32>
    %176 = arith.select %173, %171, %175 : vector<128x128xi1>, vector<128x128xf32>
    %177 = arith.truncf %176 : vector<128x128xf32> to vector<128x128xbf16>
    %c0_83 = arith.constant 0 : index
    %c0_84 = arith.constant 0 : index
    %178 = vector.load %arg34[%c0_83, %c0_84] : memref<128x128xbf16, #tpu.memory_space<vmem>>, vector<128x128xbf16>
    %cst_85 = arith.constant dense<0.000000e+00> : vector<128x128xf32>
    %179 = tpu.matmul %177, %178, %cst_85 {dimension_numbers = #tpu.dot_dimension_numbers<[1], [0], [0], [1], [0, 0, 1, 1], [], []>} : vector<128x128xbf16>, vector<128x128xbf16>, vector<128x128xf32> -> vector<128x128xf32>
    %cst_86 = arith.constant 0.000000e+00 : f32
    %180 = vector.broadcast %cst_86 : f32 to vector<128x128xf32>
    %181 = arith.cmpf oge, %179, %180 : vector<128x128xf32>
    %182 = vector.broadcast %161 : f32 to vector<128x128xf32>
    %183 = arith.mulf %182, %179 : vector<128x128xf32>
    %184 = arith.select %181, %179, %183 : vector<128x128xi1>, vector<128x128xf32>
    %185 = arith.truncf %184 : vector<128x128xf32> to vector<128x128xbf16>
    %c0_87 = arith.constant 0 : index
    %c0_88 = arith.constant 0 : index
    %186 = vector.load %arg35[%c0_87, %c0_88] : memref<128x128xbf16, #tpu.memory_space<vmem>>, vector<128x128xbf16>
    %cst_89 = arith.constant dense<0.000000e+00> : vector<128x128xf32>
    %187 = tpu.matmul %185, %186, %cst_89 {dimension_numbers = #tpu.dot_dimension_numbers<[1], [0], [0], [1], [0, 0, 1, 1], [], []>} : vector<128x128xbf16>, vector<128x128xbf16>, vector<128x128xf32> -> vector<128x128xf32>
    %cst_90 = arith.constant 0.000000e+00 : f32
    %188 = vector.broadcast %cst_90 : f32 to vector<128x128xf32>
    %189 = arith.cmpf oge, %187, %188 : vector<128x128xf32>
    %190 = vector.broadcast %162 : f32 to vector<128x128xf32>
    %191 = arith.mulf %190, %187 : vector<128x128xf32>
    %192 = arith.select %189, %187, %191 : vector<128x128xi1>, vector<128x128xf32>
    %193 = arith.truncf %192 : vector<128x128xf32> to vector<128x128xbf16>
    %c0_91 = arith.constant 0 : index
    %c0_92 = arith.constant 0 : index
    %194 = vector.load %arg36[%c0_91, %c0_92] : memref<128x128xbf16, #tpu.memory_space<vmem>>, vector<128x128xbf16>
    %cst_93 = arith.constant dense<0.000000e+00> : vector<128x128xf32>
    %195 = tpu.matmul %193, %194, %cst_93 {dimension_numbers = #tpu.dot_dimension_numbers<[1], [0], [0], [1], [0, 0, 1, 1], [], []>} : vector<128x128xbf16>, vector<128x128xbf16>, vector<128x128xf32> -> vector<128x128xf32>
    %c0_94 = arith.constant 0 : index
    %c0_95 = arith.constant 0 : index
    %196 = vector.load %arg37[%c0_94, %c0_95] : memref<1x128xf32, #tpu.memory_space<vmem>>, vector<1x128xf32>
    %197 = vector.broadcast %196 : vector<1x128xf32> to vector<128x128xf32>
    %198 = arith.addf %195, %197 : vector<128x128xf32>
    %199 = arith.truncf %198 : vector<128x128xf32> to vector<128x128xbf16>
    %cst_96 = arith.constant dense<0.000000e+00> : vector<128x128xf32>
    %200 = tpu.matmul %126, %199, %cst_96 {dimension_numbers = #tpu.dot_dimension_numbers<[1], [0], [0], [1], [0, 0, 1, 1], [], []>} : vector<128x128xbf16>, vector<128x128xbf16>, vector<128x128xf32> -> vector<128x128xf32>
    %c15 = arith.constant 15 : index
    %201 = memref.load %arg3[%c15] : memref<30xf32, #tpu.memory_space<smem>>
    %c16 = arith.constant 16 : index
    %202 = memref.load %arg3[%c16] : memref<30xf32, #tpu.memory_space<smem>>
    %c17 = arith.constant 17 : index
    %203 = memref.load %arg3[%c17] : memref<30xf32, #tpu.memory_space<smem>>
    %204 = arith.truncf %200 : vector<128x128xf32> to vector<128x128xbf16>
    %c0_97 = arith.constant 0 : index
    %c0_98 = arith.constant 0 : index
    %205 = vector.load %arg38[%c0_97, %c0_98] : memref<128x128xbf16, #tpu.memory_space<vmem>>, vector<128x128xbf16>
    %cst_99 = arith.constant dense<0.000000e+00> : vector<128x128xf32>
    %206 = tpu.matmul %204, %205, %cst_99 {dimension_numbers = #tpu.dot_dimension_numbers<[1], [0], [0], [1], [0, 0, 1, 1], [], []>} : vector<128x128xbf16>, vector<128x128xbf16>, vector<128x128xf32> -> vector<128x128xf32>
    %c0_100 = arith.constant 0 : index
    %c0_101 = arith.constant 0 : index
    %207 = vector.load %arg39[%c0_100, %c0_101] : memref<1x128xf32, #tpu.memory_space<vmem>>, vector<1x128xf32>
    %208 = vector.broadcast %207 : vector<1x128xf32> to vector<128x128xf32>
    %209 = arith.addf %206, %208 : vector<128x128xf32>
    %cst_102 = arith.constant 0.000000e+00 : f32
    %210 = vector.broadcast %cst_102 : f32 to vector<128x128xf32>
    %211 = arith.cmpf oge, %209, %210 : vector<128x128xf32>
    %212 = vector.broadcast %201 : f32 to vector<128x128xf32>
    %213 = arith.mulf %212, %209 : vector<128x128xf32>
    %214 = arith.select %211, %209, %213 : vector<128x128xi1>, vector<128x128xf32>
    %215 = arith.truncf %214 : vector<128x128xf32> to vector<128x128xbf16>
    %c0_103 = arith.constant 0 : index
    %c0_104 = arith.constant 0 : index
    %216 = vector.load %arg40[%c0_103, %c0_104] : memref<128x128xbf16, #tpu.memory_space<vmem>>, vector<128x128xbf16>
    %cst_105 = arith.constant dense<0.000000e+00> : vector<128x128xf32>
    %217 = tpu.matmul %215, %216, %cst_105 {dimension_numbers = #tpu.dot_dimension_numbers<[1], [0], [0], [1], [0, 0, 1, 1], [], []>} : vector<128x128xbf16>, vector<128x128xbf16>, vector<128x128xf32> -> vector<128x128xf32>
    %cst_106 = arith.constant 0.000000e+00 : f32
    %218 = vector.broadcast %cst_106 : f32 to vector<128x128xf32>
    %219 = arith.cmpf oge, %217, %218 : vector<128x128xf32>
    %220 = vector.broadcast %202 : f32 to vector<128x128xf32>
    %221 = arith.mulf %220, %217 : vector<128x128xf32>
    %222 = arith.select %219, %217, %221 : vector<128x128xi1>, vector<128x128xf32>
    %223 = arith.truncf %222 : vector<128x128xf32> to vector<128x128xbf16>
    %c0_107 = arith.constant 0 : index
    %c0_108 = arith.constant 0 : index
    %224 = vector.load %arg41[%c0_107, %c0_108] : memref<128x128xbf16, #tpu.memory_space<vmem>>, vector<128x128xbf16>
    %cst_109 = arith.constant dense<0.000000e+00> : vector<128x128xf32>
    %225 = tpu.matmul %223, %224, %cst_109 {dimension_numbers = #tpu.dot_dimension_numbers<[1], [0], [0], [1], [0, 0, 1, 1], [], []>} : vector<128x128xbf16>, vector<128x128xbf16>, vector<128x128xf32> -> vector<128x128xf32>
    %cst_110 = arith.constant 0.000000e+00 : f32
    %226 = vector.broadcast %cst_110 : f32 to vector<128x128xf32>
    %227 = arith.cmpf oge, %225, %226 : vector<128x128xf32>
    %228 = vector.broadcast %203 : f32 to vector<128x128xf32>
    %229 = arith.mulf %228, %225 : vector<128x128xf32>
    %230 = arith.select %227, %225, %229 : vector<128x128xi1>, vector<128x128xf32>
    %231 = arith.truncf %230 : vector<128x128xf32> to vector<128x128xbf16>
    %c0_111 = arith.constant 0 : index
    %c0_112 = arith.constant 0 : index
    %232 = vector.load %arg42[%c0_111, %c0_112] : memref<128x128xbf16, #tpu.memory_space<vmem>>, vector<128x128xbf16>
    %cst_113 = arith.constant dense<0.000000e+00> : vector<128x128xf32>
    %233 = tpu.matmul %231, %232, %cst_113 {dimension_numbers = #tpu.dot_dimension_numbers<[1], [0], [0], [1], [0, 0, 1, 1], [], []>} : vector<128x128xbf16>, vector<128x128xbf16>, vector<128x128xf32> -> vector<128x128xf32>
    %c0_114 = arith.constant 0 : index
    %c0_115 = arith.constant 0 : index
    %234 = vector.load %arg43[%c0_114, %c0_115] : memref<1x128xf32, #tpu.memory_space<vmem>>, vector<1x128xf32>
    %235 = vector.broadcast %234 : vector<1x128xf32> to vector<128x128xf32>
    %236 = arith.addf %233, %235 : vector<128x128xf32>
    %237 = vector.broadcast %4 : vector<128x1xf32> to vector<128x128xf32>
    %238 = arith.mulf %236, %237 : vector<128x128xf32>
    %cst_116 = arith.constant dense<0.000000e+00> : vector<128xf32>
    %239 = vector.multi_reduction <add>, %238, %cst_116 [0] : vector<128x128xf32> to vector<128xf32>
    %240 = vector.shape_cast %239 : vector<128xf32> to vector<1x128xf32>
    %cst_117 = arith.constant 6.250000e-02 : f32
    %241 = vector.broadcast %cst_117 : f32 to vector<1x128xf32>
    %242 = arith.mulf %240, %241 : vector<1x128xf32>
    %c0_118 = arith.constant 0 : index
    %c0_119 = arith.constant 0 : index
    %243 = vector.load %arg46[%c0_118, %c0_119] : memref<1x128xf32, #tpu.memory_space<vmem>>, vector<1x128xf32>
    %244 = arith.mulf %243, %242 : vector<1x128xf32>
    %245 = vector.broadcast %244 : vector<1x128xf32> to vector<128x128xf32>
    %246 = arith.subf %236, %245 : vector<128x128xf32>
    %247 = arith.mulf %246, %246 : vector<128x128xf32>
    %248 = vector.broadcast %4 : vector<128x1xf32> to vector<128x128xf32>
    %249 = arith.mulf %247, %248 : vector<128x128xf32>
    %cst_120 = arith.constant dense<0.000000e+00> : vector<128xf32>
    %250 = vector.multi_reduction <add>, %249, %cst_120 [0] : vector<128x128xf32> to vector<128xf32>
    %251 = vector.shape_cast %250 : vector<128xf32> to vector<1x128xf32>
    %cst_121 = arith.constant 6.250000e-02 : f32
    %252 = vector.broadcast %cst_121 : f32 to vector<1x128xf32>
    %253 = arith.mulf %251, %252 : vector<1x128xf32>
    %cst_122 = arith.constant 9.99999974E-6 : f32
    %254 = vector.broadcast %cst_122 : f32 to vector<1x128xf32>
    %255 = arith.addf %253, %254 : vector<1x128xf32>
    %256 = math.rsqrt %255 : vector<1x128xf32>
    %257 = vector.broadcast %256 : vector<1x128xf32> to vector<128x128xf32>
    %258 = arith.mulf %246, %257 : vector<128x128xf32>
    %c0_123 = arith.constant 0 : index
    %c0_124 = arith.constant 0 : index
    %259 = vector.load %arg44[%c0_123, %c0_124] : memref<1x128xf32, #tpu.memory_space<vmem>>, vector<1x128xf32>
    %260 = vector.broadcast %259 : vector<1x128xf32> to vector<128x128xf32>
    %261 = arith.mulf %258, %260 : vector<128x128xf32>
    %c0_125 = arith.constant 0 : index
    %c0_126 = arith.constant 0 : index
    %262 = vector.load %arg45[%c0_125, %c0_126] : memref<1x128xf32, #tpu.memory_space<vmem>>, vector<1x128xf32>
    %263 = vector.broadcast %262 : vector<1x128xf32> to vector<128x128xf32>
    %264 = arith.addf %261, %263 : vector<128x128xf32>
    %265 = arith.truncf %264 : vector<128x128xf32> to vector<128x128xbf16>
    %cst_127 = arith.constant dense<0.000000e+00> : vector<256x128xf32>
    %266 = tpu.matmul %123, %265, %cst_127 {dimension_numbers = #tpu.dot_dimension_numbers<[1], [0], [0], [1], [0, 0, 1, 1], [], []>} : vector<256x128xbf16>, vector<128x128xbf16>, vector<256x128xf32> -> vector<256x128xf32>
    %267 = vector.extract_strided_slice %266 {offsets = [0, 0], sizes = [128, 128], strides = [1, 1]} : vector<256x128xf32> to vector<128x128xf32>
    %268 = vector.extract_strided_slice %266 {offsets = [128, 0], sizes = [128, 128], strides = [1, 1]} : vector<256x128xf32> to vector<128x128xf32>
    %269 = arith.mulf %267, %268 : vector<128x128xf32>
    %c18 = arith.constant 18 : index
    %270 = memref.load %arg3[%c18] : memref<30xf32, #tpu.memory_space<smem>>
    %c19 = arith.constant 19 : index
    %271 = memref.load %arg3[%c19] : memref<30xf32, #tpu.memory_space<smem>>
    %c20 = arith.constant 20 : index
    %272 = memref.load %arg3[%c20] : memref<30xf32, #tpu.memory_space<smem>>
    %273 = arith.truncf %269 : vector<128x128xf32> to vector<128x128xbf16>
    %c0_128 = arith.constant 0 : index
    %c0_129 = arith.constant 0 : index
    %274 = vector.load %arg47[%c0_128, %c0_129] : memref<128x128xbf16, #tpu.memory_space<vmem>>, vector<128x128xbf16>
    %cst_130 = arith.constant dense<0.000000e+00> : vector<128x128xf32>
    %275 = tpu.matmul %273, %274, %cst_130 {dimension_numbers = #tpu.dot_dimension_numbers<[1], [0], [0], [1], [0, 0, 1, 1], [], []>} : vector<128x128xbf16>, vector<128x128xbf16>, vector<128x128xf32> -> vector<128x128xf32>
    %c0_131 = arith.constant 0 : index
    %c0_132 = arith.constant 0 : index
    %276 = vector.load %arg48[%c0_131, %c0_132] : memref<128x128xbf16, #tpu.memory_space<vmem>>, vector<128x128xbf16>
    %cst_133 = arith.constant dense<0.000000e+00> : vector<128x128xf32>
    %277 = tpu.matmul %116, %276, %cst_133 {dimension_numbers = #tpu.dot_dimension_numbers<[1], [0], [0], [1], [0, 0, 1, 1], [], []>} : vector<128x128xbf16>, vector<128x128xbf16>, vector<128x128xf32> -> vector<128x128xf32>
    %278 = arith.addf %275, %277 : vector<128x128xf32>
    %c0_134 = arith.constant 0 : index
    %c0_135 = arith.constant 0 : index
    %279 = vector.load %arg49[%c0_134, %c0_135] : memref<1x128xf32, #tpu.memory_space<vmem>>, vector<1x128xf32>
    %280 = vector.broadcast %279 : vector<1x128xf32> to vector<128x128xf32>
    %281 = arith.addf %278, %280 : vector<128x128xf32>
    %cst_136 = arith.constant 0.000000e+00 : f32
    %282 = vector.broadcast %cst_136 : f32 to vector<128x128xf32>
    %283 = arith.cmpf oge, %281, %282 : vector<128x128xf32>
    %284 = vector.broadcast %270 : f32 to vector<128x128xf32>
    %285 = arith.mulf %284, %281 : vector<128x128xf32>
    %286 = arith.select %283, %281, %285 : vector<128x128xi1>, vector<128x128xf32>
    %287 = arith.truncf %286 : vector<128x128xf32> to vector<128x128xbf16>
    %c0_137 = arith.constant 0 : index
    %c0_138 = arith.constant 0 : index
    %288 = vector.load %arg50[%c0_137, %c0_138] : memref<128x128xbf16, #tpu.memory_space<vmem>>, vector<128x128xbf16>
    %cst_139 = arith.constant dense<0.000000e+00> : vector<128x128xf32>
    %289 = tpu.matmul %287, %288, %cst_139 {dimension_numbers = #tpu.dot_dimension_numbers<[1], [0], [0], [1], [0, 0, 1, 1], [], []>} : vector<128x128xbf16>, vector<128x128xbf16>, vector<128x128xf32> -> vector<128x128xf32>
    %cst_140 = arith.constant 0.000000e+00 : f32
    %290 = vector.broadcast %cst_140 : f32 to vector<128x128xf32>
    %291 = arith.cmpf oge, %289, %290 : vector<128x128xf32>
    %292 = vector.broadcast %271 : f32 to vector<128x128xf32>
    %293 = arith.mulf %292, %289 : vector<128x128xf32>
    %294 = arith.select %291, %289, %293 : vector<128x128xi1>, vector<128x128xf32>
    %295 = arith.truncf %294 : vector<128x128xf32> to vector<128x128xbf16>
    %c0_141 = arith.constant 0 : index
    %c0_142 = arith.constant 0 : index
    %296 = vector.load %arg51[%c0_141, %c0_142] : memref<128x128xbf16, #tpu.memory_space<vmem>>, vector<128x128xbf16>
    %cst_143 = arith.constant dense<0.000000e+00> : vector<128x128xf32>
    %297 = tpu.matmul %295, %296, %cst_143 {dimension_numbers = #tpu.dot_dimension_numbers<[1], [0], [0], [1], [0, 0, 1, 1], [], []>} : vector<128x128xbf16>, vector<128x128xbf16>, vector<128x128xf32> -> vector<128x128xf32>
    %cst_144 = arith.constant 0.000000e+00 : f32
    %298 = vector.broadcast %cst_144 : f32 to vector<128x128xf32>
    %299 = arith.cmpf oge, %297, %298 : vector<128x128xf32>
    %300 = vector.broadcast %272 : f32 to vector<128x128xf32>
    %301 = arith.mulf %300, %297 : vector<128x128xf32>
    %302 = arith.select %299, %297, %301 : vector<128x128xi1>, vector<128x128xf32>
    %303 = arith.truncf %302 : vector<128x128xf32> to vector<128x128xbf16>
    %c0_145 = arith.constant 0 : index
    %c0_146 = arith.constant 0 : index
    %304 = vector.load %arg52[%c0_145, %c0_146] : memref<128x128xbf16, #tpu.memory_space<vmem>>, vector<128x128xbf16>
    %cst_147 = arith.constant dense<0.000000e+00> : vector<128x128xf32>
    %305 = tpu.matmul %303, %304, %cst_147 {dimension_numbers = #tpu.dot_dimension_numbers<[1], [0], [0], [1], [0, 0, 1, 1], [], []>} : vector<128x128xbf16>, vector<128x128xbf16>, vector<128x128xf32> -> vector<128x128xf32>
    %c0_148 = arith.constant 0 : index
    %c0_149 = arith.constant 0 : index
    %306 = vector.load %arg53[%c0_148, %c0_149] : memref<1x128xf32, #tpu.memory_space<vmem>>, vector<1x128xf32>
    %307 = vector.broadcast %306 : vector<1x128xf32> to vector<128x128xf32>
    %308 = arith.addf %305, %307 : vector<128x128xf32>
    %309 = arith.truncf %308 : vector<128x128xf32> to vector<128x128xbf16>
    %cst_150 = arith.constant dense<0.000000e+00> : vector<128x128xf32>
    %310 = tpu.matmul %126, %309, %cst_150 {dimension_numbers = #tpu.dot_dimension_numbers<[1], [0], [0], [1], [0, 0, 1, 1], [], []>} : vector<128x128xbf16>, vector<128x128xbf16>, vector<128x128xf32> -> vector<128x128xf32>
    %c21 = arith.constant 21 : index
    %311 = memref.load %arg3[%c21] : memref<30xf32, #tpu.memory_space<smem>>
    %c22 = arith.constant 22 : index
    %312 = memref.load %arg3[%c22] : memref<30xf32, #tpu.memory_space<smem>>
    %c23 = arith.constant 23 : index
    %313 = memref.load %arg3[%c23] : memref<30xf32, #tpu.memory_space<smem>>
    %314 = arith.truncf %310 : vector<128x128xf32> to vector<128x128xbf16>
    %c0_151 = arith.constant 0 : index
    %c0_152 = arith.constant 0 : index
    %315 = vector.load %arg54[%c0_151, %c0_152] : memref<128x128xbf16, #tpu.memory_space<vmem>>, vector<128x128xbf16>
    %cst_153 = arith.constant dense<0.000000e+00> : vector<128x128xf32>
    %316 = tpu.matmul %314, %315, %cst_153 {dimension_numbers = #tpu.dot_dimension_numbers<[1], [0], [0], [1], [0, 0, 1, 1], [], []>} : vector<128x128xbf16>, vector<128x128xbf16>, vector<128x128xf32> -> vector<128x128xf32>
    %c0_154 = arith.constant 0 : index
    %c0_155 = arith.constant 0 : index
    %317 = vector.load %arg55[%c0_154, %c0_155] : memref<1x128xf32, #tpu.memory_space<vmem>>, vector<1x128xf32>
    %318 = vector.broadcast %317 : vector<1x128xf32> to vector<128x128xf32>
    %319 = arith.addf %316, %318 : vector<128x128xf32>
    %cst_156 = arith.constant 0.000000e+00 : f32
    %320 = vector.broadcast %cst_156 : f32 to vector<128x128xf32>
    %321 = arith.cmpf oge, %319, %320 : vector<128x128xf32>
    %322 = vector.broadcast %311 : f32 to vector<128x128xf32>
    %323 = arith.mulf %322, %319 : vector<128x128xf32>
    %324 = arith.select %321, %319, %323 : vector<128x128xi1>, vector<128x128xf32>
    %325 = arith.truncf %324 : vector<128x128xf32> to vector<128x128xbf16>
    %c0_157 = arith.constant 0 : index
    %c0_158 = arith.constant 0 : index
    %326 = vector.load %arg56[%c0_157, %c0_158] : memref<128x128xbf16, #tpu.memory_space<vmem>>, vector<128x128xbf16>
    %cst_159 = arith.constant dense<0.000000e+00> : vector<128x128xf32>
    %327 = tpu.matmul %325, %326, %cst_159 {dimension_numbers = #tpu.dot_dimension_numbers<[1], [0], [0], [1], [0, 0, 1, 1], [], []>} : vector<128x128xbf16>, vector<128x128xbf16>, vector<128x128xf32> -> vector<128x128xf32>
    %cst_160 = arith.constant 0.000000e+00 : f32
    %328 = vector.broadcast %cst_160 : f32 to vector<128x128xf32>
    %329 = arith.cmpf oge, %327, %328 : vector<128x128xf32>
    %330 = vector.broadcast %312 : f32 to vector<128x128xf32>
    %331 = arith.mulf %330, %327 : vector<128x128xf32>
    %332 = arith.select %329, %327, %331 : vector<128x128xi1>, vector<128x128xf32>
    %333 = arith.truncf %332 : vector<128x128xf32> to vector<128x128xbf16>
    %c0_161 = arith.constant 0 : index
    %c0_162 = arith.constant 0 : index
    %334 = vector.load %arg57[%c0_161, %c0_162] : memref<128x128xbf16, #tpu.memory_space<vmem>>, vector<128x128xbf16>
    %cst_163 = arith.constant dense<0.000000e+00> : vector<128x128xf32>
    %335 = tpu.matmul %333, %334, %cst_163 {dimension_numbers = #tpu.dot_dimension_numbers<[1], [0], [0], [1], [0, 0, 1, 1], [], []>} : vector<128x128xbf16>, vector<128x128xbf16>, vector<128x128xf32> -> vector<128x128xf32>
    %cst_164 = arith.constant 0.000000e+00 : f32
    %336 = vector.broadcast %cst_164 : f32 to vector<128x128xf32>
    %337 = arith.cmpf oge, %335, %336 : vector<128x128xf32>
    %338 = vector.broadcast %313 : f32 to vector<128x128xf32>
    %339 = arith.mulf %338, %335 : vector<128x128xf32>
    %340 = arith.select %337, %335, %339 : vector<128x128xi1>, vector<128x128xf32>
    %341 = arith.truncf %340 : vector<128x128xf32> to vector<128x128xbf16>
    %c0_165 = arith.constant 0 : index
    %c0_166 = arith.constant 0 : index
    %342 = vector.load %arg58[%c0_165, %c0_166] : memref<128x128xbf16, #tpu.memory_space<vmem>>, vector<128x128xbf16>
    %cst_167 = arith.constant dense<0.000000e+00> : vector<128x128xf32>
    %343 = tpu.matmul %341, %342, %cst_167 {dimension_numbers = #tpu.dot_dimension_numbers<[1], [0], [0], [1], [0, 0, 1, 1], [], []>} : vector<128x128xbf16>, vector<128x128xbf16>, vector<128x128xf32> -> vector<128x128xf32>
    %c0_168 = arith.constant 0 : index
    %c0_169 = arith.constant 0 : index
    %344 = vector.load %arg59[%c0_168, %c0_169] : memref<1x128xf32, #tpu.memory_space<vmem>>, vector<1x128xf32>
    %345 = vector.broadcast %344 : vector<1x128xf32> to vector<128x128xf32>
    %346 = arith.addf %343, %345 : vector<128x128xf32>
    %347 = arith.addf %264, %346 : vector<128x128xf32>
    %348 = vector.broadcast %4 : vector<128x1xf32> to vector<128x128xf32>
    %349 = arith.mulf %347, %348 : vector<128x128xf32>
    %cst_170 = arith.constant dense<0.000000e+00> : vector<128xf32>
    %350 = vector.multi_reduction <add>, %349, %cst_170 [0] : vector<128x128xf32> to vector<128xf32>
    %351 = vector.shape_cast %350 : vector<128xf32> to vector<1x128xf32>
    %cst_171 = arith.constant 6.250000e-02 : f32
    %352 = vector.broadcast %cst_171 : f32 to vector<1x128xf32>
    %353 = arith.mulf %351, %352 : vector<1x128xf32>
    %c0_172 = arith.constant 0 : index
    %c0_173 = arith.constant 0 : index
    %354 = vector.load %arg62[%c0_172, %c0_173] : memref<1x128xf32, #tpu.memory_space<vmem>>, vector<1x128xf32>
    %355 = arith.mulf %354, %353 : vector<1x128xf32>
    %356 = vector.broadcast %355 : vector<1x128xf32> to vector<128x128xf32>
    %357 = arith.subf %347, %356 : vector<128x128xf32>
    %358 = arith.mulf %357, %357 : vector<128x128xf32>
    %359 = vector.broadcast %4 : vector<128x1xf32> to vector<128x128xf32>
    %360 = arith.mulf %358, %359 : vector<128x128xf32>
    %cst_174 = arith.constant dense<0.000000e+00> : vector<128xf32>
    %361 = vector.multi_reduction <add>, %360, %cst_174 [0] : vector<128x128xf32> to vector<128xf32>
    %362 = vector.shape_cast %361 : vector<128xf32> to vector<1x128xf32>
    %cst_175 = arith.constant 6.250000e-02 : f32
    %363 = vector.broadcast %cst_175 : f32 to vector<1x128xf32>
    %364 = arith.mulf %362, %363 : vector<1x128xf32>
    %cst_176 = arith.constant 9.99999974E-6 : f32
    %365 = vector.broadcast %cst_176 : f32 to vector<1x128xf32>
    %366 = arith.addf %364, %365 : vector<1x128xf32>
    %367 = math.rsqrt %366 : vector<1x128xf32>
    %368 = vector.broadcast %367 : vector<1x128xf32> to vector<128x128xf32>
    %369 = arith.mulf %357, %368 : vector<128x128xf32>
    %c0_177 = arith.constant 0 : index
    %c0_178 = arith.constant 0 : index
    %370 = vector.load %arg60[%c0_177, %c0_178] : memref<1x128xf32, #tpu.memory_space<vmem>>, vector<1x128xf32>
    %371 = vector.broadcast %370 : vector<1x128xf32> to vector<128x128xf32>
    %372 = arith.mulf %369, %371 : vector<128x128xf32>
    %c0_179 = arith.constant 0 : index
    %c0_180 = arith.constant 0 : index
    %373 = vector.load %arg61[%c0_179, %c0_180] : memref<1x128xf32, #tpu.memory_space<vmem>>, vector<1x128xf32>
    %374 = vector.broadcast %373 : vector<1x128xf32> to vector<128x128xf32>
    %375 = arith.addf %372, %374 : vector<128x128xf32>
    %376 = arith.truncf %375 : vector<128x128xf32> to vector<128x128xbf16>
    %cst_181 = arith.constant dense<0.000000e+00> : vector<256x128xf32>
    %377 = tpu.matmul %123, %376, %cst_181 {dimension_numbers = #tpu.dot_dimension_numbers<[1], [0], [0], [1], [0, 0, 1, 1], [], []>} : vector<256x128xbf16>, vector<128x128xbf16>, vector<256x128xf32> -> vector<256x128xf32>
    %378 = vector.extract_strided_slice %377 {offsets = [0, 0], sizes = [128, 128], strides = [1, 1]} : vector<256x128xf32> to vector<128x128xf32>
    %379 = vector.extract_strided_slice %377 {offsets = [128, 0], sizes = [128, 128], strides = [1, 1]} : vector<256x128xf32> to vector<128x128xf32>
    %380 = arith.mulf %378, %379 : vector<128x128xf32>
    %c24 = arith.constant 24 : index
    %381 = memref.load %arg3[%c24] : memref<30xf32, #tpu.memory_space<smem>>
    %c25 = arith.constant 25 : index
    %382 = memref.load %arg3[%c25] : memref<30xf32, #tpu.memory_space<smem>>
    %c26 = arith.constant 26 : index
    %383 = memref.load %arg3[%c26] : memref<30xf32, #tpu.memory_space<smem>>
    %384 = arith.truncf %380 : vector<128x128xf32> to vector<128x128xbf16>
    %c0_182 = arith.constant 0 : index
    %c0_183 = arith.constant 0 : index
    %385 = vector.load %arg63[%c0_182, %c0_183] : memref<128x128xbf16, #tpu.memory_space<vmem>>, vector<128x128xbf16>
    %cst_184 = arith.constant dense<0.000000e+00> : vector<128x128xf32>
    %386 = tpu.matmul %384, %385, %cst_184 {dimension_numbers = #tpu.dot_dimension_numbers<[1], [0], [0], [1], [0, 0, 1, 1], [], []>} : vector<128x128xbf16>, vector<128x128xbf16>, vector<128x128xf32> -> vector<128x128xf32>
    %c0_185 = arith.constant 0 : index
    %c0_186 = arith.constant 0 : index
    %387 = vector.load %arg64[%c0_185, %c0_186] : memref<128x128xbf16, #tpu.memory_space<vmem>>, vector<128x128xbf16>
    %cst_187 = arith.constant dense<0.000000e+00> : vector<128x128xf32>
    %388 = tpu.matmul %116, %387, %cst_187 {dimension_numbers = #tpu.dot_dimension_numbers<[1], [0], [0], [1], [0, 0, 1, 1], [], []>} : vector<128x128xbf16>, vector<128x128xbf16>, vector<128x128xf32> -> vector<128x128xf32>
    %389 = arith.addf %386, %388 : vector<128x128xf32>
    %c0_188 = arith.constant 0 : index
    %c0_189 = arith.constant 0 : index
    %390 = vector.load %arg65[%c0_188, %c0_189] : memref<1x128xf32, #tpu.memory_space<vmem>>, vector<1x128xf32>
    %391 = vector.broadcast %390 : vector<1x128xf32> to vector<128x128xf32>
    %392 = arith.addf %389, %391 : vector<128x128xf32>
    %cst_190 = arith.constant 0.000000e+00 : f32
    %393 = vector.broadcast %cst_190 : f32 to vector<128x128xf32>
    %394 = arith.cmpf oge, %392, %393 : vector<128x128xf32>
    %395 = vector.broadcast %381 : f32 to vector<128x128xf32>
    %396 = arith.mulf %395, %392 : vector<128x128xf32>
    %397 = arith.select %394, %392, %396 : vector<128x128xi1>, vector<128x128xf32>
    %398 = arith.truncf %397 : vector<128x128xf32> to vector<128x128xbf16>
    %c0_191 = arith.constant 0 : index
    %c0_192 = arith.constant 0 : index
    %399 = vector.load %arg66[%c0_191, %c0_192] : memref<128x128xbf16, #tpu.memory_space<vmem>>, vector<128x128xbf16>
    %cst_193 = arith.constant dense<0.000000e+00> : vector<128x128xf32>
    %400 = tpu.matmul %398, %399, %cst_193 {dimension_numbers = #tpu.dot_dimension_numbers<[1], [0], [0], [1], [0, 0, 1, 1], [], []>} : vector<128x128xbf16>, vector<128x128xbf16>, vector<128x128xf32> -> vector<128x128xf32>
    %cst_194 = arith.constant 0.000000e+00 : f32
    %401 = vector.broadcast %cst_194 : f32 to vector<128x128xf32>
    %402 = arith.cmpf oge, %400, %401 : vector<128x128xf32>
    %403 = vector.broadcast %382 : f32 to vector<128x128xf32>
    %404 = arith.mulf %403, %400 : vector<128x128xf32>
    %405 = arith.select %402, %400, %404 : vector<128x128xi1>, vector<128x128xf32>
    %406 = arith.truncf %405 : vector<128x128xf32> to vector<128x128xbf16>
    %c0_195 = arith.constant 0 : index
    %c0_196 = arith.constant 0 : index
    %407 = vector.load %arg67[%c0_195, %c0_196] : memref<128x128xbf16, #tpu.memory_space<vmem>>, vector<128x128xbf16>
    %cst_197 = arith.constant dense<0.000000e+00> : vector<128x128xf32>
    %408 = tpu.matmul %406, %407, %cst_197 {dimension_numbers = #tpu.dot_dimension_numbers<[1], [0], [0], [1], [0, 0, 1, 1], [], []>} : vector<128x128xbf16>, vector<128x128xbf16>, vector<128x128xf32> -> vector<128x128xf32>
    %cst_198 = arith.constant 0.000000e+00 : f32
    %409 = vector.broadcast %cst_198 : f32 to vector<128x128xf32>
    %410 = arith.cmpf oge, %408, %409 : vector<128x128xf32>
    %411 = vector.broadcast %383 : f32 to vector<128x128xf32>
    %412 = arith.mulf %411, %408 : vector<128x128xf32>
    %413 = arith.select %410, %408, %412 : vector<128x128xi1>, vector<128x128xf32>
    %414 = arith.truncf %413 : vector<128x128xf32> to vector<128x128xbf16>
    %c0_199 = arith.constant 0 : index
    %c0_200 = arith.constant 0 : index
    %415 = vector.load %arg68[%c0_199, %c0_200] : memref<128x128xbf16, #tpu.memory_space<vmem>>, vector<128x128xbf16>
    %cst_201 = arith.constant dense<0.000000e+00> : vector<128x128xf32>
    %416 = tpu.matmul %414, %415, %cst_201 {dimension_numbers = #tpu.dot_dimension_numbers<[1], [0], [0], [1], [0, 0, 1, 1], [], []>} : vector<128x128xbf16>, vector<128x128xbf16>, vector<128x128xf32> -> vector<128x128xf32>
    %c0_202 = arith.constant 0 : index
    %c0_203 = arith.constant 0 : index
    %417 = vector.load %arg69[%c0_202, %c0_203] : memref<1x128xf32, #tpu.memory_space<vmem>>, vector<1x128xf32>
    %418 = vector.broadcast %417 : vector<1x128xf32> to vector<128x128xf32>
    %419 = arith.addf %416, %418 : vector<128x128xf32>
    %420 = arith.truncf %419 : vector<128x128xf32> to vector<128x128xbf16>
    %cst_204 = arith.constant dense<0.000000e+00> : vector<128x128xf32>
    %421 = tpu.matmul %126, %420, %cst_204 {dimension_numbers = #tpu.dot_dimension_numbers<[1], [0], [0], [1], [0, 0, 1, 1], [], []>} : vector<128x128xbf16>, vector<128x128xbf16>, vector<128x128xf32> -> vector<128x128xf32>
    %c27 = arith.constant 27 : index
    %422 = memref.load %arg3[%c27] : memref<30xf32, #tpu.memory_space<smem>>
    %c28 = arith.constant 28 : index
    %423 = memref.load %arg3[%c28] : memref<30xf32, #tpu.memory_space<smem>>
    %c29 = arith.constant 29 : index
    %424 = memref.load %arg3[%c29] : memref<30xf32, #tpu.memory_space<smem>>
    %425 = arith.truncf %421 : vector<128x128xf32> to vector<128x128xbf16>
    %c0_205 = arith.constant 0 : index
    %c0_206 = arith.constant 0 : index
    %426 = vector.load %arg70[%c0_205, %c0_206] : memref<128x128xbf16, #tpu.memory_space<vmem>>, vector<128x128xbf16>
    %cst_207 = arith.constant dense<0.000000e+00> : vector<128x128xf32>
    %427 = tpu.matmul %425, %426, %cst_207 {dimension_numbers = #tpu.dot_dimension_numbers<[1], [0], [0], [1], [0, 0, 1, 1], [], []>} : vector<128x128xbf16>, vector<128x128xbf16>, vector<128x128xf32> -> vector<128x128xf32>
    %c0_208 = arith.constant 0 : index
    %c0_209 = arith.constant 0 : index
    %428 = vector.load %arg71[%c0_208, %c0_209] : memref<1x128xf32, #tpu.memory_space<vmem>>, vector<1x128xf32>
    %429 = vector.broadcast %428 : vector<1x128xf32> to vector<128x128xf32>
    %430 = arith.addf %427, %429 : vector<128x128xf32>
    %cst_210 = arith.constant 0.000000e+00 : f32
    %431 = vector.broadcast %cst_210 : f32 to vector<128x128xf32>
    %432 = arith.cmpf oge, %430, %431 : vector<128x128xf32>
    %433 = vector.broadcast %422 : f32 to vector<128x128xf32>
    %434 = arith.mulf %433, %430 : vector<128x128xf32>
    %435 = arith.select %432, %430, %434 : vector<128x128xi1>, vector<128x128xf32>
    %436 = arith.truncf %435 : vector<128x128xf32> to vector<128x128xbf16>
    %c0_211 = arith.constant 0 : index
    %c0_212 = arith.constant 0 : index
    %437 = vector.load %arg72[%c0_211, %c0_212] : memref<128x128xbf16, #tpu.memory_space<vmem>>, vector<128x128xbf16>
    %cst_213 = arith.constant dense<0.000000e+00> : vector<128x128xf32>
    %438 = tpu.matmul %436, %437, %cst_213 {dimension_numbers = #tpu.dot_dimension_numbers<[1], [0], [0], [1], [0, 0, 1, 1], [], []>} : vector<128x128xbf16>, vector<128x128xbf16>, vector<128x128xf32> -> vector<128x128xf32>
    %cst_214 = arith.constant 0.000000e+00 : f32
    %439 = vector.broadcast %cst_214 : f32 to vector<128x128xf32>
    %440 = arith.cmpf oge, %438, %439 : vector<128x128xf32>
    %441 = vector.broadcast %423 : f32 to vector<128x128xf32>
    %442 = arith.mulf %441, %438 : vector<128x128xf32>
    %443 = arith.select %440, %438, %442 : vector<128x128xi1>, vector<128x128xf32>
    %444 = arith.truncf %443 : vector<128x128xf32> to vector<128x128xbf16>
    %c0_215 = arith.constant 0 : index
    %c0_216 = arith.constant 0 : index
    %445 = vector.load %arg73[%c0_215, %c0_216] : memref<128x128xbf16, #tpu.memory_space<vmem>>, vector<128x128xbf16>
    %cst_217 = arith.constant dense<0.000000e+00> : vector<128x128xf32>
    %446 = tpu.matmul %444, %445, %cst_217 {dimension_numbers = #tpu.dot_dimension_numbers<[1], [0], [0], [1], [0, 0, 1, 1], [], []>} : vector<128x128xbf16>, vector<128x128xbf16>, vector<128x128xf32> -> vector<128x128xf32>
    %cst_218 = arith.constant 0.000000e+00 : f32
    %447 = vector.broadcast %cst_218 : f32 to vector<128x128xf32>
    %448 = arith.cmpf oge, %446, %447 : vector<128x128xf32>
    %449 = vector.broadcast %424 : f32 to vector<128x128xf32>
    %450 = arith.mulf %449, %446 : vector<128x128xf32>
    %451 = arith.select %448, %446, %450 : vector<128x128xi1>, vector<128x128xf32>
    %452 = arith.truncf %451 : vector<128x128xf32> to vector<128x128xbf16>
    %c0_219 = arith.constant 0 : index
    %c0_220 = arith.constant 0 : index
    %453 = vector.load %arg74[%c0_219, %c0_220] : memref<128x128xbf16, #tpu.memory_space<vmem>>, vector<128x128xbf16>
    %cst_221 = arith.constant dense<0.000000e+00> : vector<128x128xf32>
    %454 = tpu.matmul %452, %453, %cst_221 {dimension_numbers = #tpu.dot_dimension_numbers<[1], [0], [0], [1], [0, 0, 1, 1], [], []>} : vector<128x128xbf16>, vector<128x128xbf16>, vector<128x128xf32> -> vector<128x128xf32>
    %c0_222 = arith.constant 0 : index
    %c0_223 = arith.constant 0 : index
    %455 = vector.load %arg75[%c0_222, %c0_223] : memref<1x128xf32, #tpu.memory_space<vmem>>, vector<1x128xf32>
    %456 = vector.broadcast %455 : vector<1x128xf32> to vector<128x128xf32>
    %457 = arith.addf %454, %456 : vector<128x128xf32>
    %458 = arith.addf %375, %457 : vector<128x128xf32>
    %c9 = arith.constant 9 : index
    %459 = memref.load %arg3[%c9] : memref<30xf32, #tpu.memory_space<smem>>
    %c10 = arith.constant 10 : index
    %460 = memref.load %arg3[%c10] : memref<30xf32, #tpu.memory_space<smem>>
    %c11 = arith.constant 11 : index
    %461 = memref.load %arg3[%c11] : memref<30xf32, #tpu.memory_space<smem>>
    %462 = arith.truncf %458 : vector<128x128xf32> to vector<128x128xbf16>
    %c0_224 = arith.constant 0 : index
    %c0_225 = arith.constant 0 : index
    %463 = vector.load %arg22[%c0_224, %c0_225] : memref<128x128xbf16, #tpu.memory_space<vmem>>, vector<128x128xbf16>
    %cst_226 = arith.constant dense<0.000000e+00> : vector<128x128xf32>
    %464 = tpu.matmul %462, %463, %cst_226 {dimension_numbers = #tpu.dot_dimension_numbers<[1], [0], [0], [1], [0, 0, 1, 1], [], []>} : vector<128x128xbf16>, vector<128x128xbf16>, vector<128x128xf32> -> vector<128x128xf32>
    %c0_227 = arith.constant 0 : index
    %c0_228 = arith.constant 0 : index
    %465 = vector.load %arg23[%c0_227, %c0_228] : memref<1x128xf32, #tpu.memory_space<vmem>>, vector<1x128xf32>
    %466 = vector.broadcast %465 : vector<1x128xf32> to vector<128x128xf32>
    %467 = arith.addf %464, %466 : vector<128x128xf32>
    %cst_229 = arith.constant 0.000000e+00 : f32
    %468 = vector.broadcast %cst_229 : f32 to vector<128x128xf32>
    %469 = arith.cmpf oge, %467, %468 : vector<128x128xf32>
    %470 = vector.broadcast %459 : f32 to vector<128x128xf32>
    %471 = arith.mulf %470, %467 : vector<128x128xf32>
    %472 = arith.select %469, %467, %471 : vector<128x128xi1>, vector<128x128xf32>
    %473 = arith.truncf %472 : vector<128x128xf32> to vector<128x128xbf16>
    %c0_230 = arith.constant 0 : index
    %c0_231 = arith.constant 0 : index
    %474 = vector.load %arg24[%c0_230, %c0_231] : memref<128x128xbf16, #tpu.memory_space<vmem>>, vector<128x128xbf16>
    %cst_232 = arith.constant dense<0.000000e+00> : vector<128x128xf32>
    %475 = tpu.matmul %473, %474, %cst_232 {dimension_numbers = #tpu.dot_dimension_numbers<[1], [0], [0], [1], [0, 0, 1, 1], [], []>} : vector<128x128xbf16>, vector<128x128xbf16>, vector<128x128xf32> -> vector<128x128xf32>
    %cst_233 = arith.constant 0.000000e+00 : f32
    %476 = vector.broadcast %cst_233 : f32 to vector<128x128xf32>
    %477 = arith.cmpf oge, %475, %476 : vector<128x128xf32>
    %478 = vector.broadcast %460 : f32 to vector<128x128xf32>
    %479 = arith.mulf %478, %475 : vector<128x128xf32>
    %480 = arith.select %477, %475, %479 : vector<128x128xi1>, vector<128x128xf32>
    %481 = arith.truncf %480 : vector<128x128xf32> to vector<128x128xbf16>
    %c0_234 = arith.constant 0 : index
    %c0_235 = arith.constant 0 : index
    %482 = vector.load %arg25[%c0_234, %c0_235] : memref<128x128xbf16, #tpu.memory_space<vmem>>, vector<128x128xbf16>
    %cst_236 = arith.constant dense<0.000000e+00> : vector<128x128xf32>
    %483 = tpu.matmul %481, %482, %cst_236 {dimension_numbers = #tpu.dot_dimension_numbers<[1], [0], [0], [1], [0, 0, 1, 1], [], []>} : vector<128x128xbf16>, vector<128x128xbf16>, vector<128x128xf32> -> vector<128x128xf32>
    %cst_237 = arith.constant 0.000000e+00 : f32
    %484 = vector.broadcast %cst_237 : f32 to vector<128x128xf32>
    %485 = arith.cmpf oge, %483, %484 : vector<128x128xf32>
    %486 = vector.broadcast %461 : f32 to vector<128x128xf32>
    %487 = arith.mulf %486, %483 : vector<128x128xf32>
    %488 = arith.select %485, %483, %487 : vector<128x128xi1>, vector<128x128xf32>
    %489 = arith.truncf %488 : vector<128x128xf32> to vector<128x128xbf16>
    %c0_238 = arith.constant 0 : index
    %c0_239 = arith.constant 0 : index
    %490 = vector.load %arg26[%c0_238, %c0_239] : memref<128x128xbf16, #tpu.memory_space<vmem>>, vector<128x128xbf16>
    %cst_240 = arith.constant dense<0.000000e+00> : vector<128x128xf32>
    %491 = tpu.matmul %489, %490, %cst_240 {dimension_numbers = #tpu.dot_dimension_numbers<[1], [0], [0], [1], [0, 0, 1, 1], [], []>} : vector<128x128xbf16>, vector<128x128xbf16>, vector<128x128xf32> -> vector<128x128xf32>
    %c0_241 = arith.constant 0 : index
    %c0_242 = arith.constant 0 : index
    %492 = vector.load %arg27[%c0_241, %c0_242] : memref<1x128xf32, #tpu.memory_space<vmem>>, vector<1x128xf32>
    %493 = vector.broadcast %492 : vector<1x128xf32> to vector<128x128xf32>
    %494 = arith.addf %491, %493 : vector<128x128xf32>
    %c0_243 = arith.constant 0 : index
    %c0_244 = arith.constant 0 : index
    %495 = vector.load %arg76[%c0_243, %c0_244] : memref<128x128xf32, #tpu.memory_space<vmem>>, vector<128x128xf32>
    tpu.vector_store %arg76[%c0_243, %c0_244], %494 {strides = array<i32>} : memref<128x128xf32, #tpu.memory_space<vmem>>, vector<128x128xf32>,
    return
  }
}

</mosaic_0001>

<llo_original>
// kernel: gnn_forward.1
$region0: #{gnn_forward.1}
  #allocation0 [shape = 'u32[]', space=smem, size = 0x4, offset = 0x4, fixed_abs, tag = 'smem constant byte address 0x4 - core index']
  #allocation1 [shape = 'u32[144,128]{1,0:T(1,128)}', space=vmem, size = 0x12000, scoped, tag = 'internal scratch']
  %s0 = inlined_call_operand.smem [shape: u32[77], index: -1, kind: input, shape index: {}]
  %s1 = sld [smem:[%s0]]
  %s2 = scalar_lea.smem %s0, 1
  %s3 = sld [smem:[%s2]]
  %s4 = scalar_lea.smem %s0, 2
  %s5 = sld [smem:[%s4]]
  %s6 = scalar_lea.smem %s0, 3
  %s7 = sld [smem:[%s6]]
  %s8 = scalar_lea.smem %s0, 4
  %s9 = sld [smem:[%s8]]
  %s10 = scalar_lea.smem %s0, 5
  %s11 = sld [smem:[%s10]]
  %s12 = scalar_lea.smem %s0, 6
  %s13 = sld [smem:[%s12]]
  %s14 = scalar_lea.smem %s0, 7
  %s15 = sld [smem:[%s14]]
  %s16 = scalar_lea.smem %s0, 8
  %s17 = sld [smem:[%s16]]
  %s18 = scalar_lea.smem %s0, 9
  %s19 = sld [smem:[%s18]]
  %s20 = scalar_lea.smem %s0, 10
  %s21 = sld [smem:[%s20]]
  %s22 = scalar_lea.smem %s0, 11
  %s23 = sld [smem:[%s22]]
  %s24 = scalar_lea.smem %s0, 12
  %s25 = sld [smem:[%s24]]
  %s26 = scalar_lea.smem %s0, 13
  %s27 = sld [smem:[%s26]]
  %s28 = scalar_lea.smem %s0, 14
  %s29 = sld [smem:[%s28]]
  %s30 = scalar_lea.smem %s0, 15
  %s31 = sld [smem:[%s30]]
  %s32 = scalar_lea.smem %s0, 16
  %s33 = sld [smem:[%s32]]
  %s34 = scalar_lea.smem %s0, 17
  %s35 = sld [smem:[%s34]]
  %s36 = scalar_lea.smem %s0, 18
  %s37 = sld [smem:[%s36]]
  %s38 = scalar_lea.smem %s0, 19
  %s39 = sld [smem:[%s38]]
  %s40 = scalar_lea.smem %s0, 20
  %s41 = sld [smem:[%s40]]
  %s42 = scalar_lea.smem %s0, 21
  %s43 = sld [smem:[%s42]]
  %s44 = scalar_lea.smem %s0, 22
  %s45 = sld [smem:[%s44]]
  %s46 = scalar_lea.smem %s0, 23
  %s47 = sld [smem:[%s46]]
  %s48 = scalar_lea.smem %s0, 24
  %s49 = sld [smem:[%s48]]
  %s50 = scalar_lea.smem %s0, 25
  %s51 = sld [smem:[%s50]]
  %s52 = scalar_lea.smem %s0, 26
  %s53 = sld [smem:[%s52]]
  %s54 = scalar_lea.smem %s0, 27
  %s55 = sld [smem:[%s54]]
  %s56 = scalar_lea.smem %s0, 28
  %s57 = sld [smem:[%s56]]
  %s58 = scalar_lea.smem %s0, 29
  %s59 = sld [smem:[%s58]]
  %s60 = scalar_lea.smem %s0, 30
  %s61 = sld [smem:[%s60]]
  %s62 = scalar_lea.smem %s0, 31
  %s63 = sld [smem:[%s62]]
  %s64 = scalar_lea.smem %s0, 32
  %s65 = sld [smem:[%s64]]
  %s66 = scalar_lea.smem %s0, 33
  %s67 = sld [smem:[%s66]]
  %s68 = scalar_lea.smem %s0, 34
  %s69 = sld [smem:[%s68]]
  %s70 = scalar_lea.smem %s0, 35
  %s71 = sld [smem:[%s70]]
  %s72 = scalar_lea.smem %s0, 36
  %s73 = sld [smem:[%s72]]
  %s74 = scalar_lea.smem %s0, 37
  %s75 = sld [smem:[%s74]]
  %s76 = scalar_lea.smem %s0, 38
  %s77 = sld [smem:[%s76]]
  %s78 = scalar_lea.smem %s0, 39
  %s79 = sld [smem:[%s78]]
  %s80 = scalar_lea.smem %s0, 40
  %s81 = sld [smem:[%s80]]
  %s82 = scalar_lea.smem %s0, 41
  %s83 = sld [smem:[%s82]]
  %s84 = scalar_lea.smem %s0, 42
  %s85 = sld [smem:[%s84]]
  %s86 = scalar_lea.smem %s0, 43
  %s87 = sld [smem:[%s86]]
  %s88 = scalar_lea.smem %s0, 44
  %s89 = sld [smem:[%s88]]
  %s90 = scalar_lea.smem %s0, 45
  %s91 = sld [smem:[%s90]]
  %s92 = scalar_lea.smem %s0, 46
  %s93 = sld [smem:[%s92]]
  %s94 = scalar_lea.smem %s0, 47
  %s95 = sld [smem:[%s94]]
  %s96 = scalar_lea.smem %s0, 48
  %s97 = sld [smem:[%s96]]
  %s98 = scalar_lea.smem %s0, 49
  %s99 = sld [smem:[%s98]]
  %s100 = scalar_lea.smem %s0, 50
  %s101 = sld [smem:[%s100]]
  %s102 = scalar_lea.smem %s0, 51
  %s103 = sld [smem:[%s102]]
  %s104 = scalar_lea.smem %s0, 52
  %s105 = sld [smem:[%s104]]
  %s106 = scalar_lea.smem %s0, 53
  %s107 = sld [smem:[%s106]]
  %s108 = scalar_lea.smem %s0, 54
  %s109 = sld [smem:[%s108]]
  %s110 = scalar_lea.smem %s0, 55
  %s111 = sld [smem:[%s110]]
  %s112 = scalar_lea.smem %s0, 56
  %s113 = sld [smem:[%s112]]
  %s114 = scalar_lea.smem %s0, 57
  %s115 = sld [smem:[%s114]]
  %s116 = scalar_lea.smem %s0, 58
  %s117 = sld [smem:[%s116]]
  %s118 = scalar_lea.smem %s0, 59
  %s119 = sld [smem:[%s118]]
  %s120 = scalar_lea.smem %s0, 60
  %s121 = sld [smem:[%s120]]
  %s122 = scalar_lea.smem %s0, 61
  %s123 = sld [smem:[%s122]]
  %s124 = scalar_lea.smem %s0, 62
  %s125 = sld [smem:[%s124]]
  %s126 = scalar_lea.smem %s0, 63
  %s127 = sld [smem:[%s126]]
  %s128 = scalar_lea.smem %s0, 64
  %s129 = sld [smem:[%s128]]
  %s130 = scalar_lea.smem %s0, 65
  %s131 = sld [smem:[%s130]]
  %s132 = scalar_lea.smem %s0, 66
  %s133 = sld [smem:[%s132]]
  %s134 = scalar_lea.smem %s0, 67
  %s135 = sld [smem:[%s134]]
  %s136 = scalar_lea.smem %s0, 68
  %s137 = sld [smem:[%s136]]
  %s138 = scalar_lea.smem %s0, 69
  %s139 = sld [smem:[%s138]]
  %s140 = scalar_lea.smem %s0, 70
  %s141 = sld [smem:[%s140]]
  %s142 = scalar_lea.smem %s0, 71
  %s143 = sld [smem:[%s142]]
  %s144 = scalar_lea.smem %s0, 72
  %s145 = sld [smem:[%s144]]
  %s146 = scalar_lea.smem %s0, 73
  %s147 = sld [smem:[%s146]]
  %s148 = scalar_lea.smem %s0, 74
  %s149 = sld [smem:[%s148]]
  %s150 = scalar_lea.smem %s0, 75
  %s151 = sld [smem:[%s150]]
  %s152 = scalar_lea.smem %s0, 76
  %s153 = sld [smem:[%s152]]
  %s154 = sld [smem:[#allocation0]]
  $region318: #{gnn_forward.1} parent=0
    _
  %s156 = ssub.s32 1, %s154
  %s157 = scalar_select 0, %s156, %s154
  $region1: #{gnn_forward.1} parent=0
    #allocation2 [shape = 'u8[512]{0}', space=smem, size = 0x200, scoped, tag = 'input window, operand 3, single buffered']
    #allocation3 [shape = 's32[1]{0}', space=sflag, size = 0x4, scoped, tag = 'scoped memory for gnn_forward.1']
    %158 = vsyncpa [#allocation3], 0
    // Predicated region
    $region2: #{gnn_forward.1} parent=1 // pred_check
      _
    $region3: #{gnn_forward.1} parent=1 // pred_check_branch
      %160 = sbr.rel (0) target = $region5
    $region4: #{gnn_forward.1} parent=1 // pred_region
      _
    $region5: #{gnn_forward.1} parent=1 // pred_fallthru
      _
    // Predicated region
    $region6: #{gnn_forward.1} parent=1 // pred_check
      _
    $region7: #{gnn_forward.1} parent=1 // pred_check_branch
      %162 = sbr.rel (0) target = $region9
    $region8: #{gnn_forward.1} parent=1 // pred_region
      _
    $region9: #{gnn_forward.1} parent=1 // pred_fallthru
      _
    // Predicated region
    $region10: #{gnn_forward.1} parent=1 // pred_check
      _
    $region11: #{gnn_forward.1} parent=1 // pred_check_branch
      %164 = sbr.rel (0) target = $region13
    $region12: #{gnn_forward.1} parent=1 // pred_region
      _
    $region13: #{gnn_forward.1} parent=1 // pred_fallthru
      _
    // Predicated region
    $region14: #{gnn_forward.1} parent=1 // pred_check
      _
    $region15: #{gnn_forward.1} parent=1 // pred_check_branch
      %166 = sbr.rel (0) target = $region17
    $region16: #{gnn_forward.1} parent=1 // pred_region
      %s168 = ssub.s32 16, 16
      %169 = vsyncadd [#allocation3], %s168
      %s171 = sshll.u32 %s7, 4
      %s172 = int_to_ptr.vmem [resolvable:$true] %s171
      %174 = dma.vmem_to_smem %s172, 16, [#allocation2], [#allocation3]
    $region17: #{gnn_forward.1} parent=1 // pred_fallthru
      _
    // Predicated region
    $region18: #{gnn_forward.1} parent=1 // pred_check
      _
    $region19: #{gnn_forward.1} parent=1 // pred_check_branch
      %176 = sbr.rel (0) target = $region21
    $region20: #{gnn_forward.1} parent=1 // pred_region
      _
    $region21: #{gnn_forward.1} parent=1 // pred_fallthru
      _
    // Predicated region
    $region22: #{gnn_forward.1} parent=1 // pred_check
      _
    $region23: #{gnn_forward.1} parent=1 // pred_check_branch
      %178 = sbr.rel (0) target = $region25
    $region24: #{gnn_forward.1} parent=1 // pred_region
      _
    $region25: #{gnn_forward.1} parent=1 // pred_fallthru
      _
    // Predicated region
    $region26: #{gnn_forward.1} parent=1 // pred_check
      _
    $region27: #{gnn_forward.1} parent=1 // pred_check_branch
      %180 = sbr.rel (0) target = $region29
    $region28: #{gnn_forward.1} parent=1 // pred_region
      _
    $region29: #{gnn_forward.1} parent=1 // pred_fallthru
      _
    // Predicated region
    $region30: #{gnn_forward.1} parent=1 // pred_check
      _
    $region31: #{gnn_forward.1} parent=1 // pred_check_branch
      %182 = sbr.rel (0) target = $region33
    $region32: #{gnn_forward.1} parent=1 // pred_region
      _
    $region33: #{gnn_forward.1} parent=1 // pred_fallthru
      _
    // Predicated region
    $region34: #{gnn_forward.1} parent=1 // pred_check
      _
    $region35: #{gnn_forward.1} parent=1 // pred_check_branch
      %184 = sbr.rel (0) target = $region37
    $region36: #{gnn_forward.1} parent=1 // pred_region
      _
    $region37: #{gnn_forward.1} parent=1 // pred_fallthru
      _
    // Predicated region
    $region38: #{gnn_forward.1} parent=1 // pred_check
      _
    $region39: #{gnn_forward.1} parent=1 // pred_check_branch
      %186 = sbr.rel (0) target = $region41
    $region40: #{gnn_forward.1} parent=1 // pred_region
      _
    $region41: #{gnn_forward.1} parent=1 // pred_fallthru
      _
    // Predicated region
    $region42: #{gnn_forward.1} parent=1 // pred_check
      _
    $region43: #{gnn_forward.1} parent=1 // pred_check_branch
      %188 = sbr.rel (0) target = $region45
    $region44: #{gnn_forward.1} parent=1 // pred_region
      _
    $region45: #{gnn_forward.1} parent=1 // pred_fallthru
      _
    // Predicated region
    $region46: #{gnn_forward.1} parent=1 // pred_check
      _
    $region47: #{gnn_forward.1} parent=1 // pred_check_branch
      %190 = sbr.rel (0) target = $region49
    $region48: #{gnn_forward.1} parent=1 // pred_region
      _
    $region49: #{gnn_forward.1} parent=1 // pred_fallthru
      _
    // Predicated region
    $region50: #{gnn_forward.1} parent=1 // pred_check
      _
    $region51: #{gnn_forward.1} parent=1 // pred_check_branch
      %192 = sbr.rel (0) target = $region53
    $region52: #{gnn_forward.1} parent=1 // pred_region
      _
    $region53: #{gnn_forward.1} parent=1 // pred_fallthru
      _
    // Predicated region
    $region54: #{gnn_forward.1} parent=1 // pred_check
      _
    $region55: #{gnn_forward.1} parent=1 // pred_check_branch
      %194 = sbr.rel (0) target = $region57
    $region56: #{gnn_forward.1} parent=1 // pred_region
      _
    $region57: #{gnn_forward.1} parent=1 // pred_fallthru
      _
    // Predicated region
    $region58: #{gnn_forward.1} parent=1 // pred_check
      _
    $region59: #{gnn_forward.1} parent=1 // pred_check_branch
      %196 = sbr.rel (0) target = $region61
    $region60: #{gnn_forward.1} parent=1 // pred_region
      _
    $region61: #{gnn_forward.1} parent=1 // pred_fallthru
      _
    // Predicated region
    $region62: #{gnn_forward.1} parent=1 // pred_check
      _
    $region63: #{gnn_forward.1} parent=1 // pred_check_branch
      %198 = sbr.rel (0) target = $region65
    $region64: #{gnn_forward.1} parent=1 // pred_region
      _
    $region65: #{gnn_forward.1} parent=1 // pred_fallthru
      _
    // Predicated region
    $region66: #{gnn_forward.1} parent=1 // pred_check
      _
    $region67: #{gnn_forward.1} parent=1 // pred_check_branch
      %200 = sbr.rel (0) target = $region69
    $region68: #{gnn_forward.1} parent=1 // pred_region
      _
    $region69: #{gnn_forward.1} parent=1 // pred_fallthru
      _
    // Predicated region
    $region70: #{gnn_forward.1} parent=1 // pred_check
      _
    $region71: #{gnn_forward.1} parent=1 // pred_check_branch
      %202 = sbr.rel (0) target = $region73
    $region72: #{gnn_forward.1} parent=1 // pred_region
      _
    $region73: #{gnn_forward.1} parent=1 // pred_fallthru
      _
    // Predicated region
    $region74: #{gnn_forward.1} parent=1 // pred_check
      _
    $region75: #{gnn_forward.1} parent=1 // pred_check_branch
      %204 = sbr.rel (0) target = $region77
    $region76: #{gnn_forward.1} parent=1 // pred_region
      _
    $region77: #{gnn_forward.1} parent=1 // pred_fallthru
      _
    // Predicated region
    $region78: #{gnn_forward.1} parent=1 // pred_check
      _
    $region79: #{gnn_forward.1} parent=1 // pred_check_branch
      %206 = sbr.rel (0) target = $region81
    $region80: #{gnn_forward.1} parent=1 // pred_region
      _
    $region81: #{gnn_forward.1} parent=1 // pred_fallthru
      _
    // Predicated region
    $region82: #{gnn_forward.1} parent=1 // pred_check
      _
    $region83: #{gnn_forward.1} parent=1 // pred_check_branch
      %208 = sbr.rel (0) target = $region85
    $region84: #{gnn_forward.1} parent=1 // pred_region
      _
    $region85: #{gnn_forward.1} parent=1 // pred_fallthru
      _
    // Predicated region
    $region86: #{gnn_forward.1} parent=1 // pred_check
      _
    $region87: #{gnn_forward.1} parent=1 // pred_check_branch
      %210 = sbr.rel (0) target = $region89
    $region88: #{gnn_forward.1} parent=1 // pred_region
      _
    $region89: #{gnn_forward.1} parent=1 // pred_fallthru
      _
    // Predicated region
    $region90: #{gnn_forward.1} parent=1 // pred_check
      _
    $region91: #{gnn_forward.1} parent=1 // pred_check_branch
      %212 = sbr.rel (0) target = $region93
    $region92: #{gnn_forward.1} parent=1 // pred_region
      _
    $region93: #{gnn_forward.1} parent=1 // pred_fallthru
      _
    // Predicated region
    $region94: #{gnn_forward.1} parent=1 // pred_check
      _
    $region95: #{gnn_forward.1} parent=1 // pred_check_branch
      %214 = sbr.rel (0) target = $region97
    $region96: #{gnn_forward.1} parent=1 // pred_region
      _
    $region97: #{gnn_forward.1} parent=1 // pred_fallthru
      _
    // Predicated region
    $region98: #{gnn_forward.1} parent=1 // pred_check
      _
    $region99: #{gnn_forward.1} parent=1 // pred_check_branch
      %216 = sbr.rel (0) target = $region101
    $region100: #{gnn_forward.1} parent=1 // pred_region
      _
    $region101: #{gnn_forward.1} parent=1 // pred_fallthru
      _
    // Predicated region
    $region102: #{gnn_forward.1} parent=1 // pred_check
      _
    $region103: #{gnn_forward.1} parent=1 // pred_check_branch
      %218 = sbr.rel (0) target = $region105
    $region104: #{gnn_forward.1} parent=1 // pred_region
      _
    $region105: #{gnn_forward.1} parent=1 // pred_fallthru
      _
    // Predicated region
    $region106: #{gnn_forward.1} parent=1 // pred_check
      _
    $region107: #{gnn_forward.1} parent=1 // pred_check_branch
      %220 = sbr.rel (0) target = $region109
    $region108: #{gnn_forward.1} parent=1 // pred_region
      _
    $region109: #{gnn_forward.1} parent=1 // pred_fallthru
      _
    // Predicated region
    $region110: #{gnn_forward.1} parent=1 // pred_check
      _
    $region111: #{gnn_forward.1} parent=1 // pred_check_branch
      %222 = sbr.rel (0) target = $region113
    $region112: #{gnn_forward.1} parent=1 // pred_region
      _
    $region113: #{gnn_forward.1} parent=1 // pred_fallthru
      _
    // Predicated region
    $region114: #{gnn_forward.1} parent=1 // pred_check
      _
    $region115: #{gnn_forward.1} parent=1 // pred_check_branch
      %224 = sbr.rel (0) target = $region117
    $region116: #{gnn_forward.1} parent=1 // pred_region
      _
    $region117: #{gnn_forward.1} parent=1 // pred_fallthru
      _
    // Predicated region
    $region118: #{gnn_forward.1} parent=1 // pred_check
      _
    $region119: #{gnn_forward.1} parent=1 // pred_check_branch
      %226 = sbr.rel (0) target = $region121
    $region120: #{gnn_forward.1} parent=1 // pred_region
      _
    $region121: #{gnn_forward.1} parent=1 // pred_fallthru
      _
    // Predicated region
    $region122: #{gnn_forward.1} parent=1 // pred_check
      _
    $region123: #{gnn_forward.1} parent=1 // pred_check_branch
      %228 = sbr.rel (0) target = $region125
    $region124: #{gnn_forward.1} parent=1 // pred_region
      _
    $region125: #{gnn_forward.1} parent=1 // pred_fallthru
      _
    // Predicated region
    $region126: #{gnn_forward.1} parent=1 // pred_check
      _
    $region127: #{gnn_forward.1} parent=1 // pred_check_branch
      %230 = sbr.rel (0) target = $region129
    $region128: #{gnn_forward.1} parent=1 // pred_region
      _
    $region129: #{gnn_forward.1} parent=1 // pred_fallthru
      _
    // Predicated region
    $region130: #{gnn_forward.1} parent=1 // pred_check
      _
    $region131: #{gnn_forward.1} parent=1 // pred_check_branch
      %232 = sbr.rel (0) target = $region133
    $region132: #{gnn_forward.1} parent=1 // pred_region
      _
    $region133: #{gnn_forward.1} parent=1 // pred_fallthru
      _
    // Predicated region
    $region134: #{gnn_forward.1} parent=1 // pred_check
      _
    $region135: #{gnn_forward.1} parent=1 // pred_check_branch
      %234 = sbr.rel (0) target = $region137
    $region136: #{gnn_forward.1} parent=1 // pred_region
      _
    $region137: #{gnn_forward.1} parent=1 // pred_fallthru
      _
    // Predicated region
    $region138: #{gnn_forward.1} parent=1 // pred_check
      _
    $region139: #{gnn_forward.1} parent=1 // pred_check_branch
      %236 = sbr.rel (0) target = $region141
    $region140: #{gnn_forward.1} parent=1 // pred_region
      _
    $region141: #{gnn_forward.1} parent=1 // pred_fallthru
      _
    // Predicated region
    $region142: #{gnn_forward.1} parent=1 // pred_check
      _
    $region143: #{gnn_forward.1} parent=1 // pred_check_branch
      %238 = sbr.rel (0) target = $region145
    $region144: #{gnn_forward.1} parent=1 // pred_region
      _
    $region145: #{gnn_forward.1} parent=1 // pred_fallthru
      _
    // Predicated region
    $region146: #{gnn_forward.1} parent=1 // pred_check
      _
    $region147: #{gnn_forward.1} parent=1 // pred_check_branch
      %240 = sbr.rel (0) target = $region149
    $region148: #{gnn_forward.1} parent=1 // pred_region
      _
    $region149: #{gnn_forward.1} parent=1 // pred_fallthru
      _
    // Predicated region
    $region150: #{gnn_forward.1} parent=1 // pred_check
      _
    $region151: #{gnn_forward.1} parent=1 // pred_check_branch
      %242 = sbr.rel (0) target = $region153
    $region152: #{gnn_forward.1} parent=1 // pred_region
      _
    $region153: #{gnn_forward.1} parent=1 // pred_fallthru
      _
    // Predicated region
    $region154: #{gnn_forward.1} parent=1 // pred_check
      _
    $region155: #{gnn_forward.1} parent=1 // pred_check_branch
      %244 = sbr.rel (0) target = $region157
    $region156: #{gnn_forward.1} parent=1 // pred_region
      _
    $region157: #{gnn_forward.1} parent=1 // pred_fallthru
      _
    // Predicated region
    $region158: #{gnn_forward.1} parent=1 // pred_check
      _
    $region159: #{gnn_forward.1} parent=1 // pred_check_branch
      %246 = sbr.rel (0) target = $region161
    $region160: #{gnn_forward.1} parent=1 // pred_region
      _
    $region161: #{gnn_forward.1} parent=1 // pred_fallthru
      _
    // Predicated region
    $region162: #{gnn_forward.1} parent=1 // pred_check
      _
    $region163: #{gnn_forward.1} parent=1 // pred_check_branch
      %248 = sbr.rel (0) target = $region165
    $region164: #{gnn_forward.1} parent=1 // pred_region
      _
    $region165: #{gnn_forward.1} parent=1 // pred_fallthru
      _
    // Predicated region
    $region166: #{gnn_forward.1} parent=1 // pred_check
      _
    $region167: #{gnn_forward.1} parent=1 // pred_check_branch
      %250 = sbr.rel (0) target = $region169
    $region168: #{gnn_forward.1} parent=1 // pred_region
      _
    $region169: #{gnn_forward.1} parent=1 // pred_fallthru
      _
    // Predicated region
    $region170: #{gnn_forward.1} parent=1 // pred_check
      _
    $region171: #{gnn_forward.1} parent=1 // pred_check_branch
      %252 = sbr.rel (0) target = $region173
    $region172: #{gnn_forward.1} parent=1 // pred_region
      _
    $region173: #{gnn_forward.1} parent=1 // pred_fallthru
      _
    // Predicated region
    $region174: #{gnn_forward.1} parent=1 // pred_check
      _
    $region175: #{gnn_forward.1} parent=1 // pred_check_branch
      %254 = sbr.rel (0) target = $region177
    $region176: #{gnn_forward.1} parent=1 // pred_region
      _
    $region177: #{gnn_forward.1} parent=1 // pred_fallthru
      _
    // Predicated region
    $region178: #{gnn_forward.1} parent=1 // pred_check
      _
    $region179: #{gnn_forward.1} parent=1 // pred_check_branch
      %256 = sbr.rel (0) target = $region181
    $region180: #{gnn_forward.1} parent=1 // pred_region
      _
    $region181: #{gnn_forward.1} parent=1 // pred_fallthru
      _
    // Predicated region
    $region182: #{gnn_forward.1} parent=1 // pred_check
      _
    $region183: #{gnn_forward.1} parent=1 // pred_check_branch
      %258 = sbr.rel (0) target = $region185
    $region184: #{gnn_forward.1} parent=1 // pred_region
      _
    $region185: #{gnn_forward.1} parent=1 // pred_fallthru
      _
    // Predicated region
    $region186: #{gnn_forward.1} parent=1 // pred_check
      _
    $region187: #{gnn_forward.1} parent=1 // pred_check_branch
      %260 = sbr.rel (0) target = $region189
    $region188: #{gnn_forward.1} parent=1 // pred_region
      _
    $region189: #{gnn_forward.1} parent=1 // pred_fallthru
      _
    // Predicated region
    $region190: #{gnn_forward.1} parent=1 // pred_check
      _
    $region191: #{gnn_forward.1} parent=1 // pred_check_branch
      %262 = sbr.rel (0) target = $region193
    $region192: #{gnn_forward.1} parent=1 // pred_region
      _
    $region193: #{gnn_forward.1} parent=1 // pred_fallthru
      _
    // Predicated region
    $region194: #{gnn_forward.1} parent=1 // pred_check
      _
    $region195: #{gnn_forward.1} parent=1 // pred_check_branch
      %264 = sbr.rel (0) target = $region197
    $region196: #{gnn_forward.1} parent=1 // pred_region
      _
    $region197: #{gnn_forward.1} parent=1 // pred_fallthru
      _
    // Predicated region
    $region198: #{gnn_forward.1} parent=1 // pred_check
      _
    $region199: #{gnn_forward.1} parent=1 // pred_check_branch
      %266 = sbr.rel (0) target = $region201
    $region200: #{gnn_forward.1} parent=1 // pred_region
      _
    $region201: #{gnn_forward.1} parent=1 // pred_fallthru
      _
    // Predicated region
    $region202: #{gnn_forward.1} parent=1 // pred_check
      _
    $region203: #{gnn_forward.1} parent=1 // pred_check_branch
      %268 = sbr.rel (0) target = $region205
    $region204: #{gnn_forward.1} parent=1 // pred_region
      _
    $region205: #{gnn_forward.1} parent=1 // pred_fallthru
      _
    // Predicated region
    $region206: #{gnn_forward.1} parent=1 // pred_check
      _
    $region207: #{gnn_forward.1} parent=1 // pred_check_branch
      %270 = sbr.rel (0) target = $region209
    $region208: #{gnn_forward.1} parent=1 // pred_region
      _
    $region209: #{gnn_forward.1} parent=1 // pred_fallthru
      _
    // Predicated region
    $region210: #{gnn_forward.1} parent=1 // pred_check
      _
    $region211: #{gnn_forward.1} parent=1 // pred_check_branch
      %272 = sbr.rel (0) target = $region213
    $region212: #{gnn_forward.1} parent=1 // pred_region
      _
    $region213: #{gnn_forward.1} parent=1 // pred_fallthru
      _
    // Predicated region
    $region214: #{gnn_forward.1} parent=1 // pred_check
      _
    $region215: #{gnn_forward.1} parent=1 // pred_check_branch
      %274 = sbr.rel (0) target = $region217
    $region216: #{gnn_forward.1} parent=1 // pred_region
      _
    $region217: #{gnn_forward.1} parent=1 // pred_fallthru
      _
    // Predicated region
    $region218: #{gnn_forward.1} parent=1 // pred_check
      _
    $region219: #{gnn_forward.1} parent=1 // pred_check_branch
      %276 = sbr.rel (0) target = $region221
    $region220: #{gnn_forward.1} parent=1 // pred_region
      _
    $region221: #{gnn_forward.1} parent=1 // pred_fallthru
      _
    // Predicated region
    $region222: #{gnn_forward.1} parent=1 // pred_check
      _
    $region223: #{gnn_forward.1} parent=1 // pred_check_branch
      %278 = sbr.rel (0) target = $region225
    $region224: #{gnn_forward.1} parent=1 // pred_region
      _
    $region225: #{gnn_forward.1} parent=1 // pred_fallthru
      _
    // Predicated region
    $region226: #{gnn_forward.1} parent=1 // pred_check
      _
    $region227: #{gnn_forward.1} parent=1 // pred_check_branch
      %280 = sbr.rel (0) target = $region229
    $region228: #{gnn_forward.1} parent=1 // pred_region
      _
    $region229: #{gnn_forward.1} parent=1 // pred_fallthru
      _
    // Predicated region
    $region230: #{gnn_forward.1} parent=1 // pred_check
      _
    $region231: #{gnn_forward.1} parent=1 // pred_check_branch
      %282 = sbr.rel (0) target = $region233
    $region232: #{gnn_forward.1} parent=1 // pred_region
      _
    $region233: #{gnn_forward.1} parent=1 // pred_fallthru
      _
    // Predicated region
    $region234: #{gnn_forward.1} parent=1 // pred_check
      _
    $region235: #{gnn_forward.1} parent=1 // pred_check_branch
      %284 = sbr.rel (0) target = $region237
    $region236: #{gnn_forward.1} parent=1 // pred_region
      _
    $region237: #{gnn_forward.1} parent=1 // pred_fallthru
      _
    // Predicated region
    $region238: #{gnn_forward.1} parent=1 // pred_check
      _
    $region239: #{gnn_forward.1} parent=1 // pred_check_branch
      %286 = sbr.rel (0) target = $region241
    $region240: #{gnn_forward.1} parent=1 // pred_region
      _
    $region241: #{gnn_forward.1} parent=1 // pred_fallthru
      _
    // Predicated region
    $region242: #{gnn_forward.1} parent=1 // pred_check
      _
    $region243: #{gnn_forward.1} parent=1 // pred_check_branch
      %288 = sbr.rel (0) target = $region245
    $region244: #{gnn_forward.1} parent=1 // pred_region
      _
    $region245: #{gnn_forward.1} parent=1 // pred_fallthru
      _
    // Predicated region
    $region246: #{gnn_forward.1} parent=1 // pred_check
      _
    $region247: #{gnn_forward.1} parent=1 // pred_check_branch
      %290 = sbr.rel (0) target = $region249
    $region248: #{gnn_forward.1} parent=1 // pred_region
      _
    $region249: #{gnn_forward.1} parent=1 // pred_fallthru
      _
    // Predicated region
    $region250: #{gnn_forward.1} parent=1 // pred_check
      _
    $region251: #{gnn_forward.1} parent=1 // pred_check_branch
      %292 = sbr.rel (0) target = $region253
    $region252: #{gnn_forward.1} parent=1 // pred_region
      _
    $region253: #{gnn_forward.1} parent=1 // pred_fallthru
      _
    // Predicated region
    $region254: #{gnn_forward.1} parent=1 // pred_check
      _
    $region255: #{gnn_forward.1} parent=1 // pred_check_branch
      %294 = sbr.rel (0) target = $region257
    $region256: #{gnn_forward.1} parent=1 // pred_region
      _
    $region257: #{gnn_forward.1} parent=1 // pred_fallthru
      _
    // Predicated region
    $region258: #{gnn_forward.1} parent=1 // pred_check
      _
    $region259: #{gnn_forward.1} parent=1 // pred_check_branch
      %296 = sbr.rel (0) target = $region261
    $region260: #{gnn_forward.1} parent=1 // pred_region
      _
    $region261: #{gnn_forward.1} parent=1 // pred_fallthru
      _
    // Predicated region
    $region262: #{gnn_forward.1} parent=1 // pred_check
      _
    $region263: #{gnn_forward.1} parent=1 // pred_check_branch
      %298 = sbr.rel (0) target = $region265
    $region264: #{gnn_forward.1} parent=1 // pred_region
      _
    $region265: #{gnn_forward.1} parent=1 // pred_fallthru
      _
    // Predicated region
    $region266: #{gnn_forward.1} parent=1 // pred_check
      _
    $region267: #{gnn_forward.1} parent=1 // pred_check_branch
      %300 = sbr.rel (0) target = $region269
    $region268: #{gnn_forward.1} parent=1 // pred_region
      _
    $region269: #{gnn_forward.1} parent=1 // pred_fallthru
      _
    // Predicated region
    $region270: #{gnn_forward.1} parent=1 // pred_check
      _
    $region271: #{gnn_forward.1} parent=1 // pred_check_branch
      %302 = sbr.rel (0) target = $region273
    $region272: #{gnn_forward.1} parent=1 // pred_region
      _
    $region273: #{gnn_forward.1} parent=1 // pred_fallthru
      _
    // Predicated region
    $region274: #{gnn_forward.1} parent=1 // pred_check
      _
    $region275: #{gnn_forward.1} parent=1 // pred_check_branch
      %304 = sbr.rel (0) target = $region277
    $region276: #{gnn_forward.1} parent=1 // pred_region
      _
    $region277: #{gnn_forward.1} parent=1 // pred_fallthru
      _
    // Predicated region
    $region278: #{gnn_forward.1} parent=1 // pred_check
      _
    $region279: #{gnn_forward.1} parent=1 // pred_check_branch
      %306 = sbr.rel (0) target = $region281
    $region280: #{gnn_forward.1} parent=1 // pred_region
      _
    $region281: #{gnn_forward.1} parent=1 // pred_fallthru
      _
    // Predicated region
    $region282: #{gnn_forward.1} parent=1 // pred_check
      _
    $region283: #{gnn_forward.1} parent=1 // pred_check_branch
      %308 = sbr.rel (0) target = $region285
    $region284: #{gnn_forward.1} parent=1 // pred_region
      _
    $region285: #{gnn_forward.1} parent=1 // pred_fallthru
      _
    // Predicated region
    $region286: #{gnn_forward.1} parent=1 // pred_check
      _
    $region287: #{gnn_forward.1} parent=1 // pred_check_branch
      %310 = sbr.rel (0) target = $region289
    $region288: #{gnn_forward.1} parent=1 // pred_region
      _
    $region289: #{gnn_forward.1} parent=1 // pred_fallthru
      _
    // Predicated region
    $region290: #{gnn_forward.1} parent=1 // pred_check
      _
    $region291: #{gnn_forward.1} parent=1 // pred_check_branch
      %312 = sbr.rel (0) target = $region293
    $region292: #{gnn_forward.1} parent=1 // pred_region
      _
    $region293: #{gnn_forward.1} parent=1 // pred_fallthru
      _
    // Predicated region
    $region294: #{gnn_forward.1} parent=1 // pred_check
      _
    $region295: #{gnn_forward.1} parent=1 // pred_check_branch
      %314 = sbr.rel (0) target = $region297
    $region296: #{gnn_forward.1} parent=1 // pred_region
      _
    $region297: #{gnn_forward.1} parent=1 // pred_fallthru
      _
    // Predicated region
    $region298: #{gnn_forward.1} parent=1 // pred_check
      _
    $region299: #{gnn_forward.1} parent=1 // pred_check_branch
      %316 = sbr.rel (0) target = $region301
    $region300: #{gnn_forward.1} parent=1 // pred_region
      _
    $region301: #{gnn_forward.1} parent=1 // pred_fallthru
      _
    // Predicated region
    $region302: #{gnn_forward.1} parent=1 // pred_check
      _
    $region303: #{gnn_forward.1} parent=1 // pred_check_branch
      %318 = sbr.rel (0) target = $region305
    $region304: #{gnn_forward.1} parent=1 // pred_region
      _
    $region305: #{gnn_forward.1} parent=1 // pred_fallthru
      _
    // Predicated region
    $region306: #{gnn_forward.1} parent=1 // pred_check
      _
    $region307: #{gnn_forward.1} parent=1 // pred_check_branch
      %320 = sbr.rel (0) target = $region309
    $region308: #{gnn_forward.1} parent=1 // pred_region
      %321 = dma.done [#allocation3], 16
    $region309: #{gnn_forward.1} parent=1 // pred_fallthru
      _
    %322 = sfence
    %v324 = vlaneseq
    %v325 = vshrl.u32 %v324, 7
    %v326 = vadd.s32 %v325, 8
    %v327 = vadd.s32 %v325, 16
    %v328 = vadd.s32 %v325, 24
    %v329 = vadd.s32 %v325, 32
    %v330 = vadd.s32 %v325, 40
    %v331 = vadd.s32 %v325, 48
    %v332 = vadd.s32 %v325, 56
    %v333 = vadd.s32 %v325, 64
    %v334 = vadd.s32 %v325, 72
    %v335 = vadd.s32 %v325, 80
    %v336 = vadd.s32 %v325, 88
    %v337 = vadd.s32 %v325, 96
    %v338 = vadd.s32 %v325, 104
    %v339 = vadd.s32 %v325, 112
    %v340 = vadd.s32 %v325, 120
    %vm341 = vcmp.lt.s32.totalorder %v325, 16
    %vm342 = vcmp.lt.s32.totalorder %v326, 16
    %vm343 = vcmp.lt.s32.totalorder %v327, 16
    %vm344 = vcmp.lt.s32.totalorder %v328, 16
    %vm345 = vcmp.lt.s32.totalorder %v329, 16
    %vm346 = vcmp.lt.s32.totalorder %v330, 16
    %vm347 = vcmp.lt.s32.totalorder %v331, 16
    %vm348 = vcmp.lt.s32.totalorder %v332, 16
    %vm349 = vcmp.lt.s32.totalorder %v333, 16
    %vm350 = vcmp.lt.s32.totalorder %v334, 16
    %vm351 = vcmp.lt.s32.totalorder %v335, 16
    %vm352 = vcmp.lt.s32.totalorder %v336, 16
    %vm353 = vcmp.lt.s32.totalorder %v337, 16
    %vm354 = vcmp.lt.s32.totalorder %v338, 16
    %vm355 = vcmp.lt.s32.totalorder %v339, 16
    %vm356 = vcmp.lt.s32.totalorder %v340, 16
    %v357 = vsel %vm341, 1, 0
    %v358 = vsel %vm342, 1, 0
    %v359 = vsel %vm343, 1, 0
    %v360 = vsel %vm344, 1, 0
    %v361 = vsel %vm345, 1, 0
    %v362 = vsel %vm346, 1, 0
    %v363 = vsel %vm347, 1, 0
    %v364 = vsel %vm348, 1, 0
    %v365 = vsel %vm349, 1, 0
    %v366 = vsel %vm350, 1, 0
    %v367 = vsel %vm351, 1, 0
    %v368 = vsel %vm352, 1, 0
    %v369 = vsel %vm353, 1, 0
    %v370 = vsel %vm354, 1, 0
    %v371 = vsel %vm355, 1, 0
    %v372 = vsel %vm356, 1, 0
    %v373 = vcvt.s32.f32 %v357
    %v374 = vcvt.s32.f32 %v358
    %v375 = vcvt.s32.f32 %v359
    %v376 = vcvt.s32.f32 %v360
    %v377 = vcvt.s32.f32 %v361
    %v378 = vcvt.s32.f32 %v362
    %v379 = vcvt.s32.f32 %v363
    %v380 = vcvt.s32.f32 %v364
    %v381 = vcvt.s32.f32 %v365
    %v382 = vcvt.s32.f32 %v366
    %v383 = vcvt.s32.f32 %v367
    %v384 = vcvt.s32.f32 %v368
    %v385 = vcvt.s32.f32 %v369
    %v386 = vcvt.s32.f32 %v370
    %v387 = vcvt.s32.f32 %v371
    %v388 = vcvt.s32.f32 %v372
    %v389 = vld [vmem:[%s1] sm:$0xff]
    %v390 = vld [vmem:[%s1 + $0x8] sm:$0xff]
    %v391 = vld [vmem:[%s1 + $0x10] sm:$0xff]
    %v392 = vld [vmem:[%s1 + $0x18] sm:$0xff]
    %v393 = vld [vmem:[%s1 + $0x20] sm:$0xff]
    %v394 = vld [vmem:[%s1 + $0x28] sm:$0xff]
    %v395 = vld [vmem:[%s1 + $0x30] sm:$0xff]
    %v396 = vld [vmem:[%s1 + $0x38] sm:$0xff]
    %v397 = vld [vmem:[%s1 + $0x40] sm:$0xff]
    %v398 = vld [vmem:[%s1 + $0x48] sm:$0xff]
    %v399 = vld [vmem:[%s1 + $0x50] sm:$0xff]
    %v400 = vld [vmem:[%s1 + $0x58] sm:$0xff]
    %v401 = vld [vmem:[%s1 + $0x60] sm:$0xff]
    %v402 = vld [vmem:[%s1 + $0x68] sm:$0xff]
    %v403 = vld [vmem:[%s1 + $0x70] sm:$0xff]
    %v404 = vld [vmem:[%s1 + $0x78] sm:$0xff]
    %v405 = vld [vmem:[%s3] sm:$0xff]
    %v406 = vld [vmem:[%s3 + $0x8] sm:$0xff]
    %v407 = vld [vmem:[%s3 + $0x10] sm:$0xff]
    %v408 = vld [vmem:[%s3 + $0x18] sm:$0xff]
    %v409 = vld [vmem:[%s3 + $0x20] sm:$0xff]
    %v410 = vld [vmem:[%s3 + $0x28] sm:$0xff]
    %v411 = vld [vmem:[%s3 + $0x30] sm:$0xff]
    %v412 = vld [vmem:[%s3 + $0x38] sm:$0xff]
    %v413 = vld [vmem:[%s3 + $0x40] sm:$0xff]
    %v414 = vld [vmem:[%s3 + $0x48] sm:$0xff]
    %v415 = vld [vmem:[%s3 + $0x50] sm:$0xff]
    %v416 = vld [vmem:[%s3 + $0x58] sm:$0xff]
    %v417 = vld [vmem:[%s3 + $0x60] sm:$0xff]
    %v418 = vld [vmem:[%s3 + $0x68] sm:$0xff]
    %v419 = vld [vmem:[%s3 + $0x70] sm:$0xff]
    %v420 = vld [vmem:[%s3 + $0x78] sm:$0xff]
    %s421 = sld [smem:[#allocation2]]
    %s422 = sld [smem:[#allocation2 + $0x1]]
    %s423 = sld [smem:[#allocation2 + $0x2]]
    %v424 = vpack.c.bf16 %v390, %v389
    %v425 = vpack.c.bf16 %v392, %v391
    %v426 = vpack.c.bf16 %v394, %v393
    %v427 = vpack.c.bf16 %v396, %v395
    %v428 = vpack.c.bf16 %v398, %v397
    %v429 = vpack.c.bf16 %v400, %v399
    %v430 = vpack.c.bf16 %v402, %v401
    %v431 = vpack.c.bf16 %v404, %v403
    %v432 = vld [vmem:[%s9] sm:$0xf]
    %v433 = vld [vmem:[%s11] sm:$0x1]
    %v435 = vlaneseq
    %v436 = vshrl.u32 %v435, 7
    %v437 = vsub.s32 0, %v436
    %v438 = vrot.slane %v433, %v437
    %vm440 = vcmask 64512
    %v442 = vsel %vm440, %v424, 0
    %v445 = vsel %vm440, %v425, 0
    %v448 = vsel %vm440, %v426, 0
    %v451 = vsel %vm440, %v427, 0
    %v454 = vsel %vm440, %v428, 0
    %v457 = vsel %vm440, %v429, 0
    %v460 = vsel %vm440, %v430, 0
    %v463 = vsel %vm440, %v431, 0
    %vm465 = vcmask 1043456
    %v467 = vsel %vm465, %v432, 0
    %469 = vmatprep.subr.bf16.mxu0 0
    %470 = vmatpush1.bf16.msra.mxu0 %v467
    %471 = vmatprep.subr.bf16.mxu0 0
    %472 = vmatpush1.bf16.msra.mxu0 0
    %473 = vmatprep.subr.bf16.mxu0 0
    %474 = vmatpush1.bf16.msra.mxu0 0
    %475 = vmatprep.subr.bf16.mxu0 0
    %476 = vmatpush1.bf16.msra.mxu0 0
    %477 = vmatprep.subr.bf16.mxu0 0
    %478 = vmatpush1.bf16.msra.mxu0 0
    %479 = vmatprep.subr.bf16.mxu0 0
    %480 = vmatpush1.bf16.msra.mxu0 0
    %481 = vmatprep.subr.bf16.mxu0 0
    %482 = vmatpush1.bf16.msra.mxu0 0
    %483 = vmatprep.subr.bf16.mxu0 0
    %484 = vmatpush1.bf16.msra.mxu0 0
    %485 = vmatprep.subr.bf16.mxu0 0
    %486 = vmatpush1.bf16.msra.mxu0 0
    %487 = vmatprep.subr.bf16.mxu0 0
    %488 = vmatpush1.bf16.msra.mxu0 0
    %489 = vmatprep.subr.bf16.mxu0 0
    %490 = vmatpush1.bf16.msra.mxu0 0
    %491 = vmatprep.subr.bf16.mxu0 0
    %492 = vmatpush1.bf16.msra.mxu0 0
    %493 = vmatprep.subr.bf16.mxu0 0
    %494 = vmatpush1.bf16.msra.mxu0 0
    %495 = vmatprep.subr.bf16.mxu0 0
    %496 = vmatpush1.bf16.msra.mxu0 0
    %497 = vmatprep.subr.bf16.mxu0 0
    %498 = vmatpush1.bf16.msra.mxu0 0
    %499 = vmatprep.subr.bf16.mxu0 0
    %500 = vmatpush1.bf16.msra.mxu0 0
    %501 = vmatprep.mubr.bf16.mxu0 0
    %502 = vmatmul.mubr.bf16.gmra.mrb[0].mxu0 %v442
    %v503 = vpop.f32.mrb[0].mxu0
    %v504 = vadd.f32 %v438, %v503
    %v505 = vpop.f32.mrb[0].mxu0
    %v506 = vpop.f32.mrb[0].mxu0
    %v507 = vadd.f32 %v438, %v506
    %v508 = vpop.f32.mrb[0].mxu0
    %509 = vmatprep.mubr.bf16.mxu0 0
    %510 = vmatmul.mubr.bf16.gmra.mrb[0].mxu0 %v445
    %v511 = vpop.f32.mrb[0].mxu0
    %v512 = vadd.f32 %v438, %v511
    %v513 = vpop.f32.mrb[0].mxu0
    %v514 = vpop.f32.mrb[0].mxu0
    %v515 = vadd.f32 %v438, %v514
    %v516 = vpop.f32.mrb[0].mxu0
    %517 = vmatprep.mubr.bf16.mxu0 0
    %518 = vmatmul.mubr.bf16.gmra.mrb[0].mxu0 %v448
    %v519 = vpop.f32.mrb[0].mxu0
    %v520 = vadd.f32 %v438, %v519
    %v521 = vpop.f32.mrb[0].mxu0
    %v522 = vpop.f32.mrb[0].mxu0
    %v523 = vadd.f32 %v438, %v522
    %v524 = vpop.f32.mrb[0].mxu0
    %525 = vmatprep.mubr.bf16.mxu0 0
    %526 = vmatmul.mubr.bf16.gmra.mrb[0].mxu0 %v451
    %v527 = vpop.f32.mrb[0].mxu0
    %v528 = vadd.f32 %v438, %v527
    %v529 = vpop.f32.mrb[0].mxu0
    %v530 = vpop.f32.mrb[0].mxu0
    %v531 = vadd.f32 %v438, %v530
    %v532 = vpop.f32.mrb[0].mxu0
    %533 = vmatprep.mubr.bf16.mxu0 0
    %534 = vmatmul.mubr.bf16.gmra.mrb[0].mxu0 %v454
    %v535 = vpop.f32.mrb[0].mxu0
    %v536 = vadd.f32 %v438, %v535
    %v537 = vpop.f32.mrb[0].mxu0
    %v538 = vpop.f32.mrb[0].mxu0
    %v539 = vadd.f32 %v438, %v538
    %v540 = vpop.f32.mrb[0].mxu0
    %541 = vmatprep.mubr.bf16.mxu0 0
    %542 = vmatmul.mubr.bf16.gmra.mrb[0].mxu0 %v457
    %v543 = vpop.f32.mrb[0].mxu0
    %v544 = vadd.f32 %v438, %v543
    %v545 = vpop.f32.mrb[0].mxu0
    %v546 = vpop.f32.mrb[0].mxu0
    %v547 = vadd.f32 %v438, %v546
    %v548 = vpop.f32.mrb[0].mxu0
    %549 = vmatprep.mubr.bf16.mxu0 0
    %550 = vmatmul.mubr.bf16.gmra.mrb[0].mxu0 %v460
    %v551 = vpop.f32.mrb[0].mxu0
    %v552 = vadd.f32 %v438, %v551
    %v553 = vpop.f32.mrb[0].mxu0
    %v554 = vpop.f32.mrb[0].mxu0
    %v555 = vadd.f32 %v438, %v554
    %v556 = vpop.f32.mrb[0].mxu0
    %557 = vmatprep.mubr.bf16.mxu0 0
    %558 = vmatmul.mubr.bf16.gmra.mrb[0].mxu0 %v463
    %v559 = vpop.f32.mrb[0].mxu0
    %v560 = vadd.f32 %v438, %v559
    %v561 = vpop.f32.mrb[0].mxu0
    %v562 = vpop.f32.mrb[0].mxu0
    %v563 = vadd.f32 %v438, %v562
    %v564 = vpop.f32.mrb[0].mxu0
    %565 = vdwg.mxu0
    %vm566 = vcmp.ge.f32.partialorder %v504, 0.0
    %vm567 = vcmp.ge.f32.partialorder %v507, 0.0
    %vm568 = vcmp.ge.f32.partialorder %v512, 0.0
    %vm569 = vcmp.ge.f32.partialorder %v515, 0.0
    %vm570 = vcmp.ge.f32.partialorder %v520, 0.0
    %vm571 = vcmp.ge.f32.partialorder %v523, 0.0
    %vm572 = vcmp.ge.f32.partialorder %v528, 0.0
    %vm573 = vcmp.ge.f32.partialorder %v531, 0.0
    %vm574 = vcmp.ge.f32.partialorder %v536, 0.0
    %vm575 = vcmp.ge.f32.partialorder %v539, 0.0
    %vm576 = vcmp.ge.f32.partialorder %v544, 0.0
    %vm577 = vcmp.ge.f32.partialorder %v547, 0.0
    %vm578 = vcmp.ge.f32.partialorder %v552, 0.0
    %vm579 = vcmp.ge.f32.partialorder %v555, 0.0
    %vm580 = vcmp.ge.f32.partialorder %v560, 0.0
    %vm581 = vcmp.ge.f32.partialorder %v563, 0.0
    %v582 = vstv %s421
    %v583 = vmul.f32 %v582, %v504
    %v584 = vmul.f32 %v582, %v507
    %v585 = vmul.f32 %v582, %v512
    %v586 = vmul.f32 %v582, %v515
    %v587 = vmul.f32 %v582, %v520
    %v588 = vmul.f32 %v582, %v523
    %v589 = vmul.f32 %v582, %v528
    %v590 = vmul.f32 %v582, %v531
    %v591 = vmul.f32 %v582, %v536
    %v592 = vmul.f32 %v582, %v539
    %v593 = vmul.f32 %v582, %v544
    %v594 = vmul.f32 %v582, %v547
    %v595 = vmul.f32 %v582, %v552
    %v596 = vmul.f32 %v582, %v555
    %v597 = vmul.f32 %v582, %v560
    %v598 = vmul.f32 %v582, %v563
    %v599 = vsel %vm566, %v504, %v583
    %v600 = vsel %vm567, %v507, %v584
    %v601 = vsel %vm568, %v512, %v585
    %v602 = vsel %vm569, %v515, %v586
    %v603 = vsel %vm570, %v520, %v587
    %v604 = vsel %vm571, %v523, %v588
    %v605 = vsel %vm572, %v528, %v589
    %v606 = vsel %vm573, %v531, %v590
    %v607 = vsel %vm574, %v536, %v591
    %v608 = vsel %vm575, %v539, %v592
    %v609 = vsel %vm576, %v544, %v593
    %v610 = vsel %vm577, %v547, %v594
    %v611 = vsel %vm578, %v552, %v595
    %v612 = vsel %vm579, %v555, %v596
    %v613 = vsel %vm580, %v560, %v597
    %v614 = vsel %vm581, %v563, %v598
    %v615 = vpack.c.bf16 %v600, %v599
    %v616 = vpack.c.bf16 %v602, %v601
    %v617 = vpack.c.bf16 %v604, %v603
    %v618 = vpack.c.bf16 %v606, %v605
    %v619 = vpack.c.bf16 %v608, %v607
    %v620 = vpack.c.bf16 %v610, %v609
    %v621 = vpack.c.bf16 %v612, %v611
    %v622 = vpack.c.bf16 %v614, %v613
    %v623 = vld [vmem:[%s13] sm:$0xf]
    %v624 = vld [vmem:[%s13 + $0x4] sm:$0xf]
    %v625 = vld [vmem:[%s13 + $0x8] sm:$0xf]
    %v626 = vld [vmem:[%s13 + $0xc] sm:$0xf]
    %v627 = vld [vmem:[%s13 + $0x10] sm:$0xf]
    %v628 = vld [vmem:[%s13 + $0x14] sm:$0xf]
    %v629 = vld [vmem:[%s13 + $0x18] sm:$0xf]
    %v630 = vld [vmem:[%s13 + $0x1c] sm:$0xf]
    %v631 = vld [vmem:[%s13 + $0x20] sm:$0xf]
    %v632 = vld [vmem:[%s13 + $0x24] sm:$0xf]
    %v633 = vld [vmem:[%s13 + $0x28] sm:$0xf]
    %v634 = vld [vmem:[%s13 + $0x2c] sm:$0xf]
    %v635 = vld [vmem:[%s13 + $0x30] sm:$0xf]
    %v636 = vld [vmem:[%s13 + $0x34] sm:$0xf]
    %v637 = vld [vmem:[%s13 + $0x38] sm:$0xf]
    %v638 = vld [vmem:[%s13 + $0x3c] sm:$0xf]
    %v655 = vunpack.c.l.b16 %v623
    %v656 = vunpack.c.l.b16 %v624
    %v657 = vunpack.c.l.b16 %v625
    %v658 = vunpack.c.l.b16 %v626
    %v659 = vunpack.c.l.b16 %v627
    %v660 = vunpack.c.l.b16 %v628
    %v661 = vunpack.c.l.b16 %v629
    %v662 = vunpack.c.l.b16 %v630
    %v663 = vunpack.c.l.b16 %v631
    %v664 = vunpack.c.l.b16 %v632
    %v665 = vunpack.c.l.b16 %v633
    %v666 = vunpack.c.l.b16 %v634
    %v667 = vunpack.c.l.b16 %v635
    %v668 = vunpack.c.l.b16 %v636
    %v669 = vunpack.c.l.b16 %v637
    %v670 = vunpack.c.l.b16 %v638
    %v671 = vpack.c.b16 %v656, %v655
    %v672 = vpack.c.b16 %v658, %v657
    %v673 = vpack.c.b16 %v660, %v659
    %v674 = vpack.c.b16 %v662, %v661
    %v675 = vpack.c.b16 %v664, %v663
    %v676 = vpack.c.b16 %v666, %v665
    %v677 = vpack.c.b16 %v668, %v667
    %v678 = vpack.c.b16 %v670, %v669
    %687 = vmatprep.subr.bf16.mxu0 0
    %688 = vmatpush1.bf16.msra.mxu0 %v671
    %689 = vmatprep.subr.bf16.mxu0 0
    %690 = vmatpush1.bf16.msra.mxu0 %v672
    %691 = vmatprep.subr.bf16.mxu0 0
    %692 = vmatpush1.bf16.msra.mxu0 %v673
    %693 = vmatprep.subr.bf16.mxu0 0
    %694 = vmatpush1.bf16.msra.mxu0 %v674
    %695 = vmatprep.subr.bf16.mxu0 0
    %696 = vmatpush1.bf16.msra.mxu0 %v675
    %697 = vmatprep.subr.bf16.mxu0 0
    %698 = vmatpush1.bf16.msra.mxu0 %v676
    %699 = vmatprep.subr.bf16.mxu0 0
    %700 = vmatpush1.bf16.msra.mxu0 %v677
    %701 = vmatprep.subr.bf16.mxu0 0
    %702 = vmatpush1.bf16.msra.mxu0 %v678
    %703 = vmatprep.subr.bf16.mxu0 0
    %704 = vmatpush1.bf16.msra.mxu0 0
    %705 = vmatprep.subr.bf16.mxu0 0
    %706 = vmatpush1.bf16.msra.mxu0 0
    %707 = vmatprep.subr.bf16.mxu0 0
    %708 = vmatpush1.bf16.msra.mxu0 0
    %709 = vmatprep.subr.bf16.mxu0 0
    %710 = vmatpush1.bf16.msra.mxu0 0
    %711 = vmatprep.subr.bf16.mxu0 0
    %712 = vmatpush1.bf16.msra.mxu0 0
    %713 = vmatprep.subr.bf16.mxu0 0
    %714 = vmatpush1.bf16.msra.mxu0 0
    %715 = vmatprep.subr.bf16.mxu0 0
    %716 = vmatpush1.bf16.msra.mxu0 0
    %717 = vmatprep.subr.bf16.mxu0 0
    %718 = vmatpush1.bf16.msra.mxu0 0
    %719 = vmatprep.mubr.bf16.mxu0 0
    %720 = vmatmul.mubr.bf16.gmra.mrb[0].mxu0 %v615
    %v721 = vpop.f32.mrb[0].mxu0
    %v722 = vadd.f32 0.0, %v721
    %v723 = vpop.f32.mrb[0].mxu0
    %v724 = vpop.f32.mrb[0].mxu0
    %v725 = vadd.f32 0.0, %v724
    %v726 = vpop.f32.mrb[0].mxu0
    %727 = vmatprep.mubr.bf16.mxu0 0
    %728 = vmatmul.mubr.bf16.gmra.mrb[0].mxu0 %v616
    %v729 = vpop.f32.mrb[0].mxu0
    %v730 = vadd.f32 0.0, %v729
    %v731 = vpop.f32.mrb[0].mxu0
    %v732 = vpop.f32.mrb[0].mxu0
    %v733 = vadd.f32 0.0, %v732
    %v734 = vpop.f32.mrb[0].mxu0
    %735 = vmatprep.mubr.bf16.mxu0 0
    %736 = vmatmul.mubr.bf16.gmra.mrb[0].mxu0 %v617
    %v737 = vpop.f32.mrb[0].mxu0
    %v738 = vadd.f32 0.0, %v737
    %v739 = vpop.f32.mrb[0].mxu0
    %v740 = vpop.f32.mrb[0].mxu0
    %v741 = vadd.f32 0.0, %v740
    %v742 = vpop.f32.mrb[0].mxu0
    %743 = vmatprep.mubr.bf16.mxu0 0
    %744 = vmatmul.mubr.bf16.gmra.mrb[0].mxu0 %v618
    %v745 = vpop.f32.mrb[0].mxu0
    %v746 = vadd.f32 0.0, %v745
    %v747 = vpop.f32.mrb[0].mxu0
    %v748 = vpop.f32.mrb[0].mxu0
    %v749 = vadd.f32 0.0, %v748
    %v750 = vpop.f32.mrb[0].mxu0
    %751 = vmatprep.mubr.bf16.mxu0 0
    %752 = vmatmul.mubr.bf16.gmra.mrb[0].mxu0 %v619
    %v753 = vpop.f32.mrb[0].mxu0
    %v754 = vadd.f32 0.0, %v753
    %v755 = vpop.f32.mrb[0].mxu0
    %v756 = vpop.f32.mrb[0].mxu0
    %v757 = vadd.f32 0.0, %v756
    %v758 = vpop.f32.mrb[0].mxu0
    %759 = vmatprep.mubr.bf16.mxu0 0
    %760 = vmatmul.mubr.bf16.gmra.mrb[0].mxu0 %v620
    %v761 = vpop.f32.mrb[0].mxu0
    %v762 = vadd.f32 0.0, %v761
    %v763 = vpop.f32.mrb[0].mxu0
    %v764 = vpop.f32.mrb[0].mxu0
    %v765 = vadd.f32 0.0, %v764
    %v766 = vpop.f32.mrb[0].mxu0
    %767 = vmatprep.mubr.bf16.mxu0 0
    %768 = vmatmul.mubr.bf16.gmra.mrb[0].mxu0 %v621
    %v769 = vpop.f32.mrb[0].mxu0
    %v770 = vadd.f32 0.0, %v769
    %v771 = vpop.f32.mrb[0].mxu0
    %v772 = vpop.f32.mrb[0].mxu0
    %v773 = vadd.f32 0.0, %v772
    %v774 = vpop.f32.mrb[0].mxu0
    %775 = vmatprep.mubr.bf16.mxu0 0
    %776 = vmatmul.mubr.bf16.gmra.mrb[0].mxu0 %v622
    %v777 = vpop.f32.mrb[0].mxu0
    %v778 = vadd.f32 0.0, %v777
    %v779 = vpop.f32.mrb[0].mxu0
    %v780 = vpop.f32.mrb[0].mxu0
    %v781 = vadd.f32 0.0, %v780
    %v782 = vpop.f32.mrb[0].mxu0
    %783 = vdwg.mxu0
    %vm784 = vcmp.ge.f32.partialorder %v722, 0.0
    %vm785 = vcmp.ge.f32.partialorder %v725, 0.0
    %vm786 = vcmp.ge.f32.partialorder %v730, 0.0
    %vm787 = vcmp.ge.f32.partialorder %v733, 0.0
    %vm788 = vcmp.ge.f32.partialorder %v738, 0.0
    %vm789 = vcmp.ge.f32.partialorder %v741, 0.0
    %vm790 = vcmp.ge.f32.partialorder %v746, 0.0
    %vm791 = vcmp.ge.f32.partialorder %v749, 0.0
    %vm792 = vcmp.ge.f32.partialorder %v754, 0.0
    %vm793 = vcmp.ge.f32.partialorder %v757, 0.0
    %vm794 = vcmp.ge.f32.partialorder %v762, 0.0
    %vm795 = vcmp.ge.f32.partialorder %v765, 0.0
    %vm796 = vcmp.ge.f32.partialorder %v770, 0.0
    %vm797 = vcmp.ge.f32.partialorder %v773, 0.0
    %vm798 = vcmp.ge.f32.partialorder %v778, 0.0
    %vm799 = vcmp.ge.f32.partialorder %v781, 0.0
    %v800 = vstv %s422
    %v801 = vmul.f32 %v800, %v722
    %v802 = vmul.f32 %v800, %v725
    %v803 = vmul.f32 %v800, %v730
    %v804 = vmul.f32 %v800, %v733
    %v805 = vmul.f32 %v800, %v738
    %v806 = vmul.f32 %v800, %v741
    %v807 = vmul.f32 %v800, %v746
    %v808 = vmul.f32 %v800, %v749
    %v809 = vmul.f32 %v800, %v754
    %v810 = vmul.f32 %v800, %v757
    %v811 = vmul.f32 %v800, %v762
    %v812 = vmul.f32 %v800, %v765
    %v813 = vmul.f32 %v800, %v770
    %v814 = vmul.f32 %v800, %v773
    %v815 = vmul.f32 %v800, %v778
    %v816 = vmul.f32 %v800, %v781
    %v817 = vsel %vm784, %v722, %v801
    %v818 = vsel %vm785, %v725, %v802
    %v819 = vsel %vm786, %v730, %v803
    %v820 = vsel %vm787, %v733, %v804
    %v821 = vsel %vm788, %v738, %v805
    %v822 = vsel %vm789, %v741, %v806
    %v823 = vsel %vm790, %v746, %v807
    %v824 = vsel %vm791, %v749, %v808
    %v825 = vsel %vm792, %v754, %v809
    %v826 = vsel %vm793, %v757, %v810
    %v827 = vsel %vm794, %v762, %v811
    %v828 = vsel %vm795, %v765, %v812
    %v829 = vsel %vm796, %v770, %v813
    %v830 = vsel %vm797, %v773, %v814
    %v831 = vsel %vm798, %v778, %v815
    %v832 = vsel %vm799, %v781, %v816
    %v833 = vpack.c.bf16 %v818, %v817
    %v834 = vpack.c.bf16 %v820, %v819
    %v835 = vpack.c.bf16 %v822, %v821
    %v836 = vpack.c.bf16 %v824, %v823
    %v837 = vpack.c.bf16 %v826, %v825
    %v838 = vpack.c.bf16 %v828, %v827
    %v839 = vpack.c.bf16 %v830, %v829
    %v840 = vpack.c.bf16 %v832, %v831
    %v841 = vld [vmem:[%s15] sm:$0xf]
    %v842 = vld [vmem:[%s15 + $0x4] sm:$0xf]
    %v843 = vld [vmem:[%s15 + $0x8] sm:$0xf]
    %v844 = vld [vmem:[%s15 + $0xc] sm:$0xf]
    %v845 = vld [vmem:[%s15 + $0x10] sm:$0xf]
    %v846 = vld [vmem:[%s15 + $0x14] sm:$0xf]
    %v847 = vld [vmem:[%s15 + $0x18] sm:$0xf]
    %v848 = vld [vmem:[%s15 + $0x1c] sm:$0xf]
    %v849 = vld [vmem:[%s15 + $0x20] sm:$0xf]
    %v850 = vld [vmem:[%s15 + $0x24] sm:$0xf]
    %v851 = vld [vmem:[%s15 + $0x28] sm:$0xf]
    %v852 = vld [vmem:[%s15 + $0x2c] sm:$0xf]
    %v853 = vld [vmem:[%s15 + $0x30] sm:$0xf]
    %v854 = vld [vmem:[%s15 + $0x34] sm:$0xf]
    %v855 = vld [vmem:[%s15 + $0x38] sm:$0xf]
    %v856 = vld [vmem:[%s15 + $0x3c] sm:$0xf]
    %v873 = vunpack.c.l.b16 %v841
    %v874 = vunpack.c.l.b16 %v842
    %v875 = vunpack.c.l.b16 %v843
    %v876 = vunpack.c.l.b16 %v844
    %v877 = vunpack.c.l.b16 %v845
    %v878 = vunpack.c.l.b16 %v846
    %v879 = vunpack.c.l.b16 %v847
    %v880 = vunpack.c.l.b16 %v848
    %v881 = vunpack.c.l.b16 %v849
    %v882 = vunpack.c.l.b16 %v850
    %v883 = vunpack.c.l.b16 %v851
    %v884 = vunpack.c.l.b16 %v852
    %v885 = vunpack.c.l.b16 %v853
    %v886 = vunpack.c.l.b16 %v854
    %v887 = vunpack.c.l.b16 %v855
    %v888 = vunpack.c.l.b16 %v856
    %v889 = vpack.c.b16 %v874, %v873
    %v890 = vpack.c.b16 %v876, %v875
    %v891 = vpack.c.b16 %v878, %v877
    %v892 = vpack.c.b16 %v880, %v879
    %v893 = vpack.c.b16 %v882, %v881
    %v894 = vpack.c.b16 %v884, %v883
    %v895 = vpack.c.b16 %v886, %v885
    %v896 = vpack.c.b16 %v888, %v887
    %905 = vmatprep.subr.bf16.mxu0 0
    %906 = vmatpush1.bf16.msra.mxu0 %v889
    %907 = vmatprep.subr.bf16.mxu0 0
    %908 = vmatpush1.bf16.msra.mxu0 %v890
    %909 = vmatprep.subr.bf16.mxu0 0
    %910 = vmatpush1.bf16.msra.mxu0 %v891
    %911 = vmatprep.subr.bf16.mxu0 0
    %912 = vmatpush1.bf16.msra.mxu0 %v892
    %913 = vmatprep.subr.bf16.mxu0 0
    %914 = vmatpush1.bf16.msra.mxu0 %v893
    %915 = vmatprep.subr.bf16.mxu0 0
    %916 = vmatpush1.bf16.msra.mxu0 %v894
    %917 = vmatprep.subr.bf16.mxu0 0
    %918 = vmatpush1.bf16.msra.mxu0 %v895
    %919 = vmatprep.subr.bf16.mxu0 0
    %920 = vmatpush1.bf16.msra.mxu0 %v896
    %921 = vmatprep.subr.bf16.mxu0 0
    %922 = vmatpush1.bf16.msra.mxu0 0
    %923 = vmatprep.subr.bf16.mxu0 0
    %924 = vmatpush1.bf16.msra.mxu0 0
    %925 = vmatprep.subr.bf16.mxu0 0
    %926 = vmatpush1.bf16.msra.mxu0 0
    %927 = vmatprep.subr.bf16.mxu0 0
    %928 = vmatpush1.bf16.msra.mxu0 0
    %929 = vmatprep.subr.bf16.mxu0 0
    %930 = vmatpush1.bf16.msra.mxu0 0
    %931 = vmatprep.subr.bf16.mxu0 0
    %932 = vmatpush1.bf16.msra.mxu0 0
    %933 = vmatprep.subr.bf16.mxu0 0
    %934 = vmatpush1.bf16.msra.mxu0 0
    %935 = vmatprep.subr.bf16.mxu0 0
    %936 = vmatpush1.bf16.msra.mxu0 0
    %937 = vmatprep.mubr.bf16.mxu0 0
    %938 = vmatmul.mubr.bf16.gmra.mrb[0].mxu0 %v833
    %v939 = vpop.f32.mrb[0].mxu0
    %v940 = vadd.f32 0.0, %v939
    %v941 = vpop.f32.mrb[0].mxu0
    %v942 = vpop.f32.mrb[0].mxu0
    %v943 = vadd.f32 0.0, %v942
    %v944 = vpop.f32.mrb[0].mxu0
    %945 = vmatprep.mubr.bf16.mxu0 0
    %946 = vmatmul.mubr.bf16.gmra.mrb[0].mxu0 %v834
    %v947 = vpop.f32.mrb[0].mxu0
    %v948 = vadd.f32 0.0, %v947
    %v949 = vpop.f32.mrb[0].mxu0
    %v950 = vpop.f32.mrb[0].mxu0
    %v951 = vadd.f32 0.0, %v950
    %v952 = vpop.f32.mrb[0].mxu0
    %953 = vmatprep.mubr.bf16.mxu0 0
    %954 = vmatmul.mubr.bf16.gmra.mrb[0].mxu0 %v835
    %v955 = vpop.f32.mrb[0].mxu0
    %v956 = vadd.f32 0.0, %v955
    %v957 = vpop.f32.mrb[0].mxu0
    %v958 = vpop.f32.mrb[0].mxu0
    %v959 = vadd.f32 0.0, %v958
    %v960 = vpop.f32.mrb[0].mxu0
    %961 = vmatprep.mubr.bf16.mxu0 0
    %962 = vmatmul.mubr.bf16.gmra.mrb[0].mxu0 %v836
    %v963 = vpop.f32.mrb[0].mxu0
    %v964 = vadd.f32 0.0, %v963
    %v965 = vpop.f32.mrb[0].mxu0
    %v966 = vpop.f32.mrb[0].mxu0
    %v967 = vadd.f32 0.0, %v966
    %v968 = vpop.f32.mrb[0].mxu0
    %969 = vmatprep.mubr.bf16.mxu0 0
    %970 = vmatmul.mubr.bf16.gmra.mrb[0].mxu0 %v837
    %v971 = vpop.f32.mrb[0].mxu0
    %v972 = vadd.f32 0.0, %v971
    %v973 = vpop.f32.mrb[0].mxu0
    %v974 = vpop.f32.mrb[0].mxu0
    %v975 = vadd.f32 0.0, %v974
    %v976 = vpop.f32.mrb[0].mxu0
    %977 = vmatprep.mubr.bf16.mxu0 0
    %978 = vmatmul.mubr.bf16.gmra.mrb[0].mxu0 %v838
    %v979 = vpop.f32.mrb[0].mxu0
    %v980 = vadd.f32 0.0, %v979
    %v981 = vpop.f32.mrb[0].mxu0
    %v982 = vpop.f32.mrb[0].mxu0
    %v983 = vadd.f32 0.0, %v982
    %v984 = vpop.f32.mrb[0].mxu0
    %985 = vmatprep.mubr.bf16.mxu0 0
    %986 = vmatmul.mubr.bf16.gmra.mrb[0].mxu0 %v839
    %v987 = vpop.f32.mrb[0].mxu0
    %v988 = vadd.f32 0.0, %v987
    %v989 = vpop.f32.mrb[0].mxu0
    %v990 = vpop.f32.mrb[0].mxu0
    %v991 = vadd.f32 0.0, %v990
    %v992 = vpop.f32.mrb[0].mxu0
    %993 = vmatprep.mubr.bf16.mxu0 0
    %994 = vmatmul.mubr.bf16.gmra.mrb[0].mxu0 %v840
    %v995 = vpop.f32.mrb[0].mxu0
    %v996 = vadd.f32 0.0, %v995
    %v997 = vpop.f32.mrb[0].mxu0
    %v998 = vpop.f32.mrb[0].mxu0
    %v999 = vadd.f32 0.0, %v998
    %v1000 = vpop.f32.mrb[0].mxu0
    %1001 = vdwg.mxu0
    %vm1002 = vcmp.ge.f32.partialorder %v940, 0.0
    %vm1003 = vcmp.ge.f32.partialorder %v943, 0.0
    %vm1004 = vcmp.ge.f32.partialorder %v948, 0.0
    %vm1005 = vcmp.ge.f32.partialorder %v951, 0.0
    %vm1006 = vcmp.ge.f32.partialorder %v956, 0.0
    %vm1007 = vcmp.ge.f32.partialorder %v959, 0.0
    %vm1008 = vcmp.ge.f32.partialorder %v964, 0.0
    %vm1009 = vcmp.ge.f32.partialorder %v967, 0.0
    %vm1010 = vcmp.ge.f32.partialorder %v972, 0.0
    %vm1011 = vcmp.ge.f32.partialorder %v975, 0.0
    %vm1012 = vcmp.ge.f32.partialorder %v980, 0.0
    %vm1013 = vcmp.ge.f32.partialorder %v983, 0.0
    %vm1014 = vcmp.ge.f32.partialorder %v988, 0.0
    %vm1015 = vcmp.ge.f32.partialorder %v991, 0.0
    %vm1016 = vcmp.ge.f32.partialorder %v996, 0.0
    %vm1017 = vcmp.ge.f32.partialorder %v999, 0.0
    %v1018 = vstv %s423
    %v1019 = vmul.f32 %v1018, %v940
    %v1020 = vmul.f32 %v1018, %v943
    %v1021 = vmul.f32 %v1018, %v948
    %v1022 = vmul.f32 %v1018, %v951
    %v1023 = vmul.f32 %v1018, %v956
    %v1024 = vmul.f32 %v1018, %v959
    %v1025 = vmul.f32 %v1018, %v964
    %v1026 = vmul.f32 %v1018, %v967
    %v1027 = vmul.f32 %v1018, %v972
    %v1028 = vmul.f32 %v1018, %v975
    %v1029 = vmul.f32 %v1018, %v980
    %v1030 = vmul.f32 %v1018, %v983
    %v1031 = vmul.f32 %v1018, %v988
    %v1032 = vmul.f32 %v1018, %v991
    %v1033 = vmul.f32 %v1018, %v996
    %v1034 = vmul.f32 %v1018, %v999
    %v1035 = vsel %vm1002, %v940, %v1019
    %v1036 = vsel %vm1003, %v943, %v1020
    %v1037 = vsel %vm1004, %v948, %v1021
    %v1038 = vsel %vm1005, %v951, %v1022
    %v1039 = vsel %vm1006, %v956, %v1023
    %v1040 = vsel %vm1007, %v959, %v1024
    %v1041 = vsel %vm1008, %v964, %v1025
    %v1042 = vsel %vm1009, %v967, %v1026
    %v1043 = vsel %vm1010, %v972, %v1027
    %v1044 = vsel %vm1011, %v975, %v1028
    %v1045 = vsel %vm1012, %v980, %v1029
    %v1046 = vsel %vm1013, %v983, %v1030
    %v1047 = vsel %vm1014, %v988, %v1031
    %v1048 = vsel %vm1015, %v991, %v1032
    %v1049 = vsel %vm1016, %v996, %v1033
    %v1050 = vsel %vm1017, %v999, %v1034
    %v1051 = vpack.c.bf16 %v1036, %v1035
    %v1052 = vpack.c.bf16 %v1038, %v1037
    %v1053 = vpack.c.bf16 %v1040, %v1039
    %v1054 = vpack.c.bf16 %v1042, %v1041
    %v1055 = vpack.c.bf16 %v1044, %v1043
    %v1056 = vpack.c.bf16 %v1046, %v1045
    %v1057 = vpack.c.bf16 %v1048, %v1047
    %v1058 = vpack.c.bf16 %v1050, %v1049
    %v1059 = vld [vmem:[%s17] sm:$0xf]
    %v1060 = vld [vmem:[%s17 + $0x4] sm:$0xf]
    %v1061 = vld [vmem:[%s17 + $0x8] sm:$0xf]
    %v1062 = vld [vmem:[%s17 + $0xc] sm:$0xf]
    %v1063 = vld [vmem:[%s17 + $0x10] sm:$0xf]
    %v1064 = vld [vmem:[%s17 + $0x14] sm:$0xf]
    %v1065 = vld [vmem:[%s17 + $0x18] sm:$0xf]
    %v1066 = vld [vmem:[%s17 + $0x1c] sm:$0xf]
    %v1067 = vld [vmem:[%s17 + $0x20] sm:$0xf]
    %v1068 = vld [vmem:[%s17 + $0x24] sm:$0xf]
    %v1069 = vld [vmem:[%s17 + $0x28] sm:$0xf]
    %v1070 = vld [vmem:[%s17 + $0x2c] sm:$0xf]
    %v1071 = vld [vmem:[%s17 + $0x30] sm:$0xf]
    %v1072 = vld [vmem:[%s17 + $0x34] sm:$0xf]
    %v1073 = vld [vmem:[%s17 + $0x38] sm:$0xf]
    %v1074 = vld [vmem:[%s17 + $0x3c] sm:$0xf]
    %v1075 = vld [vmem:[%s19] sm:$0x1]
    %v1077 = vlaneseq
    %v1078 = vshrl.u32 %v1077, 7
    %v1079 = vsub.s32 0, %v1078
    %v1080 = vrot.slane %v1075, %v1079
    %v1098 = vunpack.c.l.b16 %v1059
    %v1099 = vunpack.c.l.b16 %v1060
    %v1100 = vunpack.c.l.b16 %v1061
    %v1101 = vunpack.c.l.b16 %v1062
    %v1102 = vunpack.c.l.b16 %v1063
    %v1103 = vunpack.c.l.b16 %v1064
    %v1104 = vunpack.c.l.b16 %v1065
    %v1105 = vunpack.c.l.b16 %v1066
    %v1106 = vunpack.c.l.b16 %v1067
    %v1107 = vunpack.c.l.b16 %v1068
    %v1108 = vunpack.c.l.b16 %v1069
    %v1109 = vunpack.c.l.b16 %v1070
    %v1110 = vunpack.c.l.b16 %v1071
    %v1111 = vunpack.c.l.b16 %v1072
    %v1112 = vunpack.c.l.b16 %v1073
    %v1113 = vunpack.c.l.b16 %v1074
    %v1114 = vpack.c.b16 %v1099, %v1098
    %v1115 = vpack.c.b16 %v1101, %v1100
    %v1116 = vpack.c.b16 %v1103, %v1102
    %v1117 = vpack.c.b16 %v1105, %v1104
    %v1118 = vpack.c.b16 %v1107, %v1106
    %v1119 = vpack.c.b16 %v1109, %v1108
    %v1120 = vpack.c.b16 %v1111, %v1110
    %v1121 = vpack.c.b16 %v1113, %v1112
    %1130 = vmatprep.subr.bf16.mxu0 0
    %1131 = vmatpush1.bf16.msra.mxu0 %v1114
    %1132 = vmatprep.subr.bf16.mxu0 0
    %1133 = vmatpush1.bf16.msra.mxu0 %v1115
    %1134 = vmatprep.subr.bf16.mxu0 0
    %1135 = vmatpush1.bf16.msra.mxu0 %v1116
    %1136 = vmatprep.subr.bf16.mxu0 0
    %1137 = vmatpush1.bf16.msra.mxu0 %v1117
    %1138 = vmatprep.subr.bf16.mxu0 0
    %1139 = vmatpush1.bf16.msra.mxu0 %v1118
    %1140 = vmatprep.subr.bf16.mxu0 0
    %1141 = vmatpush1.bf16.msra.mxu0 %v1119
    %1142 = vmatprep.subr.bf16.mxu0 0
    %1143 = vmatpush1.bf16.msra.mxu0 %v1120
    %1144 = vmatprep.subr.bf16.mxu0 0
    %1145 = vmatpush1.bf16.msra.mxu0 %v1121
    %1146 = vmatprep.subr.bf16.mxu0 0
    %1147 = vmatpush1.bf16.msra.mxu0 0
    %1148 = vmatprep.subr.bf16.mxu0 0
    %1149 = vmatpush1.bf16.msra.mxu0 0
    %1150 = vmatprep.subr.bf16.mxu0 0
    %1151 = vmatpush1.bf16.msra.mxu0 0
    %1152 = vmatprep.subr.bf16.mxu0 0
    %1153 = vmatpush1.bf16.msra.mxu0 0
    %1154 = vmatprep.subr.bf16.mxu0 0
    %1155 = vmatpush1.bf16.msra.mxu0 0
    %1156 = vmatprep.subr.bf16.mxu0 0
    %1157 = vmatpush1.bf16.msra.mxu0 0
    %1158 = vmatprep.subr.bf16.mxu0 0
    %1159 = vmatpush1.bf16.msra.mxu0 0
    %1160 = vmatprep.subr.bf16.mxu0 0
    %1161 = vmatpush1.bf16.msra.mxu0 0
    %1162 = vmatprep.mubr.bf16.mxu0 0
    %1163 = vmatmul.mubr.bf16.gmra.mrb[0].mxu0 %v1051
    %v1164 = vpop.f32.mrb[0].mxu0
    %v1165 = vadd.f32 %v1080, %v1164
    %v1166 = vpop.f32.mrb[0].mxu0
    %v1167 = vpop.f32.mrb[0].mxu0
    %v1168 = vadd.f32 %v1080, %v1167
    %v1169 = vpop.f32.mrb[0].mxu0
    %1170 = vmatprep.mubr.bf16.mxu0 0
    %1171 = vmatmul.mubr.bf16.gmra.mrb[0].mxu0 %v1052
    %v1172 = vpop.f32.mrb[0].mxu0
    %v1173 = vadd.f32 %v1080, %v1172
    %v1174 = vpop.f32.mrb[0].mxu0
    %v1175 = vpop.f32.mrb[0].mxu0
    %v1176 = vadd.f32 %v1080, %v1175
    %v1177 = vpop.f32.mrb[0].mxu0
    %1178 = vmatprep.mubr.bf16.mxu0 0
    %1179 = vmatmul.mubr.bf16.gmra.mrb[0].mxu0 %v1053
    %v1180 = vpop.f32.mrb[0].mxu0
    %v1181 = vadd.f32 %v1080, %v1180
    %v1182 = vpop.f32.mrb[0].mxu0
    %v1183 = vpop.f32.mrb[0].mxu0
    %v1184 = vadd.f32 %v1080, %v1183
    %v1185 = vpop.f32.mrb[0].mxu0
    %1186 = vmatprep.mubr.bf16.mxu0 0
    %1187 = vmatmul.mubr.bf16.gmra.mrb[0].mxu0 %v1054
    %v1188 = vpop.f32.mrb[0].mxu0
    %v1189 = vadd.f32 %v1080, %v1188
    %v1190 = vpop.f32.mrb[0].mxu0
    %v1191 = vpop.f32.mrb[0].mxu0
    %v1192 = vadd.f32 %v1080, %v1191
    %v1193 = vpop.f32.mrb[0].mxu0
    %1194 = vmatprep.mubr.bf16.mxu0 0
    %1195 = vmatmul.mubr.bf16.gmra.mrb[0].mxu0 %v1055
    %v1196 = vpop.f32.mrb[0].mxu0
    %v1197 = vadd.f32 %v1080, %v1196
    %v1198 = vpop.f32.mrb[0].mxu0
    %v1199 = vpop.f32.mrb[0].mxu0
    %v1200 = vadd.f32 %v1080, %v1199
    %v1201 = vpop.f32.mrb[0].mxu0
    %1202 = vmatprep.mubr.bf16.mxu0 0
    %1203 = vmatmul.mubr.bf16.gmra.mrb[0].mxu0 %v1056
    %v1204 = vpop.f32.mrb[0].mxu0
    %v1205 = vadd.f32 %v1080, %v1204
    %v1206 = vpop.f32.mrb[0].mxu0
    %v1207 = vpop.f32.mrb[0].mxu0
    %v1208 = vadd.f32 %v1080, %v1207
    %v1209 = vpop.f32.mrb[0].mxu0
    %1210 = vmatprep.mubr.bf16.mxu0 0
    %1211 = vmatmul.mubr.bf16.gmra.mrb[0].mxu0 %v1057
    %v1212 = vpop.f32.mrb[0].mxu0
    %v1213 = vadd.f32 %v1080, %v1212
    %v1214 = vpop.f32.mrb[0].mxu0
    %v1215 = vpop.f32.mrb[0].mxu0
    %v1216 = vadd.f32 %v1080, %v1215
    %v1217 = vpop.f32.mrb[0].mxu0
    %1218 = vmatprep.mubr.bf16.mxu0 0
    %1219 = vmatmul.mubr.bf16.gmra.mrb[0].mxu0 %v1058
    %v1220 = vpop.f32.mrb[0].mxu0
    %v1221 = vadd.f32 %v1080, %v1220
    %v1222 = vpop.f32.mrb[0].mxu0
    %v1223 = vpop.f32.mrb[0].mxu0
    %v1224 = vadd.f32 %v1080, %v1223
    %v1225 = vpop.f32.mrb[0].mxu0
    %1226 = vdwg.mxu0
    %s1227 = sld [smem:[#allocation2 + $0x3]]
    %s1228 = sld [smem:[#allocation2 + $0x4]]
    %s1229 = sld [smem:[#allocation2 + $0x5]]
    %v1230 = vpack.c.bf16 %v406, %v405
    %v1231 = vpack.c.bf16 %v408, %v407
    %v1232 = vpack.c.bf16 %v410, %v409
    %v1233 = vpack.c.bf16 %v412, %v411
    %v1234 = vpack.c.bf16 %v414, %v413
    %v1235 = vpack.c.bf16 %v416, %v415
    %v1236 = vpack.c.bf16 %v418, %v417
    %v1237 = vpack.c.bf16 %v420, %v419
    %v1238 = vld [vmem:[%s21] sm:$0xf]
    %v1239 = vld [vmem:[%s23] sm:$0x1]
    %v1241 = vlaneseq
    %v1242 = vshrl.u32 %v1241, 7
    %v1243 = vsub.s32 0, %v1242
    %v1244 = vrot.slane %v1239, %v1243
    %v1247 = vsel %vm440, %v1230, 0
    %v1250 = vsel %vm440, %v1231, 0
    %v1253 = vsel %vm440, %v1232, 0
    %v1256 = vsel %vm440, %v1233, 0
    %v1259 = vsel %vm440, %v1234, 0
    %v1262 = vsel %vm440, %v1235, 0
    %v1265 = vsel %vm440, %v1236, 0
    %v1268 = vsel %vm440, %v1237, 0
    %v1271 = vsel %vm465, %v1238, 0
    %1273 = vmatprep.subr.bf16.mxu0 0
    %1274 = vmatpush1.bf16.msra.mxu0 %v1271
    %1275 = vmatprep.subr.bf16.mxu0 0
    %1276 = vmatpush1.bf16.msra.mxu0 0
    %1277 = vmatprep.subr.bf16.mxu0 0
    %1278 = vmatpush1.bf16.msra.mxu0 0
    %1279 = vmatprep.subr.bf16.mxu0 0
    %1280 = vmatpush1.bf16.msra.mxu0 0
    %1281 = vmatprep.subr.bf16.mxu0 0
    %1282 = vmatpush1.bf16.msra.mxu0 0
    %1283 = vmatprep.subr.bf16.mxu0 0
    %1284 = vmatpush1.bf16.msra.mxu0 0
    %1285 = vmatprep.subr.bf16.mxu0 0
    %1286 = vmatpush1.bf16.msra.mxu0 0
    %1287 = vmatprep.subr.bf16.mxu0 0
    %1288 = vmatpush1.bf16.msra.mxu0 0
    %1289 = vmatprep.subr.bf16.mxu0 0
    %1290 = vmatpush1.bf16.msra.mxu0 0
    %1291 = vmatprep.subr.bf16.mxu0 0
    %1292 = vmatpush1.bf16.msra.mxu0 0
    %1293 = vmatprep.subr.bf16.mxu0 0
    %1294 = vmatpush1.bf16.msra.mxu0 0
    %1295 = vmatprep.subr.bf16.mxu0 0
    %1296 = vmatpush1.bf16.msra.mxu0 0
    %1297 = vmatprep.subr.bf16.mxu0 0
    %1298 = vmatpush1.bf16.msra.mxu0 0
    %1299 = vmatprep.subr.bf16.mxu0 0
    %1300 = vmatpush1.bf16.msra.mxu0 0
    %1301 = vmatprep.subr.bf16.mxu0 0
    %1302 = vmatpush1.bf16.msra.mxu0 0
    %1303 = vmatprep.subr.bf16.mxu0 0
    %1304 = vmatpush1.bf16.msra.mxu0 0
    %1305 = vmatprep.mubr.bf16.mxu0 0
    %1306 = vmatmul.mubr.bf16.gmra.mrb[0].mxu0 %v1247
    %v1307 = vpop.f32.mrb[0].mxu0
    %v1308 = vadd.f32 %v1244, %v1307
    %v1309 = vpop.f32.mrb[0].mxu0
    %v1310 = vpop.f32.mrb[0].mxu0
    %v1311 = vadd.f32 %v1244, %v1310
    %v1312 = vpop.f32.mrb[0].mxu0
    %1313 = vmatprep.mubr.bf16.mxu0 0
    %1314 = vmatmul.mubr.bf16.gmra.mrb[0].mxu0 %v1250
    %v1315 = vpop.f32.mrb[0].mxu0
    %v1316 = vadd.f32 %v1244, %v1315
    %v1317 = vpop.f32.mrb[0].mxu0
    %v1318 = vpop.f32.mrb[0].mxu0
    %v1319 = vadd.f32 %v1244, %v1318
    %v1320 = vpop.f32.mrb[0].mxu0
    %1321 = vmatprep.mubr.bf16.mxu0 0
    %1322 = vmatmul.mubr.bf16.gmra.mrb[0].mxu0 %v1253
    %v1323 = vpop.f32.mrb[0].mxu0
    %v1324 = vadd.f32 %v1244, %v1323
    %v1325 = vpop.f32.mrb[0].mxu0
    %v1326 = vpop.f32.mrb[0].mxu0
    %v1327 = vadd.f32 %v1244, %v1326
    %v1328 = vpop.f32.mrb[0].mxu0
    %1329 = vmatprep.mubr.bf16.mxu0 0
    %1330 = vmatmul.mubr.bf16.gmra.mrb[0].mxu0 %v1256
    %v1331 = vpop.f32.mrb[0].mxu0
    %v1332 = vadd.f32 %v1244, %v1331
    %v1333 = vpop.f32.mrb[0].mxu0
    %v1334 = vpop.f32.mrb[0].mxu0
    %v1335 = vadd.f32 %v1244, %v1334
    %v1336 = vpop.f32.mrb[0].mxu0
    %1337 = vmatprep.mubr.bf16.mxu0 0
    %1338 = vmatmul.mubr.bf16.gmra.mrb[0].mxu0 %v1259
    %v1339 = vpop.f32.mrb[0].mxu0
    %v1340 = vadd.f32 %v1244, %v1339
    %v1341 = vpop.f32.mrb[0].mxu0
    %v1342 = vpop.f32.mrb[0].mxu0
    %v1343 = vadd.f32 %v1244, %v1342
    %v1344 = vpop.f32.mrb[0].mxu0
    %1345 = vmatprep.mubr.bf16.mxu0 0
    %1346 = vmatmul.mubr.bf16.gmra.mrb[0].mxu0 %v1262
    %v1347 = vpop.f32.mrb[0].mxu0
    %v1348 = vadd.f32 %v1244, %v1347
    %v1349 = vpop.f32.mrb[0].mxu0
    %v1350 = vpop.f32.mrb[0].mxu0
    %v1351 = vadd.f32 %v1244, %v1350
    %v1352 = vpop.f32.mrb[0].mxu0
    %1353 = vmatprep.mubr.bf16.mxu0 0
    %1354 = vmatmul.mubr.bf16.gmra.mrb[0].mxu0 %v1265
    %v1355 = vpop.f32.mrb[0].mxu0
    %v1356 = vadd.f32 %v1244, %v1355
    %v1357 = vpop.f32.mrb[0].mxu0
    %v1358 = vpop.f32.mrb[0].mxu0
    %v1359 = vadd.f32 %v1244, %v1358
    %v1360 = vpop.f32.mrb[0].mxu0
    %1361 = vmatprep.mubr.bf16.mxu0 0
    %1362 = vmatmul.mubr.bf16.gmra.mrb[0].mxu0 %v1268
    %v1363 = vpop.f32.mrb[0].mxu0
    %v1364 = vadd.f32 %v1244, %v1363
    %v1365 = vpop.f32.mrb[0].mxu0
    %v1366 = vpop.f32.mrb[0].mxu0
    %v1367 = vadd.f32 %v1244, %v1366
    %v1368 = vpop.f32.mrb[0].mxu0
    %1369 = vdwg.mxu0
    %vm1370 = vcmp.ge.f32.partialorder %v1308, 0.0
    %vm1371 = vcmp.ge.f32.partialorder %v1311, 0.0
    %vm1372 = vcmp.ge.f32.partialorder %v1316, 0.0
    %vm1373 = vcmp.ge.f32.partialorder %v1319, 0.0
    %vm1374 = vcmp.ge.f32.partialorder %v1324, 0.0
    %vm1375 = vcmp.ge.f32.partialorder %v1327, 0.0
    %vm1376 = vcmp.ge.f32.partialorder %v1332, 0.0
    %vm1377 = vcmp.ge.f32.partialorder %v1335, 0.0
    %vm1378 = vcmp.ge.f32.partialorder %v1340, 0.0
    %vm1379 = vcmp.ge.f32.partialorder %v1343, 0.0
    %vm1380 = vcmp.ge.f32.partialorder %v1348, 0.0
    %vm1381 = vcmp.ge.f32.partialorder %v1351, 0.0
    %vm1382 = vcmp.ge.f32.partialorder %v1356, 0.0
    %vm1383 = vcmp.ge.f32.partialorder %v1359, 0.0
    %vm1384 = vcmp.ge.f32.partialorder %v1364, 0.0
    %vm1385 = vcmp.ge.f32.partialorder %v1367, 0.0
    %v1386 = vstv %s1227
    %v1387 = vmul.f32 %v1386, %v1308
    %v1388 = vmul.f32 %v1386, %v1311
    %v1389 = vmul.f32 %v1386, %v1316
    %v1390 = vmul.f32 %v1386, %v1319
    %v1391 = vmul.f32 %v1386, %v1324
    %v1392 = vmul.f32 %v1386, %v1327
    %v1393 = vmul.f32 %v1386, %v1332
    %v1394 = vmul.f32 %v1386, %v1335
    %v1395 = vmul.f32 %v1386, %v1340
    %v1396 = vmul.f32 %v1386, %v1343
    %v1397 = vmul.f32 %v1386, %v1348
    %v1398 = vmul.f32 %v1386, %v1351
    %v1399 = vmul.f32 %v1386, %v1356
    %v1400 = vmul.f32 %v1386, %v1359
    %v1401 = vmul.f32 %v1386, %v1364
    %v1402 = vmul.f32 %v1386, %v1367
    %v1403 = vsel %vm1370, %v1308, %v1387
    %v1404 = vsel %vm1371, %v1311, %v1388
    %v1405 = vsel %vm1372, %v1316, %v1389
    %v1406 = vsel %vm1373, %v1319, %v1390
    %v1407 = vsel %vm1374, %v1324, %v1391
    %v1408 = vsel %vm1375, %v1327, %v1392
    %v1409 = vsel %vm1376, %v1332, %v1393
    %v1410 = vsel %vm1377, %v1335, %v1394
    %v1411 = vsel %vm1378, %v1340, %v1395
    %v1412 = vsel %vm1379, %v1343, %v1396
    %v1413 = vsel %vm1380, %v1348, %v1397
    %v1414 = vsel %vm1381, %v1351, %v1398
    %v1415 = vsel %vm1382, %v1356, %v1399
    %v1416 = vsel %vm1383, %v1359, %v1400
    %v1417 = vsel %vm1384, %v1364, %v1401
    %v1418 = vsel %vm1385, %v1367, %v1402
    %v1419 = vpack.c.bf16 %v1404, %v1403
    %v1420 = vpack.c.bf16 %v1406, %v1405
    %v1421 = vpack.c.bf16 %v1408, %v1407
    %v1422 = vpack.c.bf16 %v1410, %v1409
    %v1423 = vpack.c.bf16 %v1412, %v1411
    %v1424 = vpack.c.bf16 %v1414, %v1413
    %v1425 = vpack.c.bf16 %v1416, %v1415
    %v1426 = vpack.c.bf16 %v1418, %v1417
    %v1427 = vld [vmem:[%s25] sm:$0xf]
    %v1428 = vld [vmem:[%s25 + $0x4] sm:$0xf]
    %v1429 = vld [vmem:[%s25 + $0x8] sm:$0xf]
    %v1430 = vld [vmem:[%s25 + $0xc] sm:$0xf]
    %v1431 = vld [vmem:[%s25 + $0x10] sm:$0xf]
    %v1432 = vld [vmem:[%s25 + $0x14] sm:$0xf]
    %v1433 = vld [vmem:[%s25 + $0x18] sm:$0xf]
    %v1434 = vld [vmem:[%s25 + $0x1c] sm:$0xf]
    %v1435 = vld [vmem:[%s25 + $0x20] sm:$0xf]
    %v1436 = vld [vmem:[%s25 + $0x24] sm:$0xf]
    %v1437 = vld [vmem:[%s25 + $0x28] sm:$0xf]
    %v1438 = vld [vmem:[%s25 + $0x2c] sm:$0xf]
    %v1439 = vld [vmem:[%s25 + $0x30] sm:$0xf]
    %v1440 = vld [vmem:[%s25 + $0x34] sm:$0xf]
    %v1441 = vld [vmem:[%s25 + $0x38] sm:$0xf]
    %v1442 = vld [vmem:[%s25 + $0x3c] sm:$0xf]
    %v1459 = vunpack.c.l.b16 %v1427
    %v1460 = vunpack.c.l.b16 %v1428
    %v1461 = vunpack.c.l.b16 %v1429
    %v1462 = vunpack.c.l.b16 %v1430
    %v1463 = vunpack.c.l.b16 %v1431
    %v1464 = vunpack.c.l.b16 %v1432
    %v1465 = vunpack.c.l.b16 %v1433
    %v1466 = vunpack.c.l.b16 %v1434
    %v1467 = vunpack.c.l.b16 %v1435
    %v1468 = vunpack.c.l.b16 %v1436
    %v1469 = vunpack.c.l.b16 %v1437
    %v1470 = vunpack.c.l.b16 %v1438
    %v1471 = vunpack.c.l.b16 %v1439
    %v1472 = vunpack.c.l.b16 %v1440
    %v1473 = vunpack.c.l.b16 %v1441
    %v1474 = vunpack.c.l.b16 %v1442
    %v1475 = vpack.c.b16 %v1460, %v1459
    %v1476 = vpack.c.b16 %v1462, %v1461
    %v1477 = vpack.c.b16 %v1464, %v1463
    %v1478 = vpack.c.b16 %v1466, %v1465
    %v1479 = vpack.c.b16 %v1468, %v1467
    %v1480 = vpack.c.b16 %v1470, %v1469
    %v1481 = vpack.c.b16 %v1472, %v1471
    %v1482 = vpack.c.b16 %v1474, %v1473
    %1491 = vmatprep.subr.bf16.mxu0 0
    %1492 = vmatpush1.bf16.msra.mxu0 %v1475
    %1493 = vmatprep.subr.bf16.mxu0 0
    %1494 = vmatpush1.bf16.msra.mxu0 %v1476
    %1495 = vmatprep.subr.bf16.mxu0 0
    %1496 = vmatpush1.bf16.msra.mxu0 %v1477
    %1497 = vmatprep.subr.bf16.mxu0 0
    %1498 = vmatpush1.bf16.msra.mxu0 %v1478
    %1499 = vmatprep.subr.bf16.mxu0 0
    %1500 = vmatpush1.bf16.msra.mxu0 %v1479
    %1501 = vmatprep.subr.bf16.mxu0 0
    %1502 = vmatpush1.bf16.msra.mxu0 %v1480
    %1503 = vmatprep.subr.bf16.mxu0 0
    %1504 = vmatpush1.bf16.msra.mxu0 %v1481
    %1505 = vmatprep.subr.bf16.mxu0 0
    %1506 = vmatpush1.bf16.msra.mxu0 %v1482
    %1507 = vmatprep.subr.bf16.mxu0 0
    %1508 = vmatpush1.bf16.msra.mxu0 0
    %1509 = vmatprep.subr.bf16.mxu0 0
    %1510 = vmatpush1.bf16.msra.mxu0 0
    %1511 = vmatprep.subr.bf16.mxu0 0
    %1512 = vmatpush1.bf16.msra.mxu0 0
    %1513 = vmatprep.subr.bf16.mxu0 0
    %1514 = vmatpush1.bf16.msra.mxu0 0
    %1515 = vmatprep.subr.bf16.mxu0 0
    %1516 = vmatpush1.bf16.msra.mxu0 0
    %1517 = vmatprep.subr.bf16.mxu0 0
    %1518 = vmatpush1.bf16.msra.mxu0 0
    %1519 = vmatprep.subr.bf16.mxu0 0
    %1520 = vmatpush1.bf16.msra.mxu0 0
    %1521 = vmatprep.subr.bf16.mxu0 0
    %1522 = vmatpush1.bf16.msra.mxu0 0
    %1523 = vmatprep.mubr.bf16.mxu0 0
    %1524 = vmatmul.mubr.bf16.gmra.mrb[0].mxu0 %v1419
    %v1525 = vpop.f32.mrb[0].mxu0
    %v1526 = vadd.f32 0.0, %v1525
    %v1527 = vpop.f32.mrb[0].mxu0
    %v1528 = vpop.f32.mrb[0].mxu0
    %v1529 = vadd.f32 0.0, %v1528
    %v1530 = vpop.f32.mrb[0].mxu0
    %1531 = vmatprep.mubr.bf16.mxu0 0
    %1532 = vmatmul.mubr.bf16.gmra.mrb[0].mxu0 %v1420
    %v1533 = vpop.f32.mrb[0].mxu0
    %v1534 = vadd.f32 0.0, %v1533
    %v1535 = vpop.f32.mrb[0].mxu0
    %v1536 = vpop.f32.mrb[0].mxu0
    %v1537 = vadd.f32 0.0, %v1536
    %v1538 = vpop.f32.mrb[0].mxu0
    %1539 = vmatprep.mubr.bf16.mxu0 0
    %1540 = vmatmul.mubr.bf16.gmra.mrb[0].mxu0 %v1421
    %v1541 = vpop.f32.mrb[0].mxu0
    %v1542 = vadd.f32 0.0, %v1541
    %v1543 = vpop.f32.mrb[0].mxu0
    %v1544 = vpop.f32.mrb[0].mxu0
    %v1545 = vadd.f32 0.0, %v1544
    %v1546 = vpop.f32.mrb[0].mxu0
    %1547 = vmatprep.mubr.bf16.mxu0 0
    %1548 = vmatmul.mubr.bf16.gmra.mrb[0].mxu0 %v1422
    %v1549 = vpop.f32.mrb[0].mxu0
    %v1550 = vadd.f32 0.0, %v1549
    %v1551 = vpop.f32.mrb[0].mxu0
    %v1552 = vpop.f32.mrb[0].mxu0
    %v1553 = vadd.f32 0.0, %v1552
    %v1554 = vpop.f32.mrb[0].mxu0
    %1555 = vmatprep.mubr.bf16.mxu0 0
    %1556 = vmatmul.mubr.bf16.gmra.mrb[0].mxu0 %v1423
    %v1557 = vpop.f32.mrb[0].mxu0
    %v1558 = vadd.f32 0.0, %v1557
    %v1559 = vpop.f32.mrb[0].mxu0
    %v1560 = vpop.f32.mrb[0].mxu0
    %v1561 = vadd.f32 0.0, %v1560
    %v1562 = vpop.f32.mrb[0].mxu0
    %1563 = vmatprep.mubr.bf16.mxu0 0
    %1564 = vmatmul.mubr.bf16.gmra.mrb[0].mxu0 %v1424
    %v1565 = vpop.f32.mrb[0].mxu0
    %v1566 = vadd.f32 0.0, %v1565
    %v1567 = vpop.f32.mrb[0].mxu0
    %v1568 = vpop.f32.mrb[0].mxu0
    %v1569 = vadd.f32 0.0, %v1568
    %v1570 = vpop.f32.mrb[0].mxu0
    %1571 = vmatprep.mubr.bf16.mxu0 0
    %1572 = vmatmul.mubr.bf16.gmra.mrb[0].mxu0 %v1425
    %v1573 = vpop.f32.mrb[0].mxu0
    %v1574 = vadd.f32 0.0, %v1573
    %v1575 = vpop.f32.mrb[0].mxu0
    %v1576 = vpop.f32.mrb[0].mxu0
    %v1577 = vadd.f32 0.0, %v1576
    %v1578 = vpop.f32.mrb[0].mxu0
    %1579 = vmatprep.mubr.bf16.mxu0 0
    %1580 = vmatmul.mubr.bf16.gmra.mrb[0].mxu0 %v1426
    %v1581 = vpop.f32.mrb[0].mxu0
    %v1582 = vadd.f32 0.0, %v1581
    %v1583 = vpop.f32.mrb[0].mxu0
    %v1584 = vpop.f32.mrb[0].mxu0
    %v1585 = vadd.f32 0.0, %v1584
    %v1586 = vpop.f32.mrb[0].mxu0
    %1587 = vdwg.mxu0
    %vm1588 = vcmp.ge.f32.partialorder %v1526, 0.0
    %vm1589 = vcmp.ge.f32.partialorder %v1529, 0.0
    %vm1590 = vcmp.ge.f32.partialorder %v1534, 0.0
    %vm1591 = vcmp.ge.f32.partialorder %v1537, 0.0
    %vm1592 = vcmp.ge.f32.partialorder %v1542, 0.0
    %vm1593 = vcmp.ge.f32.partialorder %v1545, 0.0
    %vm1594 = vcmp.ge.f32.partialorder %v1550, 0.0
    %vm1595 = vcmp.ge.f32.partialorder %v1553, 0.0
    %vm1596 = vcmp.ge.f32.partialorder %v1558, 0.0
    %vm1597 = vcmp.ge.f32.partialorder %v1561, 0.0
    %vm1598 = vcmp.ge.f32.partialorder %v1566, 0.0
    %vm1599 = vcmp.ge.f32.partialorder %v1569, 0.0
    %vm1600 = vcmp.ge.f32.partialorder %v1574, 0.0
    %vm1601 = vcmp.ge.f32.partialorder %v1577, 0.0
    %vm1602 = vcmp.ge.f32.partialorder %v1582, 0.0
    %vm1603 = vcmp.ge.f32.partialorder %v1585, 0.0
    %v1604 = vstv %s1228
    %v1605 = vmul.f32 %v1604, %v1526
    %v1606 = vmul.f32 %v1604, %v1529
    %v1607 = vmul.f32 %v1604, %v1534
    %v1608 = vmul.f32 %v1604, %v1537
    %v1609 = vmul.f32 %v1604, %v1542
    %v1610 = vmul.f32 %v1604, %v1545
    %v1611 = vmul.f32 %v1604, %v1550
    %v1612 = vmul.f32 %v1604, %v1553
    %v1613 = vmul.f32 %v1604, %v1558
    %v1614 = vmul.f32 %v1604, %v1561
    %v1615 = vmul.f32 %v1604, %v1566
    %v1616 = vmul.f32 %v1604, %v1569
    %v1617 = vmul.f32 %v1604, %v1574
    %v1618 = vmul.f32 %v1604, %v1577
    %v1619 = vmul.f32 %v1604, %v1582
    %v1620 = vmul.f32 %v1604, %v1585
    %v1621 = vsel %vm1588, %v1526, %v1605
    %v1622 = vsel %vm1589, %v1529, %v1606
    %v1623 = vsel %vm1590, %v1534, %v1607
    %v1624 = vsel %vm1591, %v1537, %v1608
    %v1625 = vsel %vm1592, %v1542, %v1609
    %v1626 = vsel %vm1593, %v1545, %v1610
    %v1627 = vsel %vm1594, %v1550, %v1611
    %v1628 = vsel %vm1595, %v1553, %v1612
    %v1629 = vsel %vm1596, %v1558, %v1613
    %v1630 = vsel %vm1597, %v1561, %v1614
    %v1631 = vsel %vm1598, %v1566, %v1615
    %v1632 = vsel %vm1599, %v1569, %v1616
    %v1633 = vsel %vm1600, %v1574, %v1617
    %v1634 = vsel %vm1601, %v1577, %v1618
    %v1635 = vsel %vm1602, %v1582, %v1619
    %v1636 = vsel %vm1603, %v1585, %v1620
    %v1637 = vpack.c.bf16 %v1622, %v1621
    %v1638 = vpack.c.bf16 %v1624, %v1623
    %v1639 = vpack.c.bf16 %v1626, %v1625
    %v1640 = vpack.c.bf16 %v1628, %v1627
    %v1641 = vpack.c.bf16 %v1630, %v1629
    %v1642 = vpack.c.bf16 %v1632, %v1631
    %v1643 = vpack.c.bf16 %v1634, %v1633
    %v1644 = vpack.c.bf16 %v1636, %v1635
    %v1645 = vld [vmem:[%s27] sm:$0xf]
    %v1646 = vld [vmem:[%s27 + $0x4] sm:$0xf]
    %v1647 = vld [vmem:[%s27 + $0x8] sm:$0xf]
    %v1648 = vld [vmem:[%s27 + $0xc] sm:$0xf]
    %v1649 = vld [vmem:[%s27 + $0x10] sm:$0xf]
    %v1650 = vld [vmem:[%s27 + $0x14] sm:$0xf]
    %v1651 = vld [vmem:[%s27 + $0x18] sm:$0xf]
    %v1652 = vld [vmem:[%s27 + $0x1c] sm:$0xf]
    %v1653 = vld [vmem:[%s27 + $0x20] sm:$0xf]
    %v1654 = vld [vmem:[%s27 + $0x24] sm:$0xf]
    %v1655 = vld [vmem:[%s27 + $0x28] sm:$0xf]
    %v1656 = vld [vmem:[%s27 + $0x2c] sm:$0xf]
    %v1657 = vld [vmem:[%s27 + $0x30] sm:$0xf]
    %v1658 = vld [vmem:[%s27 + $0x34] sm:$0xf]
    %v1659 = vld [vmem:[%s27 + $0x38] sm:$0xf]
    %v1660 = vld [vmem:[%s27 + $0x3c] sm:$0xf]
    %v1677 = vunpack.c.l.b16 %v1645
    %v1678 = vunpack.c.l.b16 %v1646
    %v1679 = vunpack.c.l.b16 %v1647
    %v1680 = vunpack.c.l.b16 %v1648
    %v1681 = vunpack.c.l.b16 %v1649
    %v1682 = vunpack.c.l.b16 %v1650
    %v1683 = vunpack.c.l.b16 %v1651
    %v1684 = vunpack.c.l.b16 %v1652
    %v1685 = vunpack.c.l.b16 %v1653
    %v1686 = vunpack.c.l.b16 %v1654
    %v1687 = vunpack.c.l.b16 %v1655
    %v1688 = vunpack.c.l.b16 %v1656
    %v1689 = vunpack.c.l.b16 %v1657
    %v1690 = vunpack.c.l.b16 %v1658
    %v1691 = vunpack.c.l.b16 %v1659
    %v1692 = vunpack.c.l.b16 %v1660
    %v1693 = vpack.c.b16 %v1678, %v1677
    %v1694 = vpack.c.b16 %v1680, %v1679
    %v1695 = vpack.c.b16 %v1682, %v1681
    %v1696 = vpack.c.b16 %v1684, %v1683
    %v1697 = vpack.c.b16 %v1686, %v1685
    %v1698 = vpack.c.b16 %v1688, %v1687
    %v1699 = vpack.c.b16 %v1690, %v1689
    %v1700 = vpack.c.b16 %v1692, %v1691
    %1709 = vmatprep.subr.bf16.mxu0 0
    %1710 = vmatpush1.bf16.msra.mxu0 %v1693
    %1711 = vmatprep.subr.bf16.mxu0 0
    %1712 = vmatpush1.bf16.msra.mxu0 %v1694
    %1713 = vmatprep.subr.bf16.mxu0 0
    %1714 = vmatpush1.bf16.msra.mxu0 %v1695
    %1715 = vmatprep.subr.bf16.mxu0 0
    %1716 = vmatpush1.bf16.msra.mxu0 %v1696
    %1717 = vmatprep.subr.bf16.mxu0 0
    %1718 = vmatpush1.bf16.msra.mxu0 %v1697
    %1719 = vmatprep.subr.bf16.mxu0 0
    %1720 = vmatpush1.bf16.msra.mxu0 %v1698
    %1721 = vmatprep.subr.bf16.mxu0 0
    %1722 = vmatpush1.bf16.msra.mxu0 %v1699
    %1723 = vmatprep.subr.bf16.mxu0 0
    %1724 = vmatpush1.bf16.msra.mxu0 %v1700
    %1725 = vmatprep.subr.bf16.mxu0 0
    %1726 = vmatpush1.bf16.msra.mxu0 0
    %1727 = vmatprep.subr.bf16.mxu0 0
    %1728 = vmatpush1.bf16.msra.mxu0 0
    %1729 = vmatprep.subr.bf16.mxu0 0
    %1730 = vmatpush1.bf16.msra.mxu0 0
    %1731 = vmatprep.subr.bf16.mxu0 0
    %1732 = vmatpush1.bf16.msra.mxu0 0
    %1733 = vmatprep.subr.bf16.mxu0 0
    %1734 = vmatpush1.bf16.msra.mxu0 0
    %1735 = vmatprep.subr.bf16.mxu0 0
    %1736 = vmatpush1.bf16.msra.mxu0 0
    %1737 = vmatprep.subr.bf16.mxu0 0
    %1738 = vmatpush1.bf16.msra.mxu0 0
    %1739 = vmatprep.subr.bf16.mxu0 0
    %1740 = vmatpush1.bf16.msra.mxu0 0
    %1741 = vmatprep.mubr.bf16.mxu0 0
    %1742 = vmatmul.mubr.bf16.gmra.mrb[0].mxu0 %v1637
    %v1743 = vpop.f32.mrb[0].mxu0
    %v1744 = vadd.f32 0.0, %v1743
    %v1745 = vpop.f32.mrb[0].mxu0
    %v1746 = vpop.f32.mrb[0].mxu0
    %v1747 = vadd.f32 0.0, %v1746
    %v1748 = vpop.f32.mrb[0].mxu0
    %1749 = vmatprep.mubr.bf16.mxu0 0
    %1750 = vmatmul.mubr.bf16.gmra.mrb[0].mxu0 %v1638
    %v1751 = vpop.f32.mrb[0].mxu0
    %v1752 = vadd.f32 0.0, %v1751
    %v1753 = vpop.f32.mrb[0].mxu0
    %v1754 = vpop.f32.mrb[0].mxu0
    %v1755 = vadd.f32 0.0, %v1754
    %v1756 = vpop.f32.mrb[0].mxu0
    %1757 = vmatprep.mubr.bf16.mxu0 0
    %1758 = vmatmul.mubr.bf16.gmra.mrb[0].mxu0 %v1639
    %v1759 = vpop.f32.mrb[0].mxu0
    %v1760 = vadd.f32 0.0, %v1759
    %v1761 = vpop.f32.mrb[0].mxu0
    %v1762 = vpop.f32.mrb[0].mxu0
    %v1763 = vadd.f32 0.0, %v1762
    %v1764 = vpop.f32.mrb[0].mxu0
    %1765 = vmatprep.mubr.bf16.mxu0 0
    %1766 = vmatmul.mubr.bf16.gmra.mrb[0].mxu0 %v1640
    %v1767 = vpop.f32.mrb[0].mxu0
    %v1768 = vadd.f32 0.0, %v1767
    %v1769 = vpop.f32.mrb[0].mxu0
    %v1770 = vpop.f32.mrb[0].mxu0
    %v1771 = vadd.f32 0.0, %v1770
    %v1772 = vpop.f32.mrb[0].mxu0
    %1773 = vmatprep.mubr.bf16.mxu0 0
    %1774 = vmatmul.mubr.bf16.gmra.mrb[0].mxu0 %v1641
    %v1775 = vpop.f32.mrb[0].mxu0
    %v1776 = vadd.f32 0.0, %v1775
    %v1777 = vpop.f32.mrb[0].mxu0
    %v1778 = vpop.f32.mrb[0].mxu0
    %v1779 = vadd.f32 0.0, %v1778
    %v1780 = vpop.f32.mrb[0].mxu0
    %1781 = vmatprep.mubr.bf16.mxu0 0
    %1782 = vmatmul.mubr.bf16.gmra.mrb[0].mxu0 %v1642
    %v1783 = vpop.f32.mrb[0].mxu0
    %v1784 = vadd.f32 0.0, %v1783
    %v1785 = vpop.f32.mrb[0].mxu0
    %v1786 = vpop.f32.mrb[0].mxu0
    %v1787 = vadd.f32 0.0, %v1786
    %v1788 = vpop.f32.mrb[0].mxu0
    %1789 = vmatprep.mubr.bf16.mxu0 0
    %1790 = vmatmul.mubr.bf16.gmra.mrb[0].mxu0 %v1643
    %v1791 = vpop.f32.mrb[0].mxu0
    %v1792 = vadd.f32 0.0, %v1791
    %v1793 = vpop.f32.mrb[0].mxu0
    %v1794 = vpop.f32.mrb[0].mxu0
    %v1795 = vadd.f32 0.0, %v1794
    %v1796 = vpop.f32.mrb[0].mxu0
    %1797 = vmatprep.mubr.bf16.mxu0 0
    %1798 = vmatmul.mubr.bf16.gmra.mrb[0].mxu0 %v1644
    %v1799 = vpop.f32.mrb[0].mxu0
    %v1800 = vadd.f32 0.0, %v1799
    %v1801 = vpop.f32.mrb[0].mxu0
    %v1802 = vpop.f32.mrb[0].mxu0
    %v1803 = vadd.f32 0.0, %v1802
    %v1804 = vpop.f32.mrb[0].mxu0
    %1805 = vdwg.mxu0
    %vm1806 = vcmp.ge.f32.partialorder %v1744, 0.0
    %vm1807 = vcmp.ge.f32.partialorder %v1747, 0.0
    %vm1808 = vcmp.ge.f32.partialorder %v1752, 0.0
    %vm1809 = vcmp.ge.f32.partialorder %v1755, 0.0
    %vm1810 = vcmp.ge.f32.partialorder %v1760, 0.0
    %vm1811 = vcmp.ge.f32.partialorder %v1763, 0.0
    %vm1812 = vcmp.ge.f32.partialorder %v1768, 0.0
    %vm1813 = vcmp.ge.f32.partialorder %v1771, 0.0
    %vm1814 = vcmp.ge.f32.partialorder %v1776, 0.0
    %vm1815 = vcmp.ge.f32.partialorder %v1779, 0.0
    %vm1816 = vcmp.ge.f32.partialorder %v1784, 0.0
    %vm1817 = vcmp.ge.f32.partialorder %v1787, 0.0
    %vm1818 = vcmp.ge.f32.partialorder %v1792, 0.0
    %vm1819 = vcmp.ge.f32.partialorder %v1795, 0.0
    %vm1820 = vcmp.ge.f32.partialorder %v1800, 0.0
    %vm1821 = vcmp.ge.f32.partialorder %v1803, 0.0
    %v1822 = vstv %s1229
    %v1823 = vmul.f32 %v1822, %v1744
    %v1824 = vmul.f32 %v1822, %v1747
    %v1825 = vmul.f32 %v1822, %v1752
    %v1826 = vmul.f32 %v1822, %v1755
    %v1827 = vmul.f32 %v1822, %v1760
    %v1828 = vmul.f32 %v1822, %v1763
    %v1829 = vmul.f32 %v1822, %v1768
    %v1830 = vmul.f32 %v1822, %v1771
    %v1831 = vmul.f32 %v1822, %v1776
    %v1832 = vmul.f32 %v1822, %v1779
    %v1833 = vmul.f32 %v1822, %v1784
    %v1834 = vmul.f32 %v1822, %v1787
    %v1835 = vmul.f32 %v1822, %v1792
    %v1836 = vmul.f32 %v1822, %v1795
    %v1837 = vmul.f32 %v1822, %v1800
    %v1838 = vmul.f32 %v1822, %v1803
    %v1839 = vsel %vm1806, %v1744, %v1823
    %v1840 = vsel %vm1807, %v1747, %v1824
    %v1841 = vsel %vm1808, %v1752, %v1825
    %v1842 = vsel %vm1809, %v1755, %v1826
    %v1843 = vsel %vm1810, %v1760, %v1827
    %v1844 = vsel %vm1811, %v1763, %v1828
    %v1845 = vsel %vm1812, %v1768, %v1829
    %v1846 = vsel %vm1813, %v1771, %v1830
    %v1847 = vsel %vm1814, %v1776, %v1831
    %v1848 = vsel %vm1815, %v1779, %v1832
    %v1849 = vsel %vm1816, %v1784, %v1833
    %v1850 = vsel %vm1817, %v1787, %v1834
    %v1851 = vsel %vm1818, %v1792, %v1835
    %v1852 = vsel %vm1819, %v1795, %v1836
    %v1853 = vsel %vm1820, %v1800, %v1837
    %v1854 = vsel %vm1821, %v1803, %v1838
    %v1855 = vpack.c.bf16 %v1840, %v1839
    %v1856 = vpack.c.bf16 %v1842, %v1841
    %v1857 = vpack.c.bf16 %v1844, %v1843
    %v1858 = vpack.c.bf16 %v1846, %v1845
    %v1859 = vpack.c.bf16 %v1848, %v1847
    %v1860 = vpack.c.bf16 %v1850, %v1849
    %v1861 = vpack.c.bf16 %v1852, %v1851
    %v1862 = vpack.c.bf16 %v1854, %v1853
    %v1863 = vld [vmem:[%s29] sm:$0xf]
    %v1864 = vld [vmem:[%s29 + $0x4] sm:$0xf]
    %v1865 = vld [vmem:[%s29 + $0x8] sm:$0xf]
    %v1866 = vld [vmem:[%s29 + $0xc] sm:$0xf]
    %v1867 = vld [vmem:[%s29 + $0x10] sm:$0xf]
    %v1868 = vld [vmem:[%s29 + $0x14] sm:$0xf]
    %v1869 = vld [vmem:[%s29 + $0x18] sm:$0xf]
    %v1870 = vld [vmem:[%s29 + $0x1c] sm:$0xf]
    %v1871 = vld [vmem:[%s29 + $0x20] sm:$0xf]
    %v1872 = vld [vmem:[%s29 + $0x24] sm:$0xf]
    %v1873 = vld [vmem:[%s29 + $0x28] sm:$0xf]
    %v1874 = vld [vmem:[%s29 + $0x2c] sm:$0xf]
    %v1875 = vld [vmem:[%s29 + $0x30] sm:$0xf]
    %v1876 = vld [vmem:[%s29 + $0x34] sm:$0xf]
    %v1877 = vld [vmem:[%s29 + $0x38] sm:$0xf]
    %v1878 = vld [vmem:[%s29 + $0x3c] sm:$0xf]
    %v1879 = vld [vmem:[%s31] sm:$0x1]
    %v1881 = vlaneseq
    %v1882 = vshrl.u32 %v1881, 7
    %v1883 = vsub.s32 0, %v1882
    %v1884 = vrot.slane %v1879, %v1883
    %v1902 = vunpack.c.l.b16 %v1863
    %v1903 = vunpack.c.l.b16 %v1864
    %v1904 = vunpack.c.l.b16 %v1865
    %v1905 = vunpack.c.l.b16 %v1866
    %v1906 = vunpack.c.l.b16 %v1867
    %v1907 = vunpack.c.l.b16 %v1868
    %v1908 = vunpack.c.l.b16 %v1869
    %v1909 = vunpack.c.l.b16 %v1870
    %v1910 = vunpack.c.l.b16 %v1871
    %v1911 = vunpack.c.l.b16 %v1872
    %v1912 = vunpack.c.l.b16 %v1873
    %v1913 = vunpack.c.l.b16 %v1874
    %v1914 = vunpack.c.l.b16 %v1875
    %v1915 = vunpack.c.l.b16 %v1876
    %v1916 = vunpack.c.l.b16 %v1877
    %v1917 = vunpack.c.l.b16 %v1878
    %v1918 = vpack.c.b16 %v1903, %v1902
    %v1919 = vpack.c.b16 %v1905, %v1904
    %v1920 = vpack.c.b16 %v1907, %v1906
    %v1921 = vpack.c.b16 %v1909, %v1908
    %v1922 = vpack.c.b16 %v1911, %v1910
    %v1923 = vpack.c.b16 %v1913, %v1912
    %v1924 = vpack.c.b16 %v1915, %v1914
    %v1925 = vpack.c.b16 %v1917, %v1916
    %1934 = vmatprep.subr.bf16.mxu0 0
    %1935 = vmatpush1.bf16.msra.mxu0 %v1918
    %1936 = vmatprep.subr.bf16.mxu0 0
    %1937 = vmatpush1.bf16.msra.mxu0 %v1919
    %1938 = vmatprep.subr.bf16.mxu0 0
    %1939 = vmatpush1.bf16.msra.mxu0 %v1920
    %1940 = vmatprep.subr.bf16.mxu0 0
    %1941 = vmatpush1.bf16.msra.mxu0 %v1921
    %1942 = vmatprep.subr.bf16.mxu0 0
    %1943 = vmatpush1.bf16.msra.mxu0 %v1922
    %1944 = vmatprep.subr.bf16.mxu0 0
    %1945 = vmatpush1.bf16.msra.mxu0 %v1923
    %1946 = vmatprep.subr.bf16.mxu0 0
    %1947 = vmatpush1.bf16.msra.mxu0 %v1924
    %1948 = vmatprep.subr.bf16.mxu0 0
    %1949 = vmatpush1.bf16.msra.mxu0 %v1925
    %1950 = vmatprep.subr.bf16.mxu0 0
    %1951 = vmatpush1.bf16.msra.mxu0 0
    %1952 = vmatprep.subr.bf16.mxu0 0
    %1953 = vmatpush1.bf16.msra.mxu0 0
    %1954 = vmatprep.subr.bf16.mxu0 0
    %1955 = vmatpush1.bf16.msra.mxu0 0
    %1956 = vmatprep.subr.bf16.mxu0 0
    %1957 = vmatpush1.bf16.msra.mxu0 0
    %1958 = vmatprep.subr.bf16.mxu0 0
    %1959 = vmatpush1.bf16.msra.mxu0 0
    %1960 = vmatprep.subr.bf16.mxu0 0
    %1961 = vmatpush1.bf16.msra.mxu0 0
    %1962 = vmatprep.subr.bf16.mxu0 0
    %1963 = vmatpush1.bf16.msra.mxu0 0
    %1964 = vmatprep.subr.bf16.mxu0 0
    %1965 = vmatpush1.bf16.msra.mxu0 0
    %1966 = vmatprep.mubr.bf16.mxu0 0
    %1967 = vmatmul.mubr.bf16.gmra.mrb[0].mxu0 %v1855
    %v1968 = vpop.f32.mrb[0].mxu0
    %v1969 = vadd.f32 %v1884, %v1968
    %v1970 = vpop.f32.mrb[0].mxu0
    %v1971 = vpop.f32.mrb[0].mxu0
    %v1972 = vadd.f32 %v1884, %v1971
    %v1973 = vpop.f32.mrb[0].mxu0
    %1974 = vmatprep.mubr.bf16.mxu0 0
    %1975 = vmatmul.mubr.bf16.gmra.mrb[0].mxu0 %v1856
    %v1976 = vpop.f32.mrb[0].mxu0
    %v1977 = vadd.f32 %v1884, %v1976
    %v1978 = vpop.f32.mrb[0].mxu0
    %v1979 = vpop.f32.mrb[0].mxu0
    %v1980 = vadd.f32 %v1884, %v1979
    %v1981 = vpop.f32.mrb[0].mxu0
    %1982 = vmatprep.mubr.bf16.mxu0 0
    %1983 = vmatmul.mubr.bf16.gmra.mrb[0].mxu0 %v1857
    %v1984 = vpop.f32.mrb[0].mxu0
    %v1985 = vadd.f32 %v1884, %v1984
    %v1986 = vpop.f32.mrb[0].mxu0
    %v1987 = vpop.f32.mrb[0].mxu0
    %v1988 = vadd.f32 %v1884, %v1987
    %v1989 = vpop.f32.mrb[0].mxu0
    %1990 = vmatprep.mubr.bf16.mxu0 0
    %1991 = vmatmul.mubr.bf16.gmra.mrb[0].mxu0 %v1858
    %v1992 = vpop.f32.mrb[0].mxu0
    %v1993 = vadd.f32 %v1884, %v1992
    %v1994 = vpop.f32.mrb[0].mxu0
    %v1995 = vpop.f32.mrb[0].mxu0
    %v1996 = vadd.f32 %v1884, %v1995
    %v1997 = vpop.f32.mrb[0].mxu0
    %1998 = vmatprep.mubr.bf16.mxu0 0
    %1999 = vmatmul.mubr.bf16.gmra.mrb[0].mxu0 %v1859
    %v2000 = vpop.f32.mrb[0].mxu0
    %v2001 = vadd.f32 %v1884, %v2000
    %v2002 = vpop.f32.mrb[0].mxu0
    %v2003 = vpop.f32.mrb[0].mxu0
    %v2004 = vadd.f32 %v1884, %v2003
    %v2005 = vpop.f32.mrb[0].mxu0
    %2006 = vmatprep.mubr.bf16.mxu0 0
    %2007 = vmatmul.mubr.bf16.gmra.mrb[0].mxu0 %v1860
    %v2008 = vpop.f32.mrb[0].mxu0
    %v2009 = vadd.f32 %v1884, %v2008
    %v2010 = vpop.f32.mrb[0].mxu0
    %v2011 = vpop.f32.mrb[0].mxu0
    %v2012 = vadd.f32 %v1884, %v2011
    %v2013 = vpop.f32.mrb[0].mxu0
    %2014 = vmatprep.mubr.bf16.mxu0 0
    %2015 = vmatmul.mubr.bf16.gmra.mrb[0].mxu0 %v1861
    %v2016 = vpop.f32.mrb[0].mxu0
    %v2017 = vadd.f32 %v1884, %v2016
    %v2018 = vpop.f32.mrb[0].mxu0
    %v2019 = vpop.f32.mrb[0].mxu0
    %v2020 = vadd.f32 %v1884, %v2019
    %v2021 = vpop.f32.mrb[0].mxu0
    %2022 = vmatprep.mubr.bf16.mxu0 0
    %2023 = vmatmul.mubr.bf16.gmra.mrb[0].mxu0 %v1862
    %v2024 = vpop.f32.mrb[0].mxu0
    %v2025 = vadd.f32 %v1884, %v2024
    %v2026 = vpop.f32.mrb[0].mxu0
    %v2027 = vpop.f32.mrb[0].mxu0
    %v2028 = vadd.f32 %v1884, %v2027
    %v2029 = vpop.f32.mrb[0].mxu0
    %2030 = vdwg.mxu0
    %s2031 = sld [smem:[#allocation2 + $0x6]]
    %s2032 = sld [smem:[#allocation2 + $0x7]]
    %s2033 = sld [smem:[#allocation2 + $0x8]]
    %v2034 = vld [vmem:[%s33] sm:$0xf]
    %v2035 = vld [vmem:[%s35] sm:$0x1]
    %v2037 = vlaneseq
    %v2038 = vshrl.u32 %v2037, 7
    %v2039 = vsub.s32 0, %v2038
    %v2040 = vrot.slane %v2035, %v2039
    %v2043 = vsel %vm465, %v2034, 0
    %2045 = vmatprep.subr.bf16.mxu0 0
    %2046 = vmatpush1.bf16.msra.mxu0 %v2043
    %2047 = vmatprep.subr.bf16.mxu0 0
    %2048 = vmatpush1.bf16.msra.mxu0 0
    %2049 = vmatprep.subr.bf16.mxu0 0
    %2050 = vmatpush1.bf16.msra.mxu0 0
    %2051 = vmatprep.subr.bf16.mxu0 0
    %2052 = vmatpush1.bf16.msra.mxu0 0
    %2053 = vmatprep.subr.bf16.mxu0 0
    %2054 = vmatpush1.bf16.msra.mxu0 0
    %2055 = vmatprep.subr.bf16.mxu0 0
    %2056 = vmatpush1.bf16.msra.mxu0 0
    %2057 = vmatprep.subr.bf16.mxu0 0
    %2058 = vmatpush1.bf16.msra.mxu0 0
    %2059 = vmatprep.subr.bf16.mxu0 0
    %2060 = vmatpush1.bf16.msra.mxu0 0
    %2061 = vmatprep.subr.bf16.mxu0 0
    %2062 = vmatpush1.bf16.msra.mxu0 0
    %2063 = vmatprep.subr.bf16.mxu0 0
    %2064 = vmatpush1.bf16.msra.mxu0 0
    %2065 = vmatprep.subr.bf16.mxu0 0
    %2066 = vmatpush1.bf16.msra.mxu0 0
    %2067 = vmatprep.subr.bf16.mxu0 0
    %2068 = vmatpush1.bf16.msra.mxu0 0
    %2069 = vmatprep.subr.bf16.mxu0 0
    %2070 = vmatpush1.bf16.msra.mxu0 0
    %2071 = vmatprep.subr.bf16.mxu0 0
    %2072 = vmatpush1.bf16.msra.mxu0 0
    %2073 = vmatprep.subr.bf16.mxu0 0
    %2074 = vmatpush1.bf16.msra.mxu0 0
    %2075 = vmatprep.subr.bf16.mxu0 0
    %2076 = vmatpush1.bf16.msra.mxu0 0
    %2077 = vmatprep.mubr.bf16.mxu0 0
    %2078 = vmatmul.mubr.bf16.gmra.mrb[0].mxu0 %v1247
    %v2079 = vpop.f32.mrb[0].mxu0
    %v2080 = vadd.f32 %v2040, %v2079
    %v2081 = vpop.f32.mrb[0].mxu0
    %v2082 = vpop.f32.mrb[0].mxu0
    %v2083 = vadd.f32 %v2040, %v2082
    %v2084 = vpop.f32.mrb[0].mxu0
    %2085 = vmatprep.mubr.bf16.mxu0 0
    %2086 = vmatmul.mubr.bf16.gmra.mrb[0].mxu0 %v1250
    %v2087 = vpop.f32.mrb[0].mxu0
    %v2088 = vadd.f32 %v2040, %v2087
    %v2089 = vpop.f32.mrb[0].mxu0
    %v2090 = vpop.f32.mrb[0].mxu0
    %v2091 = vadd.f32 %v2040, %v2090
    %v2092 = vpop.f32.mrb[0].mxu0
    %2093 = vmatprep.mubr.bf16.mxu0 0
    %2094 = vmatmul.mubr.bf16.gmra.mrb[0].mxu0 %v1253
    %v2095 = vpop.f32.mrb[0].mxu0
    %v2096 = vadd.f32 %v2040, %v2095
    %v2097 = vpop.f32.mrb[0].mxu0
    %v2098 = vpop.f32.mrb[0].mxu0
    %v2099 = vadd.f32 %v2040, %v2098
    %v2100 = vpop.f32.mrb[0].mxu0
    %2101 = vmatprep.mubr.bf16.mxu0 0
    %2102 = vmatmul.mubr.bf16.gmra.mrb[0].mxu0 %v1256
    %v2103 = vpop.f32.mrb[0].mxu0
    %v2104 = vadd.f32 %v2040, %v2103
    %v2105 = vpop.f32.mrb[0].mxu0
    %v2106 = vpop.f32.mrb[0].mxu0
    %v2107 = vadd.f32 %v2040, %v2106
    %v2108 = vpop.f32.mrb[0].mxu0
    %2109 = vmatprep.mubr.bf16.mxu0 0
    %2110 = vmatmul.mubr.bf16.gmra.mrb[0].mxu0 %v1259
    %v2111 = vpop.f32.mrb[0].mxu0
    %v2112 = vadd.f32 %v2040, %v2111
    %v2113 = vpop.f32.mrb[0].mxu0
    %v2114 = vpop.f32.mrb[0].mxu0
    %v2115 = vadd.f32 %v2040, %v2114
    %v2116 = vpop.f32.mrb[0].mxu0
    %2117 = vmatprep.mubr.bf16.mxu0 0
    %2118 = vmatmul.mubr.bf16.gmra.mrb[0].mxu0 %v1262
    %v2119 = vpop.f32.mrb[0].mxu0
    %v2120 = vadd.f32 %v2040, %v2119
    %v2121 = vpop.f32.mrb[0].mxu0
    %v2122 = vpop.f32.mrb[0].mxu0
    %v2123 = vadd.f32 %v2040, %v2122
    %v2124 = vpop.f32.mrb[0].mxu0
    %2125 = vmatprep.mubr.bf16.mxu0 0
    %2126 = vmatmul.mubr.bf16.gmra.mrb[0].mxu0 %v1265
    %v2127 = vpop.f32.mrb[0].mxu0
    %v2128 = vadd.f32 %v2040, %v2127
    %v2129 = vpop.f32.mrb[0].mxu0
    %v2130 = vpop.f32.mrb[0].mxu0
    %v2131 = vadd.f32 %v2040, %v2130
    %v2132 = vpop.f32.mrb[0].mxu0
    %2133 = vmatprep.mubr.bf16.mxu0 0
    %2134 = vmatmul.mubr.bf16.gmra.mrb[0].mxu0 %v1268
    %v2135 = vpop.f32.mrb[0].mxu0
    %v2136 = vadd.f32 %v2040, %v2135
    %v2137 = vpop.f32.mrb[0].mxu0
    %v2138 = vpop.f32.mrb[0].mxu0
    %v2139 = vadd.f32 %v2040, %v2138
    %v2140 = vpop.f32.mrb[0].mxu0
    %2141 = vdwg.mxu0
    %vm2142 = vcmp.ge.f32.partialorder %v2080, 0.0
    %vm2143 = vcmp.ge.f32.partialorder %v2083, 0.0
    %vm2144 = vcmp.ge.f32.partialorder %v2088, 0.0
    %vm2145 = vcmp.ge.f32.partialorder %v2091, 0.0
    %vm2146 = vcmp.ge.f32.partialorder %v2096, 0.0
    %vm2147 = vcmp.ge.f32.partialorder %v2099, 0.0
    %vm2148 = vcmp.ge.f32.partialorder %v2104, 0.0
    %vm2149 = vcmp.ge.f32.partialorder %v2107, 0.0
    %vm2150 = vcmp.ge.f32.partialorder %v2112, 0.0
    %vm2151 = vcmp.ge.f32.partialorder %v2115, 0.0
    %vm2152 = vcmp.ge.f32.partialorder %v2120, 0.0
    %vm2153 = vcmp.ge.f32.partialorder %v2123, 0.0
    %vm2154 = vcmp.ge.f32.partialorder %v2128, 0.0
    %vm2155 = vcmp.ge.f32.partialorder %v2131, 0.0
    %vm2156 = vcmp.ge.f32.partialorder %v2136, 0.0
    %vm2157 = vcmp.ge.f32.partialorder %v2139, 0.0
    %v2158 = vstv %s2031
    %v2159 = vmul.f32 %v2158, %v2080
    %v2160 = vmul.f32 %v2158, %v2083
    %v2161 = vmul.f32 %v2158, %v2088
    %v2162 = vmul.f32 %v2158, %v2091
    %v2163 = vmul.f32 %v2158, %v2096
    %v2164 = vmul.f32 %v2158, %v2099
    %v2165 = vmul.f32 %v2158, %v2104
    %v2166 = vmul.f32 %v2158, %v2107
    %v2167 = vmul.f32 %v2158, %v2112
    %v2168 = vmul.f32 %v2158, %v2115
    %v2169 = vmul.f32 %v2158, %v2120
    %v2170 = vmul.f32 %v2158, %v2123
    %v2171 = vmul.f32 %v2158, %v2128
    %v2172 = vmul.f32 %v2158, %v2131
    %v2173 = vmul.f32 %v2158, %v2136
    %v2174 = vmul.f32 %v2158, %v2139
    %v2175 = vsel %vm2142, %v2080, %v2159
    %v2176 = vsel %vm2143, %v2083, %v2160
    %v2177 = vsel %vm2144, %v2088, %v2161
    %v2178 = vsel %vm2145, %v2091, %v2162
    %v2179 = vsel %vm2146, %v2096, %v2163
    %v2180 = vsel %vm2147, %v2099, %v2164
    %v2181 = vsel %vm2148, %v2104, %v2165
    %v2182 = vsel %vm2149, %v2107, %v2166
    %v2183 = vsel %vm2150, %v2112, %v2167
    %v2184 = vsel %vm2151, %v2115, %v2168
    %v2185 = vsel %vm2152, %v2120, %v2169
    %v2186 = vsel %vm2153, %v2123, %v2170
    %v2187 = vsel %vm2154, %v2128, %v2171
    %v2188 = vsel %vm2155, %v2131, %v2172
    %v2189 = vsel %vm2156, %v2136, %v2173
    %v2190 = vsel %vm2157, %v2139, %v2174
    %v2191 = vpack.c.bf16 %v2176, %v2175
    %v2192 = vpack.c.bf16 %v2178, %v2177
    %v2193 = vpack.c.bf16 %v2180, %v2179
    %v2194 = vpack.c.bf16 %v2182, %v2181
    %v2195 = vpack.c.bf16 %v2184, %v2183
    %v2196 = vpack.c.bf16 %v2186, %v2185
    %v2197 = vpack.c.bf16 %v2188, %v2187
    %v2198 = vpack.c.bf16 %v2190, %v2189
    %v2199 = vld [vmem:[%s37] sm:$0xf]
    %v2200 = vld [vmem:[%s37 + $0x4] sm:$0xf]
    %v2201 = vld [vmem:[%s37 + $0x8] sm:$0xf]
    %v2202 = vld [vmem:[%s37 + $0xc] sm:$0xf]
    %v2203 = vld [vmem:[%s37 + $0x10] sm:$0xf]
    %v2204 = vld [vmem:[%s37 + $0x14] sm:$0xf]
    %v2205 = vld [vmem:[%s37 + $0x18] sm:$0xf]
    %v2206 = vld [vmem:[%s37 + $0x1c] sm:$0xf]
    %v2207 = vld [vmem:[%s37 + $0x20] sm:$0xf]
    %v2208 = vld [vmem:[%s37 + $0x24] sm:$0xf]
    %v2209 = vld [vmem:[%s37 + $0x28] sm:$0xf]
    %v2210 = vld [vmem:[%s37 + $0x2c] sm:$0xf]
    %v2211 = vld [vmem:[%s37 + $0x30] sm:$0xf]
    %v2212 = vld [vmem:[%s37 + $0x34] sm:$0xf]
    %v2213 = vld [vmem:[%s37 + $0x38] sm:$0xf]
    %v2214 = vld [vmem:[%s37 + $0x3c] sm:$0xf]
    %v2231 = vunpack.c.l.b16 %v2199
    %v2232 = vunpack.c.l.b16 %v2200
    %v2233 = vunpack.c.l.b16 %v2201
    %v2234 = vunpack.c.l.b16 %v2202
    %v2235 = vunpack.c.l.b16 %v2203
    %v2236 = vunpack.c.l.b16 %v2204
    %v2237 = vunpack.c.l.b16 %v2205
    %v2238 = vunpack.c.l.b16 %v2206
    %v2239 = vunpack.c.l.b16 %v2207
    %v2240 = vunpack.c.l.b16 %v2208
    %v2241 = vunpack.c.l.b16 %v2209
    %v2242 = vunpack.c.l.b16 %v2210
    %v2243 = vunpack.c.l.b16 %v2211
    %v2244 = vunpack.c.l.b16 %v2212
    %v2245 = vunpack.c.l.b16 %v2213
    %v2246 = vunpack.c.l.b16 %v2214
    %v2247 = vpack.c.b16 %v2232, %v2231
    %v2248 = vpack.c.b16 %v2234, %v2233
    %v2249 = vpack.c.b16 %v2236, %v2235
    %v2250 = vpack.c.b16 %v2238, %v2237
    %v2251 = vpack.c.b16 %v2240, %v2239
    %v2252 = vpack.c.b16 %v2242, %v2241
    %v2253 = vpack.c.b16 %v2244, %v2243
    %v2254 = vpack.c.b16 %v2246, %v2245
    %2263 = vmatprep.subr.bf16.mxu0 0
    %2264 = vmatpush1.bf16.msra.mxu0 %v2247
    %2265 = vmatprep.subr.bf16.mxu0 0
    %2266 = vmatpush1.bf16.msra.mxu0 %v2248
    %2267 = vmatprep.subr.bf16.mxu0 0
    %2268 = vmatpush1.bf16.msra.mxu0 %v2249
    %2269 = vmatprep.subr.bf16.mxu0 0
    %2270 = vmatpush1.bf16.msra.mxu0 %v2250
    %2271 = vmatprep.subr.bf16.mxu0 0
    %2272 = vmatpush1.bf16.msra.mxu0 %v2251
    %2273 = vmatprep.subr.bf16.mxu0 0
    %2274 = vmatpush1.bf16.msra.mxu0 %v2252
    %2275 = vmatprep.subr.bf16.mxu0 0
    %2276 = vmatpush1.bf16.msra.mxu0 %v2253
    %2277 = vmatprep.subr.bf16.mxu0 0
    %2278 = vmatpush1.bf16.msra.mxu0 %v2254
    %2279 = vmatprep.subr.bf16.mxu0 0
    %2280 = vmatpush1.bf16.msra.mxu0 0
    %2281 = vmatprep.subr.bf16.mxu0 0
    %2282 = vmatpush1.bf16.msra.mxu0 0
    %2283 = vmatprep.subr.bf16.mxu0 0
    %2284 = vmatpush1.bf16.msra.mxu0 0
    %2285 = vmatprep.subr.bf16.mxu0 0
    %2286 = vmatpush1.bf16.msra.mxu0 0
    %2287 = vmatprep.subr.bf16.mxu0 0
    %2288 = vmatpush1.bf16.msra.mxu0 0
    %2289 = vmatprep.subr.bf16.mxu0 0
    %2290 = vmatpush1.bf16.msra.mxu0 0
    %2291 = vmatprep.subr.bf16.mxu0 0
    %2292 = vmatpush1.bf16.msra.mxu0 0
    %2293 = vmatprep.subr.bf16.mxu0 0
    %2294 = vmatpush1.bf16.msra.mxu0 0
    %2295 = vmatprep.mubr.bf16.mxu0 0
    %2296 = vmatmul.mubr.bf16.gmra.mrb[0].mxu0 %v2191
    %v2297 = vpop.f32.mrb[0].mxu0
    %v2298 = vadd.f32 0.0, %v2297
    %v2299 = vpop.f32.mrb[0].mxu0
    %v2300 = vpop.f32.mrb[0].mxu0
    %v2301 = vadd.f32 0.0, %v2300
    %v2302 = vpop.f32.mrb[0].mxu0
    %2303 = vmatprep.mubr.bf16.mxu0 0
    %2304 = vmatmul.mubr.bf16.gmra.mrb[0].mxu0 %v2192
    %v2305 = vpop.f32.mrb[0].mxu0
    %v2306 = vadd.f32 0.0, %v2305
    %v2307 = vpop.f32.mrb[0].mxu0
    %v2308 = vpop.f32.mrb[0].mxu0
    %v2309 = vadd.f32 0.0, %v2308
    %v2310 = vpop.f32.mrb[0].mxu0
    %2311 = vmatprep.mubr.bf16.mxu0 0
    %2312 = vmatmul.mubr.bf16.gmra.mrb[0].mxu0 %v2193
    %v2313 = vpop.f32.mrb[0].mxu0
    %v2314 = vadd.f32 0.0, %v2313
    %v2315 = vpop.f32.mrb[0].mxu0
    %v2316 = vpop.f32.mrb[0].mxu0
    %v2317 = vadd.f32 0.0, %v2316
    %v2318 = vpop.f32.mrb[0].mxu0
    %2319 = vmatprep.mubr.bf16.mxu0 0
    %2320 = vmatmul.mubr.bf16.gmra.mrb[0].mxu0 %v2194
    %v2321 = vpop.f32.mrb[0].mxu0
    %v2322 = vadd.f32 0.0, %v2321
    %v2323 = vpop.f32.mrb[0].mxu0
    %v2324 = vpop.f32.mrb[0].mxu0
    %v2325 = vadd.f32 0.0, %v2324
    %v2326 = vpop.f32.mrb[0].mxu0
    %2327 = vmatprep.mubr.bf16.mxu0 0
    %2328 = vmatmul.mubr.bf16.gmra.mrb[0].mxu0 %v2195
    %v2329 = vpop.f32.mrb[0].mxu0
    %v2330 = vadd.f32 0.0, %v2329
    %v2331 = vpop.f32.mrb[0].mxu0
    %v2332 = vpop.f32.mrb[0].mxu0
    %v2333 = vadd.f32 0.0, %v2332
    %v2334 = vpop.f32.mrb[0].mxu0
    %2335 = vmatprep.mubr.bf16.mxu0 0
    %2336 = vmatmul.mubr.bf16.gmra.mrb[0].mxu0 %v2196
    %v2337 = vpop.f32.mrb[0].mxu0
    %v2338 = vadd.f32 0.0, %v2337
    %v2339 = vpop.f32.mrb[0].mxu0
    %v2340 = vpop.f32.mrb[0].mxu0
    %v2341 = vadd.f32 0.0, %v2340
    %v2342 = vpop.f32.mrb[0].mxu0
    %2343 = vmatprep.mubr.bf16.mxu0 0
    %2344 = vmatmul.mubr.bf16.gmra.mrb[0].mxu0 %v2197
    %v2345 = vpop.f32.mrb[0].mxu0
    %v2346 = vadd.f32 0.0, %v2345
    %v2347 = vpop.f32.mrb[0].mxu0
    %v2348 = vpop.f32.mrb[0].mxu0
    %v2349 = vadd.f32 0.0, %v2348
    %v2350 = vpop.f32.mrb[0].mxu0
    %2351 = vmatprep.mubr.bf16.mxu0 0
    %2352 = vmatmul.mubr.bf16.gmra.mrb[0].mxu0 %v2198
    %v2353 = vpop.f32.mrb[0].mxu0
    %v2354 = vadd.f32 0.0, %v2353
    %v2355 = vpop.f32.mrb[0].mxu0
    %v2356 = vpop.f32.mrb[0].mxu0
    %v2357 = vadd.f32 0.0, %v2356
    %v2358 = vpop.f32.mrb[0].mxu0
    %2359 = vdwg.mxu0
    %vm2360 = vcmp.ge.f32.partialorder %v2298, 0.0
    %vm2361 = vcmp.ge.f32.partialorder %v2301, 0.0
    %vm2362 = vcmp.ge.f32.partialorder %v2306, 0.0
    %vm2363 = vcmp.ge.f32.partialorder %v2309, 0.0
    %vm2364 = vcmp.ge.f32.partialorder %v2314, 0.0
    %vm2365 = vcmp.ge.f32.partialorder %v2317, 0.0
    %vm2366 = vcmp.ge.f32.partialorder %v2322, 0.0
    %vm2367 = vcmp.ge.f32.partialorder %v2325, 0.0
    %vm2368 = vcmp.ge.f32.partialorder %v2330, 0.0
    %vm2369 = vcmp.ge.f32.partialorder %v2333, 0.0
    %vm2370 = vcmp.ge.f32.partialorder %v2338, 0.0
    %vm2371 = vcmp.ge.f32.partialorder %v2341, 0.0
    %vm2372 = vcmp.ge.f32.partialorder %v2346, 0.0
    %vm2373 = vcmp.ge.f32.partialorder %v2349, 0.0
    %vm2374 = vcmp.ge.f32.partialorder %v2354, 0.0
    %vm2375 = vcmp.ge.f32.partialorder %v2357, 0.0
    %v2376 = vstv %s2032
    %v2377 = vmul.f32 %v2376, %v2298
    %v2378 = vmul.f32 %v2376, %v2301
    %v2379 = vmul.f32 %v2376, %v2306
    %v2380 = vmul.f32 %v2376, %v2309
    %v2381 = vmul.f32 %v2376, %v2314
    %v2382 = vmul.f32 %v2376, %v2317
    %v2383 = vmul.f32 %v2376, %v2322
    %v2384 = vmul.f32 %v2376, %v2325
    %v2385 = vmul.f32 %v2376, %v2330
    %v2386 = vmul.f32 %v2376, %v2333
    %v2387 = vmul.f32 %v2376, %v2338
    %v2388 = vmul.f32 %v2376, %v2341
    %v2389 = vmul.f32 %v2376, %v2346
    %v2390 = vmul.f32 %v2376, %v2349
    %v2391 = vmul.f32 %v2376, %v2354
    %v2392 = vmul.f32 %v2376, %v2357
    %v2393 = vsel %vm2360, %v2298, %v2377
    %v2394 = vsel %vm2361, %v2301, %v2378
    %v2395 = vsel %vm2362, %v2306, %v2379
    %v2396 = vsel %vm2363, %v2309, %v2380
    %v2397 = vsel %vm2364, %v2314, %v2381
    %v2398 = vsel %vm2365, %v2317, %v2382
    %v2399 = vsel %vm2366, %v2322, %v2383
    %v2400 = vsel %vm2367, %v2325, %v2384
    %v2401 = vsel %vm2368, %v2330, %v2385
    %v2402 = vsel %vm2369, %v2333, %v2386
    %v2403 = vsel %vm2370, %v2338, %v2387
    %v2404 = vsel %vm2371, %v2341, %v2388
    %v2405 = vsel %vm2372, %v2346, %v2389
    %v2406 = vsel %vm2373, %v2349, %v2390
    %v2407 = vsel %vm2374, %v2354, %v2391
    %v2408 = vsel %vm2375, %v2357, %v2392
    %v2409 = vpack.c.bf16 %v2394, %v2393
    %v2410 = vpack.c.bf16 %v2396, %v2395
    %v2411 = vpack.c.bf16 %v2398, %v2397
    %v2412 = vpack.c.bf16 %v2400, %v2399
    %v2413 = vpack.c.bf16 %v2402, %v2401
    %v2414 = vpack.c.bf16 %v2404, %v2403
    %v2415 = vpack.c.bf16 %v2406, %v2405
    %v2416 = vpack.c.bf16 %v2408, %v2407
    %v2417 = vld [vmem:[%s39] sm:$0xf]
    %v2418 = vld [vmem:[%s39 + $0x4] sm:$0xf]
    %v2419 = vld [vmem:[%s39 + $0x8] sm:$0xf]
    %v2420 = vld [vmem:[%s39 + $0xc] sm:$0xf]
    %v2421 = vld [vmem:[%s39 + $0x10] sm:$0xf]
    %v2422 = vld [vmem:[%s39 + $0x14] sm:$0xf]
    %v2423 = vld [vmem:[%s39 + $0x18] sm:$0xf]
    %v2424 = vld [vmem:[%s39 + $0x1c] sm:$0xf]
    %v2425 = vld [vmem:[%s39 + $0x20] sm:$0xf]
    %v2426 = vld [vmem:[%s39 + $0x24] sm:$0xf]
    %v2427 = vld [vmem:[%s39 + $0x28] sm:$0xf]
    %v2428 = vld [vmem:[%s39 + $0x2c] sm:$0xf]
    %v2429 = vld [vmem:[%s39 + $0x30] sm:$0xf]
    %v2430 = vld [vmem:[%s39 + $0x34] sm:$0xf]
    %v2431 = vld [vmem:[%s39 + $0x38] sm:$0xf]
    %v2432 = vld [vmem:[%s39 + $0x3c] sm:$0xf]
    %v2449 = vunpack.c.l.b16 %v2417
    %v2450 = vunpack.c.l.b16 %v2418
    %v2451 = vunpack.c.l.b16 %v2419
    %v2452 = vunpack.c.l.b16 %v2420
    %v2453 = vunpack.c.l.b16 %v2421
    %v2454 = vunpack.c.l.b16 %v2422
    %v2455 = vunpack.c.l.b16 %v2423
    %v2456 = vunpack.c.l.b16 %v2424
    %v2457 = vunpack.c.l.b16 %v2425
    %v2458 = vunpack.c.l.b16 %v2426
    %v2459 = vunpack.c.l.b16 %v2427
    %v2460 = vunpack.c.l.b16 %v2428
    %v2461 = vunpack.c.l.b16 %v2429
    %v2462 = vunpack.c.l.b16 %v2430
    %v2463 = vunpack.c.l.b16 %v2431
    %v2464 = vunpack.c.l.b16 %v2432
    %v2465 = vpack.c.b16 %v2450, %v2449
    %v2466 = vpack.c.b16 %v2452, %v2451
    %v2467 = vpack.c.b16 %v2454, %v2453
    %v2468 = vpack.c.b16 %v2456, %v2455
    %v2469 = vpack.c.b16 %v2458, %v2457
    %v2470 = vpack.c.b16 %v2460, %v2459
    %v2471 = vpack.c.b16 %v2462, %v2461
    %v2472 = vpack.c.b16 %v2464, %v2463
    %2481 = vmatprep.subr.bf16.mxu0 0
    %2482 = vmatpush1.bf16.msra.mxu0 %v2465
    %2483 = vmatprep.subr.bf16.mxu0 0
    %2484 = vmatpush1.bf16.msra.mxu0 %v2466
    %2485 = vmatprep.subr.bf16.mxu0 0
    %2486 = vmatpush1.bf16.msra.mxu0 %v2467
    %2487 = vmatprep.subr.bf16.mxu0 0
    %2488 = vmatpush1.bf16.msra.mxu0 %v2468
    %2489 = vmatprep.subr.bf16.mxu0 0
    %2490 = vmatpush1.bf16.msra.mxu0 %v2469
    %2491 = vmatprep.subr.bf16.mxu0 0
    %2492 = vmatpush1.bf16.msra.mxu0 %v2470
    %2493 = vmatprep.subr.bf16.mxu0 0
    %2494 = vmatpush1.bf16.msra.mxu0 %v2471
    %2495 = vmatprep.subr.bf16.mxu0 0
    %2496 = vmatpush1.bf16.msra.mxu0 %v2472
    %2497 = vmatprep.subr.bf16.mxu0 0
    %2498 = vmatpush1.bf16.msra.mxu0 0
    %2499 = vmatprep.subr.bf16.mxu0 0
    %2500 = vmatpush1.bf16.msra.mxu0 0
    %2501 = vmatprep.subr.bf16.mxu0 0
    %2502 = vmatpush1.bf16.msra.mxu0 0
    %2503 = vmatprep.subr.bf16.mxu0 0
    %2504 = vmatpush1.bf16.msra.mxu0 0
    %2505 = vmatprep.subr.bf16.mxu0 0
    %2506 = vmatpush1.bf16.msra.mxu0 0
    %2507 = vmatprep.subr.bf16.mxu0 0
    %2508 = vmatpush1.bf16.msra.mxu0 0
    %2509 = vmatprep.subr.bf16.mxu0 0
    %2510 = vmatpush1.bf16.msra.mxu0 0
    %2511 = vmatprep.subr.bf16.mxu0 0
    %2512 = vmatpush1.bf16.msra.mxu0 0
    %2513 = vmatprep.mubr.bf16.mxu0 0
    %2514 = vmatmul.mubr.bf16.gmra.mrb[0].mxu0 %v2409
    %v2515 = vpop.f32.mrb[0].mxu0
    %v2516 = vadd.f32 0.0, %v2515
    %v2517 = vpop.f32.mrb[0].mxu0
    %v2518 = vpop.f32.mrb[0].mxu0
    %v2519 = vadd.f32 0.0, %v2518
    %v2520 = vpop.f32.mrb[0].mxu0
    %2521 = vmatprep.mubr.bf16.mxu0 0
    %2522 = vmatmul.mubr.bf16.gmra.mrb[0].mxu0 %v2410
    %v2523 = vpop.f32.mrb[0].mxu0
    %v2524 = vadd.f32 0.0, %v2523
    %v2525 = vpop.f32.mrb[0].mxu0
    %v2526 = vpop.f32.mrb[0].mxu0
    %v2527 = vadd.f32 0.0, %v2526
    %v2528 = vpop.f32.mrb[0].mxu0
    %2529 = vmatprep.mubr.bf16.mxu0 0
    %2530 = vmatmul.mubr.bf16.gmra.mrb[0].mxu0 %v2411
    %v2531 = vpop.f32.mrb[0].mxu0
    %v2532 = vadd.f32 0.0, %v2531
    %v2533 = vpop.f32.mrb[0].mxu0
    %v2534 = vpop.f32.mrb[0].mxu0
    %v2535 = vadd.f32 0.0, %v2534
    %v2536 = vpop.f32.mrb[0].mxu0
    %2537 = vmatprep.mubr.bf16.mxu0 0
    %2538 = vmatmul.mubr.bf16.gmra.mrb[0].mxu0 %v2412
    %v2539 = vpop.f32.mrb[0].mxu0
    %v2540 = vadd.f32 0.0, %v2539
    %v2541 = vpop.f32.mrb[0].mxu0
    %v2542 = vpop.f32.mrb[0].mxu0
    %v2543 = vadd.f32 0.0, %v2542
    %v2544 = vpop.f32.mrb[0].mxu0
    %2545 = vmatprep.mubr.bf16.mxu0 0
    %2546 = vmatmul.mubr.bf16.gmra.mrb[0].mxu0 %v2413
    %v2547 = vpop.f32.mrb[0].mxu0
    %v2548 = vadd.f32 0.0, %v2547
    %v2549 = vpop.f32.mrb[0].mxu0
    %v2550 = vpop.f32.mrb[0].mxu0
    %v2551 = vadd.f32 0.0, %v2550
    %v2552 = vpop.f32.mrb[0].mxu0
    %2553 = vmatprep.mubr.bf16.mxu0 0
    %2554 = vmatmul.mubr.bf16.gmra.mrb[0].mxu0 %v2414
    %v2555 = vpop.f32.mrb[0].mxu0
    %v2556 = vadd.f32 0.0, %v2555
    %v2557 = vpop.f32.mrb[0].mxu0
    %v2558 = vpop.f32.mrb[0].mxu0
    %v2559 = vadd.f32 0.0, %v2558
    %v2560 = vpop.f32.mrb[0].mxu0
    %2561 = vmatprep.mubr.bf16.mxu0 0
    %2562 = vmatmul.mubr.bf16.gmra.mrb[0].mxu0 %v2415
    %v2563 = vpop.f32.mrb[0].mxu0
    %v2564 = vadd.f32 0.0, %v2563
    %v2565 = vpop.f32.mrb[0].mxu0
    %v2566 = vpop.f32.mrb[0].mxu0
    %v2567 = vadd.f32 0.0, %v2566
    %v2568 = vpop.f32.mrb[0].mxu0
    %2569 = vmatprep.mubr.bf16.mxu0 0
    %2570 = vmatmul.mubr.bf16.gmra.mrb[0].mxu0 %v2416
    %v2571 = vpop.f32.mrb[0].mxu0
    %v2572 = vadd.f32 0.0, %v2571
    %v2573 = vpop.f32.mrb[0].mxu0
    %v2574 = vpop.f32.mrb[0].mxu0
    %v2575 = vadd.f32 0.0, %v2574
    %v2576 = vpop.f32.mrb[0].mxu0
    %2577 = vdwg.mxu0
    %vm2578 = vcmp.ge.f32.partialorder %v2516, 0.0
    %vm2579 = vcmp.ge.f32.partialorder %v2519, 0.0
    %vm2580 = vcmp.ge.f32.partialorder %v2524, 0.0
    %vm2581 = vcmp.ge.f32.partialorder %v2527, 0.0
    %vm2582 = vcmp.ge.f32.partialorder %v2532, 0.0
    %vm2583 = vcmp.ge.f32.partialorder %v2535, 0.0
    %vm2584 = vcmp.ge.f32.partialorder %v2540, 0.0
    %vm2585 = vcmp.ge.f32.partialorder %v2543, 0.0
    %vm2586 = vcmp.ge.f32.partialorder %v2548, 0.0
    %vm2587 = vcmp.ge.f32.partialorder %v2551, 0.0
    %vm2588 = vcmp.ge.f32.partialorder %v2556, 0.0
    %vm2589 = vcmp.ge.f32.partialorder %v2559, 0.0
    %vm2590 = vcmp.ge.f32.partialorder %v2564, 0.0
    %vm2591 = vcmp.ge.f32.partialorder %v2567, 0.0
    %vm2592 = vcmp.ge.f32.partialorder %v2572, 0.0
    %vm2593 = vcmp.ge.f32.partialorder %v2575, 0.0
    %v2594 = vstv %s2033
    %v2595 = vmul.f32 %v2594, %v2516
    %v2596 = vmul.f32 %v2594, %v2519
    %v2597 = vmul.f32 %v2594, %v2524
    %v2598 = vmul.f32 %v2594, %v2527
    %v2599 = vmul.f32 %v2594, %v2532
    %v2600 = vmul.f32 %v2594, %v2535
    %v2601 = vmul.f32 %v2594, %v2540
    %v2602 = vmul.f32 %v2594, %v2543
    %v2603 = vmul.f32 %v2594, %v2548
    %v2604 = vmul.f32 %v2594, %v2551
    %v2605 = vmul.f32 %v2594, %v2556
    %v2606 = vmul.f32 %v2594, %v2559
    %v2607 = vmul.f32 %v2594, %v2564
    %v2608 = vmul.f32 %v2594, %v2567
    %v2609 = vmul.f32 %v2594, %v2572
    %v2610 = vmul.f32 %v2594, %v2575
    %v2611 = vsel %vm2578, %v2516, %v2595
    %v2612 = vsel %vm2579, %v2519, %v2596
    %v2613 = vsel %vm2580, %v2524, %v2597
    %v2614 = vsel %vm2581, %v2527, %v2598
    %v2615 = vsel %vm2582, %v2532, %v2599
    %v2616 = vsel %vm2583, %v2535, %v2600
    %v2617 = vsel %vm2584, %v2540, %v2601
    %v2618 = vsel %vm2585, %v2543, %v2602
    %v2619 = vsel %vm2586, %v2548, %v2603
    %v2620 = vsel %vm2587, %v2551, %v2604
    %v2621 = vsel %vm2588, %v2556, %v2605
    %v2622 = vsel %vm2589, %v2559, %v2606
    %v2623 = vsel %vm2590, %v2564, %v2607
    %v2624 = vsel %vm2591, %v2567, %v2608
    %v2625 = vsel %vm2592, %v2572, %v2609
    %v2626 = vsel %vm2593, %v2575, %v2610
    %v2627 = vpack.c.bf16 %v2612, %v2611
    %v2628 = vpack.c.bf16 %v2614, %v2613
    %v2629 = vpack.c.bf16 %v2616, %v2615
    %v2630 = vpack.c.bf16 %v2618, %v2617
    %v2631 = vpack.c.bf16 %v2620, %v2619
    %v2632 = vpack.c.bf16 %v2622, %v2621
    %v2633 = vpack.c.bf16 %v2624, %v2623
    %v2634 = vpack.c.bf16 %v2626, %v2625
    %v2635 = vld [vmem:[%s41] sm:$0xf]
    %v2636 = vld [vmem:[%s41 + $0x4] sm:$0xf]
    %v2637 = vld [vmem:[%s41 + $0x8] sm:$0xf]
    %v2638 = vld [vmem:[%s41 + $0xc] sm:$0xf]
    %v2639 = vld [vmem:[%s41 + $0x10] sm:$0xf]
    %v2640 = vld [vmem:[%s41 + $0x14] sm:$0xf]
    %v2641 = vld [vmem:[%s41 + $0x18] sm:$0xf]
    %v2642 = vld [vmem:[%s41 + $0x1c] sm:$0xf]
    %v2643 = vld [vmem:[%s41 + $0x20] sm:$0xf]
    %v2644 = vld [vmem:[%s41 + $0x24] sm:$0xf]
    %v2645 = vld [vmem:[%s41 + $0x28] sm:$0xf]
    %v2646 = vld [vmem:[%s41 + $0x2c] sm:$0xf]
    %v2647 = vld [vmem:[%s41 + $0x30] sm:$0xf]
    %v2648 = vld [vmem:[%s41 + $0x34] sm:$0xf]
    %v2649 = vld [vmem:[%s41 + $0x38] sm:$0xf]
    %v2650 = vld [vmem:[%s41 + $0x3c] sm:$0xf]
    %v2651 = vld [vmem:[%s43] sm:$0x1]
    %v2653 = vlaneseq
    %v2654 = vshrl.u32 %v2653, 7
    %v2655 = vsub.s32 0, %v2654
    %v2656 = vrot.slane %v2651, %v2655
    %v2674 = vunpack.c.l.b16 %v2635
    %v2675 = vunpack.c.l.b16 %v2636
    %v2676 = vunpack.c.l.b16 %v2637
    %v2677 = vunpack.c.l.b16 %v2638
    %v2678 = vunpack.c.l.b16 %v2639
    %v2679 = vunpack.c.l.b16 %v2640
    %v2680 = vunpack.c.l.b16 %v2641
    %v2681 = vunpack.c.l.b16 %v2642
    %v2682 = vunpack.c.l.b16 %v2643
    %v2683 = vunpack.c.l.b16 %v2644
    %v2684 = vunpack.c.l.b16 %v2645
    %v2685 = vunpack.c.l.b16 %v2646
    %v2686 = vunpack.c.l.b16 %v2647
    %v2687 = vunpack.c.l.b16 %v2648
    %v2688 = vunpack.c.l.b16 %v2649
    %v2689 = vunpack.c.l.b16 %v2650
    %v2690 = vpack.c.b16 %v2675, %v2674
    %v2691 = vpack.c.b16 %v2677, %v2676
    %v2692 = vpack.c.b16 %v2679, %v2678
    %v2693 = vpack.c.b16 %v2681, %v2680
    %v2694 = vpack.c.b16 %v2683, %v2682
    %v2695 = vpack.c.b16 %v2685, %v2684
    %v2696 = vpack.c.b16 %v2687, %v2686
    %v2697 = vpack.c.b16 %v2689, %v2688
    %2706 = vmatprep.subr.bf16.mxu0 0
    %2707 = vmatpush1.bf16.msra.mxu0 %v2690
    %2708 = vmatprep.subr.bf16.mxu0 0
    %2709 = vmatpush1.bf16.msra.mxu0 %v2691
    %2710 = vmatprep.subr.bf16.mxu0 0
    %2711 = vmatpush1.bf16.msra.mxu0 %v2692
    %2712 = vmatprep.subr.bf16.mxu0 0
    %2713 = vmatpush1.bf16.msra.mxu0 %v2693
    %2714 = vmatprep.subr.bf16.mxu0 0
    %2715 = vmatpush1.bf16.msra.mxu0 %v2694
    %2716 = vmatprep.subr.bf16.mxu0 0
    %2717 = vmatpush1.bf16.msra.mxu0 %v2695
    %2718 = vmatprep.subr.bf16.mxu0 0
    %2719 = vmatpush1.bf16.msra.mxu0 %v2696
    %2720 = vmatprep.subr.bf16.mxu0 0
    %2721 = vmatpush1.bf16.msra.mxu0 %v2697
    %2722 = vmatprep.subr.bf16.mxu0 0
    %2723 = vmatpush1.bf16.msra.mxu0 0
    %2724 = vmatprep.subr.bf16.mxu0 0
    %2725 = vmatpush1.bf16.msra.mxu0 0
    %2726 = vmatprep.subr.bf16.mxu0 0
    %2727 = vmatpush1.bf16.msra.mxu0 0
    %2728 = vmatprep.subr.bf16.mxu0 0
    %2729 = vmatpush1.bf16.msra.mxu0 0
    %2730 = vmatprep.subr.bf16.mxu0 0
    %2731 = vmatpush1.bf16.msra.mxu0 0
    %2732 = vmatprep.subr.bf16.mxu0 0
    %2733 = vmatpush1.bf16.msra.mxu0 0
    %2734 = vmatprep.subr.bf16.mxu0 0
    %2735 = vmatpush1.bf16.msra.mxu0 0
    %2736 = vmatprep.subr.bf16.mxu0 0
    %2737 = vmatpush1.bf16.msra.mxu0 0
    %2738 = vmatprep.mubr.bf16.mxu0 0
    %2739 = vmatmul.mubr.bf16.gmra.mrb[0].mxu0 %v2627
    %v2740 = vpop.f32.mrb[0].mxu0
    %v2741 = vadd.f32 %v2656, %v2740
    %v2742 = vpop.f32.mrb[0].mxu0
    %v2743 = vpop.f32.mrb[0].mxu0
    %v2744 = vadd.f32 %v2656, %v2743
    %v2745 = vpop.f32.mrb[0].mxu0
    %2746 = vmatprep.mubr.bf16.mxu0 0
    %2747 = vmatmul.mubr.bf16.gmra.mrb[0].mxu0 %v2628
    %v2748 = vpop.f32.mrb[0].mxu0
    %v2749 = vadd.f32 %v2656, %v2748
    %v2750 = vpop.f32.mrb[0].mxu0
    %v2751 = vpop.f32.mrb[0].mxu0
    %v2752 = vadd.f32 %v2656, %v2751
    %v2753 = vpop.f32.mrb[0].mxu0
    %2754 = vmatprep.mubr.bf16.mxu0 0
    %2755 = vmatmul.mubr.bf16.gmra.mrb[0].mxu0 %v2629
    %v2756 = vpop.f32.mrb[0].mxu0
    %v2757 = vadd.f32 %v2656, %v2756
    %v2758 = vpop.f32.mrb[0].mxu0
    %v2759 = vpop.f32.mrb[0].mxu0
    %v2760 = vadd.f32 %v2656, %v2759
    %v2761 = vpop.f32.mrb[0].mxu0
    %2762 = vmatprep.mubr.bf16.mxu0 0
    %2763 = vmatmul.mubr.bf16.gmra.mrb[0].mxu0 %v2630
    %v2764 = vpop.f32.mrb[0].mxu0
    %v2765 = vadd.f32 %v2656, %v2764
    %v2766 = vpop.f32.mrb[0].mxu0
    %v2767 = vpop.f32.mrb[0].mxu0
    %v2768 = vadd.f32 %v2656, %v2767
    %v2769 = vpop.f32.mrb[0].mxu0
    %2770 = vmatprep.mubr.bf16.mxu0 0
    %2771 = vmatmul.mubr.bf16.gmra.mrb[0].mxu0 %v2631
    %v2772 = vpop.f32.mrb[0].mxu0
    %v2773 = vadd.f32 %v2656, %v2772
    %v2774 = vpop.f32.mrb[0].mxu0
    %v2775 = vpop.f32.mrb[0].mxu0
    %v2776 = vadd.f32 %v2656, %v2775
    %v2777 = vpop.f32.mrb[0].mxu0
    %2778 = vmatprep.mubr.bf16.mxu0 0
    %2779 = vmatmul.mubr.bf16.gmra.mrb[0].mxu0 %v2632
    %v2780 = vpop.f32.mrb[0].mxu0
    %v2781 = vadd.f32 %v2656, %v2780
    %v2782 = vpop.f32.mrb[0].mxu0
    %v2783 = vpop.f32.mrb[0].mxu0
    %v2784 = vadd.f32 %v2656, %v2783
    %v2785 = vpop.f32.mrb[0].mxu0
    %2786 = vmatprep.mubr.bf16.mxu0 0
    %2787 = vmatmul.mubr.bf16.gmra.mrb[0].mxu0 %v2633
    %v2788 = vpop.f32.mrb[0].mxu0
    %v2789 = vadd.f32 %v2656, %v2788
    %v2790 = vpop.f32.mrb[0].mxu0
    %v2791 = vpop.f32.mrb[0].mxu0
    %v2792 = vadd.f32 %v2656, %v2791
    %v2793 = vpop.f32.mrb[0].mxu0
    %2794 = vmatprep.mubr.bf16.mxu0 0
    %2795 = vmatmul.mubr.bf16.gmra.mrb[0].mxu0 %v2634
    %v2796 = vpop.f32.mrb[0].mxu0
    %v2797 = vadd.f32 %v2656, %v2796
    %v2798 = vpop.f32.mrb[0].mxu0
    %v2799 = vpop.f32.mrb[0].mxu0
    %v2800 = vadd.f32 %v2656, %v2799
    %v2801 = vpop.f32.mrb[0].mxu0
    %2802 = vdwg.mxu0
    %v2803 = vpack.c.bf16 %v1972, %v1969
    %v2804 = vpack.c.bf16 %v1980, %v1977
    %v2805 = vpack.c.bf16 %v1988, %v1985
    %v2806 = vpack.c.bf16 %v1996, %v1993
    %v2807 = vpack.c.bf16 %v2004, %v2001
    %v2808 = vpack.c.bf16 %v2012, %v2009
    %v2809 = vpack.c.bf16 %v2020, %v2017
    %v2810 = vpack.c.bf16 %v2028, %v2025
    %v2811 = vpack.c.bf16 %v2744, %v2741
    %v2812 = vpack.c.bf16 %v2752, %v2749
    %v2813 = vpack.c.bf16 %v2760, %v2757
    %v2814 = vpack.c.bf16 %v2768, %v2765
    %v2815 = vpack.c.bf16 %v2776, %v2773
    %v2816 = vpack.c.bf16 %v2784, %v2781
    %v2817 = vpack.c.bf16 %v2792, %v2789
    %v2818 = vpack.c.bf16 %v2800, %v2797
    %v2819 = vlaneseq
    %v2820 = vand.u32 %v2819, 127
    %v2821 = vld [vmem:[%s5] sm:$0xff]
    %v2822 = vld [vmem:[%s5 + $0x8] sm:$0xff]
    %v2823 = vld [vmem:[%s5 + $0x10] sm:$0xff]
    %v2824 = vld [vmem:[%s5 + $0x18] sm:$0xff]
    %v2825 = vld [vmem:[%s5 + $0x20] sm:$0xff]
    %v2826 = vld [vmem:[%s5 + $0x28] sm:$0xff]
    %v2827 = vld [vmem:[%s5 + $0x30] sm:$0xff]
    %v2828 = vld [vmem:[%s5 + $0x38] sm:$0xff]
    %v2829 = vld [vmem:[%s5 + $0x40] sm:$0xff]
    %v2830 = vld [vmem:[%s5 + $0x48] sm:$0xff]
    %v2831 = vld [vmem:[%s5 + $0x50] sm:$0xff]
    %v2832 = vld [vmem:[%s5 + $0x58] sm:$0xff]
    %v2833 = vld [vmem:[%s5 + $0x60] sm:$0xff]
    %v2834 = vld [vmem:[%s5 + $0x68] sm:$0xff]
    %v2835 = vld [vmem:[%s5 + $0x70] sm:$0xff]
    %v2836 = vld [vmem:[%s5 + $0x78] sm:$0xff]
    %v2837 = vld [vmem:[%s5 + $0x80] sm:$0xff]
    %v2838 = vld [vmem:[%s5 + $0x88] sm:$0xff]
    %v2839 = vld [vmem:[%s5 + $0x90] sm:$0xff]
    %v2840 = vld [vmem:[%s5 + $0x98] sm:$0xff]
    %v2841 = vld [vmem:[%s5 + $0xa0] sm:$0xff]
    %v2842 = vld [vmem:[%s5 + $0xa8] sm:$0xff]
    %v2843 = vld [vmem:[%s5 + $0xb0] sm:$0xff]
    %v2844 = vld [vmem:[%s5 + $0xb8] sm:$0xff]
    %v2845 = vld [vmem:[%s5 + $0xc0] sm:$0xff]
    %v2846 = vld [vmem:[%s5 + $0xc8] sm:$0xff]
    %v2847 = vld [vmem:[%s5 + $0xd0] sm:$0xff]
    %v2848 = vld [vmem:[%s5 + $0xd8] sm:$0xff]
    %v2849 = vld [vmem:[%s5 + $0xe0] sm:$0xff]
    %v2850 = vld [vmem:[%s5 + $0xe8] sm:$0xff]
    %v2851 = vld [vmem:[%s5 + $0xf0] sm:$0xff]
    %v2852 = vld [vmem:[%s5 + $0xf8] sm:$0xff]
    %2853 = vset.pattern.permute.xlu0 0
    %2854 = vperm.xlu0 %2853, %v2821
    %v2855 = vpop.permute.xlu0 %2854
    %2856 = vset.pattern.permute.xlu0 0
    %2857 = vperm.xlu0 %2856, %v2822
    %v2858 = vpop.permute.xlu0 %2857
    %2859 = vset.pattern.permute.xlu0 0
    %2860 = vperm.xlu0 %2859, %v2823
    %v2861 = vpop.permute.xlu0 %2860
    %2862 = vset.pattern.permute.xlu0 0
    %2863 = vperm.xlu0 %2862, %v2824
    %v2864 = vpop.permute.xlu0 %2863
    %2865 = vset.pattern.permute.xlu0 0
    %2866 = vperm.xlu0 %2865, %v2825
    %v2867 = vpop.permute.xlu0 %2866
    %2868 = vset.pattern.permute.xlu0 0
    %2869 = vperm.xlu0 %2868, %v2826
    %v2870 = vpop.permute.xlu0 %2869
    %2871 = vset.pattern.permute.xlu0 0
    %2872 = vperm.xlu0 %2871, %v2827
    %v2873 = vpop.permute.xlu0 %2872
    %2874 = vset.pattern.permute.xlu0 0
    %2875 = vperm.xlu0 %2874, %v2828
    %v2876 = vpop.permute.xlu0 %2875
    %2877 = vset.pattern.permute.xlu0 0
    %2878 = vperm.xlu0 %2877, %v2829
    %v2879 = vpop.permute.xlu0 %2878
    %2880 = vset.pattern.permute.xlu0 0
    %2881 = vperm.xlu0 %2880, %v2830
    %v2882 = vpop.permute.xlu0 %2881
    %2883 = vset.pattern.permute.xlu0 0
    %2884 = vperm.xlu0 %2883, %v2831
    %v2885 = vpop.permute.xlu0 %2884
    %2886 = vset.pattern.permute.xlu0 0
    %2887 = vperm.xlu0 %2886, %v2832
    %v2888 = vpop.permute.xlu0 %2887
    %2889 = vset.pattern.permute.xlu0 0
    %2890 = vperm.xlu0 %2889, %v2833
    %v2891 = vpop.permute.xlu0 %2890
    %2892 = vset.pattern.permute.xlu0 0
    %2893 = vperm.xlu0 %2892, %v2834
    %v2894 = vpop.permute.xlu0 %2893
    %2895 = vset.pattern.permute.xlu0 0
    %2896 = vperm.xlu0 %2895, %v2835
    %v2897 = vpop.permute.xlu0 %2896
    %2898 = vset.pattern.permute.xlu0 0
    %2899 = vperm.xlu0 %2898, %v2836
    %v2900 = vpop.permute.xlu0 %2899
    %2901 = vset.pattern.permute.xlu0 0
    %2902 = vperm.xlu0 %2901, %v2837
    %v2903 = vpop.permute.xlu0 %2902
    %2904 = vset.pattern.permute.xlu0 0
    %2905 = vperm.xlu0 %2904, %v2838
    %v2906 = vpop.permute.xlu0 %2905
    %2907 = vset.pattern.permute.xlu0 0
    %2908 = vperm.xlu0 %2907, %v2839
    %v2909 = vpop.permute.xlu0 %2908
    %2910 = vset.pattern.permute.xlu0 0
    %2911 = vperm.xlu0 %2910, %v2840
    %v2912 = vpop.permute.xlu0 %2911
    %2913 = vset.pattern.permute.xlu0 0
    %2914 = vperm.xlu0 %2913, %v2841
    %v2915 = vpop.permute.xlu0 %2914
    %2916 = vset.pattern.permute.xlu0 0
    %2917 = vperm.xlu0 %2916, %v2842
    %v2918 = vpop.permute.xlu0 %2917
    %2919 = vset.pattern.permute.xlu0 0
    %2920 = vperm.xlu0 %2919, %v2843
    %v2921 = vpop.permute.xlu0 %2920
    %2922 = vset.pattern.permute.xlu0 0
    %2923 = vperm.xlu0 %2922, %v2844
    %v2924 = vpop.permute.xlu0 %2923
    %2925 = vset.pattern.permute.xlu0 0
    %2926 = vperm.xlu0 %2925, %v2845
    %v2927 = vpop.permute.xlu0 %2926
    %2928 = vset.pattern.permute.xlu0 0
    %2929 = vperm.xlu0 %2928, %v2846
    %v2930 = vpop.permute.xlu0 %2929
    %2931 = vset.pattern.permute.xlu0 0
    %2932 = vperm.xlu0 %2931, %v2847
    %v2933 = vpop.permute.xlu0 %2932
    %2934 = vset.pattern.permute.xlu0 0
    %2935 = vperm.xlu0 %2934, %v2848
    %v2936 = vpop.permute.xlu0 %2935
    %2937 = vset.pattern.permute.xlu0 0
    %2938 = vperm.xlu0 %2937, %v2849
    %v2939 = vpop.permute.xlu0 %2938
    %2940 = vset.pattern.permute.xlu0 0
    %2941 = vperm.xlu0 %2940, %v2850
    %v2942 = vpop.permute.xlu0 %2941
    %2943 = vset.pattern.permute.xlu0 0
    %2944 = vperm.xlu0 %2943, %v2851
    %v2945 = vpop.permute.xlu0 %2944
    %2946 = vset.pattern.permute.xlu0 0
    %2947 = vperm.xlu0 %2946, %v2852
    %v2948 = vpop.permute.xlu0 %2947
    %vm2949 = vcmp.eq.s32.totalorder %v2820, %v2855
    %vm2950 = vcmp.eq.s32.totalorder %v2820, %v2858
    %vm2951 = vcmp.eq.s32.totalorder %v2820, %v2861
    %vm2952 = vcmp.eq.s32.totalorder %v2820, %v2864
    %vm2953 = vcmp.eq.s32.totalorder %v2820, %v2867
    %vm2954 = vcmp.eq.s32.totalorder %v2820, %v2870
    %vm2955 = vcmp.eq.s32.totalorder %v2820, %v2873
    %vm2956 = vcmp.eq.s32.totalorder %v2820, %v2876
    %vm2957 = vcmp.eq.s32.totalorder %v2820, %v2879
    %vm2958 = vcmp.eq.s32.totalorder %v2820, %v2882
    %vm2959 = vcmp.eq.s32.totalorder %v2820, %v2885
    %vm2960 = vcmp.eq.s32.totalorder %v2820, %v2888
    %vm2961 = vcmp.eq.s32.totalorder %v2820, %v2891
    %vm2962 = vcmp.eq.s32.totalorder %v2820, %v2894
    %vm2963 = vcmp.eq.s32.totalorder %v2820, %v2897
    %vm2964 = vcmp.eq.s32.totalorder %v2820, %v2900
    %vm2965 = vcmp.eq.s32.totalorder %v2820, %v2903
    %vm2966 = vcmp.eq.s32.totalorder %v2820, %v2906
    %vm2967 = vcmp.eq.s32.totalorder %v2820, %v2909
    %vm2968 = vcmp.eq.s32.totalorder %v2820, %v2912
    %vm2969 = vcmp.eq.s32.totalorder %v2820, %v2915
    %vm2970 = vcmp.eq.s32.totalorder %v2820, %v2918
    %vm2971 = vcmp.eq.s32.totalorder %v2820, %v2921
    %vm2972 = vcmp.eq.s32.totalorder %v2820, %v2924
    %vm2973 = vcmp.eq.s32.totalorder %v2820, %v2927
    %vm2974 = vcmp.eq.s32.totalorder %v2820, %v2930
    %vm2975 = vcmp.eq.s32.totalorder %v2820, %v2933
    %vm2976 = vcmp.eq.s32.totalorder %v2820, %v2936
    %vm2977 = vcmp.eq.s32.totalorder %v2820, %v2939
    %vm2978 = vcmp.eq.s32.totalorder %v2820, %v2942
    %vm2979 = vcmp.eq.s32.totalorder %v2820, %v2945
    %vm2980 = vcmp.eq.s32.totalorder %v2820, %v2948
    %v2981 = vsel %vm2949, 1, 0
    %v2982 = vsel %vm2950, 1, 0
    %v2983 = vsel %vm2951, 1, 0
    %v2984 = vsel %vm2952, 1, 0
    %v2985 = vsel %vm2953, 1, 0
    %v2986 = vsel %vm2954, 1, 0
    %v2987 = vsel %vm2955, 1, 0
    %v2988 = vsel %vm2956, 1, 0
    %v2989 = vsel %vm2957, 1, 0
    %v2990 = vsel %vm2958, 1, 0
    %v2991 = vsel %vm2959, 1, 0
    %v2992 = vsel %vm2960, 1, 0
    %v2993 = vsel %vm2961, 1, 0
    %v2994 = vsel %vm2962, 1, 0
    %v2995 = vsel %vm2963, 1, 0
    %v2996 = vsel %vm2964, 1, 0
    %v2997 = vsel %vm2965, 1, 0
    %v2998 = vsel %vm2966, 1, 0
    %v2999 = vsel %vm2967, 1, 0
    %v3000 = vsel %vm2968, 1, 0
    %v3001 = vsel %vm2969, 1, 0
    %v3002 = vsel %vm2970, 1, 0
    %v3003 = vsel %vm2971, 1, 0
    %v3004 = vsel %vm2972, 1, 0
    %v3005 = vsel %vm2973, 1, 0
    %v3006 = vsel %vm2974, 1, 0
    %v3007 = vsel %vm2975, 1, 0
    %v3008 = vsel %vm2976, 1, 0
    %v3009 = vsel %vm2977, 1, 0
    %v3010 = vsel %vm2978, 1, 0
    %v3011 = vsel %vm2979, 1, 0
    %v3012 = vsel %vm2980, 1, 0
    %v3013 = vcvt.s32.f32 %v2981
    %v3014 = vcvt.s32.f32 %v2982
    %v3015 = vcvt.s32.f32 %v2983
    %v3016 = vcvt.s32.f32 %v2984
    %v3017 = vcvt.s32.f32 %v2985
    %v3018 = vcvt.s32.f32 %v2986
    %v3019 = vcvt.s32.f32 %v2987
    %v3020 = vcvt.s32.f32 %v2988
    %v3021 = vcvt.s32.f32 %v2989
    %v3022 = vcvt.s32.f32 %v2990
    %v3023 = vcvt.s32.f32 %v2991
    %v3024 = vcvt.s32.f32 %v2992
    %v3025 = vcvt.s32.f32 %v2993
    %v3026 = vcvt.s32.f32 %v2994
    %v3027 = vcvt.s32.f32 %v2995
    %v3028 = vcvt.s32.f32 %v2996
    %v3029 = vcvt.s32.f32 %v2997
    %v3030 = vcvt.s32.f32 %v2998
    %v3031 = vcvt.s32.f32 %v2999
    %v3032 = vcvt.s32.f32 %v3000
    %v3033 = vcvt.s32.f32 %v3001
    %v3034 = vcvt.s32.f32 %v3002
    %v3035 = vcvt.s32.f32 %v3003
    %v3036 = vcvt.s32.f32 %v3004
    %v3037 = vcvt.s32.f32 %v3005
    %v3038 = vcvt.s32.f32 %v3006
    %v3039 = vcvt.s32.f32 %v3007
    %v3040 = vcvt.s32.f32 %v3008
    %v3041 = vcvt.s32.f32 %v3009
    %v3042 = vcvt.s32.f32 %v3010
    %v3043 = vcvt.s32.f32 %v3011
    %v3044 = vcvt.s32.f32 %v3012
    %v3045 = vpack.c.bf16 %v3014, %v3013
    %v3046 = vpack.c.bf16 %v3016, %v3015
    %v3047 = vpack.c.bf16 %v3018, %v3017
    %v3048 = vpack.c.bf16 %v3020, %v3019
    %v3049 = vpack.c.bf16 %v3022, %v3021
    %v3050 = vpack.c.bf16 %v3024, %v3023
    %v3051 = vpack.c.bf16 %v3026, %v3025
    %v3052 = vpack.c.bf16 %v3028, %v3027
    %v3053 = vpack.c.bf16 %v3030, %v3029
    %v3054 = vpack.c.bf16 %v3032, %v3031
    %v3055 = vpack.c.bf16 %v3034, %v3033
    %v3056 = vpack.c.bf16 %v3036, %v3035
    %v3057 = vpack.c.bf16 %v3038, %v3037
    %v3058 = vpack.c.bf16 %v3040, %v3039
    %v3059 = vpack.c.bf16 %v3042, %v3041
    %v3060 = vpack.c.bf16 %v3044, %v3043
    %3061 = vxpose.xlu0.b32.start [1/16] %v3013, 128
    %3062 = vxpose.xlu0.b32.cont [2/16] %v3014, 128
    %3063 = vxpose.xlu0.b32.cont [3/16] %v3015, 128
    %3064 = vxpose.xlu0.b32.cont [4/16] %v3016, 128
    %3065 = vxpose.xlu0.b32.cont [5/16] %v3017, 128
    %3066 = vxpose.xlu0.b32.cont [6/16] %v3018, 128
    %3067 = vxpose.xlu0.b32.cont [7/16] %v3019, 128
    %3068 = vxpose.xlu0.b32.cont [8/16] %v3020, 128
    %3069 = vxpose.xlu0.b32.cont [9/16] %v3021, 128
    %3070 = vxpose.xlu0.b32.cont [10/16] %v3022, 128
    %3071 = vxpose.xlu0.b32.cont [11/16] %v3023, 128
    %3072 = vxpose.xlu0.b32.cont [12/16] %v3024, 128
    %3073 = vxpose.xlu0.b32.cont [13/16] %v3025, 128
    %3074 = vxpose.xlu0.b32.cont [14/16] %v3026, 128
    %3075 = vxpose.xlu0.b32.cont [15/16] %v3027, 128
    %3076 = vxpose.xlu0.b32.end [16/16] %v3028, 128
    %v3077 = vpop.trf.xlu0
    %v3078 = vpop.trf.xlu0
    %v3079 = vpop.trf.xlu0
    %v3080 = vpop.trf.xlu0
    %v3081 = vpop.trf.xlu0
    %v3082 = vpop.trf.xlu0
    %v3083 = vpop.trf.xlu0
    %v3084 = vpop.trf.xlu0
    %v3085 = vpop.trf.xlu0
    %v3086 = vpop.trf.xlu0
    %v3087 = vpop.trf.xlu0
    %v3088 = vpop.trf.xlu0
    %v3089 = vpop.trf.xlu0
    %v3090 = vpop.trf.xlu0
    %v3091 = vpop.trf.xlu0
    %v3092 = vpop.trf.xlu0
    %v3093 = vpack.c.bf16 %v3078, %v3077
    %v3094 = vpack.c.bf16 %v3080, %v3079
    %v3095 = vpack.c.bf16 %v3082, %v3081
    %v3096 = vpack.c.bf16 %v3084, %v3083
    %v3097 = vpack.c.bf16 %v3086, %v3085
    %v3098 = vpack.c.bf16 %v3088, %v3087
    %v3099 = vpack.c.bf16 %v3090, %v3089
    %v3100 = vpack.c.bf16 %v3092, %v3091
    %v3101 = vmul.f32 %v1165, %v373
    %v3102 = vmul.f32 %v1168, %v374
    %v3103 = vmul.f32 %v1173, %v375
    %v3104 = vmul.f32 %v1176, %v376
    %v3105 = vmul.f32 %v1181, %v377
    %v3106 = vmul.f32 %v1184, %v378
    %v3107 = vmul.f32 %v1189, %v379
    %v3108 = vmul.f32 %v1192, %v380
    %v3109 = vmul.f32 %v1197, %v381
    %v3110 = vmul.f32 %v1200, %v382
    %v3111 = vmul.f32 %v1205, %v383
    %v3112 = vmul.f32 %v1208, %v384
    %v3113 = vmul.f32 %v1213, %v385
    %v3114 = vmul.f32 %v1216, %v386
    %v3115 = vmul.f32 %v1221, %v387
    %v3116 = vmul.f32 %v1224, %v388
    %v3117 = vadd.f32 %v3101, %v3102
    %v3118 = vadd.f32 %v3117, %v3103
    %v3119 = vadd.f32 %v3118, %v3104
    %v3120 = vadd.f32 %v3119, %v3105
    %v3121 = vadd.f32 %v3120, %v3106
    %v3122 = vadd.f32 %v3121, %v3107
    %v3123 = vadd.f32 %v3122, %v3108
    %v3124 = vadd.f32 %v3123, %v3109
    %v3125 = vadd.f32 %v3124, %v3110
    %v3126 = vadd.f32 %v3125, %v3111
    %v3127 = vadd.f32 %v3126, %v3112
    %v3128 = vadd.f32 %v3127, %v3113
    %v3129 = vadd.f32 %v3128, %v3114
    %v3130 = vadd.f32 %v3129, %v3115
    %v3131 = vadd.f32 %v3130, %v3116
    %v3132 = vrot.slane %v3131, 4
    %v3133 = vadd.f32 %v3131, %v3132
    %v3134 = vrot.slane %v3133, 2
    %v3135 = vadd.f32 %v3133, %v3134
    %v3136 = vrot.slane %v3135, 1
    %v3137 = vadd.f32 %v3135, %v3136
    %v3138 = vmul.f32 %v3137, 0.0625
    %v3139 = vld [vmem:[%s61] sm:$0x1]
    %v3140 = vmul.f32 %v3139, %v3138
    %v3142 = vlaneseq
    %v3143 = vshrl.u32 %v3142, 7
    %v3144 = vsub.s32 0, %v3143
    %v3145 = vrot.slane %v3140, %v3144
    %v3147 = vsub.f32 %v1165, %v3145
    %v3148 = vsub.f32 %v1168, %v3145
    %v3149 = vsub.f32 %v1173, %v3145
    %v3150 = vsub.f32 %v1176, %v3145
    %v3151 = vsub.f32 %v1181, %v3145
    %v3152 = vsub.f32 %v1184, %v3145
    %v3153 = vsub.f32 %v1189, %v3145
    %v3154 = vsub.f32 %v1192, %v3145
    %v3155 = vsub.f32 %v1197, %v3145
    %v3156 = vsub.f32 %v1200, %v3145
    %v3157 = vsub.f32 %v1205, %v3145
    %v3158 = vsub.f32 %v1208, %v3145
    %v3159 = vsub.f32 %v1213, %v3145
    %v3160 = vsub.f32 %v1216, %v3145
    %v3161 = vsub.f32 %v1221, %v3145
    %v3162 = vsub.f32 %v1224, %v3145
    %v3163 = vmul.f32 %v3147, %v3147
    %v3164 = vmul.f32 %v3148, %v3148
    %v3165 = vmul.f32 %v3149, %v3149
    %v3166 = vmul.f32 %v3150, %v3150
    %v3167 = vmul.f32 %v3151, %v3151
    %v3168 = vmul.f32 %v3152, %v3152
    %v3169 = vmul.f32 %v3153, %v3153
    %v3170 = vmul.f32 %v3154, %v3154
    %v3171 = vmul.f32 %v3155, %v3155
    %v3172 = vmul.f32 %v3156, %v3156
    %v3173 = vmul.f32 %v3157, %v3157
    %v3174 = vmul.f32 %v3158, %v3158
    %v3175 = vmul.f32 %v3159, %v3159
    %v3176 = vmul.f32 %v3160, %v3160
    %v3177 = vmul.f32 %v3161, %v3161
    %v3178 = vmul.f32 %v3162, %v3162
    %v3179 = vmul.f32 %v3163, %v373
    %v3180 = vmul.f32 %v3164, %v374
    %v3181 = vmul.f32 %v3165, %v375
    %v3182 = vmul.f32 %v3166, %v376
    %v3183 = vmul.f32 %v3167, %v377
    %v3184 = vmul.f32 %v3168, %v378
    %v3185 = vmul.f32 %v3169, %v379
    %v3186 = vmul.f32 %v3170, %v380
    %v3187 = vmul.f32 %v3171, %v381
    %v3188 = vmul.f32 %v3172, %v382
    %v3189 = vmul.f32 %v3173, %v383
    %v3190 = vmul.f32 %v3174, %v384
    %v3191 = vmul.f32 %v3175, %v385
    %v3192 = vmul.f32 %v3176, %v386
    %v3193 = vmul.f32 %v3177, %v387
    %v3194 = vmul.f32 %v3178, %v388
    %v3195 = vadd.f32 %v3179, %v3180
    %v3196 = vadd.f32 %v3195, %v3181
    %v3197 = vadd.f32 %v3196, %v3182
    %v3198 = vadd.f32 %v3197, %v3183
    %v3199 = vadd.f32 %v3198, %v3184
    %v3200 = vadd.f32 %v3199, %v3185
    %v3201 = vadd.f32 %v3200, %v3186
    %v3202 = vadd.f32 %v3201, %v3187
    %v3203 = vadd.f32 %v3202, %v3188
    %v3204 = vadd.f32 %v3203, %v3189
    %v3205 = vadd.f32 %v3204, %v3190
    %v3206 = vadd.f32 %v3205, %v3191
    %v3207 = vadd.f32 %v3206, %v3192
    %v3208 = vadd.f32 %v3207, %v3193
    %v3209 = vadd.f32 %v3208, %v3194
    %v3210 = vrot.slane %v3209, 4
    %v3211 = vadd.f32 %v3209, %v3210
    %v3212 = vrot.slane %v3211, 2
    %v3213 = vadd.f32 %v3211, %v3212
    %v3214 = vrot.slane %v3213, 1
    %v3215 = vadd.f32 %v3213, %v3214
    %v3216 = vmul.f32 %v3215, 0.0625
    %v3217 = vadd.f32 %v3216, 1e-05
    %v3218 = vrsqrt.pop %v3217
    %v3219 = vmul.f32 %v3147, %v3218
    %v3220 = vmul.f32 %v3148, %v3218
    %v3221 = vmul.f32 %v3149, %v3218
    %v3222 = vmul.f32 %v3150, %v3218
    %v3223 = vmul.f32 %v3151, %v3218
    %v3224 = vmul.f32 %v3152, %v3218
    %v3225 = vmul.f32 %v3153, %v3218
    %v3226 = vmul.f32 %v3154, %v3218
    %v3227 = vmul.f32 %v3155, %v3218
    %v3228 = vmul.f32 %v3156, %v3218
    %v3229 = vmul.f32 %v3157, %v3218
    %v3230 = vmul.f32 %v3158, %v3218
    %v3231 = vmul.f32 %v3159, %v3218
    %v3232 = vmul.f32 %v3160, %v3218
    %v3233 = vmul.f32 %v3161, %v3218
    %v3234 = vmul.f32 %v3162, %v3218
    %v3235 = vld [vmem:[%s57] sm:$0x1]
    %v3237 = vlaneseq
    %v3238 = vshrl.u32 %v3237, 7
    %v3239 = vsub.s32 0, %v3238
    %v3240 = vrot.slane %v3235, %v3239
    %v3242 = vmul.f32 %v3219, %v3240
    %v3243 = vmul.f32 %v3220, %v3240
    %v3244 = vmul.f32 %v3221, %v3240
    %v3245 = vmul.f32 %v3222, %v3240
    %v3246 = vmul.f32 %v3223, %v3240
    %v3247 = vmul.f32 %v3224, %v3240
    %v3248 = vmul.f32 %v3225, %v3240
    %v3249 = vmul.f32 %v3226, %v3240
    %v3250 = vmul.f32 %v3227, %v3240
    %v3251 = vmul.f32 %v3228, %v3240
    %v3252 = vmul.f32 %v3229, %v3240
    %v3253 = vmul.f32 %v3230, %v3240
    %v3254 = vmul.f32 %v3231, %v3240
    %v3255 = vmul.f32 %v3232, %v3240
    %v3256 = vmul.f32 %v3233, %v3240
    %v3257 = vmul.f32 %v3234, %v3240
    %v3258 = vld [vmem:[%s59] sm:$0x1]
    %v3260 = vlaneseq
    %v3261 = vshrl.u32 %v3260, 7
    %v3262 = vsub.s32 0, %v3261
    %v3263 = vrot.slane %v3258, %v3262
    %v3265 = vadd.f32 %v3242, %v3263
    %v3266 = vadd.f32 %v3243, %v3263
    %v3267 = vadd.f32 %v3244, %v3263
    %v3268 = vadd.f32 %v3245, %v3263
    %v3269 = vadd.f32 %v3246, %v3263
    %v3270 = vadd.f32 %v3247, %v3263
    %v3271 = vadd.f32 %v3248, %v3263
    %v3272 = vadd.f32 %v3249, %v3263
    %v3273 = vadd.f32 %v3250, %v3263
    %v3274 = vadd.f32 %v3251, %v3263
    %v3275 = vadd.f32 %v3252, %v3263
    %v3276 = vadd.f32 %v3253, %v3263
    %v3277 = vadd.f32 %v3254, %v3263
    %v3278 = vadd.f32 %v3255, %v3263
    %v3279 = vadd.f32 %v3256, %v3263
    %v3280 = vadd.f32 %v3257, %v3263
    %v3281 = vpack.c.bf16 %v3266, %v3265
    %v3282 = vpack.c.bf16 %v3268, %v3267
    %v3283 = vpack.c.bf16 %v3270, %v3269
    %v3284 = vpack.c.bf16 %v3272, %v3271
    %v3285 = vpack.c.bf16 %v3274, %v3273
    %v3286 = vpack.c.bf16 %v3276, %v3275
    %v3287 = vpack.c.bf16 %v3278, %v3277
    %v3288 = vpack.c.bf16 %v3280, %v3279
    %3289 = vmatprep.subr.bf16.mxu0 0
    %3290 = vmatpush1.bf16.msra.mxu0 %v3281
    %3291 = vmatprep.subr.bf16.mxu0 0
    %3292 = vmatpush1.bf16.msra.mxu0 %v3282
    %3293 = vmatprep.subr.bf16.mxu0 0
    %3294 = vmatpush1.bf16.msra.mxu0 %v3283
    %3295 = vmatprep.subr.bf16.mxu0 0
    %3296 = vmatpush1.bf16.msra.mxu0 %v3284
    %3297 = vmatprep.subr.bf16.mxu0 0
    %3298 = vmatpush1.bf16.msra.mxu0 %v3285
    %3299 = vmatprep.subr.bf16.mxu0 0
    %3300 = vmatpush1.bf16.msra.mxu0 %v3286
    %3301 = vmatprep.subr.bf16.mxu0 0
    %3302 = vmatpush1.bf16.msra.mxu0 %v3287
    %3303 = vmatprep.subr.bf16.mxu0 0
    %3304 = vmatpush1.bf16.msra.mxu0 %v3288
    %3305 = vmatprep.subr.bf16.mxu0 0
    %3306 = vmatpush1.bf16.msra.mxu0 0
    %3307 = vmatprep.subr.bf16.mxu0 0
    %3308 = vmatpush1.bf16.msra.mxu0 0
    %3309 = vmatprep.subr.bf16.mxu0 0
    %3310 = vmatpush1.bf16.msra.mxu0 0
    %3311 = vmatprep.subr.bf16.mxu0 0
    %3312 = vmatpush1.bf16.msra.mxu0 0
    %3313 = vmatprep.subr.bf16.mxu0 0
    %3314 = vmatpush1.bf16.msra.mxu0 0
    %3315 = vmatprep.subr.bf16.mxu0 0
    %3316 = vmatpush1.bf16.msra.mxu0 0
    %3317 = vmatprep.subr.bf16.mxu0 0
    %3318 = vmatpush1.bf16.msra.mxu0 0
    %3319 = vmatprep.subr.bf16.mxu0 0
    %3320 = vmatpush1.bf16.msra.mxu0 0
    %3321 = vmatprep.mubr.bf16.mxu0 0
    %3322 = vmatmul.mubr.bf16.gmra.mrb[0].mxu0 %v3045
    %v3323 = vpop.f32.mrb[0].mxu0
    %v3324 = vadd.f32 0.0, %v3323
    %v3325 = vpop.f32.mrb[0].mxu0
    %v3326 = vpop.f32.mrb[0].mxu0
    %v3327 = vadd.f32 0.0, %v3326
    %v3328 = vpop.f32.mrb[0].mxu0
    %3329 = vmatprep.mubr.bf16.mxu0 0
    %3330 = vmatmul.mubr.bf16.gmra.mrb[0].mxu0 %v3046
    %v3331 = vpop.f32.mrb[0].mxu0
    %v3332 = vadd.f32 0.0, %v3331
    %v3333 = vpop.f32.mrb[0].mxu0
    %v3334 = vpop.f32.mrb[0].mxu0
    %v3335 = vadd.f32 0.0, %v3334
    %v3336 = vpop.f32.mrb[0].mxu0
    %3337 = vmatprep.mubr.bf16.mxu0 0
    %3338 = vmatmul.mubr.bf16.gmra.mrb[0].mxu0 %v3047
    %v3339 = vpop.f32.mrb[0].mxu0
    %v3340 = vadd.f32 0.0, %v3339
    %v3341 = vpop.f32.mrb[0].mxu0
    %v3342 = vpop.f32.mrb[0].mxu0
    %v3343 = vadd.f32 0.0, %v3342
    %v3344 = vpop.f32.mrb[0].mxu0
    %3345 = vmatprep.mubr.bf16.mxu0 0
    %3346 = vmatmul.mubr.bf16.gmra.mrb[0].mxu0 %v3048
    %v3347 = vpop.f32.mrb[0].mxu0
    %v3348 = vadd.f32 0.0, %v3347
    %v3349 = vpop.f32.mrb[0].mxu0
    %v3350 = vpop.f32.mrb[0].mxu0
    %v3351 = vadd.f32 0.0, %v3350
    %v3352 = vpop.f32.mrb[0].mxu0
    %3353 = vmatprep.mubr.bf16.mxu0 0
    %3354 = vmatmul.mubr.bf16.gmra.mrb[0].mxu0 %v3049
    %v3355 = vpop.f32.mrb[0].mxu0
    %v3356 = vadd.f32 0.0, %v3355
    %v3357 = vpop.f32.mrb[0].mxu0
    %v3358 = vpop.f32.mrb[0].mxu0
    %v3359 = vadd.f32 0.0, %v3358
    %v3360 = vpop.f32.mrb[0].mxu0
    %3361 = vmatprep.mubr.bf16.mxu0 0
    %3362 = vmatmul.mubr.bf16.gmra.mrb[0].mxu0 %v3050
    %v3363 = vpop.f32.mrb[0].mxu0
    %v3364 = vadd.f32 0.0, %v3363
    %v3365 = vpop.f32.mrb[0].mxu0
    %v3366 = vpop.f32.mrb[0].mxu0
    %v3367 = vadd.f32 0.0, %v3366
    %v3368 = vpop.f32.mrb[0].mxu0
    %3369 = vmatprep.mubr.bf16.mxu0 0
    %3370 = vmatmul.mubr.bf16.gmra.mrb[0].mxu0 %v3051
    %v3371 = vpop.f32.mrb[0].mxu0
    %v3372 = vadd.f32 0.0, %v3371
    %v3373 = vpop.f32.mrb[0].mxu0
    %v3374 = vpop.f32.mrb[0].mxu0
    %v3375 = vadd.f32 0.0, %v3374
    %v3376 = vpop.f32.mrb[0].mxu0
    %3377 = vmatprep.mubr.bf16.mxu0 0
    %3378 = vmatmul.mubr.bf16.gmra.mrb[0].mxu0 %v3052
    %v3379 = vpop.f32.mrb[0].mxu0
    %v3380 = vadd.f32 0.0, %v3379
    %v3381 = vpop.f32.mrb[0].mxu0
    %v3382 = vpop.f32.mrb[0].mxu0
    %v3383 = vadd.f32 0.0, %v3382
    %v3384 = vpop.f32.mrb[0].mxu0
    %3385 = vmatprep.mubr.bf16.mxu0 0
    %3386 = vmatmul.mubr.bf16.gmra.mrb[0].mxu0 %v3053
    %v3387 = vpop.f32.mrb[0].mxu0
    %v3388 = vadd.f32 0.0, %v3387
    %v3389 = vpop.f32.mrb[0].mxu0
    %v3390 = vpop.f32.mrb[0].mxu0
    %v3391 = vadd.f32 0.0, %v3390
    %v3392 = vpop.f32.mrb[0].mxu0
    %3393 = vmatprep.mubr.bf16.mxu0 0
    %3394 = vmatmul.mubr.bf16.gmra.mrb[0].mxu0 %v3054
    %v3395 = vpop.f32.mrb[0].mxu0
    %v3396 = vadd.f32 0.0, %v3395
    %v3397 = vpop.f32.mrb[0].mxu0
    %v3398 = vpop.f32.mrb[0].mxu0
    %v3399 = vadd.f32 0.0, %v3398
    %v3400 = vpop.f32.mrb[0].mxu0
    %3401 = vmatprep.mubr.bf16.mxu0 0
    %3402 = vmatmul.mubr.bf16.gmra.mrb[0].mxu0 %v3055
    %v3403 = vpop.f32.mrb[0].mxu0
    %v3404 = vadd.f32 0.0, %v3403
    %v3405 = vpop.f32.mrb[0].mxu0
    %v3406 = vpop.f32.mrb[0].mxu0
    %v3407 = vadd.f32 0.0, %v3406
    %v3408 = vpop.f32.mrb[0].mxu0
    %3409 = vmatprep.mubr.bf16.mxu0 0
    %3410 = vmatmul.mubr.bf16.gmra.mrb[0].mxu0 %v3056
    %v3411 = vpop.f32.mrb[0].mxu0
    %v3412 = vadd.f32 0.0, %v3411
    %v3413 = vpop.f32.mrb[0].mxu0
    %v3414 = vpop.f32.mrb[0].mxu0
    %v3415 = vadd.f32 0.0, %v3414
    %v3416 = vpop.f32.mrb[0].mxu0
    %3417 = vmatprep.mubr.bf16.mxu0 0
    %3418 = vmatmul.mubr.bf16.gmra.mrb[0].mxu0 %v3057
    %v3419 = vpop.f32.mrb[0].mxu0
    %v3420 = vadd.f32 0.0, %v3419
    %v3421 = vpop.f32.mrb[0].mxu0
    %v3422 = vpop.f32.mrb[0].mxu0
    %v3423 = vadd.f32 0.0, %v3422
    %v3424 = vpop.f32.mrb[0].mxu0
    %3425 = vmatprep.mubr.bf16.mxu0 0
    %3426 = vmatmul.mubr.bf16.gmra.mrb[0].mxu0 %v3058
    %v3427 = vpop.f32.mrb[0].mxu0
    %v3428 = vadd.f32 0.0, %v3427
    %v3429 = vpop.f32.mrb[0].mxu0
    %v3430 = vpop.f32.mrb[0].mxu0
    %v3431 = vadd.f32 0.0, %v3430
    %v3432 = vpop.f32.mrb[0].mxu0
    %3433 = vmatprep.mubr.bf16.mxu0 0
    %3434 = vmatmul.mubr.bf16.gmra.mrb[0].mxu0 %v3059
    %v3435 = vpop.f32.mrb[0].mxu0
    %v3436 = vadd.f32 0.0, %v3435
    %v3437 = vpop.f32.mrb[0].mxu0
    %v3438 = vpop.f32.mrb[0].mxu0
    %v3439 = vadd.f32 0.0, %v3438
    %v3440 = vpop.f32.mrb[0].mxu0
    %3441 = vmatprep.mubr.bf16.mxu0 0
    %3442 = vmatmul.mubr.bf16.gmra.mrb[0].mxu0 %v3060
    %v3443 = vpop.f32.mrb[0].mxu0
    %v3444 = vadd.f32 0.0, %v3443
    %v3445 = vpop.f32.mrb[0].mxu0
    %v3446 = vpop.f32.mrb[0].mxu0
    %v3447 = vadd.f32 0.0, %v3446
    %v3448 = vpop.f32.mrb[0].mxu0
    %3449 = vdwg.mxu0
    %v3450 = vmul.f32 %v3324, %v3388
    %v3451 = vmul.f32 %v3327, %v3391
    %v3452 = vmul.f32 %v3332, %v3396
    %v3453 = vmul.f32 %v3335, %v3399
    %v3454 = vmul.f32 %v3340, %v3404
    %v3455 = vmul.f32 %v3343, %v3407
    %v3456 = vmul.f32 %v3348, %v3412
    %v3457 = vmul.f32 %v3351, %v3415
    %v3458 = vmul.f32 %v3356, %v3420
    %v3459 = vmul.f32 %v3359, %v3423
    %v3460 = vmul.f32 %v3364, %v3428
    %v3461 = vmul.f32 %v3367, %v3431
    %v3462 = vmul.f32 %v3372, %v3436
    %v3463 = vmul.f32 %v3375, %v3439
    %v3464 = vmul.f32 %v3380, %v3444
    %v3465 = vmul.f32 %v3383, %v3447
    %s3466 = sld [smem:[#allocation2 + $0xc]]
    %s3467 = sld [smem:[#allocation2 + $0xd]]
    %s3468 = sld [smem:[#allocation2 + $0xe]]
    %v3469 = vpack.c.bf16 %v3451, %v3450
    %v3470 = vpack.c.bf16 %v3453, %v3452
    %v3471 = vpack.c.bf16 %v3455, %v3454
    %v3472 = vpack.c.bf16 %v3457, %v3456
    %v3473 = vpack.c.bf16 %v3459, %v3458
    %v3474 = vpack.c.bf16 %v3461, %v3460
    %v3475 = vpack.c.bf16 %v3463, %v3462
    %v3476 = vpack.c.bf16 %v3465, %v3464
    %v3477 = vld [vmem:[%s63] sm:$0xf]
    %v3478 = vld [vmem:[%s63 + $0x4] sm:$0xf]
    %v3479 = vld [vmem:[%s63 + $0x8] sm:$0xf]
    %v3480 = vld [vmem:[%s63 + $0xc] sm:$0xf]
    %v3481 = vld [vmem:[%s63 + $0x10] sm:$0xf]
    %v3482 = vld [vmem:[%s63 + $0x14] sm:$0xf]
    %v3483 = vld [vmem:[%s63 + $0x18] sm:$0xf]
    %v3484 = vld [vmem:[%s63 + $0x1c] sm:$0xf]
    %v3485 = vld [vmem:[%s63 + $0x20] sm:$0xf]
    %v3486 = vld [vmem:[%s63 + $0x24] sm:$0xf]
    %v3487 = vld [vmem:[%s63 + $0x28] sm:$0xf]
    %v3488 = vld [vmem:[%s63 + $0x2c] sm:$0xf]
    %v3489 = vld [vmem:[%s63 + $0x30] sm:$0xf]
    %v3490 = vld [vmem:[%s63 + $0x34] sm:$0xf]
    %v3491 = vld [vmem:[%s63 + $0x38] sm:$0xf]
    %v3492 = vld [vmem:[%s63 + $0x3c] sm:$0xf]
    %v3493 = vld [vmem:[%s65] sm:$0xf]
    %v3494 = vld [vmem:[%s65 + $0x4] sm:$0xf]
    %v3495 = vld [vmem:[%s65 + $0x8] sm:$0xf]
    %v3496 = vld [vmem:[%s65 + $0xc] sm:$0xf]
    %v3497 = vld [vmem:[%s65 + $0x10] sm:$0xf]
    %v3498 = vld [vmem:[%s65 + $0x14] sm:$0xf]
    %v3499 = vld [vmem:[%s65 + $0x18] sm:$0xf]
    %v3500 = vld [vmem:[%s65 + $0x1c] sm:$0xf]
    %v3501 = vld [vmem:[%s65 + $0x20] sm:$0xf]
    %v3502 = vld [vmem:[%s65 + $0x24] sm:$0xf]
    %v3503 = vld [vmem:[%s65 + $0x28] sm:$0xf]
    %v3504 = vld [vmem:[%s65 + $0x2c] sm:$0xf]
    %v3505 = vld [vmem:[%s65 + $0x30] sm:$0xf]
    %v3506 = vld [vmem:[%s65 + $0x34] sm:$0xf]
    %v3507 = vld [vmem:[%s65 + $0x38] sm:$0xf]
    %v3508 = vld [vmem:[%s65 + $0x3c] sm:$0xf]
    %v3525 = vunpack.c.l.b16 %v3493
    %v3526 = vunpack.c.l.b16 %v3494
    %v3527 = vunpack.c.l.b16 %v3495
    %v3528 = vunpack.c.l.b16 %v3496
    %v3529 = vunpack.c.l.b16 %v3497
    %v3530 = vunpack.c.l.b16 %v3498
    %v3531 = vunpack.c.l.b16 %v3499
    %v3532 = vunpack.c.l.b16 %v3500
    %v3533 = vunpack.c.l.b16 %v3501
    %v3534 = vunpack.c.l.b16 %v3502
    %v3535 = vunpack.c.l.b16 %v3503
    %v3536 = vunpack.c.l.b16 %v3504
    %v3537 = vunpack.c.l.b16 %v3505
    %v3538 = vunpack.c.l.b16 %v3506
    %v3539 = vunpack.c.l.b16 %v3507
    %v3540 = vunpack.c.l.b16 %v3508
    %v3541 = vpack.c.b16 %v3526, %v3525
    %v3542 = vpack.c.b16 %v3528, %v3527
    %v3543 = vpack.c.b16 %v3530, %v3529
    %v3544 = vpack.c.b16 %v3532, %v3531
    %v3545 = vpack.c.b16 %v3534, %v3533
    %v3546 = vpack.c.b16 %v3536, %v3535
    %v3547 = vpack.c.b16 %v3538, %v3537
    %v3548 = vpack.c.b16 %v3540, %v3539
    %3557 = vmatprep.subr.bf16.mxu0 0
    %3558 = vmatpush1.bf16.msra.mxu0 %v3541
    %3559 = vmatprep.subr.bf16.mxu0 0
    %3560 = vmatpush1.bf16.msra.mxu0 %v3542
    %3561 = vmatprep.subr.bf16.mxu0 0
    %3562 = vmatpush1.bf16.msra.mxu0 %v3543
    %3563 = vmatprep.subr.bf16.mxu0 0
    %3564 = vmatpush1.bf16.msra.mxu0 %v3544
    %3565 = vmatprep.subr.bf16.mxu0 0
    %3566 = vmatpush1.bf16.msra.mxu0 %v3545
    %3567 = vmatprep.subr.bf16.mxu0 0
    %3568 = vmatpush1.bf16.msra.mxu0 %v3546
    %3569 = vmatprep.subr.bf16.mxu0 0
    %3570 = vmatpush1.bf16.msra.mxu0 %v3547
    %3571 = vmatprep.subr.bf16.mxu0 0
    %3572 = vmatpush1.bf16.msra.mxu0 %v3548
    %3573 = vmatprep.subr.bf16.mxu0 0
    %3574 = vmatpush1.bf16.msra.mxu0 0
    %3575 = vmatprep.subr.bf16.mxu0 0
    %3576 = vmatpush1.bf16.msra.mxu0 0
    %3577 = vmatprep.subr.bf16.mxu0 0
    %3578 = vmatpush1.bf16.msra.mxu0 0
    %3579 = vmatprep.subr.bf16.mxu0 0
    %3580 = vmatpush1.bf16.msra.mxu0 0
    %3581 = vmatprep.subr.bf16.mxu0 0
    %3582 = vmatpush1.bf16.msra.mxu0 0
    %3583 = vmatprep.subr.bf16.mxu0 0
    %3584 = vmatpush1.bf16.msra.mxu0 0
    %3585 = vmatprep.subr.bf16.mxu0 0
    %3586 = vmatpush1.bf16.msra.mxu0 0
    %3587 = vmatprep.subr.bf16.mxu0 0
    %3588 = vmatpush1.bf16.msra.mxu0 0
    %3589 = vmatprep.mubr.bf16.mxu0 0
    %3590 = vmatmul.mubr.bf16.gmra.mrb[0].mxu0 %v2803
    %v3591 = vpop.f32.mrb[0].mxu0
    %v3592 = vadd.f32 0.0, %v3591
    %v3593 = vpop.f32.mrb[0].mxu0
    %v3594 = vpop.f32.mrb[0].mxu0
    %v3595 = vadd.f32 0.0, %v3594
    %v3596 = vpop.f32.mrb[0].mxu0
    %3597 = vmatprep.mubr.bf16.mxu0 0
    %3598 = vmatmul.mubr.bf16.gmra.mrb[0].mxu0 %v2804
    %v3599 = vpop.f32.mrb[0].mxu0
    %v3600 = vadd.f32 0.0, %v3599
    %v3601 = vpop.f32.mrb[0].mxu0
    %v3602 = vpop.f32.mrb[0].mxu0
    %v3603 = vadd.f32 0.0, %v3602
    %v3604 = vpop.f32.mrb[0].mxu0
    %3605 = vmatprep.mubr.bf16.mxu0 0
    %3606 = vmatmul.mubr.bf16.gmra.mrb[0].mxu0 %v2805
    %v3607 = vpop.f32.mrb[0].mxu0
    %v3608 = vadd.f32 0.0, %v3607
    %v3609 = vpop.f32.mrb[0].mxu0
    %v3610 = vpop.f32.mrb[0].mxu0
    %v3611 = vadd.f32 0.0, %v3610
    %v3612 = vpop.f32.mrb[0].mxu0
    %3613 = vmatprep.mubr.bf16.mxu0 0
    %3614 = vmatmul.mubr.bf16.gmra.mrb[0].mxu0 %v2806
    %v3615 = vpop.f32.mrb[0].mxu0
    %v3616 = vadd.f32 0.0, %v3615
    %v3617 = vpop.f32.mrb[0].mxu0
    %v3618 = vpop.f32.mrb[0].mxu0
    %v3619 = vadd.f32 0.0, %v3618
    %v3620 = vpop.f32.mrb[0].mxu0
    %3621 = vmatprep.mubr.bf16.mxu0 0
    %3622 = vmatmul.mubr.bf16.gmra.mrb[0].mxu0 %v2807
    %v3623 = vpop.f32.mrb[0].mxu0
    %v3624 = vadd.f32 0.0, %v3623
    %v3625 = vpop.f32.mrb[0].mxu0
    %v3626 = vpop.f32.mrb[0].mxu0
    %v3627 = vadd.f32 0.0, %v3626
    %v3628 = vpop.f32.mrb[0].mxu0
    %3629 = vmatprep.mubr.bf16.mxu0 0
    %3630 = vmatmul.mubr.bf16.gmra.mrb[0].mxu0 %v2808
    %v3631 = vpop.f32.mrb[0].mxu0
    %v3632 = vadd.f32 0.0, %v3631
    %v3633 = vpop.f32.mrb[0].mxu0
    %v3634 = vpop.f32.mrb[0].mxu0
    %v3635 = vadd.f32 0.0, %v3634
    %v3636 = vpop.f32.mrb[0].mxu0
    %3637 = vmatprep.mubr.bf16.mxu0 0
    %3638 = vmatmul.mubr.bf16.gmra.mrb[0].mxu0 %v2809
    %v3639 = vpop.f32.mrb[0].mxu0
    %v3640 = vadd.f32 0.0, %v3639
    %v3641 = vpop.f32.mrb[0].mxu0
    %v3642 = vpop.f32.mrb[0].mxu0
    %v3643 = vadd.f32 0.0, %v3642
    %v3644 = vpop.f32.mrb[0].mxu0
    %3645 = vmatprep.mubr.bf16.mxu0 0
    %3646 = vmatmul.mubr.bf16.gmra.mrb[0].mxu0 %v2810
    %v3647 = vpop.f32.mrb[0].mxu0
    %v3648 = vadd.f32 0.0, %v3647
    %v3649 = vpop.f32.mrb[0].mxu0
    %v3650 = vpop.f32.mrb[0].mxu0
    %v3651 = vadd.f32 0.0, %v3650
    %v3652 = vpop.f32.mrb[0].mxu0
    %3653 = vdwg.mxu0
    %v3670 = vunpack.c.l.b16 %v3477
    %v3671 = vunpack.c.l.b16 %v3478
    %v3672 = vunpack.c.l.b16 %v3479
    %v3673 = vunpack.c.l.b16 %v3480
    %v3674 = vunpack.c.l.b16 %v3481
    %v3675 = vunpack.c.l.b16 %v3482
    %v3676 = vunpack.c.l.b16 %v3483
    %v3677 = vunpack.c.l.b16 %v3484
    %v3678 = vunpack.c.l.b16 %v3485
    %v3679 = vunpack.c.l.b16 %v3486
    %v3680 = vunpack.c.l.b16 %v3487
    %v3681 = vunpack.c.l.b16 %v3488
    %v3682 = vunpack.c.l.b16 %v3489
    %v3683 = vunpack.c.l.b16 %v3490
    %v3684 = vunpack.c.l.b16 %v3491
    %v3685 = vunpack.c.l.b16 %v3492
    %v3686 = vpack.c.b16 %v3671, %v3670
    %v3687 = vpack.c.b16 %v3673, %v3672
    %v3688 = vpack.c.b16 %v3675, %v3674
    %v3689 = vpack.c.b16 %v3677, %v3676
    %v3690 = vpack.c.b16 %v3679, %v3678
    %v3691 = vpack.c.b16 %v3681, %v3680
    %v3692 = vpack.c.b16 %v3683, %v3682
    %v3693 = vpack.c.b16 %v3685, %v3684
    %3702 = vmatprep.subr.bf16.mxu0 0
    %3703 = vmatpush1.bf16.msra.mxu0 %v3686
    %3704 = vmatprep.subr.bf16.mxu0 0
    %3705 = vmatpush1.bf16.msra.mxu0 %v3687
    %3706 = vmatprep.subr.bf16.mxu0 0
    %3707 = vmatpush1.bf16.msra.mxu0 %v3688
    %3708 = vmatprep.subr.bf16.mxu0 0
    %3709 = vmatpush1.bf16.msra.mxu0 %v3689
    %3710 = vmatprep.subr.bf16.mxu0 0
    %3711 = vmatpush1.bf16.msra.mxu0 %v3690
    %3712 = vmatprep.subr.bf16.mxu0 0
    %3713 = vmatpush1.bf16.msra.mxu0 %v3691
    %3714 = vmatprep.subr.bf16.mxu0 0
    %3715 = vmatpush1.bf16.msra.mxu0 %v3692
    %3716 = vmatprep.subr.bf16.mxu0 0
    %3717 = vmatpush1.bf16.msra.mxu0 %v3693
    %3718 = vmatprep.subr.bf16.mxu0 0
    %3719 = vmatpush1.bf16.msra.mxu0 0
    %3720 = vmatprep.subr.bf16.mxu0 0
    %3721 = vmatpush1.bf16.msra.mxu0 0
    %3722 = vmatprep.subr.bf16.mxu0 0
    %3723 = vmatpush1.bf16.msra.mxu0 0
    %3724 = vmatprep.subr.bf16.mxu0 0
    %3725 = vmatpush1.bf16.msra.mxu0 0
    %3726 = vmatprep.subr.bf16.mxu0 0
    %3727 = vmatpush1.bf16.msra.mxu0 0
    %3728 = vmatprep.subr.bf16.mxu0 0
    %3729 = vmatpush1.bf16.msra.mxu0 0
    %3730 = vmatprep.subr.bf16.mxu0 0
    %3731 = vmatpush1.bf16.msra.mxu0 0
    %3732 = vmatprep.subr.bf16.mxu0 0
    %3733 = vmatpush1.bf16.msra.mxu0 0
    %3734 = vmatprep.mubr.bf16.mxu0 0
    %3735 = vmatmul.mubr.bf16.gmra.mrb[0].mxu0 %v3469
    %v3736 = vpop.f32.mrb[0].mxu0
    %v3737 = vadd.f32 %v3592, %v3736
    %v3738 = vpop.f32.mrb[0].mxu0
    %v3739 = vpop.f32.mrb[0].mxu0
    %v3740 = vadd.f32 %v3595, %v3739
    %v3741 = vpop.f32.mrb[0].mxu0
    %3742 = vmatprep.mubr.bf16.mxu0 0
    %3743 = vmatmul.mubr.bf16.gmra.mrb[0].mxu0 %v3470
    %v3744 = vpop.f32.mrb[0].mxu0
    %v3745 = vadd.f32 %v3600, %v3744
    %v3746 = vpop.f32.mrb[0].mxu0
    %v3747 = vpop.f32.mrb[0].mxu0
    %v3748 = vadd.f32 %v3603, %v3747
    %v3749 = vpop.f32.mrb[0].mxu0
    %3750 = vmatprep.mubr.bf16.mxu0 0
    %3751 = vmatmul.mubr.bf16.gmra.mrb[0].mxu0 %v3471
    %v3752 = vpop.f32.mrb[0].mxu0
    %v3753 = vadd.f32 %v3608, %v3752
    %v3754 = vpop.f32.mrb[0].mxu0
    %v3755 = vpop.f32.mrb[0].mxu0
    %v3756 = vadd.f32 %v3611, %v3755
    %v3757 = vpop.f32.mrb[0].mxu0
    %3758 = vmatprep.mubr.bf16.mxu0 0
    %3759 = vmatmul.mubr.bf16.gmra.mrb[0].mxu0 %v3472
    %v3760 = vpop.f32.mrb[0].mxu0
    %v3761 = vadd.f32 %v3616, %v3760
    %v3762 = vpop.f32.mrb[0].mxu0
    %v3763 = vpop.f32.mrb[0].mxu0
    %v3764 = vadd.f32 %v3619, %v3763
    %v3765 = vpop.f32.mrb[0].mxu0
    %3766 = vmatprep.mubr.bf16.mxu0 0
    %3767 = vmatmul.mubr.bf16.gmra.mrb[0].mxu0 %v3473
    %v3768 = vpop.f32.mrb[0].mxu0
    %v3769 = vadd.f32 %v3624, %v3768
    %v3770 = vpop.f32.mrb[0].mxu0
    %v3771 = vpop.f32.mrb[0].mxu0
    %v3772 = vadd.f32 %v3627, %v3771
    %v3773 = vpop.f32.mrb[0].mxu0
    %3774 = vmatprep.mubr.bf16.mxu0 0
    %3775 = vmatmul.mubr.bf16.gmra.mrb[0].mxu0 %v3474
    %v3776 = vpop.f32.mrb[0].mxu0
    %v3777 = vadd.f32 %v3632, %v3776
    %v3778 = vpop.f32.mrb[0].mxu0
    %v3779 = vpop.f32.mrb[0].mxu0
    %v3780 = vadd.f32 %v3635, %v3779
    %v3781 = vpop.f32.mrb[0].mxu0
    %3782 = vmatprep.mubr.bf16.mxu0 0
    %3783 = vmatmul.mubr.bf16.gmra.mrb[0].mxu0 %v3475
    %v3784 = vpop.f32.mrb[0].mxu0
    %v3785 = vadd.f32 %v3640, %v3784
    %v3786 = vpop.f32.mrb[0].mxu0
    %v3787 = vpop.f32.mrb[0].mxu0
    %v3788 = vadd.f32 %v3643, %v3787
    %v3789 = vpop.f32.mrb[0].mxu0
    %3790 = vmatprep.mubr.bf16.mxu0 0
    %3791 = vmatmul.mubr.bf16.gmra.mrb[0].mxu0 %v3476
    %v3792 = vpop.f32.mrb[0].mxu0
    %v3793 = vadd.f32 %v3648, %v3792
    %v3794 = vpop.f32.mrb[0].mxu0
    %v3795 = vpop.f32.mrb[0].mxu0
    %v3796 = vadd.f32 %v3651, %v3795
    %v3797 = vpop.f32.mrb[0].mxu0
    %3798 = vdwg.mxu0
    %v3799 = vld [vmem:[%s67] sm:$0x1]
    %v3801 = vlaneseq
    %v3802 = vshrl.u32 %v3801, 7
    %v3803 = vsub.s32 0, %v3802
    %v3804 = vrot.slane %v3799, %v3803
    %v3806 = vadd.f32 %v3737, %v3804
    %v3807 = vadd.f32 %v3740, %v3804
    %v3808 = vadd.f32 %v3745, %v3804
    %v3809 = vadd.f32 %v3748, %v3804
    %v3810 = vadd.f32 %v3753, %v3804
    %v3811 = vadd.f32 %v3756, %v3804
    %v3812 = vadd.f32 %v3761, %v3804
    %v3813 = vadd.f32 %v3764, %v3804
    %v3814 = vadd.f32 %v3769, %v3804
    %v3815 = vadd.f32 %v3772, %v3804
    %v3816 = vadd.f32 %v3777, %v3804
    %v3817 = vadd.f32 %v3780, %v3804
    %v3818 = vadd.f32 %v3785, %v3804
    %v3819 = vadd.f32 %v3788, %v3804
    %v3820 = vadd.f32 %v3793, %v3804
    %v3821 = vadd.f32 %v3796, %v3804
    %vm3822 = vcmp.ge.f32.partialorder %v3806, 0.0
    %vm3823 = vcmp.ge.f32.partialorder %v3807, 0.0
    %vm3824 = vcmp.ge.f32.partialorder %v3808, 0.0
    %vm3825 = vcmp.ge.f32.partialorder %v3809, 0.0
    %vm3826 = vcmp.ge.f32.partialorder %v3810, 0.0
    %vm3827 = vcmp.ge.f32.partialorder %v3811, 0.0
    %vm3828 = vcmp.ge.f32.partialorder %v3812, 0.0
    %vm3829 = vcmp.ge.f32.partialorder %v3813, 0.0
    %vm3830 = vcmp.ge.f32.partialorder %v3814, 0.0
    %vm3831 = vcmp.ge.f32.partialorder %v3815, 0.0
    %vm3832 = vcmp.ge.f32.partialorder %v3816, 0.0
    %vm3833 = vcmp.ge.f32.partialorder %v3817, 0.0
    %vm3834 = vcmp.ge.f32.partialorder %v3818, 0.0
    %vm3835 = vcmp.ge.f32.partialorder %v3819, 0.0
    %vm3836 = vcmp.ge.f32.partialorder %v3820, 0.0
    %vm3837 = vcmp.ge.f32.partialorder %v3821, 0.0
    %v3838 = vstv %s3466
    %v3839 = vmul.f32 %v3838, %v3806
    %v3840 = vmul.f32 %v3838, %v3807
    %v3841 = vmul.f32 %v3838, %v3808
    %v3842 = vmul.f32 %v3838, %v3809
    %v3843 = vmul.f32 %v3838, %v3810
    %v3844 = vmul.f32 %v3838, %v3811
    %v3845 = vmul.f32 %v3838, %v3812
    %v3846 = vmul.f32 %v3838, %v3813
    %v3847 = vmul.f32 %v3838, %v3814
    %v3848 = vmul.f32 %v3838, %v3815
    %v3849 = vmul.f32 %v3838, %v3816
    %v3850 = vmul.f32 %v3838, %v3817
    %v3851 = vmul.f32 %v3838, %v3818
    %v3852 = vmul.f32 %v3838, %v3819
    %v3853 = vmul.f32 %v3838, %v3820
    %v3854 = vmul.f32 %v3838, %v3821
    %v3855 = vsel %vm3822, %v3806, %v3839
    %v3856 = vsel %vm3823, %v3807, %v3840
    %v3857 = vsel %vm3824, %v3808, %v3841
    %v3858 = vsel %vm3825, %v3809, %v3842
    %v3859 = vsel %vm3826, %v3810, %v3843
    %v3860 = vsel %vm3827, %v3811, %v3844
    %v3861 = vsel %vm3828, %v3812, %v3845
    %v3862 = vsel %vm3829, %v3813, %v3846
    %v3863 = vsel %vm3830, %v3814, %v3847
    %v3864 = vsel %vm3831, %v3815, %v3848
    %v3865 = vsel %vm3832, %v3816, %v3849
    %v3866 = vsel %vm3833, %v3817, %v3850
    %v3867 = vsel %vm3834, %v3818, %v3851
    %v3868 = vsel %vm3835, %v3819, %v3852
    %v3869 = vsel %vm3836, %v3820, %v3853
    %v3870 = vsel %vm3837, %v3821, %v3854
    %v3871 = vpack.c.bf16 %v3856, %v3855
    %v3872 = vpack.c.bf16 %v3858, %v3857
    %v3873 = vpack.c.bf16 %v3860, %v3859
    %v3874 = vpack.c.bf16 %v3862, %v3861
    %v3875 = vpack.c.bf16 %v3864, %v3863
    %v3876 = vpack.c.bf16 %v3866, %v3865
    %v3877 = vpack.c.bf16 %v3868, %v3867
    %v3878 = vpack.c.bf16 %v3870, %v3869
    %v3879 = vld [vmem:[%s69] sm:$0xf]
    %v3880 = vld [vmem:[%s69 + $0x4] sm:$0xf]
    %v3881 = vld [vmem:[%s69 + $0x8] sm:$0xf]
    %v3882 = vld [vmem:[%s69 + $0xc] sm:$0xf]
    %v3883 = vld [vmem:[%s69 + $0x10] sm:$0xf]
    %v3884 = vld [vmem:[%s69 + $0x14] sm:$0xf]
    %v3885 = vld [vmem:[%s69 + $0x18] sm:$0xf]
    %v3886 = vld [vmem:[%s69 + $0x1c] sm:$0xf]
    %v3887 = vld [vmem:[%s69 + $0x20] sm:$0xf]
    %v3888 = vld [vmem:[%s69 + $0x24] sm:$0xf]
    %v3889 = vld [vmem:[%s69 + $0x28] sm:$0xf]
    %v3890 = vld [vmem:[%s69 + $0x2c] sm:$0xf]
    %v3891 = vld [vmem:[%s69 + $0x30] sm:$0xf]
    %v3892 = vld [vmem:[%s69 + $0x34] sm:$0xf]
    %v3893 = vld [vmem:[%s69 + $0x38] sm:$0xf]
    %v3894 = vld [vmem:[%s69 + $0x3c] sm:$0xf]
    %v3911 = vunpack.c.l.b16 %v3879
    %v3912 = vunpack.c.l.b16 %v3880
    %v3913 = vunpack.c.l.b16 %v3881
    %v3914 = vunpack.c.l.b16 %v3882
    %v3915 = vunpack.c.l.b16 %v3883
    %v3916 = vunpack.c.l.b16 %v3884
    %v3917 = vunpack.c.l.b16 %v3885
    %v3918 = vunpack.c.l.b16 %v3886
    %v3919 = vunpack.c.l.b16 %v3887
    %v3920 = vunpack.c.l.b16 %v3888
    %v3921 = vunpack.c.l.b16 %v3889
    %v3922 = vunpack.c.l.b16 %v3890
    %v3923 = vunpack.c.l.b16 %v3891
    %v3924 = vunpack.c.l.b16 %v3892
    %v3925 = vunpack.c.l.b16 %v3893
    %v3926 = vunpack.c.l.b16 %v3894
    %v3927 = vpack.c.b16 %v3912, %v3911
    %v3928 = vpack.c.b16 %v3914, %v3913
    %v3929 = vpack.c.b16 %v3916, %v3915
    %v3930 = vpack.c.b16 %v3918, %v3917
    %v3931 = vpack.c.b16 %v3920, %v3919
    %v3932 = vpack.c.b16 %v3922, %v3921
    %v3933 = vpack.c.b16 %v3924, %v3923
    %v3934 = vpack.c.b16 %v3926, %v3925
    %3943 = vmatprep.subr.bf16.mxu0 0
    %3944 = vmatpush1.bf16.msra.mxu0 %v3927
    %3945 = vmatprep.subr.bf16.mxu0 0
    %3946 = vmatpush1.bf16.msra.mxu0 %v3928
    %3947 = vmatprep.subr.bf16.mxu0 0
    %3948 = vmatpush1.bf16.msra.mxu0 %v3929
    %3949 = vmatprep.subr.bf16.mxu0 0
    %3950 = vmatpush1.bf16.msra.mxu0 %v3930
    %3951 = vmatprep.subr.bf16.mxu0 0
    %3952 = vmatpush1.bf16.msra.mxu0 %v3931
    %3953 = vmatprep.subr.bf16.mxu0 0
    %3954 = vmatpush1.bf16.msra.mxu0 %v3932
    %3955 = vmatprep.subr.bf16.mxu0 0
    %3956 = vmatpush1.bf16.msra.mxu0 %v3933
    %3957 = vmatprep.subr.bf16.mxu0 0
    %3958 = vmatpush1.bf16.msra.mxu0 %v3934
    %3959 = vmatprep.subr.bf16.mxu0 0
    %3960 = vmatpush1.bf16.msra.mxu0 0
    %3961 = vmatprep.subr.bf16.mxu0 0
    %3962 = vmatpush1.bf16.msra.mxu0 0
    %3963 = vmatprep.subr.bf16.mxu0 0
    %3964 = vmatpush1.bf16.msra.mxu0 0
    %3965 = vmatprep.subr.bf16.mxu0 0
    %3966 = vmatpush1.bf16.msra.mxu0 0
    %3967 = vmatprep.subr.bf16.mxu0 0
    %3968 = vmatpush1.bf16.msra.mxu0 0
    %3969 = vmatprep.subr.bf16.mxu0 0
    %3970 = vmatpush1.bf16.msra.mxu0 0
    %3971 = vmatprep.subr.bf16.mxu0 0
    %3972 = vmatpush1.bf16.msra.mxu0 0
    %3973 = vmatprep.subr.bf16.mxu0 0
    %3974 = vmatpush1.bf16.msra.mxu0 0
    %3975 = vmatprep.mubr.bf16.mxu0 0
    %3976 = vmatmul.mubr.bf16.gmra.mrb[0].mxu0 %v3871
    %v3977 = vpop.f32.mrb[0].mxu0
    %v3978 = vadd.f32 0.0, %v3977
    %v3979 = vpop.f32.mrb[0].mxu0
    %v3980 = vpop.f32.mrb[0].mxu0
    %v3981 = vadd.f32 0.0, %v3980
    %v3982 = vpop.f32.mrb[0].mxu0
    %3983 = vmatprep.mubr.bf16.mxu0 0
    %3984 = vmatmul.mubr.bf16.gmra.mrb[0].mxu0 %v3872
    %v3985 = vpop.f32.mrb[0].mxu0
    %v3986 = vadd.f32 0.0, %v3985
    %v3987 = vpop.f32.mrb[0].mxu0
    %v3988 = vpop.f32.mrb[0].mxu0
    %v3989 = vadd.f32 0.0, %v3988
    %v3990 = vpop.f32.mrb[0].mxu0
    %3991 = vmatprep.mubr.bf16.mxu0 0
    %3992 = vmatmul.mubr.bf16.gmra.mrb[0].mxu0 %v3873
    %v3993 = vpop.f32.mrb[0].mxu0
    %v3994 = vadd.f32 0.0, %v3993
    %v3995 = vpop.f32.mrb[0].mxu0
    %v3996 = vpop.f32.mrb[0].mxu0
    %v3997 = vadd.f32 0.0, %v3996
    %v3998 = vpop.f32.mrb[0].mxu0
    %3999 = vmatprep.mubr.bf16.mxu0 0
    %4000 = vmatmul.mubr.bf16.gmra.mrb[0].mxu0 %v3874
    %v4001 = vpop.f32.mrb[0].mxu0
    %v4002 = vadd.f32 0.0, %v4001
    %v4003 = vpop.f32.mrb[0].mxu0
    %v4004 = vpop.f32.mrb[0].mxu0
    %v4005 = vadd.f32 0.0, %v4004
    %v4006 = vpop.f32.mrb[0].mxu0
    %4007 = vmatprep.mubr.bf16.mxu0 0
    %4008 = vmatmul.mubr.bf16.gmra.mrb[0].mxu0 %v3875
    %v4009 = vpop.f32.mrb[0].mxu0
    %v4010 = vadd.f32 0.0, %v4009
    %v4011 = vpop.f32.mrb[0].mxu0
    %v4012 = vpop.f32.mrb[0].mxu0
    %v4013 = vadd.f32 0.0, %v4012
    %v4014 = vpop.f32.mrb[0].mxu0
    %4015 = vmatprep.mubr.bf16.mxu0 0
    %4016 = vmatmul.mubr.bf16.gmra.mrb[0].mxu0 %v3876
    %v4017 = vpop.f32.mrb[0].mxu0
    %v4018 = vadd.f32 0.0, %v4017
    %v4019 = vpop.f32.mrb[0].mxu0
    %v4020 = vpop.f32.mrb[0].mxu0
    %v4021 = vadd.f32 0.0, %v4020
    %v4022 = vpop.f32.mrb[0].mxu0
    %4023 = vmatprep.mubr.bf16.mxu0 0
    %4024 = vmatmul.mubr.bf16.gmra.mrb[0].mxu0 %v3877
    %v4025 = vpop.f32.mrb[0].mxu0
    %v4026 = vadd.f32 0.0, %v4025
    %v4027 = vpop.f32.mrb[0].mxu0
    %v4028 = vpop.f32.mrb[0].mxu0
    %v4029 = vadd.f32 0.0, %v4028
    %v4030 = vpop.f32.mrb[0].mxu0
    %4031 = vmatprep.mubr.bf16.mxu0 0
    %4032 = vmatmul.mubr.bf16.gmra.mrb[0].mxu0 %v3878
    %v4033 = vpop.f32.mrb[0].mxu0
    %v4034 = vadd.f32 0.0, %v4033
    %v4035 = vpop.f32.mrb[0].mxu0
    %v4036 = vpop.f32.mrb[0].mxu0
    %v4037 = vadd.f32 0.0, %v4036
    %v4038 = vpop.f32.mrb[0].mxu0
    %4039 = vdwg.mxu0
    %vm4040 = vcmp.ge.f32.partialorder %v3978, 0.0
    %vm4041 = vcmp.ge.f32.partialorder %v3981, 0.0
    %vm4042 = vcmp.ge.f32.partialorder %v3986, 0.0
    %vm4043 = vcmp.ge.f32.partialorder %v3989, 0.0
    %vm4044 = vcmp.ge.f32.partialorder %v3994, 0.0
    %vm4045 = vcmp.ge.f32.partialorder %v3997, 0.0
    %vm4046 = vcmp.ge.f32.partialorder %v4002, 0.0
    %vm4047 = vcmp.ge.f32.partialorder %v4005, 0.0
    %vm4048 = vcmp.ge.f32.partialorder %v4010, 0.0
    %vm4049 = vcmp.ge.f32.partialorder %v4013, 0.0
    %vm4050 = vcmp.ge.f32.partialorder %v4018, 0.0
    %vm4051 = vcmp.ge.f32.partialorder %v4021, 0.0
    %vm4052 = vcmp.ge.f32.partialorder %v4026, 0.0
    %vm4053 = vcmp.ge.f32.partialorder %v4029, 0.0
    %vm4054 = vcmp.ge.f32.partialorder %v4034, 0.0
    %vm4055 = vcmp.ge.f32.partialorder %v4037, 0.0
    %v4056 = vstv %s3467
    %v4057 = vmul.f32 %v4056, %v3978
    %v4058 = vmul.f32 %v4056, %v3981
    %v4059 = vmul.f32 %v4056, %v3986
    %v4060 = vmul.f32 %v4056, %v3989
    %v4061 = vmul.f32 %v4056, %v3994
    %v4062 = vmul.f32 %v4056, %v3997
    %v4063 = vmul.f32 %v4056, %v4002
    %v4064 = vmul.f32 %v4056, %v4005
    %v4065 = vmul.f32 %v4056, %v4010
    %v4066 = vmul.f32 %v4056, %v4013
    %v4067 = vmul.f32 %v4056, %v4018
    %v4068 = vmul.f32 %v4056, %v4021
    %v4069 = vmul.f32 %v4056, %v4026
    %v4070 = vmul.f32 %v4056, %v4029
    %v4071 = vmul.f32 %v4056, %v4034
    %v4072 = vmul.f32 %v4056, %v4037
    %v4073 = vsel %vm4040, %v3978, %v4057
    %v4074 = vsel %vm4041, %v3981, %v4058
    %v4075 = vsel %vm4042, %v3986, %v4059
    %v4076 = vsel %vm4043, %v3989, %v4060
    %v4077 = vsel %vm4044, %v3994, %v4061
    %v4078 = vsel %vm4045, %v3997, %v4062
    %v4079 = vsel %vm4046, %v4002, %v4063
    %v4080 = vsel %vm4047, %v4005, %v4064
    %v4081 = vsel %vm4048, %v4010, %v4065
    %v4082 = vsel %vm4049, %v4013, %v4066
    %v4083 = vsel %vm4050, %v4018, %v4067
    %v4084 = vsel %vm4051, %v4021, %v4068
    %v4085 = vsel %vm4052, %v4026, %v4069
    %v4086 = vsel %vm4053, %v4029, %v4070
    %v4087 = vsel %vm4054, %v4034, %v4071
    %v4088 = vsel %vm4055, %v4037, %v4072
    %v4089 = vpack.c.bf16 %v4074, %v4073
    %v4090 = vpack.c.bf16 %v4076, %v4075
    %v4091 = vpack.c.bf16 %v4078, %v4077
    %v4092 = vpack.c.bf16 %v4080, %v4079
    %v4093 = vpack.c.bf16 %v4082, %v4081
    %v4094 = vpack.c.bf16 %v4084, %v4083
    %v4095 = vpack.c.bf16 %v4086, %v4085
    %v4096 = vpack.c.bf16 %v4088, %v4087
    %v4097 = vld [vmem:[%s71] sm:$0xf]
    %v4098 = vld [vmem:[%s71 + $0x4] sm:$0xf]
    %v4099 = vld [vmem:[%s71 + $0x8] sm:$0xf]
    %v4100 = vld [vmem:[%s71 + $0xc] sm:$0xf]
    %v4101 = vld [vmem:[%s71 + $0x10] sm:$0xf]
    %v4102 = vld [vmem:[%s71 + $0x14] sm:$0xf]
    %v4103 = vld [vmem:[%s71 + $0x18] sm:$0xf]
    %v4104 = vld [vmem:[%s71 + $0x1c] sm:$0xf]
    %v4105 = vld [vmem:[%s71 + $0x20] sm:$0xf]
    %v4106 = vld [vmem:[%s71 + $0x24] sm:$0xf]
    %v4107 = vld [vmem:[%s71 + $0x28] sm:$0xf]
    %v4108 = vld [vmem:[%s71 + $0x2c] sm:$0xf]
    %v4109 = vld [vmem:[%s71 + $0x30] sm:$0xf]
    %v4110 = vld [vmem:[%s71 + $0x34] sm:$0xf]
    %v4111 = vld [vmem:[%s71 + $0x38] sm:$0xf]
    %v4112 = vld [vmem:[%s71 + $0x3c] sm:$0xf]
    %v4129 = vunpack.c.l.b16 %v4097
    %v4130 = vunpack.c.l.b16 %v4098
    %v4131 = vunpack.c.l.b16 %v4099
    %v4132 = vunpack.c.l.b16 %v4100
    %v4133 = vunpack.c.l.b16 %v4101
    %v4134 = vunpack.c.l.b16 %v4102
    %v4135 = vunpack.c.l.b16 %v4103
    %v4136 = vunpack.c.l.b16 %v4104
    %v4137 = vunpack.c.l.b16 %v4105
    %v4138 = vunpack.c.l.b16 %v4106
    %v4139 = vunpack.c.l.b16 %v4107
    %v4140 = vunpack.c.l.b16 %v4108
    %v4141 = vunpack.c.l.b16 %v4109
    %v4142 = vunpack.c.l.b16 %v4110
    %v4143 = vunpack.c.l.b16 %v4111
    %v4144 = vunpack.c.l.b16 %v4112
    %v4145 = vpack.c.b16 %v4130, %v4129
    %v4146 = vpack.c.b16 %v4132, %v4131
    %v4147 = vpack.c.b16 %v4134, %v4133
    %v4148 = vpack.c.b16 %v4136, %v4135
    %v4149 = vpack.c.b16 %v4138, %v4137
    %v4150 = vpack.c.b16 %v4140, %v4139
    %v4151 = vpack.c.b16 %v4142, %v4141
    %v4152 = vpack.c.b16 %v4144, %v4143
    %4161 = vmatprep.subr.bf16.mxu0 0
    %4162 = vmatpush1.bf16.msra.mxu0 %v4145
    %4163 = vmatprep.subr.bf16.mxu0 0
    %4164 = vmatpush1.bf16.msra.mxu0 %v4146
    %4165 = vmatprep.subr.bf16.mxu0 0
    %4166 = vmatpush1.bf16.msra.mxu0 %v4147
    %4167 = vmatprep.subr.bf16.mxu0 0
    %4168 = vmatpush1.bf16.msra.mxu0 %v4148
    %4169 = vmatprep.subr.bf16.mxu0 0
    %4170 = vmatpush1.bf16.msra.mxu0 %v4149
    %4171 = vmatprep.subr.bf16.mxu0 0
    %4172 = vmatpush1.bf16.msra.mxu0 %v4150
    %4173 = vmatprep.subr.bf16.mxu0 0
    %4174 = vmatpush1.bf16.msra.mxu0 %v4151
    %4175 = vmatprep.subr.bf16.mxu0 0
    %4176 = vmatpush1.bf16.msra.mxu0 %v4152
    %4177 = vmatprep.subr.bf16.mxu0 0
    %4178 = vmatpush1.bf16.msra.mxu0 0
    %4179 = vmatprep.subr.bf16.mxu0 0
    %4180 = vmatpush1.bf16.msra.mxu0 0
    %4181 = vmatprep.subr.bf16.mxu0 0
    %4182 = vmatpush1.bf16.msra.mxu0 0
    %4183 = vmatprep.subr.bf16.mxu0 0
    %4184 = vmatpush1.bf16.msra.mxu0 0
    %4185 = vmatprep.subr.bf16.mxu0 0
    %4186 = vmatpush1.bf16.msra.mxu0 0
    %4187 = vmatprep.subr.bf16.mxu0 0
    %4188 = vmatpush1.bf16.msra.mxu0 0
    %4189 = vmatprep.subr.bf16.mxu0 0
    %4190 = vmatpush1.bf16.msra.mxu0 0
    %4191 = vmatprep.subr.bf16.mxu0 0
    %4192 = vmatpush1.bf16.msra.mxu0 0
    %4193 = vmatprep.mubr.bf16.mxu0 0
    %4194 = vmatmul.mubr.bf16.gmra.mrb[0].mxu0 %v4089
    %v4195 = vpop.f32.mrb[0].mxu0
    %v4196 = vadd.f32 0.0, %v4195
    %v4197 = vpop.f32.mrb[0].mxu0
    %v4198 = vpop.f32.mrb[0].mxu0
    %v4199 = vadd.f32 0.0, %v4198
    %v4200 = vpop.f32.mrb[0].mxu0
    %4201 = vmatprep.mubr.bf16.mxu0 0
    %4202 = vmatmul.mubr.bf16.gmra.mrb[0].mxu0 %v4090
    %v4203 = vpop.f32.mrb[0].mxu0
    %v4204 = vadd.f32 0.0, %v4203
    %v4205 = vpop.f32.mrb[0].mxu0
    %v4206 = vpop.f32.mrb[0].mxu0
    %v4207 = vadd.f32 0.0, %v4206
    %v4208 = vpop.f32.mrb[0].mxu0
    %4209 = vmatprep.mubr.bf16.mxu0 0
    %4210 = vmatmul.mubr.bf16.gmra.mrb[0].mxu0 %v4091
    %v4211 = vpop.f32.mrb[0].mxu0
    %v4212 = vadd.f32 0.0, %v4211
    %v4213 = vpop.f32.mrb[0].mxu0
    %v4214 = vpop.f32.mrb[0].mxu0
    %v4215 = vadd.f32 0.0, %v4214
    %v4216 = vpop.f32.mrb[0].mxu0
    %4217 = vmatprep.mubr.bf16.mxu0 0
    %4218 = vmatmul.mubr.bf16.gmra.mrb[0].mxu0 %v4092
    %v4219 = vpop.f32.mrb[0].mxu0
    %v4220 = vadd.f32 0.0, %v4219
    %v4221 = vpop.f32.mrb[0].mxu0
    %v4222 = vpop.f32.mrb[0].mxu0
    %v4223 = vadd.f32 0.0, %v4222
    %v4224 = vpop.f32.mrb[0].mxu0
    %4225 = vmatprep.mubr.bf16.mxu0 0
    %4226 = vmatmul.mubr.bf16.gmra.mrb[0].mxu0 %v4093
    %v4227 = vpop.f32.mrb[0].mxu0
    %v4228 = vadd.f32 0.0, %v4227
    %v4229 = vpop.f32.mrb[0].mxu0
    %v4230 = vpop.f32.mrb[0].mxu0
    %v4231 = vadd.f32 0.0, %v4230
    %v4232 = vpop.f32.mrb[0].mxu0
    %4233 = vmatprep.mubr.bf16.mxu0 0
    %4234 = vmatmul.mubr.bf16.gmra.mrb[0].mxu0 %v4094
    %v4235 = vpop.f32.mrb[0].mxu0
    %v4236 = vadd.f32 0.0, %v4235
    %v4237 = vpop.f32.mrb[0].mxu0
    %v4238 = vpop.f32.mrb[0].mxu0
    %v4239 = vadd.f32 0.0, %v4238
    %v4240 = vpop.f32.mrb[0].mxu0
    %4241 = vmatprep.mubr.bf16.mxu0 0
    %4242 = vmatmul.mubr.bf16.gmra.mrb[0].mxu0 %v4095
    %v4243 = vpop.f32.mrb[0].mxu0
    %v4244 = vadd.f32 0.0, %v4243
    %v4245 = vpop.f32.mrb[0].mxu0
    %v4246 = vpop.f32.mrb[0].mxu0
    %v4247 = vadd.f32 0.0, %v4246
    %v4248 = vpop.f32.mrb[0].mxu0
    %4249 = vmatprep.mubr.bf16.mxu0 0
    %4250 = vmatmul.mubr.bf16.gmra.mrb[0].mxu0 %v4096
    %v4251 = vpop.f32.mrb[0].mxu0
    %v4252 = vadd.f32 0.0, %v4251
    %v4253 = vpop.f32.mrb[0].mxu0
    %v4254 = vpop.f32.mrb[0].mxu0
    %v4255 = vadd.f32 0.0, %v4254
    %v4256 = vpop.f32.mrb[0].mxu0
    %4257 = vdwg.mxu0
    %vm4258 = vcmp.ge.f32.partialorder %v4196, 0.0
    %vm4259 = vcmp.ge.f32.partialorder %v4199, 0.0
    %vm4260 = vcmp.ge.f32.partialorder %v4204, 0.0
    %vm4261 = vcmp.ge.f32.partialorder %v4207, 0.0
    %vm4262 = vcmp.ge.f32.partialorder %v4212, 0.0
    %vm4263 = vcmp.ge.f32.partialorder %v4215, 0.0
    %vm4264 = vcmp.ge.f32.partialorder %v4220, 0.0
    %vm4265 = vcmp.ge.f32.partialorder %v4223, 0.0
    %vm4266 = vcmp.ge.f32.partialorder %v4228, 0.0
    %vm4267 = vcmp.ge.f32.partialorder %v4231, 0.0
    %vm4268 = vcmp.ge.f32.partialorder %v4236, 0.0
    %vm4269 = vcmp.ge.f32.partialorder %v4239, 0.0
    %vm4270 = vcmp.ge.f32.partialorder %v4244, 0.0
    %vm4271 = vcmp.ge.f32.partialorder %v4247, 0.0
    %vm4272 = vcmp.ge.f32.partialorder %v4252, 0.0
    %vm4273 = vcmp.ge.f32.partialorder %v4255, 0.0
    %v4274 = vstv %s3468
    %v4275 = vmul.f32 %v4274, %v4196
    %v4276 = vmul.f32 %v4274, %v4199
    %v4277 = vmul.f32 %v4274, %v4204
    %v4278 = vmul.f32 %v4274, %v4207
    %v4279 = vmul.f32 %v4274, %v4212
    %v4280 = vmul.f32 %v4274, %v4215
    %v4281 = vmul.f32 %v4274, %v4220
    %v4282 = vmul.f32 %v4274, %v4223
    %v4283 = vmul.f32 %v4274, %v4228
    %v4284 = vmul.f32 %v4274, %v4231
    %v4285 = vmul.f32 %v4274, %v4236
    %v4286 = vmul.f32 %v4274, %v4239
    %v4287 = vmul.f32 %v4274, %v4244
    %v4288 = vmul.f32 %v4274, %v4247
    %v4289 = vmul.f32 %v4274, %v4252
    %v4290 = vmul.f32 %v4274, %v4255
    %v4291 = vsel %vm4258, %v4196, %v4275
    %v4292 = vsel %vm4259, %v4199, %v4276
    %v4293 = vsel %vm4260, %v4204, %v4277
    %v4294 = vsel %vm4261, %v4207, %v4278
    %v4295 = vsel %vm4262, %v4212, %v4279
    %v4296 = vsel %vm4263, %v4215, %v4280
    %v4297 = vsel %vm4264, %v4220, %v4281
    %v4298 = vsel %vm4265, %v4223, %v4282
    %v4299 = vsel %vm4266, %v4228, %v4283
    %v4300 = vsel %vm4267, %v4231, %v4284
    %v4301 = vsel %vm4268, %v4236, %v4285
    %v4302 = vsel %vm4269, %v4239, %v4286
    %v4303 = vsel %vm4270, %v4244, %v4287
    %v4304 = vsel %vm4271, %v4247, %v4288
    %v4305 = vsel %vm4272, %v4252, %v4289
    %v4306 = vsel %vm4273, %v4255, %v4290
    %v4307 = vpack.c.bf16 %v4292, %v4291
    %v4308 = vpack.c.bf16 %v4294, %v4293
    %v4309 = vpack.c.bf16 %v4296, %v4295
    %v4310 = vpack.c.bf16 %v4298, %v4297
    %v4311 = vpack.c.bf16 %v4300, %v4299
    %v4312 = vpack.c.bf16 %v4302, %v4301
    %v4313 = vpack.c.bf16 %v4304, %v4303
    %v4314 = vpack.c.bf16 %v4306, %v4305
    %v4315 = vld [vmem:[%s73] sm:$0xf]
    %v4316 = vld [vmem:[%s73 + $0x4] sm:$0xf]
    %v4317 = vld [vmem:[%s73 + $0x8] sm:$0xf]
    %v4318 = vld [vmem:[%s73 + $0xc] sm:$0xf]
    %v4319 = vld [vmem:[%s73 + $0x10] sm:$0xf]
    %v4320 = vld [vmem:[%s73 + $0x14] sm:$0xf]
    %v4321 = vld [vmem:[%s73 + $0x18] sm:$0xf]
    %v4322 = vld [vmem:[%s73 + $0x1c] sm:$0xf]
    %v4323 = vld [vmem:[%s73 + $0x20] sm:$0xf]
    %v4324 = vld [vmem:[%s73 + $0x24] sm:$0xf]
    %v4325 = vld [vmem:[%s73 + $0x28] sm:$0xf]
    %v4326 = vld [vmem:[%s73 + $0x2c] sm:$0xf]
    %v4327 = vld [vmem:[%s73 + $0x30] sm:$0xf]
    %v4328 = vld [vmem:[%s73 + $0x34] sm:$0xf]
    %v4329 = vld [vmem:[%s73 + $0x38] sm:$0xf]
    %v4330 = vld [vmem:[%s73 + $0x3c] sm:$0xf]
    %v4331 = vld [vmem:[%s75] sm:$0x1]
    %v4333 = vlaneseq
    %v4334 = vshrl.u32 %v4333, 7
    %v4335 = vsub.s32 0, %v4334
    %v4336 = vrot.slane %v4331, %v4335
    %v4354 = vunpack.c.l.b16 %v4315
    %v4355 = vunpack.c.l.b16 %v4316
    %v4356 = vunpack.c.l.b16 %v4317
    %v4357 = vunpack.c.l.b16 %v4318
    %v4358 = vunpack.c.l.b16 %v4319
    %v4359 = vunpack.c.l.b16 %v4320
    %v4360 = vunpack.c.l.b16 %v4321
    %v4361 = vunpack.c.l.b16 %v4322
    %v4362 = vunpack.c.l.b16 %v4323
    %v4363 = vunpack.c.l.b16 %v4324
    %v4364 = vunpack.c.l.b16 %v4325
    %v4365 = vunpack.c.l.b16 %v4326
    %v4366 = vunpack.c.l.b16 %v4327
    %v4367 = vunpack.c.l.b16 %v4328
    %v4368 = vunpack.c.l.b16 %v4329
    %v4369 = vunpack.c.l.b16 %v4330
    %v4370 = vpack.c.b16 %v4355, %v4354
    %v4371 = vpack.c.b16 %v4357, %v4356
    %v4372 = vpack.c.b16 %v4359, %v4358
    %v4373 = vpack.c.b16 %v4361, %v4360
    %v4374 = vpack.c.b16 %v4363, %v4362
    %v4375 = vpack.c.b16 %v4365, %v4364
    %v4376 = vpack.c.b16 %v4367, %v4366
    %v4377 = vpack.c.b16 %v4369, %v4368
    %4386 = vmatprep.subr.bf16.mxu0 0
    %4387 = vmatpush1.bf16.msra.mxu0 %v4370
    %4388 = vmatprep.subr.bf16.mxu0 0
    %4389 = vmatpush1.bf16.msra.mxu0 %v4371
    %4390 = vmatprep.subr.bf16.mxu0 0
    %4391 = vmatpush1.bf16.msra.mxu0 %v4372
    %4392 = vmatprep.subr.bf16.mxu0 0
    %4393 = vmatpush1.bf16.msra.mxu0 %v4373
    %4394 = vmatprep.subr.bf16.mxu0 0
    %4395 = vmatpush1.bf16.msra.mxu0 %v4374
    %4396 = vmatprep.subr.bf16.mxu0 0
    %4397 = vmatpush1.bf16.msra.mxu0 %v4375
    %4398 = vmatprep.subr.bf16.mxu0 0
    %4399 = vmatpush1.bf16.msra.mxu0 %v4376
    %4400 = vmatprep.subr.bf16.mxu0 0
    %4401 = vmatpush1.bf16.msra.mxu0 %v4377
    %4402 = vmatprep.subr.bf16.mxu0 0
    %4403 = vmatpush1.bf16.msra.mxu0 0
    %4404 = vmatprep.subr.bf16.mxu0 0
    %4405 = vmatpush1.bf16.msra.mxu0 0
    %4406 = vmatprep.subr.bf16.mxu0 0
    %4407 = vmatpush1.bf16.msra.mxu0 0
    %4408 = vmatprep.subr.bf16.mxu0 0
    %4409 = vmatpush1.bf16.msra.mxu0 0
    %4410 = vmatprep.subr.bf16.mxu0 0
    %4411 = vmatpush1.bf16.msra.mxu0 0
    %4412 = vmatprep.subr.bf16.mxu0 0
    %4413 = vmatpush1.bf16.msra.mxu0 0
    %4414 = vmatprep.subr.bf16.mxu0 0
    %4415 = vmatpush1.bf16.msra.mxu0 0
    %4416 = vmatprep.subr.bf16.mxu0 0
    %4417 = vmatpush1.bf16.msra.mxu0 0
    %4418 = vmatprep.mubr.bf16.mxu0 0
    %4419 = vmatmul.mubr.bf16.gmra.mrb[0].mxu0 %v4307
    %v4420 = vpop.f32.mrb[0].mxu0
    %v4421 = vadd.f32 %v4336, %v4420
    %v4422 = vpop.f32.mrb[0].mxu0
    %v4423 = vpop.f32.mrb[0].mxu0
    %v4424 = vadd.f32 %v4336, %v4423
    %v4425 = vpop.f32.mrb[0].mxu0
    %4426 = vmatprep.mubr.bf16.mxu0 0
    %4427 = vmatmul.mubr.bf16.gmra.mrb[0].mxu0 %v4308
    %v4428 = vpop.f32.mrb[0].mxu0
    %v4429 = vadd.f32 %v4336, %v4428
    %v4430 = vpop.f32.mrb[0].mxu0
    %v4431 = vpop.f32.mrb[0].mxu0
    %v4432 = vadd.f32 %v4336, %v4431
    %v4433 = vpop.f32.mrb[0].mxu0
    %4434 = vmatprep.mubr.bf16.mxu0 0
    %4435 = vmatmul.mubr.bf16.gmra.mrb[0].mxu0 %v4309
    %v4436 = vpop.f32.mrb[0].mxu0
    %v4437 = vadd.f32 %v4336, %v4436
    %v4438 = vpop.f32.mrb[0].mxu0
    %v4439 = vpop.f32.mrb[0].mxu0
    %v4440 = vadd.f32 %v4336, %v4439
    %v4441 = vpop.f32.mrb[0].mxu0
    %4442 = vmatprep.mubr.bf16.mxu0 0
    %4443 = vmatmul.mubr.bf16.gmra.mrb[0].mxu0 %v4310
    %v4444 = vpop.f32.mrb[0].mxu0
    %v4445 = vadd.f32 %v4336, %v4444
    %v4446 = vpop.f32.mrb[0].mxu0
    %v4447 = vpop.f32.mrb[0].mxu0
    %v4448 = vadd.f32 %v4336, %v4447
    %v4449 = vpop.f32.mrb[0].mxu0
    %4450 = vmatprep.mubr.bf16.mxu0 0
    %4451 = vmatmul.mubr.bf16.gmra.mrb[0].mxu0 %v4311
    %v4452 = vpop.f32.mrb[0].mxu0
    %v4453 = vadd.f32 %v4336, %v4452
    %v4454 = vpop.f32.mrb[0].mxu0
    %v4455 = vpop.f32.mrb[0].mxu0
    %v4456 = vadd.f32 %v4336, %v4455
    %v4457 = vpop.f32.mrb[0].mxu0
    %4458 = vmatprep.mubr.bf16.mxu0 0
    %4459 = vmatmul.mubr.bf16.gmra.mrb[0].mxu0 %v4312
    %v4460 = vpop.f32.mrb[0].mxu0
    %v4461 = vadd.f32 %v4336, %v4460
    %v4462 = vpop.f32.mrb[0].mxu0
    %v4463 = vpop.f32.mrb[0].mxu0
    %v4464 = vadd.f32 %v4336, %v4463
    %v4465 = vpop.f32.mrb[0].mxu0
    %4466 = vmatprep.mubr.bf16.mxu0 0
    %4467 = vmatmul.mubr.bf16.gmra.mrb[0].mxu0 %v4313
    %v4468 = vpop.f32.mrb[0].mxu0
    %v4469 = vadd.f32 %v4336, %v4468
    %v4470 = vpop.f32.mrb[0].mxu0
    %v4471 = vpop.f32.mrb[0].mxu0
    %v4472 = vadd.f32 %v4336, %v4471
    %v4473 = vpop.f32.mrb[0].mxu0
    %4474 = vmatprep.mubr.bf16.mxu0 0
    %4475 = vmatmul.mubr.bf16.gmra.mrb[0].mxu0 %v4314
    %v4476 = vpop.f32.mrb[0].mxu0
    %v4477 = vadd.f32 %v4336, %v4476
    %v4478 = vpop.f32.mrb[0].mxu0
    %v4479 = vpop.f32.mrb[0].mxu0
    %v4480 = vadd.f32 %v4336, %v4479
    %v4481 = vpop.f32.mrb[0].mxu0
    %4482 = vdwg.mxu0
    %v4483 = vpack.c.bf16 %v4424, %v4421
    %v4484 = vpack.c.bf16 %v4432, %v4429
    %v4485 = vpack.c.bf16 %v4440, %v4437
    %v4486 = vpack.c.bf16 %v4448, %v4445
    %v4487 = vpack.c.bf16 %v4456, %v4453
    %v4488 = vpack.c.bf16 %v4464, %v4461
    %v4489 = vpack.c.bf16 %v4472, %v4469
    %v4490 = vpack.c.bf16 %v4480, %v4477
    %4491 = vmatprep.subr.bf16.mxu0 0
    %4492 = vmatpush1.bf16.msra.mxu0 %v4483
    %4493 = vmatprep.subr.bf16.mxu0 0
    %4494 = vmatpush1.bf16.msra.mxu0 %v4484
    %4495 = vmatprep.subr.bf16.mxu0 0
    %4496 = vmatpush1.bf16.msra.mxu0 %v4485
    %4497 = vmatprep.subr.bf16.mxu0 0
    %4498 = vmatpush1.bf16.msra.mxu0 %v4486
    %4499 = vmatprep.subr.bf16.mxu0 0
    %4500 = vmatpush1.bf16.msra.mxu0 %v4487
    %4501 = vmatprep.subr.bf16.mxu0 0
    %4502 = vmatpush1.bf16.msra.mxu0 %v4488
    %4503 = vmatprep.subr.bf16.mxu0 0
    %4504 = vmatpush1.bf16.msra.mxu0 %v4489
    %4505 = vmatprep.subr.bf16.mxu0 0
    %4506 = vmatpush1.bf16.msra.mxu0 %v4490
    %4507 = vmatprep.subr.bf16.mxu0 0
    %4508 = vmatpush1.bf16.msra.mxu0 0
    %4509 = vmatprep.subr.bf16.mxu0 0
    %4510 = vmatpush1.bf16.msra.mxu0 0
    %4511 = vmatprep.subr.bf16.mxu0 0
    %4512 = vmatpush1.bf16.msra.mxu0 0
    %4513 = vmatprep.subr.bf16.mxu0 0
    %4514 = vmatpush1.bf16.msra.mxu0 0
    %4515 = vmatprep.subr.bf16.mxu0 0
    %4516 = vmatpush1.bf16.msra.mxu0 0
    %4517 = vmatprep.subr.bf16.mxu0 0
    %4518 = vmatpush1.bf16.msra.mxu0 0
    %4519 = vmatprep.subr.bf16.mxu0 0
    %4520 = vmatpush1.bf16.msra.mxu0 0
    %4521 = vmatprep.subr.bf16.mxu0 0
    %4522 = vmatpush1.bf16.msra.mxu0 0
    %4523 = vmatprep.mubr.bf16.mxu0 0
    %4524 = vmatmul.mubr.bf16.gmra.mrb[0].mxu0 %v3093
    %v4525 = vpop.f32.mrb[0].mxu0
    %v4526 = vadd.f32 0.0, %v4525
    %v4527 = vpop.f32.mrb[0].mxu0
    %v4528 = vpop.f32.mrb[0].mxu0
    %v4529 = vadd.f32 0.0, %v4528
    %v4530 = vpop.f32.mrb[0].mxu0
    %4531 = vmatprep.mubr.bf16.mxu0 0
    %4532 = vmatmul.mubr.bf16.gmra.mrb[0].mxu0 %v3094
    %v4533 = vpop.f32.mrb[0].mxu0
    %v4534 = vadd.f32 0.0, %v4533
    %v4535 = vpop.f32.mrb[0].mxu0
    %v4536 = vpop.f32.mrb[0].mxu0
    %v4537 = vadd.f32 0.0, %v4536
    %v4538 = vpop.f32.mrb[0].mxu0
    %4539 = vmatprep.mubr.bf16.mxu0 0
    %4540 = vmatmul.mubr.bf16.gmra.mrb[0].mxu0 %v3095
    %v4541 = vpop.f32.mrb[0].mxu0
    %v4542 = vadd.f32 0.0, %v4541
    %v4543 = vpop.f32.mrb[0].mxu0
    %v4544 = vpop.f32.mrb[0].mxu0
    %v4545 = vadd.f32 0.0, %v4544
    %v4546 = vpop.f32.mrb[0].mxu0
    %4547 = vmatprep.mubr.bf16.mxu0 0
    %4548 = vmatmul.mubr.bf16.gmra.mrb[0].mxu0 %v3096
    %v4549 = vpop.f32.mrb[0].mxu0
    %v4550 = vadd.f32 0.0, %v4549
    %v4551 = vpop.f32.mrb[0].mxu0
    %v4552 = vpop.f32.mrb[0].mxu0
    %v4553 = vadd.f32 0.0, %v4552
    %v4554 = vpop.f32.mrb[0].mxu0
    %4555 = vmatprep.mubr.bf16.mxu0 0
    %4556 = vmatmul.mubr.bf16.gmra.mrb[0].mxu0 %v3097
    %v4557 = vpop.f32.mrb[0].mxu0
    %v4558 = vadd.f32 0.0, %v4557
    %v4559 = vpop.f32.mrb[0].mxu0
    %v4560 = vpop.f32.mrb[0].mxu0
    %v4561 = vadd.f32 0.0, %v4560
    %v4562 = vpop.f32.mrb[0].mxu0
    %4563 = vmatprep.mubr.bf16.mxu0 0
    %4564 = vmatmul.mubr.bf16.gmra.mrb[0].mxu0 %v3098
    %v4565 = vpop.f32.mrb[0].mxu0
    %v4566 = vadd.f32 0.0, %v4565
    %v4567 = vpop.f32.mrb[0].mxu0
    %v4568 = vpop.f32.mrb[0].mxu0
    %v4569 = vadd.f32 0.0, %v4568
    %v4570 = vpop.f32.mrb[0].mxu0
    %4571 = vmatprep.mubr.bf16.mxu0 0
    %4572 = vmatmul.mubr.bf16.gmra.mrb[0].mxu0 %v3099
    %v4573 = vpop.f32.mrb[0].mxu0
    %v4574 = vadd.f32 0.0, %v4573
    %v4575 = vpop.f32.mrb[0].mxu0
    %v4576 = vpop.f32.mrb[0].mxu0
    %v4577 = vadd.f32 0.0, %v4576
    %v4578 = vpop.f32.mrb[0].mxu0
    %4579 = vmatprep.mubr.bf16.mxu0 0
    %4580 = vmatmul.mubr.bf16.gmra.mrb[0].mxu0 %v3100
    %v4581 = vpop.f32.mrb[0].mxu0
    %v4582 = vadd.f32 0.0, %v4581
    %v4583 = vpop.f32.mrb[0].mxu0
    %v4584 = vpop.f32.mrb[0].mxu0
    %v4585 = vadd.f32 0.0, %v4584
    %v4586 = vpop.f32.mrb[0].mxu0
    %4587 = vdwg.mxu0
    %s4588 = sld [smem:[#allocation2 + $0xf]]
    %s4589 = sld [smem:[#allocation2 + $0x10]]
    %s4590 = sld [smem:[#allocation2 + $0x11]]
    %v4591 = vpack.c.bf16 %v4529, %v4526
    %v4592 = vpack.c.bf16 %v4537, %v4534
    %v4593 = vpack.c.bf16 %v4545, %v4542
    %v4594 = vpack.c.bf16 %v4553, %v4550
    %v4595 = vpack.c.bf16 %v4561, %v4558
    %v4596 = vpack.c.bf16 %v4569, %v4566
    %v4597 = vpack.c.bf16 %v4577, %v4574
    %v4598 = vpack.c.bf16 %v4585, %v4582
    %v4599 = vld [vmem:[%s77] sm:$0xf]
    %v4600 = vld [vmem:[%s77 + $0x4] sm:$0xf]
    %v4601 = vld [vmem:[%s77 + $0x8] sm:$0xf]
    %v4602 = vld [vmem:[%s77 + $0xc] sm:$0xf]
    %v4603 = vld [vmem:[%s77 + $0x10] sm:$0xf]
    %v4604 = vld [vmem:[%s77 + $0x14] sm:$0xf]
    %v4605 = vld [vmem:[%s77 + $0x18] sm:$0xf]
    %v4606 = vld [vmem:[%s77 + $0x1c] sm:$0xf]
    %v4607 = vld [vmem:[%s77 + $0x20] sm:$0xf]
    %v4608 = vld [vmem:[%s77 + $0x24] sm:$0xf]
    %v4609 = vld [vmem:[%s77 + $0x28] sm:$0xf]
    %v4610 = vld [vmem:[%s77 + $0x2c] sm:$0xf]
    %v4611 = vld [vmem:[%s77 + $0x30] sm:$0xf]
    %v4612 = vld [vmem:[%s77 + $0x34] sm:$0xf]
    %v4613 = vld [vmem:[%s77 + $0x38] sm:$0xf]
    %v4614 = vld [vmem:[%s77 + $0x3c] sm:$0xf]
    %v4615 = vld [vmem:[%s79] sm:$0x1]
    %v4617 = vlaneseq
    %v4618 = vshrl.u32 %v4617, 7
    %v4619 = vsub.s32 0, %v4618
    %v4620 = vrot.slane %v4615, %v4619
    %v4638 = vunpack.c.l.b16 %v4599
    %v4639 = vunpack.c.l.b16 %v4600
    %v4640 = vunpack.c.l.b16 %v4601
    %v4641 = vunpack.c.l.b16 %v4602
    %v4642 = vunpack.c.l.b16 %v4603
    %v4643 = vunpack.c.l.b16 %v4604
    %v4644 = vunpack.c.l.b16 %v4605
    %v4645 = vunpack.c.l.b16 %v4606
    %v4646 = vunpack.c.l.b16 %v4607
    %v4647 = vunpack.c.l.b16 %v4608
    %v4648 = vunpack.c.l.b16 %v4609
    %v4649 = vunpack.c.l.b16 %v4610
    %v4650 = vunpack.c.l.b16 %v4611
    %v4651 = vunpack.c.l.b16 %v4612
    %v4652 = vunpack.c.l.b16 %v4613
    %v4653 = vunpack.c.l.b16 %v4614
    %v4654 = vpack.c.b16 %v4639, %v4638
    %v4655 = vpack.c.b16 %v4641, %v4640
    %v4656 = vpack.c.b16 %v4643, %v4642
    %v4657 = vpack.c.b16 %v4645, %v4644
    %v4658 = vpack.c.b16 %v4647, %v4646
    %v4659 = vpack.c.b16 %v4649, %v4648
    %v4660 = vpack.c.b16 %v4651, %v4650
    %v4661 = vpack.c.b16 %v4653, %v4652
    %4670 = vmatprep.subr.bf16.mxu0 0
    %4671 = vmatpush1.bf16.msra.mxu0 %v4654
    %4672 = vmatprep.subr.bf16.mxu0 0
    %4673 = vmatpush1.bf16.msra.mxu0 %v4655
    %4674 = vmatprep.subr.bf16.mxu0 0
    %4675 = vmatpush1.bf16.msra.mxu0 %v4656
    %4676 = vmatprep.subr.bf16.mxu0 0
    %4677 = vmatpush1.bf16.msra.mxu0 %v4657
    %4678 = vmatprep.subr.bf16.mxu0 0
    %4679 = vmatpush1.bf16.msra.mxu0 %v4658
    %4680 = vmatprep.subr.bf16.mxu0 0
    %4681 = vmatpush1.bf16.msra.mxu0 %v4659
    %4682 = vmatprep.subr.bf16.mxu0 0
    %4683 = vmatpush1.bf16.msra.mxu0 %v4660
    %4684 = vmatprep.subr.bf16.mxu0 0
    %4685 = vmatpush1.bf16.msra.mxu0 %v4661
    %4686 = vmatprep.subr.bf16.mxu0 0
    %4687 = vmatpush1.bf16.msra.mxu0 0
    %4688 = vmatprep.subr.bf16.mxu0 0
    %4689 = vmatpush1.bf16.msra.mxu0 0
    %4690 = vmatprep.subr.bf16.mxu0 0
    %4691 = vmatpush1.bf16.msra.mxu0 0
    %4692 = vmatprep.subr.bf16.mxu0 0
    %4693 = vmatpush1.bf16.msra.mxu0 0
    %4694 = vmatprep.subr.bf16.mxu0 0
    %4695 = vmatpush1.bf16.msra.mxu0 0
    %4696 = vmatprep.subr.bf16.mxu0 0
    %4697 = vmatpush1.bf16.msra.mxu0 0
    %4698 = vmatprep.subr.bf16.mxu0 0
    %4699 = vmatpush1.bf16.msra.mxu0 0
    %4700 = vmatprep.subr.bf16.mxu0 0
    %4701 = vmatpush1.bf16.msra.mxu0 0
    %4702 = vmatprep.mubr.bf16.mxu0 0
    %4703 = vmatmul.mubr.bf16.gmra.mrb[0].mxu0 %v4591
    %v4704 = vpop.f32.mrb[0].mxu0
    %v4705 = vadd.f32 %v4620, %v4704
    %v4706 = vpop.f32.mrb[0].mxu0
    %v4707 = vpop.f32.mrb[0].mxu0
    %v4708 = vadd.f32 %v4620, %v4707
    %v4709 = vpop.f32.mrb[0].mxu0
    %4710 = vmatprep.mubr.bf16.mxu0 0
    %4711 = vmatmul.mubr.bf16.gmra.mrb[0].mxu0 %v4592
    %v4712 = vpop.f32.mrb[0].mxu0
    %v4713 = vadd.f32 %v4620, %v4712
    %v4714 = vpop.f32.mrb[0].mxu0
    %v4715 = vpop.f32.mrb[0].mxu0
    %v4716 = vadd.f32 %v4620, %v4715
    %v4717 = vpop.f32.mrb[0].mxu0
    %4718 = vmatprep.mubr.bf16.mxu0 0
    %4719 = vmatmul.mubr.bf16.gmra.mrb[0].mxu0 %v4593
    %v4720 = vpop.f32.mrb[0].mxu0
    %v4721 = vadd.f32 %v4620, %v4720
    %v4722 = vpop.f32.mrb[0].mxu0
    %v4723 = vpop.f32.mrb[0].mxu0
    %v4724 = vadd.f32 %v4620, %v4723
    %v4725 = vpop.f32.mrb[0].mxu0
    %4726 = vmatprep.mubr.bf16.mxu0 0
    %4727 = vmatmul.mubr.bf16.gmra.mrb[0].mxu0 %v4594
    %v4728 = vpop.f32.mrb[0].mxu0
    %v4729 = vadd.f32 %v4620, %v4728
    %v4730 = vpop.f32.mrb[0].mxu0
    %v4731 = vpop.f32.mrb[0].mxu0
    %v4732 = vadd.f32 %v4620, %v4731
    %v4733 = vpop.f32.mrb[0].mxu0
    %4734 = vmatprep.mubr.bf16.mxu0 0
    %4735 = vmatmul.mubr.bf16.gmra.mrb[0].mxu0 %v4595
    %v4736 = vpop.f32.mrb[0].mxu0
    %v4737 = vadd.f32 %v4620, %v4736
    %v4738 = vpop.f32.mrb[0].mxu0
    %v4739 = vpop.f32.mrb[0].mxu0
    %v4740 = vadd.f32 %v4620, %v4739
    %v4741 = vpop.f32.mrb[0].mxu0
    %4742 = vmatprep.mubr.bf16.mxu0 0
    %4743 = vmatmul.mubr.bf16.gmra.mrb[0].mxu0 %v4596
    %v4744 = vpop.f32.mrb[0].mxu0
    %v4745 = vadd.f32 %v4620, %v4744
    %v4746 = vpop.f32.mrb[0].mxu0
    %v4747 = vpop.f32.mrb[0].mxu0
    %v4748 = vadd.f32 %v4620, %v4747
    %v4749 = vpop.f32.mrb[0].mxu0
    %4750 = vmatprep.mubr.bf16.mxu0 0
    %4751 = vmatmul.mubr.bf16.gmra.mrb[0].mxu0 %v4597
    %v4752 = vpop.f32.mrb[0].mxu0
    %v4753 = vadd.f32 %v4620, %v4752
    %v4754 = vpop.f32.mrb[0].mxu0
    %v4755 = vpop.f32.mrb[0].mxu0
    %v4756 = vadd.f32 %v4620, %v4755
    %v4757 = vpop.f32.mrb[0].mxu0
    %4758 = vmatprep.mubr.bf16.mxu0 0
    %4759 = vmatmul.mubr.bf16.gmra.mrb[0].mxu0 %v4598
    %v4760 = vpop.f32.mrb[0].mxu0
    %v4761 = vadd.f32 %v4620, %v4760
    %v4762 = vpop.f32.mrb[0].mxu0
    %v4763 = vpop.f32.mrb[0].mxu0
    %v4764 = vadd.f32 %v4620, %v4763
    %v4765 = vpop.f32.mrb[0].mxu0
    %4766 = vdwg.mxu0
    %vm4767 = vcmp.ge.f32.partialorder %v4705, 0.0
    %vm4768 = vcmp.ge.f32.partialorder %v4708, 0.0
    %vm4769 = vcmp.ge.f32.partialorder %v4713, 0.0
    %vm4770 = vcmp.ge.f32.partialorder %v4716, 0.0
    %vm4771 = vcmp.ge.f32.partialorder %v4721, 0.0
    %vm4772 = vcmp.ge.f32.partialorder %v4724, 0.0
    %vm4773 = vcmp.ge.f32.partialorder %v4729, 0.0
    %vm4774 = vcmp.ge.f32.partialorder %v4732, 0.0
    %vm4775 = vcmp.ge.f32.partialorder %v4737, 0.0
    %vm4776 = vcmp.ge.f32.partialorder %v4740, 0.0
    %vm4777 = vcmp.ge.f32.partialorder %v4745, 0.0
    %vm4778 = vcmp.ge.f32.partialorder %v4748, 0.0
    %vm4779 = vcmp.ge.f32.partialorder %v4753, 0.0
    %vm4780 = vcmp.ge.f32.partialorder %v4756, 0.0
    %vm4781 = vcmp.ge.f32.partialorder %v4761, 0.0
    %vm4782 = vcmp.ge.f32.partialorder %v4764, 0.0
    %v4783 = vstv %s4588
    %v4784 = vmul.f32 %v4783, %v4705
    %v4785 = vmul.f32 %v4783, %v4708
    %v4786 = vmul.f32 %v4783, %v4713
    %v4787 = vmul.f32 %v4783, %v4716
    %v4788 = vmul.f32 %v4783, %v4721
    %v4789 = vmul.f32 %v4783, %v4724
    %v4790 = vmul.f32 %v4783, %v4729
    %v4791 = vmul.f32 %v4783, %v4732
    %v4792 = vmul.f32 %v4783, %v4737
    %v4793 = vmul.f32 %v4783, %v4740
    %v4794 = vmul.f32 %v4783, %v4745
    %v4795 = vmul.f32 %v4783, %v4748
    %v4796 = vmul.f32 %v4783, %v4753
    %v4797 = vmul.f32 %v4783, %v4756
    %v4798 = vmul.f32 %v4783, %v4761
    %v4799 = vmul.f32 %v4783, %v4764
    %v4800 = vsel %vm4767, %v4705, %v4784
    %v4801 = vsel %vm4768, %v4708, %v4785
    %v4802 = vsel %vm4769, %v4713, %v4786
    %v4803 = vsel %vm4770, %v4716, %v4787
    %v4804 = vsel %vm4771, %v4721, %v4788
    %v4805 = vsel %vm4772, %v4724, %v4789
    %v4806 = vsel %vm4773, %v4729, %v4790
    %v4807 = vsel %vm4774, %v4732, %v4791
    %v4808 = vsel %vm4775, %v4737, %v4792
    %v4809 = vsel %vm4776, %v4740, %v4793
    %v4810 = vsel %vm4777, %v4745, %v4794
    %v4811 = vsel %vm4778, %v4748, %v4795
    %v4812 = vsel %vm4779, %v4753, %v4796
    %v4813 = vsel %vm4780, %v4756, %v4797
    %v4814 = vsel %vm4781, %v4761, %v4798
    %v4815 = vsel %vm4782, %v4764, %v4799
    %v4816 = vpack.c.bf16 %v4801, %v4800
    %v4817 = vpack.c.bf16 %v4803, %v4802
    %v4818 = vpack.c.bf16 %v4805, %v4804
    %v4819 = vpack.c.bf16 %v4807, %v4806
    %v4820 = vpack.c.bf16 %v4809, %v4808
    %v4821 = vpack.c.bf16 %v4811, %v4810
    %v4822 = vpack.c.bf16 %v4813, %v4812
    %v4823 = vpack.c.bf16 %v4815, %v4814
    %v4824 = vld [vmem:[%s81] sm:$0xf]
    %v4825 = vld [vmem:[%s81 + $0x4] sm:$0xf]
    %v4826 = vld [vmem:[%s81 + $0x8] sm:$0xf]
    %v4827 = vld [vmem:[%s81 + $0xc] sm:$0xf]
    %v4828 = vld [vmem:[%s81 + $0x10] sm:$0xf]
    %v4829 = vld [vmem:[%s81 + $0x14] sm:$0xf]
    %v4830 = vld [vmem:[%s81 + $0x18] sm:$0xf]
    %v4831 = vld [vmem:[%s81 + $0x1c] sm:$0xf]
    %v4832 = vld [vmem:[%s81 + $0x20] sm:$0xf]
    %v4833 = vld [vmem:[%s81 + $0x24] sm:$0xf]
    %v4834 = vld [vmem:[%s81 + $0x28] sm:$0xf]
    %v4835 = vld [vmem:[%s81 + $0x2c] sm:$0xf]
    %v4836 = vld [vmem:[%s81 + $0x30] sm:$0xf]
    %v4837 = vld [vmem:[%s81 + $0x34] sm:$0xf]
    %v4838 = vld [vmem:[%s81 + $0x38] sm:$0xf]
    %v4839 = vld [vmem:[%s81 + $0x3c] sm:$0xf]
    %v4856 = vunpack.c.l.b16 %v4824
    %v4857 = vunpack.c.l.b16 %v4825
    %v4858 = vunpack.c.l.b16 %v4826
    %v4859 = vunpack.c.l.b16 %v4827
    %v4860 = vunpack.c.l.b16 %v4828
    %v4861 = vunpack.c.l.b16 %v4829
    %v4862 = vunpack.c.l.b16 %v4830
    %v4863 = vunpack.c.l.b16 %v4831
    %v4864 = vunpack.c.l.b16 %v4832
    %v4865 = vunpack.c.l.b16 %v4833
    %v4866 = vunpack.c.l.b16 %v4834
    %v4867 = vunpack.c.l.b16 %v4835
    %v4868 = vunpack.c.l.b16 %v4836
    %v4869 = vunpack.c.l.b16 %v4837
    %v4870 = vunpack.c.l.b16 %v4838
    %v4871 = vunpack.c.l.b16 %v4839
    %v4872 = vpack.c.b16 %v4857, %v4856
    %v4873 = vpack.c.b16 %v4859, %v4858
    %v4874 = vpack.c.b16 %v4861, %v4860
    %v4875 = vpack.c.b16 %v4863, %v4862
    %v4876 = vpack.c.b16 %v4865, %v4864
    %v4877 = vpack.c.b16 %v4867, %v4866
    %v4878 = vpack.c.b16 %v4869, %v4868
    %v4879 = vpack.c.b16 %v4871, %v4870
    %4888 = vmatprep.subr.bf16.mxu0 0
    %4889 = vmatpush1.bf16.msra.mxu0 %v4872
    %4890 = vmatprep.subr.bf16.mxu0 0
    %4891 = vmatpush1.bf16.msra.mxu0 %v4873
    %4892 = vmatprep.subr.bf16.mxu0 0
    %4893 = vmatpush1.bf16.msra.mxu0 %v4874
    %4894 = vmatprep.subr.bf16.mxu0 0
    %4895 = vmatpush1.bf16.msra.mxu0 %v4875
    %4896 = vmatprep.subr.bf16.mxu0 0
    %4897 = vmatpush1.bf16.msra.mxu0 %v4876
    %4898 = vmatprep.subr.bf16.mxu0 0
    %4899 = vmatpush1.bf16.msra.mxu0 %v4877
    %4900 = vmatprep.subr.bf16.mxu0 0
    %4901 = vmatpush1.bf16.msra.mxu0 %v4878
    %4902 = vmatprep.subr.bf16.mxu0 0
    %4903 = vmatpush1.bf16.msra.mxu0 %v4879
    %4904 = vmatprep.subr.bf16.mxu0 0
    %4905 = vmatpush1.bf16.msra.mxu0 0
    %4906 = vmatprep.subr.bf16.mxu0 0
    %4907 = vmatpush1.bf16.msra.mxu0 0
    %4908 = vmatprep.subr.bf16.mxu0 0
    %4909 = vmatpush1.bf16.msra.mxu0 0
    %4910 = vmatprep.subr.bf16.mxu0 0
    %4911 = vmatpush1.bf16.msra.mxu0 0
    %4912 = vmatprep.subr.bf16.mxu0 0
    %4913 = vmatpush1.bf16.msra.mxu0 0
    %4914 = vmatprep.subr.bf16.mxu0 0
    %4915 = vmatpush1.bf16.msra.mxu0 0
    %4916 = vmatprep.subr.bf16.mxu0 0
    %4917 = vmatpush1.bf16.msra.mxu0 0
    %4918 = vmatprep.subr.bf16.mxu0 0
    %4919 = vmatpush1.bf16.msra.mxu0 0
    %4920 = vmatprep.mubr.bf16.mxu0 0
    %4921 = vmatmul.mubr.bf16.gmra.mrb[0].mxu0 %v4816
    %v4922 = vpop.f32.mrb[0].mxu0
    %v4923 = vadd.f32 0.0, %v4922
    %v4924 = vpop.f32.mrb[0].mxu0
    %v4925 = vpop.f32.mrb[0].mxu0
    %v4926 = vadd.f32 0.0, %v4925
    %v4927 = vpop.f32.mrb[0].mxu0
    %4928 = vmatprep.mubr.bf16.mxu0 0
    %4929 = vmatmul.mubr.bf16.gmra.mrb[0].mxu0 %v4817
    %v4930 = vpop.f32.mrb[0].mxu0
    %v4931 = vadd.f32 0.0, %v4930
    %v4932 = vpop.f32.mrb[0].mxu0
    %v4933 = vpop.f32.mrb[0].mxu0
    %v4934 = vadd.f32 0.0, %v4933
    %v4935 = vpop.f32.mrb[0].mxu0
    %4936 = vmatprep.mubr.bf16.mxu0 0
    %4937 = vmatmul.mubr.bf16.gmra.mrb[0].mxu0 %v4818
    %v4938 = vpop.f32.mrb[0].mxu0
    %v4939 = vadd.f32 0.0, %v4938
    %v4940 = vpop.f32.mrb[0].mxu0
    %v4941 = vpop.f32.mrb[0].mxu0
    %v4942 = vadd.f32 0.0, %v4941
    %v4943 = vpop.f32.mrb[0].mxu0
    %4944 = vmatprep.mubr.bf16.mxu0 0
    %4945 = vmatmul.mubr.bf16.gmra.mrb[0].mxu0 %v4819
    %v4946 = vpop.f32.mrb[0].mxu0
    %v4947 = vadd.f32 0.0, %v4946
    %v4948 = vpop.f32.mrb[0].mxu0
    %v4949 = vpop.f32.mrb[0].mxu0
    %v4950 = vadd.f32 0.0, %v4949
    %v4951 = vpop.f32.mrb[0].mxu0
    %4952 = vmatprep.mubr.bf16.mxu0 0
    %4953 = vmatmul.mubr.bf16.gmra.mrb[0].mxu0 %v4820
    %v4954 = vpop.f32.mrb[0].mxu0
    %v4955 = vadd.f32 0.0, %v4954
    %v4956 = vpop.f32.mrb[0].mxu0
    %v4957 = vpop.f32.mrb[0].mxu0
    %v4958 = vadd.f32 0.0, %v4957
    %v4959 = vpop.f32.mrb[0].mxu0
    %4960 = vmatprep.mubr.bf16.mxu0 0
    %4961 = vmatmul.mubr.bf16.gmra.mrb[0].mxu0 %v4821
    %v4962 = vpop.f32.mrb[0].mxu0
    %v4963 = vadd.f32 0.0, %v4962
    %v4964 = vpop.f32.mrb[0].mxu0
    %v4965 = vpop.f32.mrb[0].mxu0
    %v4966 = vadd.f32 0.0, %v4965
    %v4967 = vpop.f32.mrb[0].mxu0
    %4968 = vmatprep.mubr.bf16.mxu0 0
    %4969 = vmatmul.mubr.bf16.gmra.mrb[0].mxu0 %v4822
    %v4970 = vpop.f32.mrb[0].mxu0
    %v4971 = vadd.f32 0.0, %v4970
    %v4972 = vpop.f32.mrb[0].mxu0
    %v4973 = vpop.f32.mrb[0].mxu0
    %v4974 = vadd.f32 0.0, %v4973
    %v4975 = vpop.f32.mrb[0].mxu0
    %4976 = vmatprep.mubr.bf16.mxu0 0
    %4977 = vmatmul.mubr.bf16.gmra.mrb[0].mxu0 %v4823
    %v4978 = vpop.f32.mrb[0].mxu0
    %v4979 = vadd.f32 0.0, %v4978
    %v4980 = vpop.f32.mrb[0].mxu0
    %v4981 = vpop.f32.mrb[0].mxu0
    %v4982 = vadd.f32 0.0, %v4981
    %v4983 = vpop.f32.mrb[0].mxu0
    %4984 = vdwg.mxu0
    %vm4985 = vcmp.ge.f32.partialorder %v4923, 0.0
    %vm4986 = vcmp.ge.f32.partialorder %v4926, 0.0
    %vm4987 = vcmp.ge.f32.partialorder %v4931, 0.0
    %vm4988 = vcmp.ge.f32.partialorder %v4934, 0.0
    %vm4989 = vcmp.ge.f32.partialorder %v4939, 0.0
    %vm4990 = vcmp.ge.f32.partialorder %v4942, 0.0
    %vm4991 = vcmp.ge.f32.partialorder %v4947, 0.0
    %vm4992 = vcmp.ge.f32.partialorder %v4950, 0.0
    %vm4993 = vcmp.ge.f32.partialorder %v4955, 0.0
    %vm4994 = vcmp.ge.f32.partialorder %v4958, 0.0
    %vm4995 = vcmp.ge.f32.partialorder %v4963, 0.0
    %vm4996 = vcmp.ge.f32.partialorder %v4966, 0.0
    %vm4997 = vcmp.ge.f32.partialorder %v4971, 0.0
    %vm4998 = vcmp.ge.f32.partialorder %v4974, 0.0
    %vm4999 = vcmp.ge.f32.partialorder %v4979, 0.0
    %vm5000 = vcmp.ge.f32.partialorder %v4982, 0.0
    %v5001 = vstv %s4589
    %v5002 = vmul.f32 %v5001, %v4923
    %v5003 = vmul.f32 %v5001, %v4926
    %v5004 = vmul.f32 %v5001, %v4931
    %v5005 = vmul.f32 %v5001, %v4934
    %v5006 = vmul.f32 %v5001, %v4939
    %v5007 = vmul.f32 %v5001, %v4942
    %v5008 = vmul.f32 %v5001, %v4947
    %v5009 = vmul.f32 %v5001, %v4950
    %v5010 = vmul.f32 %v5001, %v4955
    %v5011 = vmul.f32 %v5001, %v4958
    %v5012 = vmul.f32 %v5001, %v4963
    %v5013 = vmul.f32 %v5001, %v4966
    %v5014 = vmul.f32 %v5001, %v4971
    %v5015 = vmul.f32 %v5001, %v4974
    %v5016 = vmul.f32 %v5001, %v4979
    %v5017 = vmul.f32 %v5001, %v4982
    %v5018 = vsel %vm4985, %v4923, %v5002
    %v5019 = vsel %vm4986, %v4926, %v5003
    %v5020 = vsel %vm4987, %v4931, %v5004
    %v5021 = vsel %vm4988, %v4934, %v5005
    %v5022 = vsel %vm4989, %v4939, %v5006
    %v5023 = vsel %vm4990, %v4942, %v5007
    %v5024 = vsel %vm4991, %v4947, %v5008
    %v5025 = vsel %vm4992, %v4950, %v5009
    %v5026 = vsel %vm4993, %v4955, %v5010
    %v5027 = vsel %vm4994, %v4958, %v5011
    %v5028 = vsel %vm4995, %v4963, %v5012
    %v5029 = vsel %vm4996, %v4966, %v5013
    %v5030 = vsel %vm4997, %v4971, %v5014
    %v5031 = vsel %vm4998, %v4974, %v5015
    %v5032 = vsel %vm4999, %v4979, %v5016
    %v5033 = vsel %vm5000, %v4982, %v5017
    %v5034 = vpack.c.bf16 %v5019, %v5018
    %v5035 = vpack.c.bf16 %v5021, %v5020
    %v5036 = vpack.c.bf16 %v5023, %v5022
    %v5037 = vpack.c.bf16 %v5025, %v5024
    %v5038 = vpack.c.bf16 %v5027, %v5026
    %v5039 = vpack.c.bf16 %v5029, %v5028
    %v5040 = vpack.c.bf16 %v5031, %v5030
    %v5041 = vpack.c.bf16 %v5033, %v5032
    %v5042 = vld [vmem:[%s83] sm:$0xf]
    %v5043 = vld [vmem:[%s83 + $0x4] sm:$0xf]
    %v5044 = vld [vmem:[%s83 + $0x8] sm:$0xf]
    %v5045 = vld [vmem:[%s83 + $0xc] sm:$0xf]
    %v5046 = vld [vmem:[%s83 + $0x10] sm:$0xf]
    %v5047 = vld [vmem:[%s83 + $0x14] sm:$0xf]
    %v5048 = vld [vmem:[%s83 + $0x18] sm:$0xf]
    %v5049 = vld [vmem:[%s83 + $0x1c] sm:$0xf]
    %v5050 = vld [vmem:[%s83 + $0x20] sm:$0xf]
    %v5051 = vld [vmem:[%s83 + $0x24] sm:$0xf]
    %v5052 = vld [vmem:[%s83 + $0x28] sm:$0xf]
    %v5053 = vld [vmem:[%s83 + $0x2c] sm:$0xf]
    %v5054 = vld [vmem:[%s83 + $0x30] sm:$0xf]
    %v5055 = vld [vmem:[%s83 + $0x34] sm:$0xf]
    %v5056 = vld [vmem:[%s83 + $0x38] sm:$0xf]
    %v5057 = vld [vmem:[%s83 + $0x3c] sm:$0xf]
    %v5074 = vunpack.c.l.b16 %v5042
    %v5075 = vunpack.c.l.b16 %v5043
    %v5076 = vunpack.c.l.b16 %v5044
    %v5077 = vunpack.c.l.b16 %v5045
    %v5078 = vunpack.c.l.b16 %v5046
    %v5079 = vunpack.c.l.b16 %v5047
    %v5080 = vunpack.c.l.b16 %v5048
    %v5081 = vunpack.c.l.b16 %v5049
    %v5082 = vunpack.c.l.b16 %v5050
    %v5083 = vunpack.c.l.b16 %v5051
    %v5084 = vunpack.c.l.b16 %v5052
    %v5085 = vunpack.c.l.b16 %v5053
    %v5086 = vunpack.c.l.b16 %v5054
    %v5087 = vunpack.c.l.b16 %v5055
    %v5088 = vunpack.c.l.b16 %v5056
    %v5089 = vunpack.c.l.b16 %v5057
    %v5090 = vpack.c.b16 %v5075, %v5074
    %v5091 = vpack.c.b16 %v5077, %v5076
    %v5092 = vpack.c.b16 %v5079, %v5078
    %v5093 = vpack.c.b16 %v5081, %v5080
    %v5094 = vpack.c.b16 %v5083, %v5082
    %v5095 = vpack.c.b16 %v5085, %v5084
    %v5096 = vpack.c.b16 %v5087, %v5086
    %v5097 = vpack.c.b16 %v5089, %v5088
    %5106 = vmatprep.subr.bf16.mxu0 0
    %5107 = vmatpush1.bf16.msra.mxu0 %v5090
    %5108 = vmatprep.subr.bf16.mxu0 0
    %5109 = vmatpush1.bf16.msra.mxu0 %v5091
    %5110 = vmatprep.subr.bf16.mxu0 0
    %5111 = vmatpush1.bf16.msra.mxu0 %v5092
    %5112 = vmatprep.subr.bf16.mxu0 0
    %5113 = vmatpush1.bf16.msra.mxu0 %v5093
    %5114 = vmatprep.subr.bf16.mxu0 0
    %5115 = vmatpush1.bf16.msra.mxu0 %v5094
    %5116 = vmatprep.subr.bf16.mxu0 0
    %5117 = vmatpush1.bf16.msra.mxu0 %v5095
    %5118 = vmatprep.subr.bf16.mxu0 0
    %5119 = vmatpush1.bf16.msra.mxu0 %v5096
    %5120 = vmatprep.subr.bf16.mxu0 0
    %5121 = vmatpush1.bf16.msra.mxu0 %v5097
    %5122 = vmatprep.subr.bf16.mxu0 0
    %5123 = vmatpush1.bf16.msra.mxu0 0
    %5124 = vmatprep.subr.bf16.mxu0 0
    %5125 = vmatpush1.bf16.msra.mxu0 0
    %5126 = vmatprep.subr.bf16.mxu0 0
    %5127 = vmatpush1.bf16.msra.mxu0 0
    %5128 = vmatprep.subr.bf16.mxu0 0
    %5129 = vmatpush1.bf16.msra.mxu0 0
    %5130 = vmatprep.subr.bf16.mxu0 0
    %5131 = vmatpush1.bf16.msra.mxu0 0
    %5132 = vmatprep.subr.bf16.mxu0 0
    %5133 = vmatpush1.bf16.msra.mxu0 0
    %5134 = vmatprep.subr.bf16.mxu0 0
    %5135 = vmatpush1.bf16.msra.mxu0 0
    %5136 = vmatprep.subr.bf16.mxu0 0
    %5137 = vmatpush1.bf16.msra.mxu0 0
    %5138 = vmatprep.mubr.bf16.mxu0 0
    %5139 = vmatmul.mubr.bf16.gmra.mrb[0].mxu0 %v5034
    %v5140 = vpop.f32.mrb[0].mxu0
    %v5141 = vadd.f32 0.0, %v5140
    %v5142 = vpop.f32.mrb[0].mxu0
    %v5143 = vpop.f32.mrb[0].mxu0
    %v5144 = vadd.f32 0.0, %v5143
    %v5145 = vpop.f32.mrb[0].mxu0
    %5146 = vmatprep.mubr.bf16.mxu0 0
    %5147 = vmatmul.mubr.bf16.gmra.mrb[0].mxu0 %v5035
    %v5148 = vpop.f32.mrb[0].mxu0
    %v5149 = vadd.f32 0.0, %v5148
    %v5150 = vpop.f32.mrb[0].mxu0
    %v5151 = vpop.f32.mrb[0].mxu0
    %v5152 = vadd.f32 0.0, %v5151
    %v5153 = vpop.f32.mrb[0].mxu0
    %5154 = vmatprep.mubr.bf16.mxu0 0
    %5155 = vmatmul.mubr.bf16.gmra.mrb[0].mxu0 %v5036
    %v5156 = vpop.f32.mrb[0].mxu0
    %v5157 = vadd.f32 0.0, %v5156
    %v5158 = vpop.f32.mrb[0].mxu0
    %v5159 = vpop.f32.mrb[0].mxu0
    %v5160 = vadd.f32 0.0, %v5159
    %v5161 = vpop.f32.mrb[0].mxu0
    %5162 = vmatprep.mubr.bf16.mxu0 0
    %5163 = vmatmul.mubr.bf16.gmra.mrb[0].mxu0 %v5037
    %v5164 = vpop.f32.mrb[0].mxu0
    %v5165 = vadd.f32 0.0, %v5164
    %v5166 = vpop.f32.mrb[0].mxu0
    %v5167 = vpop.f32.mrb[0].mxu0
    %v5168 = vadd.f32 0.0, %v5167
    %v5169 = vpop.f32.mrb[0].mxu0
    %5170 = vmatprep.mubr.bf16.mxu0 0
    %5171 = vmatmul.mubr.bf16.gmra.mrb[0].mxu0 %v5038
    %v5172 = vpop.f32.mrb[0].mxu0
    %v5173 = vadd.f32 0.0, %v5172
    %v5174 = vpop.f32.mrb[0].mxu0
    %v5175 = vpop.f32.mrb[0].mxu0
    %v5176 = vadd.f32 0.0, %v5175
    %v5177 = vpop.f32.mrb[0].mxu0
    %5178 = vmatprep.mubr.bf16.mxu0 0
    %5179 = vmatmul.mubr.bf16.gmra.mrb[0].mxu0 %v5039
    %v5180 = vpop.f32.mrb[0].mxu0
    %v5181 = vadd.f32 0.0, %v5180
    %v5182 = vpop.f32.mrb[0].mxu0
    %v5183 = vpop.f32.mrb[0].mxu0
    %v5184 = vadd.f32 0.0, %v5183
    %v5185 = vpop.f32.mrb[0].mxu0
    %5186 = vmatprep.mubr.bf16.mxu0 0
    %5187 = vmatmul.mubr.bf16.gmra.mrb[0].mxu0 %v5040
    %v5188 = vpop.f32.mrb[0].mxu0
    %v5189 = vadd.f32 0.0, %v5188
    %v5190 = vpop.f32.mrb[0].mxu0
    %v5191 = vpop.f32.mrb[0].mxu0
    %v5192 = vadd.f32 0.0, %v5191
    %v5193 = vpop.f32.mrb[0].mxu0
    %5194 = vmatprep.mubr.bf16.mxu0 0
    %5195 = vmatmul.mubr.bf16.gmra.mrb[0].mxu0 %v5041
    %v5196 = vpop.f32.mrb[0].mxu0
    %v5197 = vadd.f32 0.0, %v5196
    %v5198 = vpop.f32.mrb[0].mxu0
    %v5199 = vpop.f32.mrb[0].mxu0
    %v5200 = vadd.f32 0.0, %v5199
    %v5201 = vpop.f32.mrb[0].mxu0
    %5202 = vdwg.mxu0
    %vm5203 = vcmp.ge.f32.partialorder %v5141, 0.0
    %vm5204 = vcmp.ge.f32.partialorder %v5144, 0.0
    %vm5205 = vcmp.ge.f32.partialorder %v5149, 0.0
    %vm5206 = vcmp.ge.f32.partialorder %v5152, 0.0
    %vm5207 = vcmp.ge.f32.partialorder %v5157, 0.0
    %vm5208 = vcmp.ge.f32.partialorder %v5160, 0.0
    %vm5209 = vcmp.ge.f32.partialorder %v5165, 0.0
    %vm5210 = vcmp.ge.f32.partialorder %v5168, 0.0
    %vm5211 = vcmp.ge.f32.partialorder %v5173, 0.0
    %vm5212 = vcmp.ge.f32.partialorder %v5176, 0.0
    %vm5213 = vcmp.ge.f32.partialorder %v5181, 0.0
    %vm5214 = vcmp.ge.f32.partialorder %v5184, 0.0
    %vm5215 = vcmp.ge.f32.partialorder %v5189, 0.0
    %vm5216 = vcmp.ge.f32.partialorder %v5192, 0.0
    %vm5217 = vcmp.ge.f32.partialorder %v5197, 0.0
    %vm5218 = vcmp.ge.f32.partialorder %v5200, 0.0
    %v5219 = vstv %s4590
    %v5220 = vmul.f32 %v5219, %v5141
    %v5221 = vmul.f32 %v5219, %v5144
    %v5222 = vmul.f32 %v5219, %v5149
    %v5223 = vmul.f32 %v5219, %v5152
    %v5224 = vmul.f32 %v5219, %v5157
    %v5225 = vmul.f32 %v5219, %v5160
    %v5226 = vmul.f32 %v5219, %v5165
    %v5227 = vmul.f32 %v5219, %v5168
    %v5228 = vmul.f32 %v5219, %v5173
    %v5229 = vmul.f32 %v5219, %v5176
    %v5230 = vmul.f32 %v5219, %v5181
    %v5231 = vmul.f32 %v5219, %v5184
    %v5232 = vmul.f32 %v5219, %v5189
    %v5233 = vmul.f32 %v5219, %v5192
    %v5234 = vmul.f32 %v5219, %v5197
    %v5235 = vmul.f32 %v5219, %v5200
    %v5236 = vsel %vm5203, %v5141, %v5220
    %v5237 = vsel %vm5204, %v5144, %v5221
    %v5238 = vsel %vm5205, %v5149, %v5222
    %v5239 = vsel %vm5206, %v5152, %v5223
    %v5240 = vsel %vm5207, %v5157, %v5224
    %v5241 = vsel %vm5208, %v5160, %v5225
    %v5242 = vsel %vm5209, %v5165, %v5226
    %v5243 = vsel %vm5210, %v5168, %v5227
    %v5244 = vsel %vm5211, %v5173, %v5228
    %v5245 = vsel %vm5212, %v5176, %v5229
    %v5246 = vsel %vm5213, %v5181, %v5230
    %v5247 = vsel %vm5214, %v5184, %v5231
    %v5248 = vsel %vm5215, %v5189, %v5232
    %v5249 = vsel %vm5216, %v5192, %v5233
    %v5250 = vsel %vm5217, %v5197, %v5234
    %v5251 = vsel %vm5218, %v5200, %v5235
    %v5252 = vpack.c.bf16 %v5237, %v5236
    %v5253 = vpack.c.bf16 %v5239, %v5238
    %v5254 = vpack.c.bf16 %v5241, %v5240
    %v5255 = vpack.c.bf16 %v5243, %v5242
    %v5256 = vpack.c.bf16 %v5245, %v5244
    %v5257 = vpack.c.bf16 %v5247, %v5246
    %v5258 = vpack.c.bf16 %v5249, %v5248
    %v5259 = vpack.c.bf16 %v5251, %v5250
    %v5260 = vld [vmem:[%s85] sm:$0xf]
    %v5261 = vld [vmem:[%s85 + $0x4] sm:$0xf]
    %v5262 = vld [vmem:[%s85 + $0x8] sm:$0xf]
    %v5263 = vld [vmem:[%s85 + $0xc] sm:$0xf]
    %v5264 = vld [vmem:[%s85 + $0x10] sm:$0xf]
    %v5265 = vld [vmem:[%s85 + $0x14] sm:$0xf]
    %v5266 = vld [vmem:[%s85 + $0x18] sm:$0xf]
    %v5267 = vld [vmem:[%s85 + $0x1c] sm:$0xf]
    %v5268 = vld [vmem:[%s85 + $0x20] sm:$0xf]
    %v5269 = vld [vmem:[%s85 + $0x24] sm:$0xf]
    %v5270 = vld [vmem:[%s85 + $0x28] sm:$0xf]
    %v5271 = vld [vmem:[%s85 + $0x2c] sm:$0xf]
    %v5272 = vld [vmem:[%s85 + $0x30] sm:$0xf]
    %v5273 = vld [vmem:[%s85 + $0x34] sm:$0xf]
    %v5274 = vld [vmem:[%s85 + $0x38] sm:$0xf]
    %v5275 = vld [vmem:[%s85 + $0x3c] sm:$0xf]
    %v5276 = vld [vmem:[%s87] sm:$0x1]
    %v5278 = vlaneseq
    %v5279 = vshrl.u32 %v5278, 7
    %v5280 = vsub.s32 0, %v5279
    %v5281 = vrot.slane %v5276, %v5280
    %v5299 = vunpack.c.l.b16 %v5260
    %v5300 = vunpack.c.l.b16 %v5261
    %v5301 = vunpack.c.l.b16 %v5262
    %v5302 = vunpack.c.l.b16 %v5263
    %v5303 = vunpack.c.l.b16 %v5264
    %v5304 = vunpack.c.l.b16 %v5265
    %v5305 = vunpack.c.l.b16 %v5266
    %v5306 = vunpack.c.l.b16 %v5267
    %v5307 = vunpack.c.l.b16 %v5268
    %v5308 = vunpack.c.l.b16 %v5269
    %v5309 = vunpack.c.l.b16 %v5270
    %v5310 = vunpack.c.l.b16 %v5271
    %v5311 = vunpack.c.l.b16 %v5272
    %v5312 = vunpack.c.l.b16 %v5273
    %v5313 = vunpack.c.l.b16 %v5274
    %v5314 = vunpack.c.l.b16 %v5275
    %v5315 = vpack.c.b16 %v5300, %v5299
    %v5316 = vpack.c.b16 %v5302, %v5301
    %v5317 = vpack.c.b16 %v5304, %v5303
    %v5318 = vpack.c.b16 %v5306, %v5305
    %v5319 = vpack.c.b16 %v5308, %v5307
    %v5320 = vpack.c.b16 %v5310, %v5309
    %v5321 = vpack.c.b16 %v5312, %v5311
    %v5322 = vpack.c.b16 %v5314, %v5313
    %5331 = vmatprep.subr.bf16.mxu0 0
    %5332 = vmatpush1.bf16.msra.mxu0 %v5315
    %5333 = vmatprep.subr.bf16.mxu0 0
    %5334 = vmatpush1.bf16.msra.mxu0 %v5316
    %5335 = vmatprep.subr.bf16.mxu0 0
    %5336 = vmatpush1.bf16.msra.mxu0 %v5317
    %5337 = vmatprep.subr.bf16.mxu0 0
    %5338 = vmatpush1.bf16.msra.mxu0 %v5318
    %5339 = vmatprep.subr.bf16.mxu0 0
    %5340 = vmatpush1.bf16.msra.mxu0 %v5319
    %5341 = vmatprep.subr.bf16.mxu0 0
    %5342 = vmatpush1.bf16.msra.mxu0 %v5320
    %5343 = vmatprep.subr.bf16.mxu0 0
    %5344 = vmatpush1.bf16.msra.mxu0 %v5321
    %5345 = vmatprep.subr.bf16.mxu0 0
    %5346 = vmatpush1.bf16.msra.mxu0 %v5322
    %5347 = vmatprep.subr.bf16.mxu0 0
    %5348 = vmatpush1.bf16.msra.mxu0 0
    %5349 = vmatprep.subr.bf16.mxu0 0
    %5350 = vmatpush1.bf16.msra.mxu0 0
    %5351 = vmatprep.subr.bf16.mxu0 0
    %5352 = vmatpush1.bf16.msra.mxu0 0
    %5353 = vmatprep.subr.bf16.mxu0 0
    %5354 = vmatpush1.bf16.msra.mxu0 0
    %5355 = vmatprep.subr.bf16.mxu0 0
    %5356 = vmatpush1.bf16.msra.mxu0 0
    %5357 = vmatprep.subr.bf16.mxu0 0
    %5358 = vmatpush1.bf16.msra.mxu0 0
    %5359 = vmatprep.subr.bf16.mxu0 0
    %5360 = vmatpush1.bf16.msra.mxu0 0
    %5361 = vmatprep.subr.bf16.mxu0 0
    %5362 = vmatpush1.bf16.msra.mxu0 0
    %5363 = vmatprep.mubr.bf16.mxu0 0
    %5364 = vmatmul.mubr.bf16.gmra.mrb[0].mxu0 %v5252
    %v5365 = vpop.f32.mrb[0].mxu0
    %v5366 = vadd.f32 %v5281, %v5365
    %v5367 = vpop.f32.mrb[0].mxu0
    %v5368 = vpop.f32.mrb[0].mxu0
    %v5369 = vadd.f32 %v5281, %v5368
    %v5370 = vpop.f32.mrb[0].mxu0
    %5371 = vmatprep.mubr.bf16.mxu0 0
    %5372 = vmatmul.mubr.bf16.gmra.mrb[0].mxu0 %v5253
    %v5373 = vpop.f32.mrb[0].mxu0
    %v5374 = vadd.f32 %v5281, %v5373
    %v5375 = vpop.f32.mrb[0].mxu0
    %v5376 = vpop.f32.mrb[0].mxu0
    %v5377 = vadd.f32 %v5281, %v5376
    %v5378 = vpop.f32.mrb[0].mxu0
    %5379 = vmatprep.mubr.bf16.mxu0 0
    %5380 = vmatmul.mubr.bf16.gmra.mrb[0].mxu0 %v5254
    %v5381 = vpop.f32.mrb[0].mxu0
    %v5382 = vadd.f32 %v5281, %v5381
    %v5383 = vpop.f32.mrb[0].mxu0
    %v5384 = vpop.f32.mrb[0].mxu0
    %v5385 = vadd.f32 %v5281, %v5384
    %v5386 = vpop.f32.mrb[0].mxu0
    %5387 = vmatprep.mubr.bf16.mxu0 0
    %5388 = vmatmul.mubr.bf16.gmra.mrb[0].mxu0 %v5255
    %v5389 = vpop.f32.mrb[0].mxu0
    %v5390 = vadd.f32 %v5281, %v5389
    %v5391 = vpop.f32.mrb[0].mxu0
    %v5392 = vpop.f32.mrb[0].mxu0
    %v5393 = vadd.f32 %v5281, %v5392
    %v5394 = vpop.f32.mrb[0].mxu0
    %5395 = vmatprep.mubr.bf16.mxu0 0
    %5396 = vmatmul.mubr.bf16.gmra.mrb[0].mxu0 %v5256
    %v5397 = vpop.f32.mrb[0].mxu0
    %v5398 = vadd.f32 %v5281, %v5397
    %v5399 = vpop.f32.mrb[0].mxu0
    %v5400 = vpop.f32.mrb[0].mxu0
    %v5401 = vadd.f32 %v5281, %v5400
    %v5402 = vpop.f32.mrb[0].mxu0
    %5403 = vmatprep.mubr.bf16.mxu0 0
    %5404 = vmatmul.mubr.bf16.gmra.mrb[0].mxu0 %v5257
    %v5405 = vpop.f32.mrb[0].mxu0
    %v5406 = vadd.f32 %v5281, %v5405
    %v5407 = vpop.f32.mrb[0].mxu0
    %v5408 = vpop.f32.mrb[0].mxu0
    %v5409 = vadd.f32 %v5281, %v5408
    %v5410 = vpop.f32.mrb[0].mxu0
    %5411 = vmatprep.mubr.bf16.mxu0 0
    %5412 = vmatmul.mubr.bf16.gmra.mrb[0].mxu0 %v5258
    %v5413 = vpop.f32.mrb[0].mxu0
    %v5414 = vadd.f32 %v5281, %v5413
    %v5415 = vpop.f32.mrb[0].mxu0
    %v5416 = vpop.f32.mrb[0].mxu0
    %v5417 = vadd.f32 %v5281, %v5416
    %v5418 = vpop.f32.mrb[0].mxu0
    %5419 = vmatprep.mubr.bf16.mxu0 0
    %5420 = vmatmul.mubr.bf16.gmra.mrb[0].mxu0 %v5259
    %v5421 = vpop.f32.mrb[0].mxu0
    %v5422 = vadd.f32 %v5281, %v5421
    %v5423 = vpop.f32.mrb[0].mxu0
    %v5424 = vpop.f32.mrb[0].mxu0
    %v5425 = vadd.f32 %v5281, %v5424
    %v5426 = vpop.f32.mrb[0].mxu0
    %5427 = vdwg.mxu0
    %v5428 = vmul.f32 %v5366, %v373
    %v5429 = vmul.f32 %v5369, %v374
    %v5430 = vmul.f32 %v5374, %v375
    %v5431 = vmul.f32 %v5377, %v376
    %v5432 = vmul.f32 %v5382, %v377
    %v5433 = vmul.f32 %v5385, %v378
    %v5434 = vmul.f32 %v5390, %v379
    %v5435 = vmul.f32 %v5393, %v380
    %v5436 = vmul.f32 %v5398, %v381
    %v5437 = vmul.f32 %v5401, %v382
    %v5438 = vmul.f32 %v5406, %v383
    %v5439 = vmul.f32 %v5409, %v384
    %v5440 = vmul.f32 %v5414, %v385
    %v5441 = vmul.f32 %v5417, %v386
    %v5442 = vmul.f32 %v5422, %v387
    %v5443 = vmul.f32 %v5425, %v388
    %v5444 = vadd.f32 %v5428, %v5429
    %v5445 = vadd.f32 %v5444, %v5430
    %v5446 = vadd.f32 %v5445, %v5431
    %v5447 = vadd.f32 %v5446, %v5432
    %v5448 = vadd.f32 %v5447, %v5433
    %v5449 = vadd.f32 %v5448, %v5434
    %v5450 = vadd.f32 %v5449, %v5435
    %v5451 = vadd.f32 %v5450, %v5436
    %v5452 = vadd.f32 %v5451, %v5437
    %v5453 = vadd.f32 %v5452, %v5438
    %v5454 = vadd.f32 %v5453, %v5439
    %v5455 = vadd.f32 %v5454, %v5440
    %v5456 = vadd.f32 %v5455, %v5441
    %v5457 = vadd.f32 %v5456, %v5442
    %v5458 = vadd.f32 %v5457, %v5443
    %v5459 = vrot.slane %v5458, 4
    %v5460 = vadd.f32 %v5458, %v5459
    %v5461 = vrot.slane %v5460, 2
    %v5462 = vadd.f32 %v5460, %v5461
    %v5463 = vrot.slane %v5462, 1
    %v5464 = vadd.f32 %v5462, %v5463
    %v5465 = vmul.f32 %v5464, 0.0625
    %v5466 = vld [vmem:[%s93] sm:$0x1]
    %v5467 = vmul.f32 %v5466, %v5465
    %v5469 = vlaneseq
    %v5470 = vshrl.u32 %v5469, 7
    %v5471 = vsub.s32 0, %v5470
    %v5472 = vrot.slane %v5467, %v5471
    %v5474 = vsub.f32 %v5366, %v5472
    %v5475 = vsub.f32 %v5369, %v5472
    %v5476 = vsub.f32 %v5374, %v5472
    %v5477 = vsub.f32 %v5377, %v5472
    %v5478 = vsub.f32 %v5382, %v5472
    %v5479 = vsub.f32 %v5385, %v5472
    %v5480 = vsub.f32 %v5390, %v5472
    %v5481 = vsub.f32 %v5393, %v5472
    %v5482 = vsub.f32 %v5398, %v5472
    %v5483 = vsub.f32 %v5401, %v5472
    %v5484 = vsub.f32 %v5406, %v5472
    %v5485 = vsub.f32 %v5409, %v5472
    %v5486 = vsub.f32 %v5414, %v5472
    %v5487 = vsub.f32 %v5417, %v5472
    %v5488 = vsub.f32 %v5422, %v5472
    %v5489 = vsub.f32 %v5425, %v5472
    %v5490 = vmul.f32 %v5474, %v5474
    %v5491 = vmul.f32 %v5475, %v5475
    %v5492 = vmul.f32 %v5476, %v5476
    %v5493 = vmul.f32 %v5477, %v5477
    %v5494 = vmul.f32 %v5478, %v5478
    %v5495 = vmul.f32 %v5479, %v5479
    %v5496 = vmul.f32 %v5480, %v5480
    %v5497 = vmul.f32 %v5481, %v5481
    %v5498 = vmul.f32 %v5482, %v5482
    %v5499 = vmul.f32 %v5483, %v5483
    %v5500 = vmul.f32 %v5484, %v5484
    %v5501 = vmul.f32 %v5485, %v5485
    %v5502 = vmul.f32 %v5486, %v5486
    %v5503 = vmul.f32 %v5487, %v5487
    %v5504 = vmul.f32 %v5488, %v5488
    %v5505 = vmul.f32 %v5489, %v5489
    %v5506 = vmul.f32 %v5490, %v373
    %v5507 = vmul.f32 %v5491, %v374
    %v5508 = vmul.f32 %v5492, %v375
    %v5509 = vmul.f32 %v5493, %v376
    %v5510 = vmul.f32 %v5494, %v377
    %v5511 = vmul.f32 %v5495, %v378
    %v5512 = vmul.f32 %v5496, %v379
    %v5513 = vmul.f32 %v5497, %v380
    %v5514 = vmul.f32 %v5498, %v381
    %v5515 = vmul.f32 %v5499, %v382
    %v5516 = vmul.f32 %v5500, %v383
    %v5517 = vmul.f32 %v5501, %v384
    %v5518 = vmul.f32 %v5502, %v385
    %v5519 = vmul.f32 %v5503, %v386
    %v5520 = vmul.f32 %v5504, %v387
    %v5521 = vmul.f32 %v5505, %v388
    %v5522 = vadd.f32 %v5506, %v5507
    %v5523 = vadd.f32 %v5522, %v5508
    %v5524 = vadd.f32 %v5523, %v5509
    %v5525 = vadd.f32 %v5524, %v5510
    %v5526 = vadd.f32 %v5525, %v5511
    %v5527 = vadd.f32 %v5526, %v5512
    %v5528 = vadd.f32 %v5527, %v5513
    %v5529 = vadd.f32 %v5528, %v5514
    %v5530 = vadd.f32 %v5529, %v5515
    %v5531 = vadd.f32 %v5530, %v5516
    %v5532 = vadd.f32 %v5531, %v5517
    %v5533 = vadd.f32 %v5532, %v5518
    %v5534 = vadd.f32 %v5533, %v5519
    %v5535 = vadd.f32 %v5534, %v5520
    %v5536 = vadd.f32 %v5535, %v5521
    %v5537 = vrot.slane %v5536, 4
    %v5538 = vadd.f32 %v5536, %v5537
    %v5539 = vrot.slane %v5538, 2
    %v5540 = vadd.f32 %v5538, %v5539
    %v5541 = vrot.slane %v5540, 1
    %v5542 = vadd.f32 %v5540, %v5541
    %v5543 = vmul.f32 %v5542, 0.0625
    %v5544 = vadd.f32 %v5543, 1e-05
    %v5545 = vrsqrt.pop %v5544
    %v5546 = vmul.f32 %v5474, %v5545
    %v5547 = vmul.f32 %v5475, %v5545
    %v5548 = vmul.f32 %v5476, %v5545
    %v5549 = vmul.f32 %v5477, %v5545
    %v5550 = vmul.f32 %v5478, %v5545
    %v5551 = vmul.f32 %v5479, %v5545
    %v5552 = vmul.f32 %v5480, %v5545
    %v5553 = vmul.f32 %v5481, %v5545
    %v5554 = vmul.f32 %v5482, %v5545
    %v5555 = vmul.f32 %v5483, %v5545
    %v5556 = vmul.f32 %v5484, %v5545
    %v5557 = vmul.f32 %v5485, %v5545
    %v5558 = vmul.f32 %v5486, %v5545
    %v5559 = vmul.f32 %v5487, %v5545
    %v5560 = vmul.f32 %v5488, %v5545
    %v5561 = vmul.f32 %v5489, %v5545
    %v5562 = vld [vmem:[%s89] sm:$0x1]
    %v5564 = vlaneseq
    %v5565 = vshrl.u32 %v5564, 7
    %v5566 = vsub.s32 0, %v5565
    %v5567 = vrot.slane %v5562, %v5566
    %v5569 = vmul.f32 %v5546, %v5567
    %v5570 = vmul.f32 %v5547, %v5567
    %v5571 = vmul.f32 %v5548, %v5567
    %v5572 = vmul.f32 %v5549, %v5567
    %v5573 = vmul.f32 %v5550, %v5567
    %v5574 = vmul.f32 %v5551, %v5567
    %v5575 = vmul.f32 %v5552, %v5567
    %v5576 = vmul.f32 %v5553, %v5567
    %v5577 = vmul.f32 %v5554, %v5567
    %v5578 = vmul.f32 %v5555, %v5567
    %v5579 = vmul.f32 %v5556, %v5567
    %v5580 = vmul.f32 %v5557, %v5567
    %v5581 = vmul.f32 %v5558, %v5567
    %v5582 = vmul.f32 %v5559, %v5567
    %v5583 = vmul.f32 %v5560, %v5567
    %v5584 = vmul.f32 %v5561, %v5567
    %v5585 = vld [vmem:[%s91] sm:$0x1]
    %v5587 = vlaneseq
    %v5588 = vshrl.u32 %v5587, 7
    %v5589 = vsub.s32 0, %v5588
    %v5590 = vrot.slane %v5585, %v5589
    %v5592 = vadd.f32 %v5569, %v5590
    %v5593 = vadd.f32 %v5570, %v5590
    %v5594 = vadd.f32 %v5571, %v5590
    %v5595 = vadd.f32 %v5572, %v5590
    %v5596 = vadd.f32 %v5573, %v5590
    %v5597 = vadd.f32 %v5574, %v5590
    %v5598 = vadd.f32 %v5575, %v5590
    %v5599 = vadd.f32 %v5576, %v5590
    %v5600 = vadd.f32 %v5577, %v5590
    %v5601 = vadd.f32 %v5578, %v5590
    %v5602 = vadd.f32 %v5579, %v5590
    %v5603 = vadd.f32 %v5580, %v5590
    %v5604 = vadd.f32 %v5581, %v5590
    %v5605 = vadd.f32 %v5582, %v5590
    %v5606 = vadd.f32 %v5583, %v5590
    %v5607 = vadd.f32 %v5584, %v5590
    %v5608 = vpack.c.bf16 %v5593, %v5592
    %v5609 = vpack.c.bf16 %v5595, %v5594
    %v5610 = vpack.c.bf16 %v5597, %v5596
    %v5611 = vpack.c.bf16 %v5599, %v5598
    %v5612 = vpack.c.bf16 %v5601, %v5600
    %v5613 = vpack.c.bf16 %v5603, %v5602
    %v5614 = vpack.c.bf16 %v5605, %v5604
    %v5615 = vpack.c.bf16 %v5607, %v5606
    %5616 = vmatprep.subr.bf16.mxu0 0
    %5617 = vmatpush1.bf16.msra.mxu0 %v5608
    %5618 = vmatprep.subr.bf16.mxu0 0
    %5619 = vmatpush1.bf16.msra.mxu0 %v5609
    %5620 = vmatprep.subr.bf16.mxu0 0
    %5621 = vmatpush1.bf16.msra.mxu0 %v5610
    %5622 = vmatprep.subr.bf16.mxu0 0
    %5623 = vmatpush1.bf16.msra.mxu0 %v5611
    %5624 = vmatprep.subr.bf16.mxu0 0
    %5625 = vmatpush1.bf16.msra.mxu0 %v5612
    %5626 = vmatprep.subr.bf16.mxu0 0
    %5627 = vmatpush1.bf16.msra.mxu0 %v5613
    %5628 = vmatprep.subr.bf16.mxu0 0
    %5629 = vmatpush1.bf16.msra.mxu0 %v5614
    %5630 = vmatprep.subr.bf16.mxu0 0
    %5631 = vmatpush1.bf16.msra.mxu0 %v5615
    %5632 = vmatprep.subr.bf16.mxu0 0
    %5633 = vmatpush1.bf16.msra.mxu0 0
    %5634 = vmatprep.subr.bf16.mxu0 0
    %5635 = vmatpush1.bf16.msra.mxu0 0
    %5636 = vmatprep.subr.bf16.mxu0 0
    %5637 = vmatpush1.bf16.msra.mxu0 0
    %5638 = vmatprep.subr.bf16.mxu0 0
    %5639 = vmatpush1.bf16.msra.mxu0 0
    %5640 = vmatprep.subr.bf16.mxu0 0
    %5641 = vmatpush1.bf16.msra.mxu0 0
    %5642 = vmatprep.subr.bf16.mxu0 0
    %5643 = vmatpush1.bf16.msra.mxu0 0
    %5644 = vmatprep.subr.bf16.mxu0 0
    %5645 = vmatpush1.bf16.msra.mxu0 0
    %5646 = vmatprep.subr.bf16.mxu0 0
    %5647 = vmatpush1.bf16.msra.mxu0 0
    %5648 = vmatprep.mubr.bf16.mxu0 0
    %5649 = vmatmul.mubr.bf16.gmra.mrb[0].mxu0 %v3045
    %v5650 = vpop.f32.mrb[0].mxu0
    %v5651 = vadd.f32 0.0, %v5650
    %v5652 = vpop.f32.mrb[0].mxu0
    %v5653 = vpop.f32.mrb[0].mxu0
    %v5654 = vadd.f32 0.0, %v5653
    %v5655 = vpop.f32.mrb[0].mxu0
    %5656 = vmatprep.mubr.bf16.mxu0 0
    %5657 = vmatmul.mubr.bf16.gmra.mrb[0].mxu0 %v3046
    %v5658 = vpop.f32.mrb[0].mxu0
    %v5659 = vadd.f32 0.0, %v5658
    %v5660 = vpop.f32.mrb[0].mxu0
    %v5661 = vpop.f32.mrb[0].mxu0
    %v5662 = vadd.f32 0.0, %v5661
    %v5663 = vpop.f32.mrb[0].mxu0
    %5664 = vmatprep.mubr.bf16.mxu0 0
    %5665 = vmatmul.mubr.bf16.gmra.mrb[0].mxu0 %v3047
    %v5666 = vpop.f32.mrb[0].mxu0
    %v5667 = vadd.f32 0.0, %v5666
    %v5668 = vpop.f32.mrb[0].mxu0
    %v5669 = vpop.f32.mrb[0].mxu0
    %v5670 = vadd.f32 0.0, %v5669
    %v5671 = vpop.f32.mrb[0].mxu0
    %5672 = vmatprep.mubr.bf16.mxu0 0
    %5673 = vmatmul.mubr.bf16.gmra.mrb[0].mxu0 %v3048
    %v5674 = vpop.f32.mrb[0].mxu0
    %v5675 = vadd.f32 0.0, %v5674
    %v5676 = vpop.f32.mrb[0].mxu0
    %v5677 = vpop.f32.mrb[0].mxu0
    %v5678 = vadd.f32 0.0, %v5677
    %v5679 = vpop.f32.mrb[0].mxu0
    %5680 = vmatprep.mubr.bf16.mxu0 0
    %5681 = vmatmul.mubr.bf16.gmra.mrb[0].mxu0 %v3049
    %v5682 = vpop.f32.mrb[0].mxu0
    %v5683 = vadd.f32 0.0, %v5682
    %v5684 = vpop.f32.mrb[0].mxu0
    %v5685 = vpop.f32.mrb[0].mxu0
    %v5686 = vadd.f32 0.0, %v5685
    %v5687 = vpop.f32.mrb[0].mxu0
    %5688 = vmatprep.mubr.bf16.mxu0 0
    %5689 = vmatmul.mubr.bf16.gmra.mrb[0].mxu0 %v3050
    %v5690 = vpop.f32.mrb[0].mxu0
    %v5691 = vadd.f32 0.0, %v5690
    %v5692 = vpop.f32.mrb[0].mxu0
    %v5693 = vpop.f32.mrb[0].mxu0
    %v5694 = vadd.f32 0.0, %v5693
    %v5695 = vpop.f32.mrb[0].mxu0
    %5696 = vmatprep.mubr.bf16.mxu0 0
    %5697 = vmatmul.mubr.bf16.gmra.mrb[0].mxu0 %v3051
    %v5698 = vpop.f32.mrb[0].mxu0
    %v5699 = vadd.f32 0.0, %v5698
    %v5700 = vpop.f32.mrb[0].mxu0
    %v5701 = vpop.f32.mrb[0].mxu0
    %v5702 = vadd.f32 0.0, %v5701
    %v5703 = vpop.f32.mrb[0].mxu0
    %5704 = vmatprep.mubr.bf16.mxu0 0
    %5705 = vmatmul.mubr.bf16.gmra.mrb[0].mxu0 %v3052
    %v5706 = vpop.f32.mrb[0].mxu0
    %v5707 = vadd.f32 0.0, %v5706
    %v5708 = vpop.f32.mrb[0].mxu0
    %v5709 = vpop.f32.mrb[0].mxu0
    %v5710 = vadd.f32 0.0, %v5709
    %v5711 = vpop.f32.mrb[0].mxu0
    %5712 = vmatprep.mubr.bf16.mxu0 0
    %5713 = vmatmul.mubr.bf16.gmra.mrb[0].mxu0 %v3053
    %v5714 = vpop.f32.mrb[0].mxu0
    %v5715 = vadd.f32 0.0, %v5714
    %v5716 = vpop.f32.mrb[0].mxu0
    %v5717 = vpop.f32.mrb[0].mxu0
    %v5718 = vadd.f32 0.0, %v5717
    %v5719 = vpop.f32.mrb[0].mxu0
    %5720 = vmatprep.mubr.bf16.mxu0 0
    %5721 = vmatmul.mubr.bf16.gmra.mrb[0].mxu0 %v3054
    %v5722 = vpop.f32.mrb[0].mxu0
    %v5723 = vadd.f32 0.0, %v5722
    %v5724 = vpop.f32.mrb[0].mxu0
    %v5725 = vpop.f32.mrb[0].mxu0
    %v5726 = vadd.f32 0.0, %v5725
    %v5727 = vpop.f32.mrb[0].mxu0
    %5728 = vmatprep.mubr.bf16.mxu0 0
    %5729 = vmatmul.mubr.bf16.gmra.mrb[0].mxu0 %v3055
    %v5730 = vpop.f32.mrb[0].mxu0
    %v5731 = vadd.f32 0.0, %v5730
    %v5732 = vpop.f32.mrb[0].mxu0
    %v5733 = vpop.f32.mrb[0].mxu0
    %v5734 = vadd.f32 0.0, %v5733
    %v5735 = vpop.f32.mrb[0].mxu0
    %5736 = vmatprep.mubr.bf16.mxu0 0
    %5737 = vmatmul.mubr.bf16.gmra.mrb[0].mxu0 %v3056
    %v5738 = vpop.f32.mrb[0].mxu0
    %v5739 = vadd.f32 0.0, %v5738
    %v5740 = vpop.f32.mrb[0].mxu0
    %v5741 = vpop.f32.mrb[0].mxu0
    %v5742 = vadd.f32 0.0, %v5741
    %v5743 = vpop.f32.mrb[0].mxu0
    %5744 = vmatprep.mubr.bf16.mxu0 0
    %5745 = vmatmul.mubr.bf16.gmra.mrb[0].mxu0 %v3057
    %v5746 = vpop.f32.mrb[0].mxu0
    %v5747 = vadd.f32 0.0, %v5746
    %v5748 = vpop.f32.mrb[0].mxu0
    %v5749 = vpop.f32.mrb[0].mxu0
    %v5750 = vadd.f32 0.0, %v5749
    %v5751 = vpop.f32.mrb[0].mxu0
    %5752 = vmatprep.mubr.bf16.mxu0 0
    %5753 = vmatmul.mubr.bf16.gmra.mrb[0].mxu0 %v3058
    %v5754 = vpop.f32.mrb[0].mxu0
    %v5755 = vadd.f32 0.0, %v5754
    %v5756 = vpop.f32.mrb[0].mxu0
    %v5757 = vpop.f32.mrb[0].mxu0
    %v5758 = vadd.f32 0.0, %v5757
    %v5759 = vpop.f32.mrb[0].mxu0
    %5760 = vmatprep.mubr.bf16.mxu0 0
    %5761 = vmatmul.mubr.bf16.gmra.mrb[0].mxu0 %v3059
    %v5762 = vpop.f32.mrb[0].mxu0
    %v5763 = vadd.f32 0.0, %v5762
    %v5764 = vpop.f32.mrb[0].mxu0
    %v5765 = vpop.f32.mrb[0].mxu0
    %v5766 = vadd.f32 0.0, %v5765
    %v5767 = vpop.f32.mrb[0].mxu0
    %5768 = vmatprep.mubr.bf16.mxu0 0
    %5769 = vmatmul.mubr.bf16.gmra.mrb[0].mxu0 %v3060
    %v5770 = vpop.f32.mrb[0].mxu0
    %v5771 = vadd.f32 0.0, %v5770
    %v5772 = vpop.f32.mrb[0].mxu0
    %v5773 = vpop.f32.mrb[0].mxu0
    %v5774 = vadd.f32 0.0, %v5773
    %v5775 = vpop.f32.mrb[0].mxu0
    %5776 = vdwg.mxu0
    %v5777 = vmul.f32 %v5651, %v5715
    %v5778 = vmul.f32 %v5654, %v5718
    %v5779 = vmul.f32 %v5659, %v5723
    %v5780 = vmul.f32 %v5662, %v5726
    %v5781 = vmul.f32 %v5667, %v5731
    %v5782 = vmul.f32 %v5670, %v5734
    %v5783 = vmul.f32 %v5675, %v5739
    %v5784 = vmul.f32 %v5678, %v5742
    %v5785 = vmul.f32 %v5683, %v5747
    %v5786 = vmul.f32 %v5686, %v5750
    %v5787 = vmul.f32 %v5691, %v5755
    %v5788 = vmul.f32 %v5694, %v5758
    %v5789 = vmul.f32 %v5699, %v5763
    %v5790 = vmul.f32 %v5702, %v5766
    %v5791 = vmul.f32 %v5707, %v5771
    %v5792 = vmul.f32 %v5710, %v5774
    %s5793 = sld [smem:[#allocation2 + $0x12]]
    %s5794 = sld [smem:[#allocation2 + $0x13]]
    %s5795 = sld [smem:[#allocation2 + $0x14]]
    %v5796 = vpack.c.bf16 %v5778, %v5777
    %v5797 = vpack.c.bf16 %v5780, %v5779
    %v5798 = vpack.c.bf16 %v5782, %v5781
    %v5799 = vpack.c.bf16 %v5784, %v5783
    %v5800 = vpack.c.bf16 %v5786, %v5785
    %v5801 = vpack.c.bf16 %v5788, %v5787
    %v5802 = vpack.c.bf16 %v5790, %v5789
    %v5803 = vpack.c.bf16 %v5792, %v5791
    %v5804 = vld [vmem:[%s95] sm:$0xf]
    %v5805 = vld [vmem:[%s95 + $0x4] sm:$0xf]
    %v5806 = vld [vmem:[%s95 + $0x8] sm:$0xf]
    %v5807 = vld [vmem:[%s95 + $0xc] sm:$0xf]
    %v5808 = vld [vmem:[%s95 + $0x10] sm:$0xf]
    %v5809 = vld [vmem:[%s95 + $0x14] sm:$0xf]
    %v5810 = vld [vmem:[%s95 + $0x18] sm:$0xf]
    %v5811 = vld [vmem:[%s95 + $0x1c] sm:$0xf]
    %v5812 = vld [vmem:[%s95 + $0x20] sm:$0xf]
    %v5813 = vld [vmem:[%s95 + $0x24] sm:$0xf]
    %v5814 = vld [vmem:[%s95 + $0x28] sm:$0xf]
    %v5815 = vld [vmem:[%s95 + $0x2c] sm:$0xf]
    %v5816 = vld [vmem:[%s95 + $0x30] sm:$0xf]
    %v5817 = vld [vmem:[%s95 + $0x34] sm:$0xf]
    %v5818 = vld [vmem:[%s95 + $0x38] sm:$0xf]
    %v5819 = vld [vmem:[%s95 + $0x3c] sm:$0xf]
    %v5820 = vld [vmem:[%s97] sm:$0xf]
    %v5821 = vld [vmem:[%s97 + $0x4] sm:$0xf]
    %v5822 = vld [vmem:[%s97 + $0x8] sm:$0xf]
    %v5823 = vld [vmem:[%s97 + $0xc] sm:$0xf]
    %v5824 = vld [vmem:[%s97 + $0x10] sm:$0xf]
    %v5825 = vld [vmem:[%s97 + $0x14] sm:$0xf]
    %v5826 = vld [vmem:[%s97 + $0x18] sm:$0xf]
    %v5827 = vld [vmem:[%s97 + $0x1c] sm:$0xf]
    %v5828 = vld [vmem:[%s97 + $0x20] sm:$0xf]
    %v5829 = vld [vmem:[%s97 + $0x24] sm:$0xf]
    %v5830 = vld [vmem:[%s97 + $0x28] sm:$0xf]
    %v5831 = vld [vmem:[%s97 + $0x2c] sm:$0xf]
    %v5832 = vld [vmem:[%s97 + $0x30] sm:$0xf]
    %v5833 = vld [vmem:[%s97 + $0x34] sm:$0xf]
    %v5834 = vld [vmem:[%s97 + $0x38] sm:$0xf]
    %v5835 = vld [vmem:[%s97 + $0x3c] sm:$0xf]
    %v5852 = vunpack.c.l.b16 %v5820
    %v5853 = vunpack.c.l.b16 %v5821
    %v5854 = vunpack.c.l.b16 %v5822
    %v5855 = vunpack.c.l.b16 %v5823
    %v5856 = vunpack.c.l.b16 %v5824
    %v5857 = vunpack.c.l.b16 %v5825
    %v5858 = vunpack.c.l.b16 %v5826
    %v5859 = vunpack.c.l.b16 %v5827
    %v5860 = vunpack.c.l.b16 %v5828
    %v5861 = vunpack.c.l.b16 %v5829
    %v5862 = vunpack.c.l.b16 %v5830
    %v5863 = vunpack.c.l.b16 %v5831
    %v5864 = vunpack.c.l.b16 %v5832
    %v5865 = vunpack.c.l.b16 %v5833
    %v5866 = vunpack.c.l.b16 %v5834
    %v5867 = vunpack.c.l.b16 %v5835
    %v5868 = vpack.c.b16 %v5853, %v5852
    %v5869 = vpack.c.b16 %v5855, %v5854
    %v5870 = vpack.c.b16 %v5857, %v5856
    %v5871 = vpack.c.b16 %v5859, %v5858
    %v5872 = vpack.c.b16 %v5861, %v5860
    %v5873 = vpack.c.b16 %v5863, %v5862
    %v5874 = vpack.c.b16 %v5865, %v5864
    %v5875 = vpack.c.b16 %v5867, %v5866
    %5884 = vmatprep.subr.bf16.mxu0 0
    %5885 = vmatpush1.bf16.msra.mxu0 %v5868
    %5886 = vmatprep.subr.bf16.mxu0 0
    %5887 = vmatpush1.bf16.msra.mxu0 %v5869
    %5888 = vmatprep.subr.bf16.mxu0 0
    %5889 = vmatpush1.bf16.msra.mxu0 %v5870
    %5890 = vmatprep.subr.bf16.mxu0 0
    %5891 = vmatpush1.bf16.msra.mxu0 %v5871
    %5892 = vmatprep.subr.bf16.mxu0 0
    %5893 = vmatpush1.bf16.msra.mxu0 %v5872
    %5894 = vmatprep.subr.bf16.mxu0 0
    %5895 = vmatpush1.bf16.msra.mxu0 %v5873
    %5896 = vmatprep.subr.bf16.mxu0 0
    %5897 = vmatpush1.bf16.msra.mxu0 %v5874
    %5898 = vmatprep.subr.bf16.mxu0 0
    %5899 = vmatpush1.bf16.msra.mxu0 %v5875
    %5900 = vmatprep.subr.bf16.mxu0 0
    %5901 = vmatpush1.bf16.msra.mxu0 0
    %5902 = vmatprep.subr.bf16.mxu0 0
    %5903 = vmatpush1.bf16.msra.mxu0 0
    %5904 = vmatprep.subr.bf16.mxu0 0
    %5905 = vmatpush1.bf16.msra.mxu0 0
    %5906 = vmatprep.subr.bf16.mxu0 0
    %5907 = vmatpush1.bf16.msra.mxu0 0
    %5908 = vmatprep.subr.bf16.mxu0 0
    %5909 = vmatpush1.bf16.msra.mxu0 0
    %5910 = vmatprep.subr.bf16.mxu0 0
    %5911 = vmatpush1.bf16.msra.mxu0 0
    %5912 = vmatprep.subr.bf16.mxu0 0
    %5913 = vmatpush1.bf16.msra.mxu0 0
    %5914 = vmatprep.subr.bf16.mxu0 0
    %5915 = vmatpush1.bf16.msra.mxu0 0
    %5916 = vmatprep.mubr.bf16.mxu0 0
    %5917 = vmatmul.mubr.bf16.gmra.mrb[0].mxu0 %v2811
    %v5918 = vpop.f32.mrb[0].mxu0
    %v5919 = vadd.f32 0.0, %v5918
    %v5920 = vpop.f32.mrb[0].mxu0
    %v5921 = vpop.f32.mrb[0].mxu0
    %v5922 = vadd.f32 0.0, %v5921
    %v5923 = vpop.f32.mrb[0].mxu0
    %5924 = vmatprep.mubr.bf16.mxu0 0
    %5925 = vmatmul.mubr.bf16.gmra.mrb[0].mxu0 %v2812
    %v5926 = vpop.f32.mrb[0].mxu0
    %v5927 = vadd.f32 0.0, %v5926
    %v5928 = vpop.f32.mrb[0].mxu0
    %v5929 = vpop.f32.mrb[0].mxu0
    %v5930 = vadd.f32 0.0, %v5929
    %v5931 = vpop.f32.mrb[0].mxu0
    %5932 = vmatprep.mubr.bf16.mxu0 0
    %5933 = vmatmul.mubr.bf16.gmra.mrb[0].mxu0 %v2813
    %v5934 = vpop.f32.mrb[0].mxu0
    %v5935 = vadd.f32 0.0, %v5934
    %v5936 = vpop.f32.mrb[0].mxu0
    %v5937 = vpop.f32.mrb[0].mxu0
    %v5938 = vadd.f32 0.0, %v5937
    %v5939 = vpop.f32.mrb[0].mxu0
    %5940 = vmatprep.mubr.bf16.mxu0 0
    %5941 = vmatmul.mubr.bf16.gmra.mrb[0].mxu0 %v2814
    %v5942 = vpop.f32.mrb[0].mxu0
    %v5943 = vadd.f32 0.0, %v5942
    %v5944 = vpop.f32.mrb[0].mxu0
    %v5945 = vpop.f32.mrb[0].mxu0
    %v5946 = vadd.f32 0.0, %v5945
    %v5947 = vpop.f32.mrb[0].mxu0
    %5948 = vmatprep.mubr.bf16.mxu0 0
    %5949 = vmatmul.mubr.bf16.gmra.mrb[0].mxu0 %v2815
    %v5950 = vpop.f32.mrb[0].mxu0
    %v5951 = vadd.f32 0.0, %v5950
    %v5952 = vpop.f32.mrb[0].mxu0
    %v5953 = vpop.f32.mrb[0].mxu0
    %v5954 = vadd.f32 0.0, %v5953
    %v5955 = vpop.f32.mrb[0].mxu0
    %5956 = vmatprep.mubr.bf16.mxu0 0
    %5957 = vmatmul.mubr.bf16.gmra.mrb[0].mxu0 %v2816
    %v5958 = vpop.f32.mrb[0].mxu0
    %v5959 = vadd.f32 0.0, %v5958
    %v5960 = vpop.f32.mrb[0].mxu0
    %v5961 = vpop.f32.mrb[0].mxu0
    %v5962 = vadd.f32 0.0, %v5961
    %v5963 = vpop.f32.mrb[0].mxu0
    %5964 = vmatprep.mubr.bf16.mxu0 0
    %5965 = vmatmul.mubr.bf16.gmra.mrb[0].mxu0 %v2817
    %v5966 = vpop.f32.mrb[0].mxu0
    %v5967 = vadd.f32 0.0, %v5966
    %v5968 = vpop.f32.mrb[0].mxu0
    %v5969 = vpop.f32.mrb[0].mxu0
    %v5970 = vadd.f32 0.0, %v5969
    %v5971 = vpop.f32.mrb[0].mxu0
    %5972 = vmatprep.mubr.bf16.mxu0 0
    %5973 = vmatmul.mubr.bf16.gmra.mrb[0].mxu0 %v2818
    %v5974 = vpop.f32.mrb[0].mxu0
    %v5975 = vadd.f32 0.0, %v5974
    %v5976 = vpop.f32.mrb[0].mxu0
    %v5977 = vpop.f32.mrb[0].mxu0
    %v5978 = vadd.f32 0.0, %v5977
    %v5979 = vpop.f32.mrb[0].mxu0
    %5980 = vdwg.mxu0
    %v5997 = vunpack.c.l.b16 %v5804
    %v5998 = vunpack.c.l.b16 %v5805
    %v5999 = vunpack.c.l.b16 %v5806
    %v6000 = vunpack.c.l.b16 %v5807
    %v6001 = vunpack.c.l.b16 %v5808
    %v6002 = vunpack.c.l.b16 %v5809
    %v6003 = vunpack.c.l.b16 %v5810
    %v6004 = vunpack.c.l.b16 %v5811
    %v6005 = vunpack.c.l.b16 %v5812
    %v6006 = vunpack.c.l.b16 %v5813
    %v6007 = vunpack.c.l.b16 %v5814
    %v6008 = vunpack.c.l.b16 %v5815
    %v6009 = vunpack.c.l.b16 %v5816
    %v6010 = vunpack.c.l.b16 %v5817
    %v6011 = vunpack.c.l.b16 %v5818
    %v6012 = vunpack.c.l.b16 %v5819
    %v6013 = vpack.c.b16 %v5998, %v5997
    %v6014 = vpack.c.b16 %v6000, %v5999
    %v6015 = vpack.c.b16 %v6002, %v6001
    %v6016 = vpack.c.b16 %v6004, %v6003
    %v6017 = vpack.c.b16 %v6006, %v6005
    %v6018 = vpack.c.b16 %v6008, %v6007
    %v6019 = vpack.c.b16 %v6010, %v6009
    %v6020 = vpack.c.b16 %v6012, %v6011
    %6029 = vmatprep.subr.bf16.mxu0 0
    %6030 = vmatpush1.bf16.msra.mxu0 %v6013
    %6031 = vmatprep.subr.bf16.mxu0 0
    %6032 = vmatpush1.bf16.msra.mxu0 %v6014
    %6033 = vmatprep.subr.bf16.mxu0 0
    %6034 = vmatpush1.bf16.msra.mxu0 %v6015
    %6035 = vmatprep.subr.bf16.mxu0 0
    %6036 = vmatpush1.bf16.msra.mxu0 %v6016
    %6037 = vmatprep.subr.bf16.mxu0 0
    %6038 = vmatpush1.bf16.msra.mxu0 %v6017
    %6039 = vmatprep.subr.bf16.mxu0 0
    %6040 = vmatpush1.bf16.msra.mxu0 %v6018
    %6041 = vmatprep.subr.bf16.mxu0 0
    %6042 = vmatpush1.bf16.msra.mxu0 %v6019
    %6043 = vmatprep.subr.bf16.mxu0 0
    %6044 = vmatpush1.bf16.msra.mxu0 %v6020
    %6045 = vmatprep.subr.bf16.mxu0 0
    %6046 = vmatpush1.bf16.msra.mxu0 0
    %6047 = vmatprep.subr.bf16.mxu0 0
    %6048 = vmatpush1.bf16.msra.mxu0 0
    %6049 = vmatprep.subr.bf16.mxu0 0
    %6050 = vmatpush1.bf16.msra.mxu0 0
    %6051 = vmatprep.subr.bf16.mxu0 0
    %6052 = vmatpush1.bf16.msra.mxu0 0
    %6053 = vmatprep.subr.bf16.mxu0 0
    %6054 = vmatpush1.bf16.msra.mxu0 0
    %6055 = vmatprep.subr.bf16.mxu0 0
    %6056 = vmatpush1.bf16.msra.mxu0 0
    %6057 = vmatprep.subr.bf16.mxu0 0
    %6058 = vmatpush1.bf16.msra.mxu0 0
    %6059 = vmatprep.subr.bf16.mxu0 0
    %6060 = vmatpush1.bf16.msra.mxu0 0
    %6061 = vmatprep.mubr.bf16.mxu0 0
    %6062 = vmatmul.mubr.bf16.gmra.mrb[0].mxu0 %v5796
    %v6063 = vpop.f32.mrb[0].mxu0
    %v6064 = vadd.f32 %v5919, %v6063
    %v6065 = vpop.f32.mrb[0].mxu0
    %v6066 = vpop.f32.mrb[0].mxu0
    %v6067 = vadd.f32 %v5922, %v6066
    %v6068 = vpop.f32.mrb[0].mxu0
    %6069 = vmatprep.mubr.bf16.mxu0 0
    %6070 = vmatmul.mubr.bf16.gmra.mrb[0].mxu0 %v5797
    %v6071 = vpop.f32.mrb[0].mxu0
    %v6072 = vadd.f32 %v5927, %v6071
    %v6073 = vpop.f32.mrb[0].mxu0
    %v6074 = vpop.f32.mrb[0].mxu0
    %v6075 = vadd.f32 %v5930, %v6074
    %v6076 = vpop.f32.mrb[0].mxu0
    %6077 = vmatprep.mubr.bf16.mxu0 0
    %6078 = vmatmul.mubr.bf16.gmra.mrb[0].mxu0 %v5798
    %v6079 = vpop.f32.mrb[0].mxu0
    %v6080 = vadd.f32 %v5935, %v6079
    %v6081 = vpop.f32.mrb[0].mxu0
    %v6082 = vpop.f32.mrb[0].mxu0
    %v6083 = vadd.f32 %v5938, %v6082
    %v6084 = vpop.f32.mrb[0].mxu0
    %6085 = vmatprep.mubr.bf16.mxu0 0
    %6086 = vmatmul.mubr.bf16.gmra.mrb[0].mxu0 %v5799
    %v6087 = vpop.f32.mrb[0].mxu0
    %v6088 = vadd.f32 %v5943, %v6087
    %v6089 = vpop.f32.mrb[0].mxu0
    %v6090 = vpop.f32.mrb[0].mxu0
    %v6091 = vadd.f32 %v5946, %v6090
    %v6092 = vpop.f32.mrb[0].mxu0
    %6093 = vmatprep.mubr.bf16.mxu0 0
    %6094 = vmatmul.mubr.bf16.gmra.mrb[0].mxu0 %v5800
    %v6095 = vpop.f32.mrb[0].mxu0
    %v6096 = vadd.f32 %v5951, %v6095
    %v6097 = vpop.f32.mrb[0].mxu0
    %v6098 = vpop.f32.mrb[0].mxu0
    %v6099 = vadd.f32 %v5954, %v6098
    %v6100 = vpop.f32.mrb[0].mxu0
    %6101 = vmatprep.mubr.bf16.mxu0 0
    %6102 = vmatmul.mubr.bf16.gmra.mrb[0].mxu0 %v5801
    %v6103 = vpop.f32.mrb[0].mxu0
    %v6104 = vadd.f32 %v5959, %v6103
    %v6105 = vpop.f32.mrb[0].mxu0
    %v6106 = vpop.f32.mrb[0].mxu0
    %v6107 = vadd.f32 %v5962, %v6106
    %v6108 = vpop.f32.mrb[0].mxu0
    %6109 = vmatprep.mubr.bf16.mxu0 0
    %6110 = vmatmul.mubr.bf16.gmra.mrb[0].mxu0 %v5802
    %v6111 = vpop.f32.mrb[0].mxu0
    %v6112 = vadd.f32 %v5967, %v6111
    %v6113 = vpop.f32.mrb[0].mxu0
    %v6114 = vpop.f32.mrb[0].mxu0
    %v6115 = vadd.f32 %v5970, %v6114
    %v6116 = vpop.f32.mrb[0].mxu0
    %6117 = vmatprep.mubr.bf16.mxu0 0
    %6118 = vmatmul.mubr.bf16.gmra.mrb[0].mxu0 %v5803
    %v6119 = vpop.f32.mrb[0].mxu0
    %v6120 = vadd.f32 %v5975, %v6119
    %v6121 = vpop.f32.mrb[0].mxu0
    %v6122 = vpop.f32.mrb[0].mxu0
    %v6123 = vadd.f32 %v5978, %v6122
    %v6124 = vpop.f32.mrb[0].mxu0
    %6125 = vdwg.mxu0
    %v6126 = vld [vmem:[%s99] sm:$0x1]
    %v6128 = vlaneseq
    %v6129 = vshrl.u32 %v6128, 7
    %v6130 = vsub.s32 0, %v6129
    %v6131 = vrot.slane %v6126, %v6130
    %v6133 = vadd.f32 %v6064, %v6131
    %v6134 = vadd.f32 %v6067, %v6131
    %v6135 = vadd.f32 %v6072, %v6131
    %v6136 = vadd.f32 %v6075, %v6131
    %v6137 = vadd.f32 %v6080, %v6131
    %v6138 = vadd.f32 %v6083, %v6131
    %v6139 = vadd.f32 %v6088, %v6131
    %v6140 = vadd.f32 %v6091, %v6131
    %v6141 = vadd.f32 %v6096, %v6131
    %v6142 = vadd.f32 %v6099, %v6131
    %v6143 = vadd.f32 %v6104, %v6131
    %v6144 = vadd.f32 %v6107, %v6131
    %v6145 = vadd.f32 %v6112, %v6131
    %v6146 = vadd.f32 %v6115, %v6131
    %v6147 = vadd.f32 %v6120, %v6131
    %v6148 = vadd.f32 %v6123, %v6131
    %vm6149 = vcmp.ge.f32.partialorder %v6133, 0.0
    %vm6150 = vcmp.ge.f32.partialorder %v6134, 0.0
    %vm6151 = vcmp.ge.f32.partialorder %v6135, 0.0
    %vm6152 = vcmp.ge.f32.partialorder %v6136, 0.0
    %vm6153 = vcmp.ge.f32.partialorder %v6137, 0.0
    %vm6154 = vcmp.ge.f32.partialorder %v6138, 0.0
    %vm6155 = vcmp.ge.f32.partialorder %v6139, 0.0
    %vm6156 = vcmp.ge.f32.partialorder %v6140, 0.0
    %vm6157 = vcmp.ge.f32.partialorder %v6141, 0.0
    %vm6158 = vcmp.ge.f32.partialorder %v6142, 0.0
    %vm6159 = vcmp.ge.f32.partialorder %v6143, 0.0
    %vm6160 = vcmp.ge.f32.partialorder %v6144, 0.0
    %vm6161 = vcmp.ge.f32.partialorder %v6145, 0.0
    %vm6162 = vcmp.ge.f32.partialorder %v6146, 0.0
    %vm6163 = vcmp.ge.f32.partialorder %v6147, 0.0
    %vm6164 = vcmp.ge.f32.partialorder %v6148, 0.0
    %v6165 = vstv %s5793
    %v6166 = vmul.f32 %v6165, %v6133
    %v6167 = vmul.f32 %v6165, %v6134
    %v6168 = vmul.f32 %v6165, %v6135
    %v6169 = vmul.f32 %v6165, %v6136
    %v6170 = vmul.f32 %v6165, %v6137
    %v6171 = vmul.f32 %v6165, %v6138
    %v6172 = vmul.f32 %v6165, %v6139
    %v6173 = vmul.f32 %v6165, %v6140
    %v6174 = vmul.f32 %v6165, %v6141
    %v6175 = vmul.f32 %v6165, %v6142
    %v6176 = vmul.f32 %v6165, %v6143
    %v6177 = vmul.f32 %v6165, %v6144
    %v6178 = vmul.f32 %v6165, %v6145
    %v6179 = vmul.f32 %v6165, %v6146
    %v6180 = vmul.f32 %v6165, %v6147
    %v6181 = vmul.f32 %v6165, %v6148
    %v6182 = vsel %vm6149, %v6133, %v6166
    %v6183 = vsel %vm6150, %v6134, %v6167
    %v6184 = vsel %vm6151, %v6135, %v6168
    %v6185 = vsel %vm6152, %v6136, %v6169
    %v6186 = vsel %vm6153, %v6137, %v6170
    %v6187 = vsel %vm6154, %v6138, %v6171
    %v6188 = vsel %vm6155, %v6139, %v6172
    %v6189 = vsel %vm6156, %v6140, %v6173
    %v6190 = vsel %vm6157, %v6141, %v6174
    %v6191 = vsel %vm6158, %v6142, %v6175
    %v6192 = vsel %vm6159, %v6143, %v6176
    %v6193 = vsel %vm6160, %v6144, %v6177
    %v6194 = vsel %vm6161, %v6145, %v6178
    %v6195 = vsel %vm6162, %v6146, %v6179
    %v6196 = vsel %vm6163, %v6147, %v6180
    %v6197 = vsel %vm6164, %v6148, %v6181
    %v6198 = vpack.c.bf16 %v6183, %v6182
    %v6199 = vpack.c.bf16 %v6185, %v6184
    %v6200 = vpack.c.bf16 %v6187, %v6186
    %v6201 = vpack.c.bf16 %v6189, %v6188
    %v6202 = vpack.c.bf16 %v6191, %v6190
    %v6203 = vpack.c.bf16 %v6193, %v6192
    %v6204 = vpack.c.bf16 %v6195, %v6194
    %v6205 = vpack.c.bf16 %v6197, %v6196
    %v6206 = vld [vmem:[%s101] sm:$0xf]
    %v6207 = vld [vmem:[%s101 + $0x4] sm:$0xf]
    %v6208 = vld [vmem:[%s101 + $0x8] sm:$0xf]
    %v6209 = vld [vmem:[%s101 + $0xc] sm:$0xf]
    %v6210 = vld [vmem:[%s101 + $0x10] sm:$0xf]
    %v6211 = vld [vmem:[%s101 + $0x14] sm:$0xf]
    %v6212 = vld [vmem:[%s101 + $0x18] sm:$0xf]
    %v6213 = vld [vmem:[%s101 + $0x1c] sm:$0xf]
    %v6214 = vld [vmem:[%s101 + $0x20] sm:$0xf]
    %v6215 = vld [vmem:[%s101 + $0x24] sm:$0xf]
    %v6216 = vld [vmem:[%s101 + $0x28] sm:$0xf]
    %v6217 = vld [vmem:[%s101 + $0x2c] sm:$0xf]
    %v6218 = vld [vmem:[%s101 + $0x30] sm:$0xf]
    %v6219 = vld [vmem:[%s101 + $0x34] sm:$0xf]
    %v6220 = vld [vmem:[%s101 + $0x38] sm:$0xf]
    %v6221 = vld [vmem:[%s101 + $0x3c] sm:$0xf]
    %v6238 = vunpack.c.l.b16 %v6206
    %v6239 = vunpack.c.l.b16 %v6207
    %v6240 = vunpack.c.l.b16 %v6208
    %v6241 = vunpack.c.l.b16 %v6209
    %v6242 = vunpack.c.l.b16 %v6210
    %v6243 = vunpack.c.l.b16 %v6211
    %v6244 = vunpack.c.l.b16 %v6212
    %v6245 = vunpack.c.l.b16 %v6213
    %v6246 = vunpack.c.l.b16 %v6214
    %v6247 = vunpack.c.l.b16 %v6215
    %v6248 = vunpack.c.l.b16 %v6216
    %v6249 = vunpack.c.l.b16 %v6217
    %v6250 = vunpack.c.l.b16 %v6218
    %v6251 = vunpack.c.l.b16 %v6219
    %v6252 = vunpack.c.l.b16 %v6220
    %v6253 = vunpack.c.l.b16 %v6221
    %v6254 = vpack.c.b16 %v6239, %v6238
    %v6255 = vpack.c.b16 %v6241, %v6240
    %v6256 = vpack.c.b16 %v6243, %v6242
    %v6257 = vpack.c.b16 %v6245, %v6244
    %v6258 = vpack.c.b16 %v6247, %v6246
    %v6259 = vpack.c.b16 %v6249, %v6248
    %v6260 = vpack.c.b16 %v6251, %v6250
    %v6261 = vpack.c.b16 %v6253, %v6252
    %6270 = vmatprep.subr.bf16.mxu0 0
    %6271 = vmatpush1.bf16.msra.mxu0 %v6254
    %6272 = vmatprep.subr.bf16.mxu0 0
    %6273 = vmatpush1.bf16.msra.mxu0 %v6255
    %6274 = vmatprep.subr.bf16.mxu0 0
    %6275 = vmatpush1.bf16.msra.mxu0 %v6256
    %6276 = vmatprep.subr.bf16.mxu0 0
    %6277 = vmatpush1.bf16.msra.mxu0 %v6257
    %6278 = vmatprep.subr.bf16.mxu0 0
    %6279 = vmatpush1.bf16.msra.mxu0 %v6258
    %6280 = vmatprep.subr.bf16.mxu0 0
    %6281 = vmatpush1.bf16.msra.mxu0 %v6259
    %6282 = vmatprep.subr.bf16.mxu0 0
    %6283 = vmatpush1.bf16.msra.mxu0 %v6260
    %6284 = vmatprep.subr.bf16.mxu0 0
    %6285 = vmatpush1.bf16.msra.mxu0 %v6261
    %6286 = vmatprep.subr.bf16.mxu0 0
    %6287 = vmatpush1.bf16.msra.mxu0 0
    %6288 = vmatprep.subr.bf16.mxu0 0
    %6289 = vmatpush1.bf16.msra.mxu0 0
    %6290 = vmatprep.subr.bf16.mxu0 0
    %6291 = vmatpush1.bf16.msra.mxu0 0
    %6292 = vmatprep.subr.bf16.mxu0 0
    %6293 = vmatpush1.bf16.msra.mxu0 0
    %6294 = vmatprep.subr.bf16.mxu0 0
    %6295 = vmatpush1.bf16.msra.mxu0 0
    %6296 = vmatprep.subr.bf16.mxu0 0
    %6297 = vmatpush1.bf16.msra.mxu0 0
    %6298 = vmatprep.subr.bf16.mxu0 0
    %6299 = vmatpush1.bf16.msra.mxu0 0
    %6300 = vmatprep.subr.bf16.mxu0 0
    %6301 = vmatpush1.bf16.msra.mxu0 0
    %6302 = vmatprep.mubr.bf16.mxu0 0
    %6303 = vmatmul.mubr.bf16.gmra.mrb[0].mxu0 %v6198
    %v6304 = vpop.f32.mrb[0].mxu0
    %v6305 = vadd.f32 0.0, %v6304
    %v6306 = vpop.f32.mrb[0].mxu0
    %v6307 = vpop.f32.mrb[0].mxu0
    %v6308 = vadd.f32 0.0, %v6307
    %v6309 = vpop.f32.mrb[0].mxu0
    %6310 = vmatprep.mubr.bf16.mxu0 0
    %6311 = vmatmul.mubr.bf16.gmra.mrb[0].mxu0 %v6199
    %v6312 = vpop.f32.mrb[0].mxu0
    %v6313 = vadd.f32 0.0, %v6312
    %v6314 = vpop.f32.mrb[0].mxu0
    %v6315 = vpop.f32.mrb[0].mxu0
    %v6316 = vadd.f32 0.0, %v6315
    %v6317 = vpop.f32.mrb[0].mxu0
    %6318 = vmatprep.mubr.bf16.mxu0 0
    %6319 = vmatmul.mubr.bf16.gmra.mrb[0].mxu0 %v6200
    %v6320 = vpop.f32.mrb[0].mxu0
    %v6321 = vadd.f32 0.0, %v6320
    %v6322 = vpop.f32.mrb[0].mxu0
    %v6323 = vpop.f32.mrb[0].mxu0
    %v6324 = vadd.f32 0.0, %v6323
    %v6325 = vpop.f32.mrb[0].mxu0
    %6326 = vmatprep.mubr.bf16.mxu0 0
    %6327 = vmatmul.mubr.bf16.gmra.mrb[0].mxu0 %v6201
    %v6328 = vpop.f32.mrb[0].mxu0
    %v6329 = vadd.f32 0.0, %v6328
    %v6330 = vpop.f32.mrb[0].mxu0
    %v6331 = vpop.f32.mrb[0].mxu0
    %v6332 = vadd.f32 0.0, %v6331
    %v6333 = vpop.f32.mrb[0].mxu0
    %6334 = vmatprep.mubr.bf16.mxu0 0
    %6335 = vmatmul.mubr.bf16.gmra.mrb[0].mxu0 %v6202
    %v6336 = vpop.f32.mrb[0].mxu0
    %v6337 = vadd.f32 0.0, %v6336
    %v6338 = vpop.f32.mrb[0].mxu0
    %v6339 = vpop.f32.mrb[0].mxu0
    %v6340 = vadd.f32 0.0, %v6339
    %v6341 = vpop.f32.mrb[0].mxu0
    %6342 = vmatprep.mubr.bf16.mxu0 0
    %6343 = vmatmul.mubr.bf16.gmra.mrb[0].mxu0 %v6203
    %v6344 = vpop.f32.mrb[0].mxu0
    %v6345 = vadd.f32 0.0, %v6344
    %v6346 = vpop.f32.mrb[0].mxu0
    %v6347 = vpop.f32.mrb[0].mxu0
    %v6348 = vadd.f32 0.0, %v6347
    %v6349 = vpop.f32.mrb[0].mxu0
    %6350 = vmatprep.mubr.bf16.mxu0 0
    %6351 = vmatmul.mubr.bf16.gmra.mrb[0].mxu0 %v6204
    %v6352 = vpop.f32.mrb[0].mxu0
    %v6353 = vadd.f32 0.0, %v6352
    %v6354 = vpop.f32.mrb[0].mxu0
    %v6355 = vpop.f32.mrb[0].mxu0
    %v6356 = vadd.f32 0.0, %v6355
    %v6357 = vpop.f32.mrb[0].mxu0
    %6358 = vmatprep.mubr.bf16.mxu0 0
    %6359 = vmatmul.mubr.bf16.gmra.mrb[0].mxu0 %v6205
    %v6360 = vpop.f32.mrb[0].mxu0
    %v6361 = vadd.f32 0.0, %v6360
    %v6362 = vpop.f32.mrb[0].mxu0
    %v6363 = vpop.f32.mrb[0].mxu0
    %v6364 = vadd.f32 0.0, %v6363
    %v6365 = vpop.f32.mrb[0].mxu0
    %6366 = vdwg.mxu0
    %vm6367 = vcmp.ge.f32.partialorder %v6305, 0.0
    %vm6368 = vcmp.ge.f32.partialorder %v6308, 0.0
    %vm6369 = vcmp.ge.f32.partialorder %v6313, 0.0
    %vm6370 = vcmp.ge.f32.partialorder %v6316, 0.0
    %vm6371 = vcmp.ge.f32.partialorder %v6321, 0.0
    %vm6372 = vcmp.ge.f32.partialorder %v6324, 0.0
    %vm6373 = vcmp.ge.f32.partialorder %v6329, 0.0
    %vm6374 = vcmp.ge.f32.partialorder %v6332, 0.0
    %vm6375 = vcmp.ge.f32.partialorder %v6337, 0.0
    %vm6376 = vcmp.ge.f32.partialorder %v6340, 0.0
    %vm6377 = vcmp.ge.f32.partialorder %v6345, 0.0
    %vm6378 = vcmp.ge.f32.partialorder %v6348, 0.0
    %vm6379 = vcmp.ge.f32.partialorder %v6353, 0.0
    %vm6380 = vcmp.ge.f32.partialorder %v6356, 0.0
    %vm6381 = vcmp.ge.f32.partialorder %v6361, 0.0
    %vm6382 = vcmp.ge.f32.partialorder %v6364, 0.0
    %v6383 = vstv %s5794
    %v6384 = vmul.f32 %v6383, %v6305
    %v6385 = vmul.f32 %v6383, %v6308
    %v6386 = vmul.f32 %v6383, %v6313
    %v6387 = vmul.f32 %v6383, %v6316
    %v6388 = vmul.f32 %v6383, %v6321
    %v6389 = vmul.f32 %v6383, %v6324
    %v6390 = vmul.f32 %v6383, %v6329
    %v6391 = vmul.f32 %v6383, %v6332
    %v6392 = vmul.f32 %v6383, %v6337
    %v6393 = vmul.f32 %v6383, %v6340
    %v6394 = vmul.f32 %v6383, %v6345
    %v6395 = vmul.f32 %v6383, %v6348
    %v6396 = vmul.f32 %v6383, %v6353
    %v6397 = vmul.f32 %v6383, %v6356
    %v6398 = vmul.f32 %v6383, %v6361
    %v6399 = vmul.f32 %v6383, %v6364
    %v6400 = vsel %vm6367, %v6305, %v6384
    %v6401 = vsel %vm6368, %v6308, %v6385
    %v6402 = vsel %vm6369, %v6313, %v6386
    %v6403 = vsel %vm6370, %v6316, %v6387
    %v6404 = vsel %vm6371, %v6321, %v6388
    %v6405 = vsel %vm6372, %v6324, %v6389
    %v6406 = vsel %vm6373, %v6329, %v6390
    %v6407 = vsel %vm6374, %v6332, %v6391
    %v6408 = vsel %vm6375, %v6337, %v6392
    %v6409 = vsel %vm6376, %v6340, %v6393
    %v6410 = vsel %vm6377, %v6345, %v6394
    %v6411 = vsel %vm6378, %v6348, %v6395
    %v6412 = vsel %vm6379, %v6353, %v6396
    %v6413 = vsel %vm6380, %v6356, %v6397
    %v6414 = vsel %vm6381, %v6361, %v6398
    %v6415 = vsel %vm6382, %v6364, %v6399
    %v6416 = vpack.c.bf16 %v6401, %v6400
    %v6417 = vpack.c.bf16 %v6403, %v6402
    %v6418 = vpack.c.bf16 %v6405, %v6404
    %v6419 = vpack.c.bf16 %v6407, %v6406
    %v6420 = vpack.c.bf16 %v6409, %v6408
    %v6421 = vpack.c.bf16 %v6411, %v6410
    %v6422 = vpack.c.bf16 %v6413, %v6412
    %v6423 = vpack.c.bf16 %v6415, %v6414
    %v6424 = vld [vmem:[%s103] sm:$0xf]
    %v6425 = vld [vmem:[%s103 + $0x4] sm:$0xf]
    %v6426 = vld [vmem:[%s103 + $0x8] sm:$0xf]
    %v6427 = vld [vmem:[%s103 + $0xc] sm:$0xf]
    %v6428 = vld [vmem:[%s103 + $0x10] sm:$0xf]
    %v6429 = vld [vmem:[%s103 + $0x14] sm:$0xf]
    %v6430 = vld [vmem:[%s103 + $0x18] sm:$0xf]
    %v6431 = vld [vmem:[%s103 + $0x1c] sm:$0xf]
    %v6432 = vld [vmem:[%s103 + $0x20] sm:$0xf]
    %v6433 = vld [vmem:[%s103 + $0x24] sm:$0xf]
    %v6434 = vld [vmem:[%s103 + $0x28] sm:$0xf]
    %v6435 = vld [vmem:[%s103 + $0x2c] sm:$0xf]
    %v6436 = vld [vmem:[%s103 + $0x30] sm:$0xf]
    %v6437 = vld [vmem:[%s103 + $0x34] sm:$0xf]
    %v6438 = vld [vmem:[%s103 + $0x38] sm:$0xf]
    %v6439 = vld [vmem:[%s103 + $0x3c] sm:$0xf]
    %v6456 = vunpack.c.l.b16 %v6424
    %v6457 = vunpack.c.l.b16 %v6425
    %v6458 = vunpack.c.l.b16 %v6426
    %v6459 = vunpack.c.l.b16 %v6427
    %v6460 = vunpack.c.l.b16 %v6428
    %v6461 = vunpack.c.l.b16 %v6429
    %v6462 = vunpack.c.l.b16 %v6430
    %v6463 = vunpack.c.l.b16 %v6431
    %v6464 = vunpack.c.l.b16 %v6432
    %v6465 = vunpack.c.l.b16 %v6433
    %v6466 = vunpack.c.l.b16 %v6434
    %v6467 = vunpack.c.l.b16 %v6435
    %v6468 = vunpack.c.l.b16 %v6436
    %v6469 = vunpack.c.l.b16 %v6437
    %v6470 = vunpack.c.l.b16 %v6438
    %v6471 = vunpack.c.l.b16 %v6439
    %v6472 = vpack.c.b16 %v6457, %v6456
    %v6473 = vpack.c.b16 %v6459, %v6458
    %v6474 = vpack.c.b16 %v6461, %v6460
    %v6475 = vpack.c.b16 %v6463, %v6462
    %v6476 = vpack.c.b16 %v6465, %v6464
    %v6477 = vpack.c.b16 %v6467, %v6466
    %v6478 = vpack.c.b16 %v6469, %v6468
    %v6479 = vpack.c.b16 %v6471, %v6470
    %6488 = vmatprep.subr.bf16.mxu0 0
    %6489 = vmatpush1.bf16.msra.mxu0 %v6472
    %6490 = vmatprep.subr.bf16.mxu0 0
    %6491 = vmatpush1.bf16.msra.mxu0 %v6473
    %6492 = vmatprep.subr.bf16.mxu0 0
    %6493 = vmatpush1.bf16.msra.mxu0 %v6474
    %6494 = vmatprep.subr.bf16.mxu0 0
    %6495 = vmatpush1.bf16.msra.mxu0 %v6475
    %6496 = vmatprep.subr.bf16.mxu0 0
    %6497 = vmatpush1.bf16.msra.mxu0 %v6476
    %6498 = vmatprep.subr.bf16.mxu0 0
    %6499 = vmatpush1.bf16.msra.mxu0 %v6477
    %6500 = vmatprep.subr.bf16.mxu0 0
    %6501 = vmatpush1.bf16.msra.mxu0 %v6478
    %6502 = vmatprep.subr.bf16.mxu0 0
    %6503 = vmatpush1.bf16.msra.mxu0 %v6479
    %6504 = vmatprep.subr.bf16.mxu0 0
    %6505 = vmatpush1.bf16.msra.mxu0 0
    %6506 = vmatprep.subr.bf16.mxu0 0
    %6507 = vmatpush1.bf16.msra.mxu0 0
    %6508 = vmatprep.subr.bf16.mxu0 0
    %6509 = vmatpush1.bf16.msra.mxu0 0
    %6510 = vmatprep.subr.bf16.mxu0 0
    %6511 = vmatpush1.bf16.msra.mxu0 0
    %6512 = vmatprep.subr.bf16.mxu0 0
    %6513 = vmatpush1.bf16.msra.mxu0 0
    %6514 = vmatprep.subr.bf16.mxu0 0
    %6515 = vmatpush1.bf16.msra.mxu0 0
    %6516 = vmatprep.subr.bf16.mxu0 0
    %6517 = vmatpush1.bf16.msra.mxu0 0
    %6518 = vmatprep.subr.bf16.mxu0 0
    %6519 = vmatpush1.bf16.msra.mxu0 0
    %6520 = vmatprep.mubr.bf16.mxu0 0
    %6521 = vmatmul.mubr.bf16.gmra.mrb[0].mxu0 %v6416
    %v6522 = vpop.f32.mrb[0].mxu0
    %v6523 = vadd.f32 0.0, %v6522
    %v6524 = vpop.f32.mrb[0].mxu0
    %v6525 = vpop.f32.mrb[0].mxu0
    %v6526 = vadd.f32 0.0, %v6525
    %v6527 = vpop.f32.mrb[0].mxu0
    %6528 = vmatprep.mubr.bf16.mxu0 0
    %6529 = vmatmul.mubr.bf16.gmra.mrb[0].mxu0 %v6417
    %v6530 = vpop.f32.mrb[0].mxu0
    %v6531 = vadd.f32 0.0, %v6530
    %v6532 = vpop.f32.mrb[0].mxu0
    %v6533 = vpop.f32.mrb[0].mxu0
    %v6534 = vadd.f32 0.0, %v6533
    %v6535 = vpop.f32.mrb[0].mxu0
    %6536 = vmatprep.mubr.bf16.mxu0 0
    %6537 = vmatmul.mubr.bf16.gmra.mrb[0].mxu0 %v6418
    %v6538 = vpop.f32.mrb[0].mxu0
    %v6539 = vadd.f32 0.0, %v6538
    %v6540 = vpop.f32.mrb[0].mxu0
    %v6541 = vpop.f32.mrb[0].mxu0
    %v6542 = vadd.f32 0.0, %v6541
    %v6543 = vpop.f32.mrb[0].mxu0
    %6544 = vmatprep.mubr.bf16.mxu0 0
    %6545 = vmatmul.mubr.bf16.gmra.mrb[0].mxu0 %v6419
    %v6546 = vpop.f32.mrb[0].mxu0
    %v6547 = vadd.f32 0.0, %v6546
    %v6548 = vpop.f32.mrb[0].mxu0
    %v6549 = vpop.f32.mrb[0].mxu0
    %v6550 = vadd.f32 0.0, %v6549
    %v6551 = vpop.f32.mrb[0].mxu0
    %6552 = vmatprep.mubr.bf16.mxu0 0
    %6553 = vmatmul.mubr.bf16.gmra.mrb[0].mxu0 %v6420
    %v6554 = vpop.f32.mrb[0].mxu0
    %v6555 = vadd.f32 0.0, %v6554
    %v6556 = vpop.f32.mrb[0].mxu0
    %v6557 = vpop.f32.mrb[0].mxu0
    %v6558 = vadd.f32 0.0, %v6557
    %v6559 = vpop.f32.mrb[0].mxu0
    %6560 = vmatprep.mubr.bf16.mxu0 0
    %6561 = vmatmul.mubr.bf16.gmra.mrb[0].mxu0 %v6421
    %v6562 = vpop.f32.mrb[0].mxu0
    %v6563 = vadd.f32 0.0, %v6562
    %v6564 = vpop.f32.mrb[0].mxu0
    %v6565 = vpop.f32.mrb[0].mxu0
    %v6566 = vadd.f32 0.0, %v6565
    %v6567 = vpop.f32.mrb[0].mxu0
    %6568 = vmatprep.mubr.bf16.mxu0 0
    %6569 = vmatmul.mubr.bf16.gmra.mrb[0].mxu0 %v6422
    %v6570 = vpop.f32.mrb[0].mxu0
    %v6571 = vadd.f32 0.0, %v6570
    %v6572 = vpop.f32.mrb[0].mxu0
    %v6573 = vpop.f32.mrb[0].mxu0
    %v6574 = vadd.f32 0.0, %v6573
    %v6575 = vpop.f32.mrb[0].mxu0
    %6576 = vmatprep.mubr.bf16.mxu0 0
    %6577 = vmatmul.mubr.bf16.gmra.mrb[0].mxu0 %v6423
    %v6578 = vpop.f32.mrb[0].mxu0
    %v6579 = vadd.f32 0.0, %v6578
    %v6580 = vpop.f32.mrb[0].mxu0
    %v6581 = vpop.f32.mrb[0].mxu0
    %v6582 = vadd.f32 0.0, %v6581
    %v6583 = vpop.f32.mrb[0].mxu0
    %6584 = vdwg.mxu0
    %vm6585 = vcmp.ge.f32.partialorder %v6523, 0.0
    %vm6586 = vcmp.ge.f32.partialorder %v6526, 0.0
    %vm6587 = vcmp.ge.f32.partialorder %v6531, 0.0
    %vm6588 = vcmp.ge.f32.partialorder %v6534, 0.0
    %vm6589 = vcmp.ge.f32.partialorder %v6539, 0.0
    %vm6590 = vcmp.ge.f32.partialorder %v6542, 0.0
    %vm6591 = vcmp.ge.f32.partialorder %v6547, 0.0
    %vm6592 = vcmp.ge.f32.partialorder %v6550, 0.0
    %vm6593 = vcmp.ge.f32.partialorder %v6555, 0.0
    %vm6594 = vcmp.ge.f32.partialorder %v6558, 0.0
    %vm6595 = vcmp.ge.f32.partialorder %v6563, 0.0
    %vm6596 = vcmp.ge.f32.partialorder %v6566, 0.0
    %vm6597 = vcmp.ge.f32.partialorder %v6571, 0.0
    %vm6598 = vcmp.ge.f32.partialorder %v6574, 0.0
    %vm6599 = vcmp.ge.f32.partialorder %v6579, 0.0
    %vm6600 = vcmp.ge.f32.partialorder %v6582, 0.0
    %v6601 = vstv %s5795
    %v6602 = vmul.f32 %v6601, %v6523
    %v6603 = vmul.f32 %v6601, %v6526
    %v6604 = vmul.f32 %v6601, %v6531
    %v6605 = vmul.f32 %v6601, %v6534
    %v6606 = vmul.f32 %v6601, %v6539
    %v6607 = vmul.f32 %v6601, %v6542
    %v6608 = vmul.f32 %v6601, %v6547
    %v6609 = vmul.f32 %v6601, %v6550
    %v6610 = vmul.f32 %v6601, %v6555
    %v6611 = vmul.f32 %v6601, %v6558
    %v6612 = vmul.f32 %v6601, %v6563
    %v6613 = vmul.f32 %v6601, %v6566
    %v6614 = vmul.f32 %v6601, %v6571
    %v6615 = vmul.f32 %v6601, %v6574
    %v6616 = vmul.f32 %v6601, %v6579
    %v6617 = vmul.f32 %v6601, %v6582
    %v6618 = vsel %vm6585, %v6523, %v6602
    %v6619 = vsel %vm6586, %v6526, %v6603
    %v6620 = vsel %vm6587, %v6531, %v6604
    %v6621 = vsel %vm6588, %v6534, %v6605
    %v6622 = vsel %vm6589, %v6539, %v6606
    %v6623 = vsel %vm6590, %v6542, %v6607
    %v6624 = vsel %vm6591, %v6547, %v6608
    %v6625 = vsel %vm6592, %v6550, %v6609
    %v6626 = vsel %vm6593, %v6555, %v6610
    %v6627 = vsel %vm6594, %v6558, %v6611
    %v6628 = vsel %vm6595, %v6563, %v6612
    %v6629 = vsel %vm6596, %v6566, %v6613
    %v6630 = vsel %vm6597, %v6571, %v6614
    %v6631 = vsel %vm6598, %v6574, %v6615
    %v6632 = vsel %vm6599, %v6579, %v6616
    %v6633 = vsel %vm6600, %v6582, %v6617
    %v6634 = vpack.c.bf16 %v6619, %v6618
    %v6635 = vpack.c.bf16 %v6621, %v6620
    %v6636 = vpack.c.bf16 %v6623, %v6622
    %v6637 = vpack.c.bf16 %v6625, %v6624
    %v6638 = vpack.c.bf16 %v6627, %v6626
    %v6639 = vpack.c.bf16 %v6629, %v6628
    %v6640 = vpack.c.bf16 %v6631, %v6630
    %v6641 = vpack.c.bf16 %v6633, %v6632
    %v6642 = vld [vmem:[%s105] sm:$0xf]
    %v6643 = vld [vmem:[%s105 + $0x4] sm:$0xf]
    %v6644 = vld [vmem:[%s105 + $0x8] sm:$0xf]
    %v6645 = vld [vmem:[%s105 + $0xc] sm:$0xf]
    %v6646 = vld [vmem:[%s105 + $0x10] sm:$0xf]
    %v6647 = vld [vmem:[%s105 + $0x14] sm:$0xf]
    %v6648 = vld [vmem:[%s105 + $0x18] sm:$0xf]
    %v6649 = vld [vmem:[%s105 + $0x1c] sm:$0xf]
    %v6650 = vld [vmem:[%s105 + $0x20] sm:$0xf]
    %v6651 = vld [vmem:[%s105 + $0x24] sm:$0xf]
    %v6652 = vld [vmem:[%s105 + $0x28] sm:$0xf]
    %v6653 = vld [vmem:[%s105 + $0x2c] sm:$0xf]
    %v6654 = vld [vmem:[%s105 + $0x30] sm:$0xf]
    %v6655 = vld [vmem:[%s105 + $0x34] sm:$0xf]
    %v6656 = vld [vmem:[%s105 + $0x38] sm:$0xf]
    %v6657 = vld [vmem:[%s105 + $0x3c] sm:$0xf]
    %v6658 = vld [vmem:[%s107] sm:$0x1]
    %v6660 = vlaneseq
    %v6661 = vshrl.u32 %v6660, 7
    %v6662 = vsub.s32 0, %v6661
    %v6663 = vrot.slane %v6658, %v6662
    %v6681 = vunpack.c.l.b16 %v6642
    %v6682 = vunpack.c.l.b16 %v6643
    %v6683 = vunpack.c.l.b16 %v6644
    %v6684 = vunpack.c.l.b16 %v6645
    %v6685 = vunpack.c.l.b16 %v6646
    %v6686 = vunpack.c.l.b16 %v6647
    %v6687 = vunpack.c.l.b16 %v6648
    %v6688 = vunpack.c.l.b16 %v6649
    %v6689 = vunpack.c.l.b16 %v6650
    %v6690 = vunpack.c.l.b16 %v6651
    %v6691 = vunpack.c.l.b16 %v6652
    %v6692 = vunpack.c.l.b16 %v6653
    %v6693 = vunpack.c.l.b16 %v6654
    %v6694 = vunpack.c.l.b16 %v6655
    %v6695 = vunpack.c.l.b16 %v6656
    %v6696 = vunpack.c.l.b16 %v6657
    %v6697 = vpack.c.b16 %v6682, %v6681
    %v6698 = vpack.c.b16 %v6684, %v6683
    %v6699 = vpack.c.b16 %v6686, %v6685
    %v6700 = vpack.c.b16 %v6688, %v6687
    %v6701 = vpack.c.b16 %v6690, %v6689
    %v6702 = vpack.c.b16 %v6692, %v6691
    %v6703 = vpack.c.b16 %v6694, %v6693
    %v6704 = vpack.c.b16 %v6696, %v6695
    %6713 = vmatprep.subr.bf16.mxu0 0
    %6714 = vmatpush1.bf16.msra.mxu0 %v6697
    %6715 = vmatprep.subr.bf16.mxu0 0
    %6716 = vmatpush1.bf16.msra.mxu0 %v6698
    %6717 = vmatprep.subr.bf16.mxu0 0
    %6718 = vmatpush1.bf16.msra.mxu0 %v6699
    %6719 = vmatprep.subr.bf16.mxu0 0
    %6720 = vmatpush1.bf16.msra.mxu0 %v6700
    %6721 = vmatprep.subr.bf16.mxu0 0
    %6722 = vmatpush1.bf16.msra.mxu0 %v6701
    %6723 = vmatprep.subr.bf16.mxu0 0
    %6724 = vmatpush1.bf16.msra.mxu0 %v6702
    %6725 = vmatprep.subr.bf16.mxu0 0
    %6726 = vmatpush1.bf16.msra.mxu0 %v6703
    %6727 = vmatprep.subr.bf16.mxu0 0
    %6728 = vmatpush1.bf16.msra.mxu0 %v6704
    %6729 = vmatprep.subr.bf16.mxu0 0
    %6730 = vmatpush1.bf16.msra.mxu0 0
    %6731 = vmatprep.subr.bf16.mxu0 0
    %6732 = vmatpush1.bf16.msra.mxu0 0
    %6733 = vmatprep.subr.bf16.mxu0 0
    %6734 = vmatpush1.bf16.msra.mxu0 0
    %6735 = vmatprep.subr.bf16.mxu0 0
    %6736 = vmatpush1.bf16.msra.mxu0 0
    %6737 = vmatprep.subr.bf16.mxu0 0
    %6738 = vmatpush1.bf16.msra.mxu0 0
    %6739 = vmatprep.subr.bf16.mxu0 0
    %6740 = vmatpush1.bf16.msra.mxu0 0
    %6741 = vmatprep.subr.bf16.mxu0 0
    %6742 = vmatpush1.bf16.msra.mxu0 0
    %6743 = vmatprep.subr.bf16.mxu0 0
    %6744 = vmatpush1.bf16.msra.mxu0 0
    %6745 = vmatprep.mubr.bf16.mxu0 0
    %6746 = vmatmul.mubr.bf16.gmra.mrb[0].mxu0 %v6634
    %v6747 = vpop.f32.mrb[0].mxu0
    %v6748 = vadd.f32 %v6663, %v6747
    %v6749 = vpop.f32.mrb[0].mxu0
    %v6750 = vpop.f32.mrb[0].mxu0
    %v6751 = vadd.f32 %v6663, %v6750
    %v6752 = vpop.f32.mrb[0].mxu0
    %6753 = vmatprep.mubr.bf16.mxu0 0
    %6754 = vmatmul.mubr.bf16.gmra.mrb[0].mxu0 %v6635
    %v6755 = vpop.f32.mrb[0].mxu0
    %v6756 = vadd.f32 %v6663, %v6755
    %v6757 = vpop.f32.mrb[0].mxu0
    %v6758 = vpop.f32.mrb[0].mxu0
    %v6759 = vadd.f32 %v6663, %v6758
    %v6760 = vpop.f32.mrb[0].mxu0
    %6761 = vmatprep.mubr.bf16.mxu0 0
    %6762 = vmatmul.mubr.bf16.gmra.mrb[0].mxu0 %v6636
    %v6763 = vpop.f32.mrb[0].mxu0
    %v6764 = vadd.f32 %v6663, %v6763
    %v6765 = vpop.f32.mrb[0].mxu0
    %v6766 = vpop.f32.mrb[0].mxu0
    %v6767 = vadd.f32 %v6663, %v6766
    %v6768 = vpop.f32.mrb[0].mxu0
    %6769 = vmatprep.mubr.bf16.mxu0 0
    %6770 = vmatmul.mubr.bf16.gmra.mrb[0].mxu0 %v6637
    %v6771 = vpop.f32.mrb[0].mxu0
    %v6772 = vadd.f32 %v6663, %v6771
    %v6773 = vpop.f32.mrb[0].mxu0
    %v6774 = vpop.f32.mrb[0].mxu0
    %v6775 = vadd.f32 %v6663, %v6774
    %v6776 = vpop.f32.mrb[0].mxu0
    %6777 = vmatprep.mubr.bf16.mxu0 0
    %6778 = vmatmul.mubr.bf16.gmra.mrb[0].mxu0 %v6638
    %v6779 = vpop.f32.mrb[0].mxu0
    %v6780 = vadd.f32 %v6663, %v6779
    %v6781 = vpop.f32.mrb[0].mxu0
    %v6782 = vpop.f32.mrb[0].mxu0
    %v6783 = vadd.f32 %v6663, %v6782
    %v6784 = vpop.f32.mrb[0].mxu0
    %6785 = vmatprep.mubr.bf16.mxu0 0
    %6786 = vmatmul.mubr.bf16.gmra.mrb[0].mxu0 %v6639
    %v6787 = vpop.f32.mrb[0].mxu0
    %v6788 = vadd.f32 %v6663, %v6787
    %v6789 = vpop.f32.mrb[0].mxu0
    %v6790 = vpop.f32.mrb[0].mxu0
    %v6791 = vadd.f32 %v6663, %v6790
    %v6792 = vpop.f32.mrb[0].mxu0
    %6793 = vmatprep.mubr.bf16.mxu0 0
    %6794 = vmatmul.mubr.bf16.gmra.mrb[0].mxu0 %v6640
    %v6795 = vpop.f32.mrb[0].mxu0
    %v6796 = vadd.f32 %v6663, %v6795
    %v6797 = vpop.f32.mrb[0].mxu0
    %v6798 = vpop.f32.mrb[0].mxu0
    %v6799 = vadd.f32 %v6663, %v6798
    %v6800 = vpop.f32.mrb[0].mxu0
    %6801 = vmatprep.mubr.bf16.mxu0 0
    %6802 = vmatmul.mubr.bf16.gmra.mrb[0].mxu0 %v6641
    %v6803 = vpop.f32.mrb[0].mxu0
    %v6804 = vadd.f32 %v6663, %v6803
    %v6805 = vpop.f32.mrb[0].mxu0
    %v6806 = vpop.f32.mrb[0].mxu0
    %v6807 = vadd.f32 %v6663, %v6806
    %v6808 = vpop.f32.mrb[0].mxu0
    %6809 = vdwg.mxu0
    %v6810 = vpack.c.bf16 %v6751, %v6748
    %v6811 = vpack.c.bf16 %v6759, %v6756
    %v6812 = vpack.c.bf16 %v6767, %v6764
    %v6813 = vpack.c.bf16 %v6775, %v6772
    %v6814 = vpack.c.bf16 %v6783, %v6780
    %v6815 = vpack.c.bf16 %v6791, %v6788
    %v6816 = vpack.c.bf16 %v6799, %v6796
    %v6817 = vpack.c.bf16 %v6807, %v6804
    %6818 = vmatprep.subr.bf16.mxu0 0
    %6819 = vmatpush1.bf16.msra.mxu0 %v6810
    %6820 = vmatprep.subr.bf16.mxu0 0
    %6821 = vmatpush1.bf16.msra.mxu0 %v6811
    %6822 = vmatprep.subr.bf16.mxu0 0
    %6823 = vmatpush1.bf16.msra.mxu0 %v6812
    %6824 = vmatprep.subr.bf16.mxu0 0
    %6825 = vmatpush1.bf16.msra.mxu0 %v6813
    %6826 = vmatprep.subr.bf16.mxu0 0
    %6827 = vmatpush1.bf16.msra.mxu0 %v6814
    %6828 = vmatprep.subr.bf16.mxu0 0
    %6829 = vmatpush1.bf16.msra.mxu0 %v6815
    %6830 = vmatprep.subr.bf16.mxu0 0
    %6831 = vmatpush1.bf16.msra.mxu0 %v6816
    %6832 = vmatprep.subr.bf16.mxu0 0
    %6833 = vmatpush1.bf16.msra.mxu0 %v6817
    %6834 = vmatprep.subr.bf16.mxu0 0
    %6835 = vmatpush1.bf16.msra.mxu0 0
    %6836 = vmatprep.subr.bf16.mxu0 0
    %6837 = vmatpush1.bf16.msra.mxu0 0
    %6838 = vmatprep.subr.bf16.mxu0 0
    %6839 = vmatpush1.bf16.msra.mxu0 0
    %6840 = vmatprep.subr.bf16.mxu0 0
    %6841 = vmatpush1.bf16.msra.mxu0 0
    %6842 = vmatprep.subr.bf16.mxu0 0
    %6843 = vmatpush1.bf16.msra.mxu0 0
    %6844 = vmatprep.subr.bf16.mxu0 0
    %6845 = vmatpush1.bf16.msra.mxu0 0
    %6846 = vmatprep.subr.bf16.mxu0 0
    %6847 = vmatpush1.bf16.msra.mxu0 0
    %6848 = vmatprep.subr.bf16.mxu0 0
    %6849 = vmatpush1.bf16.msra.mxu0 0
    %6850 = vmatprep.mubr.bf16.mxu0 0
    %6851 = vmatmul.mubr.bf16.gmra.mrb[0].mxu0 %v3093
    %v6852 = vpop.f32.mrb[0].mxu0
    %v6853 = vadd.f32 0.0, %v6852
    %v6854 = vpop.f32.mrb[0].mxu0
    %v6855 = vpop.f32.mrb[0].mxu0
    %v6856 = vadd.f32 0.0, %v6855
    %v6857 = vpop.f32.mrb[0].mxu0
    %6858 = vmatprep.mubr.bf16.mxu0 0
    %6859 = vmatmul.mubr.bf16.gmra.mrb[0].mxu0 %v3094
    %v6860 = vpop.f32.mrb[0].mxu0
    %v6861 = vadd.f32 0.0, %v6860
    %v6862 = vpop.f32.mrb[0].mxu0
    %v6863 = vpop.f32.mrb[0].mxu0
    %v6864 = vadd.f32 0.0, %v6863
    %v6865 = vpop.f32.mrb[0].mxu0
    %6866 = vmatprep.mubr.bf16.mxu0 0
    %6867 = vmatmul.mubr.bf16.gmra.mrb[0].mxu0 %v3095
    %v6868 = vpop.f32.mrb[0].mxu0
    %v6869 = vadd.f32 0.0, %v6868
    %v6870 = vpop.f32.mrb[0].mxu0
    %v6871 = vpop.f32.mrb[0].mxu0
    %v6872 = vadd.f32 0.0, %v6871
    %v6873 = vpop.f32.mrb[0].mxu0
    %6874 = vmatprep.mubr.bf16.mxu0 0
    %6875 = vmatmul.mubr.bf16.gmra.mrb[0].mxu0 %v3096
    %v6876 = vpop.f32.mrb[0].mxu0
    %v6877 = vadd.f32 0.0, %v6876
    %v6878 = vpop.f32.mrb[0].mxu0
    %v6879 = vpop.f32.mrb[0].mxu0
    %v6880 = vadd.f32 0.0, %v6879
    %v6881 = vpop.f32.mrb[0].mxu0
    %6882 = vmatprep.mubr.bf16.mxu0 0
    %6883 = vmatmul.mubr.bf16.gmra.mrb[0].mxu0 %v3097
    %v6884 = vpop.f32.mrb[0].mxu0
    %v6885 = vadd.f32 0.0, %v6884
    %v6886 = vpop.f32.mrb[0].mxu0
    %v6887 = vpop.f32.mrb[0].mxu0
    %v6888 = vadd.f32 0.0, %v6887
    %v6889 = vpop.f32.mrb[0].mxu0
    %6890 = vmatprep.mubr.bf16.mxu0 0
    %6891 = vmatmul.mubr.bf16.gmra.mrb[0].mxu0 %v3098
    %v6892 = vpop.f32.mrb[0].mxu0
    %v6893 = vadd.f32 0.0, %v6892
    %v6894 = vpop.f32.mrb[0].mxu0
    %v6895 = vpop.f32.mrb[0].mxu0
    %v6896 = vadd.f32 0.0, %v6895
    %v6897 = vpop.f32.mrb[0].mxu0
    %6898 = vmatprep.mubr.bf16.mxu0 0
    %6899 = vmatmul.mubr.bf16.gmra.mrb[0].mxu0 %v3099
    %v6900 = vpop.f32.mrb[0].mxu0
    %v6901 = vadd.f32 0.0, %v6900
    %v6902 = vpop.f32.mrb[0].mxu0
    %v6903 = vpop.f32.mrb[0].mxu0
    %v6904 = vadd.f32 0.0, %v6903
    %v6905 = vpop.f32.mrb[0].mxu0
    %6906 = vmatprep.mubr.bf16.mxu0 0
    %6907 = vmatmul.mubr.bf16.gmra.mrb[0].mxu0 %v3100
    %v6908 = vpop.f32.mrb[0].mxu0
    %v6909 = vadd.f32 0.0, %v6908
    %v6910 = vpop.f32.mrb[0].mxu0
    %v6911 = vpop.f32.mrb[0].mxu0
    %v6912 = vadd.f32 0.0, %v6911
    %v6913 = vpop.f32.mrb[0].mxu0
    %6914 = vdwg.mxu0
    %s6915 = sld [smem:[#allocation2 + $0x15]]
    %s6916 = sld [smem:[#allocation2 + $0x16]]
    %s6917 = sld [smem:[#allocation2 + $0x17]]
    %v6918 = vpack.c.bf16 %v6856, %v6853
    %v6919 = vpack.c.bf16 %v6864, %v6861
    %v6920 = vpack.c.bf16 %v6872, %v6869
    %v6921 = vpack.c.bf16 %v6880, %v6877
    %v6922 = vpack.c.bf16 %v6888, %v6885
    %v6923 = vpack.c.bf16 %v6896, %v6893
    %v6924 = vpack.c.bf16 %v6904, %v6901
    %v6925 = vpack.c.bf16 %v6912, %v6909
    %v6926 = vld [vmem:[%s109] sm:$0xf]
    %v6927 = vld [vmem:[%s109 + $0x4] sm:$0xf]
    %v6928 = vld [vmem:[%s109 + $0x8] sm:$0xf]
    %v6929 = vld [vmem:[%s109 + $0xc] sm:$0xf]
    %v6930 = vld [vmem:[%s109 + $0x10] sm:$0xf]
    %v6931 = vld [vmem:[%s109 + $0x14] sm:$0xf]
    %v6932 = vld [vmem:[%s109 + $0x18] sm:$0xf]
    %v6933 = vld [vmem:[%s109 + $0x1c] sm:$0xf]
    %v6934 = vld [vmem:[%s109 + $0x20] sm:$0xf]
    %v6935 = vld [vmem:[%s109 + $0x24] sm:$0xf]
    %v6936 = vld [vmem:[%s109 + $0x28] sm:$0xf]
    %v6937 = vld [vmem:[%s109 + $0x2c] sm:$0xf]
    %v6938 = vld [vmem:[%s109 + $0x30] sm:$0xf]
    %v6939 = vld [vmem:[%s109 + $0x34] sm:$0xf]
    %v6940 = vld [vmem:[%s109 + $0x38] sm:$0xf]
    %v6941 = vld [vmem:[%s109 + $0x3c] sm:$0xf]
    %v6942 = vld [vmem:[%s111] sm:$0x1]
    %v6944 = vlaneseq
    %v6945 = vshrl.u32 %v6944, 7
    %v6946 = vsub.s32 0, %v6945
    %v6947 = vrot.slane %v6942, %v6946
    %v6965 = vunpack.c.l.b16 %v6926
    %v6966 = vunpack.c.l.b16 %v6927
    %v6967 = vunpack.c.l.b16 %v6928
    %v6968 = vunpack.c.l.b16 %v6929
    %v6969 = vunpack.c.l.b16 %v6930
    %v6970 = vunpack.c.l.b16 %v6931
    %v6971 = vunpack.c.l.b16 %v6932
    %v6972 = vunpack.c.l.b16 %v6933
    %v6973 = vunpack.c.l.b16 %v6934
    %v6974 = vunpack.c.l.b16 %v6935
    %v6975 = vunpack.c.l.b16 %v6936
    %v6976 = vunpack.c.l.b16 %v6937
    %v6977 = vunpack.c.l.b16 %v6938
    %v6978 = vunpack.c.l.b16 %v6939
    %v6979 = vunpack.c.l.b16 %v6940
    %v6980 = vunpack.c.l.b16 %v6941
    %v6981 = vpack.c.b16 %v6966, %v6965
    %v6982 = vpack.c.b16 %v6968, %v6967
    %v6983 = vpack.c.b16 %v6970, %v6969
    %v6984 = vpack.c.b16 %v6972, %v6971
    %v6985 = vpack.c.b16 %v6974, %v6973
    %v6986 = vpack.c.b16 %v6976, %v6975
    %v6987 = vpack.c.b16 %v6978, %v6977
    %v6988 = vpack.c.b16 %v6980, %v6979
    %6997 = vmatprep.subr.bf16.mxu0 0
    %6998 = vmatpush1.bf16.msra.mxu0 %v6981
    %6999 = vmatprep.subr.bf16.mxu0 0
    %7000 = vmatpush1.bf16.msra.mxu0 %v6982
    %7001 = vmatprep.subr.bf16.mxu0 0
    %7002 = vmatpush1.bf16.msra.mxu0 %v6983
    %7003 = vmatprep.subr.bf16.mxu0 0
    %7004 = vmatpush1.bf16.msra.mxu0 %v6984
    %7005 = vmatprep.subr.bf16.mxu0 0
    %7006 = vmatpush1.bf16.msra.mxu0 %v6985
    %7007 = vmatprep.subr.bf16.mxu0 0
    %7008 = vmatpush1.bf16.msra.mxu0 %v6986
    %7009 = vmatprep.subr.bf16.mxu0 0
    %7010 = vmatpush1.bf16.msra.mxu0 %v6987
    %7011 = vmatprep.subr.bf16.mxu0 0
    %7012 = vmatpush1.bf16.msra.mxu0 %v6988
    %7013 = vmatprep.subr.bf16.mxu0 0
    %7014 = vmatpush1.bf16.msra.mxu0 0
    %7015 = vmatprep.subr.bf16.mxu0 0
    %7016 = vmatpush1.bf16.msra.mxu0 0
    %7017 = vmatprep.subr.bf16.mxu0 0
    %7018 = vmatpush1.bf16.msra.mxu0 0
    %7019 = vmatprep.subr.bf16.mxu0 0
    %7020 = vmatpush1.bf16.msra.mxu0 0
    %7021 = vmatprep.subr.bf16.mxu0 0
    %7022 = vmatpush1.bf16.msra.mxu0 0
    %7023 = vmatprep.subr.bf16.mxu0 0
    %7024 = vmatpush1.bf16.msra.mxu0 0
    %7025 = vmatprep.subr.bf16.mxu0 0
    %7026 = vmatpush1.bf16.msra.mxu0 0
    %7027 = vmatprep.subr.bf16.mxu0 0
    %7028 = vmatpush1.bf16.msra.mxu0 0
    %7029 = vmatprep.mubr.bf16.mxu0 0
    %7030 = vmatmul.mubr.bf16.gmra.mrb[0].mxu0 %v6918
    %v7031 = vpop.f32.mrb[0].mxu0
    %v7032 = vadd.f32 %v6947, %v7031
    %v7033 = vpop.f32.mrb[0].mxu0
    %v7034 = vpop.f32.mrb[0].mxu0
    %v7035 = vadd.f32 %v6947, %v7034
    %v7036 = vpop.f32.mrb[0].mxu0
    %7037 = vmatprep.mubr.bf16.mxu0 0
    %7038 = vmatmul.mubr.bf16.gmra.mrb[0].mxu0 %v6919
    %v7039 = vpop.f32.mrb[0].mxu0
    %v7040 = vadd.f32 %v6947, %v7039
    %v7041 = vpop.f32.mrb[0].mxu0
    %v7042 = vpop.f32.mrb[0].mxu0
    %v7043 = vadd.f32 %v6947, %v7042
    %v7044 = vpop.f32.mrb[0].mxu0
    %7045 = vmatprep.mubr.bf16.mxu0 0
    %7046 = vmatmul.mubr.bf16.gmra.mrb[0].mxu0 %v6920
    %v7047 = vpop.f32.mrb[0].mxu0
    %v7048 = vadd.f32 %v6947, %v7047
    %v7049 = vpop.f32.mrb[0].mxu0
    %v7050 = vpop.f32.mrb[0].mxu0
    %v7051 = vadd.f32 %v6947, %v7050
    %v7052 = vpop.f32.mrb[0].mxu0
    %7053 = vmatprep.mubr.bf16.mxu0 0
    %7054 = vmatmul.mubr.bf16.gmra.mrb[0].mxu0 %v6921
    %v7055 = vpop.f32.mrb[0].mxu0
    %v7056 = vadd.f32 %v6947, %v7055
    %v7057 = vpop.f32.mrb[0].mxu0
    %v7058 = vpop.f32.mrb[0].mxu0
    %v7059 = vadd.f32 %v6947, %v7058
    %v7060 = vpop.f32.mrb[0].mxu0
    %7061 = vmatprep.mubr.bf16.mxu0 0
    %7062 = vmatmul.mubr.bf16.gmra.mrb[0].mxu0 %v6922
    %v7063 = vpop.f32.mrb[0].mxu0
    %v7064 = vadd.f32 %v6947, %v7063
    %v7065 = vpop.f32.mrb[0].mxu0
    %v7066 = vpop.f32.mrb[0].mxu0
    %v7067 = vadd.f32 %v6947, %v7066
    %v7068 = vpop.f32.mrb[0].mxu0
    %7069 = vmatprep.mubr.bf16.mxu0 0
    %7070 = vmatmul.mubr.bf16.gmra.mrb[0].mxu0 %v6923
    %v7071 = vpop.f32.mrb[0].mxu0
    %v7072 = vadd.f32 %v6947, %v7071
    %v7073 = vpop.f32.mrb[0].mxu0
    %v7074 = vpop.f32.mrb[0].mxu0
    %v7075 = vadd.f32 %v6947, %v7074
    %v7076 = vpop.f32.mrb[0].mxu0
    %7077 = vmatprep.mubr.bf16.mxu0 0
    %7078 = vmatmul.mubr.bf16.gmra.mrb[0].mxu0 %v6924
    %v7079 = vpop.f32.mrb[0].mxu0
    %v7080 = vadd.f32 %v6947, %v7079
    %v7081 = vpop.f32.mrb[0].mxu0
    %v7082 = vpop.f32.mrb[0].mxu0
    %v7083 = vadd.f32 %v6947, %v7082
    %v7084 = vpop.f32.mrb[0].mxu0
    %7085 = vmatprep.mubr.bf16.mxu0 0
    %7086 = vmatmul.mubr.bf16.gmra.mrb[0].mxu0 %v6925
    %v7087 = vpop.f32.mrb[0].mxu0
    %v7088 = vadd.f32 %v6947, %v7087
    %v7089 = vpop.f32.mrb[0].mxu0
    %v7090 = vpop.f32.mrb[0].mxu0
    %v7091 = vadd.f32 %v6947, %v7090
    %v7092 = vpop.f32.mrb[0].mxu0
    %7093 = vdwg.mxu0
    %vm7094 = vcmp.ge.f32.partialorder %v7032, 0.0
    %vm7095 = vcmp.ge.f32.partialorder %v7035, 0.0
    %vm7096 = vcmp.ge.f32.partialorder %v7040, 0.0
    %vm7097 = vcmp.ge.f32.partialorder %v7043, 0.0
    %vm7098 = vcmp.ge.f32.partialorder %v7048, 0.0
    %vm7099 = vcmp.ge.f32.partialorder %v7051, 0.0
    %vm7100 = vcmp.ge.f32.partialorder %v7056, 0.0
    %vm7101 = vcmp.ge.f32.partialorder %v7059, 0.0
    %vm7102 = vcmp.ge.f32.partialorder %v7064, 0.0
    %vm7103 = vcmp.ge.f32.partialorder %v7067, 0.0
    %vm7104 = vcmp.ge.f32.partialorder %v7072, 0.0
    %vm7105 = vcmp.ge.f32.partialorder %v7075, 0.0
    %vm7106 = vcmp.ge.f32.partialorder %v7080, 0.0
    %vm7107 = vcmp.ge.f32.partialorder %v7083, 0.0
    %vm7108 = vcmp.ge.f32.partialorder %v7088, 0.0
    %vm7109 = vcmp.ge.f32.partialorder %v7091, 0.0
    %v7110 = vstv %s6915
    %v7111 = vmul.f32 %v7110, %v7032
    %v7112 = vmul.f32 %v7110, %v7035
    %v7113 = vmul.f32 %v7110, %v7040
    %v7114 = vmul.f32 %v7110, %v7043
    %v7115 = vmul.f32 %v7110, %v7048
    %v7116 = vmul.f32 %v7110, %v7051
    %v7117 = vmul.f32 %v7110, %v7056
    %v7118 = vmul.f32 %v7110, %v7059
    %v7119 = vmul.f32 %v7110, %v7064
    %v7120 = vmul.f32 %v7110, %v7067
    %v7121 = vmul.f32 %v7110, %v7072
    %v7122 = vmul.f32 %v7110, %v7075
    %v7123 = vmul.f32 %v7110, %v7080
    %v7124 = vmul.f32 %v7110, %v7083
    %v7125 = vmul.f32 %v7110, %v7088
    %v7126 = vmul.f32 %v7110, %v7091
    %v7127 = vsel %vm7094, %v7032, %v7111
    %v7128 = vsel %vm7095, %v7035, %v7112
    %v7129 = vsel %vm7096, %v7040, %v7113
    %v7130 = vsel %vm7097, %v7043, %v7114
    %v7131 = vsel %vm7098, %v7048, %v7115
    %v7132 = vsel %vm7099, %v7051, %v7116
    %v7133 = vsel %vm7100, %v7056, %v7117
    %v7134 = vsel %vm7101, %v7059, %v7118
    %v7135 = vsel %vm7102, %v7064, %v7119
    %v7136 = vsel %vm7103, %v7067, %v7120
    %v7137 = vsel %vm7104, %v7072, %v7121
    %v7138 = vsel %vm7105, %v7075, %v7122
    %v7139 = vsel %vm7106, %v7080, %v7123
    %v7140 = vsel %vm7107, %v7083, %v7124
    %v7141 = vsel %vm7108, %v7088, %v7125
    %v7142 = vsel %vm7109, %v7091, %v7126
    %v7143 = vpack.c.bf16 %v7128, %v7127
    %v7144 = vpack.c.bf16 %v7130, %v7129
    %v7145 = vpack.c.bf16 %v7132, %v7131
    %v7146 = vpack.c.bf16 %v7134, %v7133
    %v7147 = vpack.c.bf16 %v7136, %v7135
    %v7148 = vpack.c.bf16 %v7138, %v7137
    %v7149 = vpack.c.bf16 %v7140, %v7139
    %v7150 = vpack.c.bf16 %v7142, %v7141
    %v7151 = vld [vmem:[%s113] sm:$0xf]
    %v7152 = vld [vmem:[%s113 + $0x4] sm:$0xf]
    %v7153 = vld [vmem:[%s113 + $0x8] sm:$0xf]
    %v7154 = vld [vmem:[%s113 + $0xc] sm:$0xf]
    %v7155 = vld [vmem:[%s113 + $0x10] sm:$0xf]
    %v7156 = vld [vmem:[%s113 + $0x14] sm:$0xf]
    %v7157 = vld [vmem:[%s113 + $0x18] sm:$0xf]
    %v7158 = vld [vmem:[%s113 + $0x1c] sm:$0xf]
    %v7159 = vld [vmem:[%s113 + $0x20] sm:$0xf]
    %v7160 = vld [vmem:[%s113 + $0x24] sm:$0xf]
    %v7161 = vld [vmem:[%s113 + $0x28] sm:$0xf]
    %v7162 = vld [vmem:[%s113 + $0x2c] sm:$0xf]
    %v7163 = vld [vmem:[%s113 + $0x30] sm:$0xf]
    %v7164 = vld [vmem:[%s113 + $0x34] sm:$0xf]
    %v7165 = vld [vmem:[%s113 + $0x38] sm:$0xf]
    %v7166 = vld [vmem:[%s113 + $0x3c] sm:$0xf]
    %v7183 = vunpack.c.l.b16 %v7151
    %v7184 = vunpack.c.l.b16 %v7152
    %v7185 = vunpack.c.l.b16 %v7153
    %v7186 = vunpack.c.l.b16 %v7154
    %v7187 = vunpack.c.l.b16 %v7155
    %v7188 = vunpack.c.l.b16 %v7156
    %v7189 = vunpack.c.l.b16 %v7157
    %v7190 = vunpack.c.l.b16 %v7158
    %v7191 = vunpack.c.l.b16 %v7159
    %v7192 = vunpack.c.l.b16 %v7160
    %v7193 = vunpack.c.l.b16 %v7161
    %v7194 = vunpack.c.l.b16 %v7162
    %v7195 = vunpack.c.l.b16 %v7163
    %v7196 = vunpack.c.l.b16 %v7164
    %v7197 = vunpack.c.l.b16 %v7165
    %v7198 = vunpack.c.l.b16 %v7166
    %v7199 = vpack.c.b16 %v7184, %v7183
    %v7200 = vpack.c.b16 %v7186, %v7185
    %v7201 = vpack.c.b16 %v7188, %v7187
    %v7202 = vpack.c.b16 %v7190, %v7189
    %v7203 = vpack.c.b16 %v7192, %v7191
    %v7204 = vpack.c.b16 %v7194, %v7193
    %v7205 = vpack.c.b16 %v7196, %v7195
    %v7206 = vpack.c.b16 %v7198, %v7197
    %7215 = vmatprep.subr.bf16.mxu0 0
    %7216 = vmatpush1.bf16.msra.mxu0 %v7199
    %7217 = vmatprep.subr.bf16.mxu0 0
    %7218 = vmatpush1.bf16.msra.mxu0 %v7200
    %7219 = vmatprep.subr.bf16.mxu0 0
    %7220 = vmatpush1.bf16.msra.mxu0 %v7201
    %7221 = vmatprep.subr.bf16.mxu0 0
    %7222 = vmatpush1.bf16.msra.mxu0 %v7202
    %7223 = vmatprep.subr.bf16.mxu0 0
    %7224 = vmatpush1.bf16.msra.mxu0 %v7203
    %7225 = vmatprep.subr.bf16.mxu0 0
    %7226 = vmatpush1.bf16.msra.mxu0 %v7204
    %7227 = vmatprep.subr.bf16.mxu0 0
    %7228 = vmatpush1.bf16.msra.mxu0 %v7205
    %7229 = vmatprep.subr.bf16.mxu0 0
    %7230 = vmatpush1.bf16.msra.mxu0 %v7206
    %7231 = vmatprep.subr.bf16.mxu0 0
    %7232 = vmatpush1.bf16.msra.mxu0 0
    %7233 = vmatprep.subr.bf16.mxu0 0
    %7234 = vmatpush1.bf16.msra.mxu0 0
    %7235 = vmatprep.subr.bf16.mxu0 0
    %7236 = vmatpush1.bf16.msra.mxu0 0
    %7237 = vmatprep.subr.bf16.mxu0 0
    %7238 = vmatpush1.bf16.msra.mxu0 0
    %7239 = vmatprep.subr.bf16.mxu0 0
    %7240 = vmatpush1.bf16.msra.mxu0 0
    %7241 = vmatprep.subr.bf16.mxu0 0
    %7242 = vmatpush1.bf16.msra.mxu0 0
    %7243 = vmatprep.subr.bf16.mxu0 0
    %7244 = vmatpush1.bf16.msra.mxu0 0
    %7245 = vmatprep.subr.bf16.mxu0 0
    %7246 = vmatpush1.bf16.msra.mxu0 0
    %7247 = vmatprep.mubr.bf16.mxu0 0
    %7248 = vmatmul.mubr.bf16.gmra.mrb[0].mxu0 %v7143
    %v7249 = vpop.f32.mrb[0].mxu0
    %v7250 = vadd.f32 0.0, %v7249
    %v7251 = vpop.f32.mrb[0].mxu0
    %v7252 = vpop.f32.mrb[0].mxu0
    %v7253 = vadd.f32 0.0, %v7252
    %v7254 = vpop.f32.mrb[0].mxu0
    %7255 = vmatprep.mubr.bf16.mxu0 0
    %7256 = vmatmul.mubr.bf16.gmra.mrb[0].mxu0 %v7144
    %v7257 = vpop.f32.mrb[0].mxu0
    %v7258 = vadd.f32 0.0, %v7257
    %v7259 = vpop.f32.mrb[0].mxu0
    %v7260 = vpop.f32.mrb[0].mxu0
    %v7261 = vadd.f32 0.0, %v7260
    %v7262 = vpop.f32.mrb[0].mxu0
    %7263 = vmatprep.mubr.bf16.mxu0 0
    %7264 = vmatmul.mubr.bf16.gmra.mrb[0].mxu0 %v7145
    %v7265 = vpop.f32.mrb[0].mxu0
    %v7266 = vadd.f32 0.0, %v7265
    %v7267 = vpop.f32.mrb[0].mxu0
    %v7268 = vpop.f32.mrb[0].mxu0
    %v7269 = vadd.f32 0.0, %v7268
    %v7270 = vpop.f32.mrb[0].mxu0
    %7271 = vmatprep.mubr.bf16.mxu0 0
    %7272 = vmatmul.mubr.bf16.gmra.mrb[0].mxu0 %v7146
    %v7273 = vpop.f32.mrb[0].mxu0
    %v7274 = vadd.f32 0.0, %v7273
    %v7275 = vpop.f32.mrb[0].mxu0
    %v7276 = vpop.f32.mrb[0].mxu0
    %v7277 = vadd.f32 0.0, %v7276
    %v7278 = vpop.f32.mrb[0].mxu0
    %7279 = vmatprep.mubr.bf16.mxu0 0
    %7280 = vmatmul.mubr.bf16.gmra.mrb[0].mxu0 %v7147
    %v7281 = vpop.f32.mrb[0].mxu0
    %v7282 = vadd.f32 0.0, %v7281
    %v7283 = vpop.f32.mrb[0].mxu0
    %v7284 = vpop.f32.mrb[0].mxu0
    %v7285 = vadd.f32 0.0, %v7284
    %v7286 = vpop.f32.mrb[0].mxu0
    %7287 = vmatprep.mubr.bf16.mxu0 0
    %7288 = vmatmul.mubr.bf16.gmra.mrb[0].mxu0 %v7148
    %v7289 = vpop.f32.mrb[0].mxu0
    %v7290 = vadd.f32 0.0, %v7289
    %v7291 = vpop.f32.mrb[0].mxu0
    %v7292 = vpop.f32.mrb[0].mxu0
    %v7293 = vadd.f32 0.0, %v7292
    %v7294 = vpop.f32.mrb[0].mxu0
    %7295 = vmatprep.mubr.bf16.mxu0 0
    %7296 = vmatmul.mubr.bf16.gmra.mrb[0].mxu0 %v7149
    %v7297 = vpop.f32.mrb[0].mxu0
    %v7298 = vadd.f32 0.0, %v7297
    %v7299 = vpop.f32.mrb[0].mxu0
    %v7300 = vpop.f32.mrb[0].mxu0
    %v7301 = vadd.f32 0.0, %v7300
    %v7302 = vpop.f32.mrb[0].mxu0
    %7303 = vmatprep.mubr.bf16.mxu0 0
    %7304 = vmatmul.mubr.bf16.gmra.mrb[0].mxu0 %v7150
    %v7305 = vpop.f32.mrb[0].mxu0
    %v7306 = vadd.f32 0.0, %v7305
    %v7307 = vpop.f32.mrb[0].mxu0
    %v7308 = vpop.f32.mrb[0].mxu0
    %v7309 = vadd.f32 0.0, %v7308
    %v7310 = vpop.f32.mrb[0].mxu0
    %7311 = vdwg.mxu0
    %vm7312 = vcmp.ge.f32.partialorder %v7250, 0.0
    %vm7313 = vcmp.ge.f32.partialorder %v7253, 0.0
    %vm7314 = vcmp.ge.f32.partialorder %v7258, 0.0
    %vm7315 = vcmp.ge.f32.partialorder %v7261, 0.0
    %vm7316 = vcmp.ge.f32.partialorder %v7266, 0.0
    %vm7317 = vcmp.ge.f32.partialorder %v7269, 0.0
    %vm7318 = vcmp.ge.f32.partialorder %v7274, 0.0
    %vm7319 = vcmp.ge.f32.partialorder %v7277, 0.0
    %vm7320 = vcmp.ge.f32.partialorder %v7282, 0.0
    %vm7321 = vcmp.ge.f32.partialorder %v7285, 0.0
    %vm7322 = vcmp.ge.f32.partialorder %v7290, 0.0
    %vm7323 = vcmp.ge.f32.partialorder %v7293, 0.0
    %vm7324 = vcmp.ge.f32.partialorder %v7298, 0.0
    %vm7325 = vcmp.ge.f32.partialorder %v7301, 0.0
    %vm7326 = vcmp.ge.f32.partialorder %v7306, 0.0
    %vm7327 = vcmp.ge.f32.partialorder %v7309, 0.0
    %v7328 = vstv %s6916
    %v7329 = vmul.f32 %v7328, %v7250
    %v7330 = vmul.f32 %v7328, %v7253
    %v7331 = vmul.f32 %v7328, %v7258
    %v7332 = vmul.f32 %v7328, %v7261
    %v7333 = vmul.f32 %v7328, %v7266
    %v7334 = vmul.f32 %v7328, %v7269
    %v7335 = vmul.f32 %v7328, %v7274
    %v7336 = vmul.f32 %v7328, %v7277
    %v7337 = vmul.f32 %v7328, %v7282
    %v7338 = vmul.f32 %v7328, %v7285
    %v7339 = vmul.f32 %v7328, %v7290
    %v7340 = vmul.f32 %v7328, %v7293
    %v7341 = vmul.f32 %v7328, %v7298
    %v7342 = vmul.f32 %v7328, %v7301
    %v7343 = vmul.f32 %v7328, %v7306
    %v7344 = vmul.f32 %v7328, %v7309
    %v7345 = vsel %vm7312, %v7250, %v7329
    %v7346 = vsel %vm7313, %v7253, %v7330
    %v7347 = vsel %vm7314, %v7258, %v7331
    %v7348 = vsel %vm7315, %v7261, %v7332
    %v7349 = vsel %vm7316, %v7266, %v7333
    %v7350 = vsel %vm7317, %v7269, %v7334
    %v7351 = vsel %vm7318, %v7274, %v7335
    %v7352 = vsel %vm7319, %v7277, %v7336
    %v7353 = vsel %vm7320, %v7282, %v7337
    %v7354 = vsel %vm7321, %v7285, %v7338
    %v7355 = vsel %vm7322, %v7290, %v7339
    %v7356 = vsel %vm7323, %v7293, %v7340
    %v7357 = vsel %vm7324, %v7298, %v7341
    %v7358 = vsel %vm7325, %v7301, %v7342
    %v7359 = vsel %vm7326, %v7306, %v7343
    %v7360 = vsel %vm7327, %v7309, %v7344
    %v7361 = vpack.c.bf16 %v7346, %v7345
    %v7362 = vpack.c.bf16 %v7348, %v7347
    %v7363 = vpack.c.bf16 %v7350, %v7349
    %v7364 = vpack.c.bf16 %v7352, %v7351
    %v7365 = vpack.c.bf16 %v7354, %v7353
    %v7366 = vpack.c.bf16 %v7356, %v7355
    %v7367 = vpack.c.bf16 %v7358, %v7357
    %v7368 = vpack.c.bf16 %v7360, %v7359
    %v7369 = vld [vmem:[%s115] sm:$0xf]
    %v7370 = vld [vmem:[%s115 + $0x4] sm:$0xf]
    %v7371 = vld [vmem:[%s115 + $0x8] sm:$0xf]
    %v7372 = vld [vmem:[%s115 + $0xc] sm:$0xf]
    %v7373 = vld [vmem:[%s115 + $0x10] sm:$0xf]
    %v7374 = vld [vmem:[%s115 + $0x14] sm:$0xf]
    %v7375 = vld [vmem:[%s115 + $0x18] sm:$0xf]
    %v7376 = vld [vmem:[%s115 + $0x1c] sm:$0xf]
    %v7377 = vld [vmem:[%s115 + $0x20] sm:$0xf]
    %v7378 = vld [vmem:[%s115 + $0x24] sm:$0xf]
    %v7379 = vld [vmem:[%s115 + $0x28] sm:$0xf]
    %v7380 = vld [vmem:[%s115 + $0x2c] sm:$0xf]
    %v7381 = vld [vmem:[%s115 + $0x30] sm:$0xf]
    %v7382 = vld [vmem:[%s115 + $0x34] sm:$0xf]
    %v7383 = vld [vmem:[%s115 + $0x38] sm:$0xf]
    %v7384 = vld [vmem:[%s115 + $0x3c] sm:$0xf]
    %v7401 = vunpack.c.l.b16 %v7369
    %v7402 = vunpack.c.l.b16 %v7370
    %v7403 = vunpack.c.l.b16 %v7371
    %v7404 = vunpack.c.l.b16 %v7372
    %v7405 = vunpack.c.l.b16 %v7373
    %v7406 = vunpack.c.l.b16 %v7374
    %v7407 = vunpack.c.l.b16 %v7375
    %v7408 = vunpack.c.l.b16 %v7376
    %v7409 = vunpack.c.l.b16 %v7377
    %v7410 = vunpack.c.l.b16 %v7378
    %v7411 = vunpack.c.l.b16 %v7379
    %v7412 = vunpack.c.l.b16 %v7380
    %v7413 = vunpack.c.l.b16 %v7381
    %v7414 = vunpack.c.l.b16 %v7382
    %v7415 = vunpack.c.l.b16 %v7383
    %v7416 = vunpack.c.l.b16 %v7384
    %v7417 = vpack.c.b16 %v7402, %v7401
    %v7418 = vpack.c.b16 %v7404, %v7403
    %v7419 = vpack.c.b16 %v7406, %v7405
    %v7420 = vpack.c.b16 %v7408, %v7407
    %v7421 = vpack.c.b16 %v7410, %v7409
    %v7422 = vpack.c.b16 %v7412, %v7411
    %v7423 = vpack.c.b16 %v7414, %v7413
    %v7424 = vpack.c.b16 %v7416, %v7415
    %7433 = vmatprep.subr.bf16.mxu0 0
    %7434 = vmatpush1.bf16.msra.mxu0 %v7417
    %7435 = vmatprep.subr.bf16.mxu0 0
    %7436 = vmatpush1.bf16.msra.mxu0 %v7418
    %7437 = vmatprep.subr.bf16.mxu0 0
    %7438 = vmatpush1.bf16.msra.mxu0 %v7419
    %7439 = vmatprep.subr.bf16.mxu0 0
    %7440 = vmatpush1.bf16.msra.mxu0 %v7420
    %7441 = vmatprep.subr.bf16.mxu0 0
    %7442 = vmatpush1.bf16.msra.mxu0 %v7421
    %7443 = vmatprep.subr.bf16.mxu0 0
    %7444 = vmatpush1.bf16.msra.mxu0 %v7422
    %7445 = vmatprep.subr.bf16.mxu0 0
    %7446 = vmatpush1.bf16.msra.mxu0 %v7423
    %7447 = vmatprep.subr.bf16.mxu0 0
    %7448 = vmatpush1.bf16.msra.mxu0 %v7424
    %7449 = vmatprep.subr.bf16.mxu0 0
    %7450 = vmatpush1.bf16.msra.mxu0 0
    %7451 = vmatprep.subr.bf16.mxu0 0
    %7452 = vmatpush1.bf16.msra.mxu0 0
    %7453 = vmatprep.subr.bf16.mxu0 0
    %7454 = vmatpush1.bf16.msra.mxu0 0
    %7455 = vmatprep.subr.bf16.mxu0 0
    %7456 = vmatpush1.bf16.msra.mxu0 0
    %7457 = vmatprep.subr.bf16.mxu0 0
    %7458 = vmatpush1.bf16.msra.mxu0 0
    %7459 = vmatprep.subr.bf16.mxu0 0
    %7460 = vmatpush1.bf16.msra.mxu0 0
    %7461 = vmatprep.subr.bf16.mxu0 0
    %7462 = vmatpush1.bf16.msra.mxu0 0
    %7463 = vmatprep.subr.bf16.mxu0 0
    %7464 = vmatpush1.bf16.msra.mxu0 0
    %7465 = vmatprep.mubr.bf16.mxu0 0
    %7466 = vmatmul.mubr.bf16.gmra.mrb[0].mxu0 %v7361
    %v7467 = vpop.f32.mrb[0].mxu0
    %v7468 = vadd.f32 0.0, %v7467
    %v7469 = vpop.f32.mrb[0].mxu0
    %v7470 = vpop.f32.mrb[0].mxu0
    %v7471 = vadd.f32 0.0, %v7470
    %v7472 = vpop.f32.mrb[0].mxu0
    %7473 = vmatprep.mubr.bf16.mxu0 0
    %7474 = vmatmul.mubr.bf16.gmra.mrb[0].mxu0 %v7362
    %v7475 = vpop.f32.mrb[0].mxu0
    %v7476 = vadd.f32 0.0, %v7475
    %v7477 = vpop.f32.mrb[0].mxu0
    %v7478 = vpop.f32.mrb[0].mxu0
    %v7479 = vadd.f32 0.0, %v7478
    %v7480 = vpop.f32.mrb[0].mxu0
    %7481 = vmatprep.mubr.bf16.mxu0 0
    %7482 = vmatmul.mubr.bf16.gmra.mrb[0].mxu0 %v7363
    %v7483 = vpop.f32.mrb[0].mxu0
    %v7484 = vadd.f32 0.0, %v7483
    %v7485 = vpop.f32.mrb[0].mxu0
    %v7486 = vpop.f32.mrb[0].mxu0
    %v7487 = vadd.f32 0.0, %v7486
    %v7488 = vpop.f32.mrb[0].mxu0
    %7489 = vmatprep.mubr.bf16.mxu0 0
    %7490 = vmatmul.mubr.bf16.gmra.mrb[0].mxu0 %v7364
    %v7491 = vpop.f32.mrb[0].mxu0
    %v7492 = vadd.f32 0.0, %v7491
    %v7493 = vpop.f32.mrb[0].mxu0
    %v7494 = vpop.f32.mrb[0].mxu0
    %v7495 = vadd.f32 0.0, %v7494
    %v7496 = vpop.f32.mrb[0].mxu0
    %7497 = vmatprep.mubr.bf16.mxu0 0
    %7498 = vmatmul.mubr.bf16.gmra.mrb[0].mxu0 %v7365
    %v7499 = vpop.f32.mrb[0].mxu0
    %v7500 = vadd.f32 0.0, %v7499
    %v7501 = vpop.f32.mrb[0].mxu0
    %v7502 = vpop.f32.mrb[0].mxu0
    %v7503 = vadd.f32 0.0, %v7502
    %v7504 = vpop.f32.mrb[0].mxu0
    %7505 = vmatprep.mubr.bf16.mxu0 0
    %7506 = vmatmul.mubr.bf16.gmra.mrb[0].mxu0 %v7366
    %v7507 = vpop.f32.mrb[0].mxu0
    %v7508 = vadd.f32 0.0, %v7507
    %v7509 = vpop.f32.mrb[0].mxu0
    %v7510 = vpop.f32.mrb[0].mxu0
    %v7511 = vadd.f32 0.0, %v7510
    %v7512 = vpop.f32.mrb[0].mxu0
    %7513 = vmatprep.mubr.bf16.mxu0 0
    %7514 = vmatmul.mubr.bf16.gmra.mrb[0].mxu0 %v7367
    %v7515 = vpop.f32.mrb[0].mxu0
    %v7516 = vadd.f32 0.0, %v7515
    %v7517 = vpop.f32.mrb[0].mxu0
    %v7518 = vpop.f32.mrb[0].mxu0
    %v7519 = vadd.f32 0.0, %v7518
    %v7520 = vpop.f32.mrb[0].mxu0
    %7521 = vmatprep.mubr.bf16.mxu0 0
    %7522 = vmatmul.mubr.bf16.gmra.mrb[0].mxu0 %v7368
    %v7523 = vpop.f32.mrb[0].mxu0
    %v7524 = vadd.f32 0.0, %v7523
    %v7525 = vpop.f32.mrb[0].mxu0
    %v7526 = vpop.f32.mrb[0].mxu0
    %v7527 = vadd.f32 0.0, %v7526
    %v7528 = vpop.f32.mrb[0].mxu0
    %7529 = vdwg.mxu0
    %vm7530 = vcmp.ge.f32.partialorder %v7468, 0.0
    %vm7531 = vcmp.ge.f32.partialorder %v7471, 0.0
    %vm7532 = vcmp.ge.f32.partialorder %v7476, 0.0
    %vm7533 = vcmp.ge.f32.partialorder %v7479, 0.0
    %vm7534 = vcmp.ge.f32.partialorder %v7484, 0.0
    %vm7535 = vcmp.ge.f32.partialorder %v7487, 0.0
    %vm7536 = vcmp.ge.f32.partialorder %v7492, 0.0
    %vm7537 = vcmp.ge.f32.partialorder %v7495, 0.0
    %vm7538 = vcmp.ge.f32.partialorder %v7500, 0.0
    %vm7539 = vcmp.ge.f32.partialorder %v7503, 0.0
    %vm7540 = vcmp.ge.f32.partialorder %v7508, 0.0
    %vm7541 = vcmp.ge.f32.partialorder %v7511, 0.0
    %vm7542 = vcmp.ge.f32.partialorder %v7516, 0.0
    %vm7543 = vcmp.ge.f32.partialorder %v7519, 0.0
    %vm7544 = vcmp.ge.f32.partialorder %v7524, 0.0
    %vm7545 = vcmp.ge.f32.partialorder %v7527, 0.0
    %v7546 = vstv %s6917
    %v7547 = vmul.f32 %v7546, %v7468
    %v7548 = vmul.f32 %v7546, %v7471
    %v7549 = vmul.f32 %v7546, %v7476
    %v7550 = vmul.f32 %v7546, %v7479
    %v7551 = vmul.f32 %v7546, %v7484
    %v7552 = vmul.f32 %v7546, %v7487
    %v7553 = vmul.f32 %v7546, %v7492
    %v7554 = vmul.f32 %v7546, %v7495
    %v7555 = vmul.f32 %v7546, %v7500
    %v7556 = vmul.f32 %v7546, %v7503
    %v7557 = vmul.f32 %v7546, %v7508
    %v7558 = vmul.f32 %v7546, %v7511
    %v7559 = vmul.f32 %v7546, %v7516
    %v7560 = vmul.f32 %v7546, %v7519
    %v7561 = vmul.f32 %v7546, %v7524
    %v7562 = vmul.f32 %v7546, %v7527
    %v7563 = vsel %vm7530, %v7468, %v7547
    %v7564 = vsel %vm7531, %v7471, %v7548
    %v7565 = vsel %vm7532, %v7476, %v7549
    %v7566 = vsel %vm7533, %v7479, %v7550
    %v7567 = vsel %vm7534, %v7484, %v7551
    %v7568 = vsel %vm7535, %v7487, %v7552
    %v7569 = vsel %vm7536, %v7492, %v7553
    %v7570 = vsel %vm7537, %v7495, %v7554
    %v7571 = vsel %vm7538, %v7500, %v7555
    %v7572 = vsel %vm7539, %v7503, %v7556
    %v7573 = vsel %vm7540, %v7508, %v7557
    %v7574 = vsel %vm7541, %v7511, %v7558
    %v7575 = vsel %vm7542, %v7516, %v7559
    %v7576 = vsel %vm7543, %v7519, %v7560
    %v7577 = vsel %vm7544, %v7524, %v7561
    %v7578 = vsel %vm7545, %v7527, %v7562
    %v7579 = vpack.c.bf16 %v7564, %v7563
    %v7580 = vpack.c.bf16 %v7566, %v7565
    %v7581 = vpack.c.bf16 %v7568, %v7567
    %v7582 = vpack.c.bf16 %v7570, %v7569
    %v7583 = vpack.c.bf16 %v7572, %v7571
    %v7584 = vpack.c.bf16 %v7574, %v7573
    %v7585 = vpack.c.bf16 %v7576, %v7575
    %v7586 = vpack.c.bf16 %v7578, %v7577
    %v7587 = vld [vmem:[%s117] sm:$0xf]
    %v7588 = vld [vmem:[%s117 + $0x4] sm:$0xf]
    %v7589 = vld [vmem:[%s117 + $0x8] sm:$0xf]
    %v7590 = vld [vmem:[%s117 + $0xc] sm:$0xf]
    %v7591 = vld [vmem:[%s117 + $0x10] sm:$0xf]
    %v7592 = vld [vmem:[%s117 + $0x14] sm:$0xf]
    %v7593 = vld [vmem:[%s117 + $0x18] sm:$0xf]
    %v7594 = vld [vmem:[%s117 + $0x1c] sm:$0xf]
    %v7595 = vld [vmem:[%s117 + $0x20] sm:$0xf]
    %v7596 = vld [vmem:[%s117 + $0x24] sm:$0xf]
    %v7597 = vld [vmem:[%s117 + $0x28] sm:$0xf]
    %v7598 = vld [vmem:[%s117 + $0x2c] sm:$0xf]
    %v7599 = vld [vmem:[%s117 + $0x30] sm:$0xf]
    %v7600 = vld [vmem:[%s117 + $0x34] sm:$0xf]
    %v7601 = vld [vmem:[%s117 + $0x38] sm:$0xf]
    %v7602 = vld [vmem:[%s117 + $0x3c] sm:$0xf]
    %v7603 = vld [vmem:[%s119] sm:$0x1]
    %v7605 = vlaneseq
    %v7606 = vshrl.u32 %v7605, 7
    %v7607 = vsub.s32 0, %v7606
    %v7608 = vrot.slane %v7603, %v7607
    %v7626 = vunpack.c.l.b16 %v7587
    %v7627 = vunpack.c.l.b16 %v7588
    %v7628 = vunpack.c.l.b16 %v7589
    %v7629 = vunpack.c.l.b16 %v7590
    %v7630 = vunpack.c.l.b16 %v7591
    %v7631 = vunpack.c.l.b16 %v7592
    %v7632 = vunpack.c.l.b16 %v7593
    %v7633 = vunpack.c.l.b16 %v7594
    %v7634 = vunpack.c.l.b16 %v7595
    %v7635 = vunpack.c.l.b16 %v7596
    %v7636 = vunpack.c.l.b16 %v7597
    %v7637 = vunpack.c.l.b16 %v7598
    %v7638 = vunpack.c.l.b16 %v7599
    %v7639 = vunpack.c.l.b16 %v7600
    %v7640 = vunpack.c.l.b16 %v7601
    %v7641 = vunpack.c.l.b16 %v7602
    %v7642 = vpack.c.b16 %v7627, %v7626
    %v7643 = vpack.c.b16 %v7629, %v7628
    %v7644 = vpack.c.b16 %v7631, %v7630
    %v7645 = vpack.c.b16 %v7633, %v7632
    %v7646 = vpack.c.b16 %v7635, %v7634
    %v7647 = vpack.c.b16 %v7637, %v7636
    %v7648 = vpack.c.b16 %v7639, %v7638
    %v7649 = vpack.c.b16 %v7641, %v7640
    %7658 = vmatprep.subr.bf16.mxu0 0
    %7659 = vmatpush1.bf16.msra.mxu0 %v7642
    %7660 = vmatprep.subr.bf16.mxu0 0
    %7661 = vmatpush1.bf16.msra.mxu0 %v7643
    %7662 = vmatprep.subr.bf16.mxu0 0
    %7663 = vmatpush1.bf16.msra.mxu0 %v7644
    %7664 = vmatprep.subr.bf16.mxu0 0
    %7665 = vmatpush1.bf16.msra.mxu0 %v7645
    %7666 = vmatprep.subr.bf16.mxu0 0
    %7667 = vmatpush1.bf16.msra.mxu0 %v7646
    %7668 = vmatprep.subr.bf16.mxu0 0
    %7669 = vmatpush1.bf16.msra.mxu0 %v7647
    %7670 = vmatprep.subr.bf16.mxu0 0
    %7671 = vmatpush1.bf16.msra.mxu0 %v7648
    %7672 = vmatprep.subr.bf16.mxu0 0
    %7673 = vmatpush1.bf16.msra.mxu0 %v7649
    %7674 = vmatprep.subr.bf16.mxu0 0
    %7675 = vmatpush1.bf16.msra.mxu0 0
    %7676 = vmatprep.subr.bf16.mxu0 0
    %7677 = vmatpush1.bf16.msra.mxu0 0
    %7678 = vmatprep.subr.bf16.mxu0 0
    %7679 = vmatpush1.bf16.msra.mxu0 0
    %7680 = vmatprep.subr.bf16.mxu0 0
    %7681 = vmatpush1.bf16.msra.mxu0 0
    %7682 = vmatprep.subr.bf16.mxu0 0
    %7683 = vmatpush1.bf16.msra.mxu0 0
    %7684 = vmatprep.subr.bf16.mxu0 0
    %7685 = vmatpush1.bf16.msra.mxu0 0
    %7686 = vmatprep.subr.bf16.mxu0 0
    %7687 = vmatpush1.bf16.msra.mxu0 0
    %7688 = vmatprep.subr.bf16.mxu0 0
    %7689 = vmatpush1.bf16.msra.mxu0 0
    %7690 = vmatprep.mubr.bf16.mxu0 0
    %7691 = vmatmul.mubr.bf16.gmra.mrb[0].mxu0 %v7579
    %v7692 = vpop.f32.mrb[0].mxu0
    %v7693 = vadd.f32 %v7608, %v7692
    %v7694 = vpop.f32.mrb[0].mxu0
    %v7695 = vpop.f32.mrb[0].mxu0
    %v7696 = vadd.f32 %v7608, %v7695
    %v7697 = vpop.f32.mrb[0].mxu0
    %7698 = vmatprep.mubr.bf16.mxu0 0
    %7699 = vmatmul.mubr.bf16.gmra.mrb[0].mxu0 %v7580
    %v7700 = vpop.f32.mrb[0].mxu0
    %v7701 = vadd.f32 %v7608, %v7700
    %v7702 = vpop.f32.mrb[0].mxu0
    %v7703 = vpop.f32.mrb[0].mxu0
    %v7704 = vadd.f32 %v7608, %v7703
    %v7705 = vpop.f32.mrb[0].mxu0
    %7706 = vmatprep.mubr.bf16.mxu0 0
    %7707 = vmatmul.mubr.bf16.gmra.mrb[0].mxu0 %v7581
    %v7708 = vpop.f32.mrb[0].mxu0
    %v7709 = vadd.f32 %v7608, %v7708
    %v7710 = vpop.f32.mrb[0].mxu0
    %v7711 = vpop.f32.mrb[0].mxu0
    %v7712 = vadd.f32 %v7608, %v7711
    %v7713 = vpop.f32.mrb[0].mxu0
    %7714 = vmatprep.mubr.bf16.mxu0 0
    %7715 = vmatmul.mubr.bf16.gmra.mrb[0].mxu0 %v7582
    %v7716 = vpop.f32.mrb[0].mxu0
    %v7717 = vadd.f32 %v7608, %v7716
    %v7718 = vpop.f32.mrb[0].mxu0
    %v7719 = vpop.f32.mrb[0].mxu0
    %v7720 = vadd.f32 %v7608, %v7719
    %v7721 = vpop.f32.mrb[0].mxu0
    %7722 = vmatprep.mubr.bf16.mxu0 0
    %7723 = vmatmul.mubr.bf16.gmra.mrb[0].mxu0 %v7583
    %v7724 = vpop.f32.mrb[0].mxu0
    %v7725 = vadd.f32 %v7608, %v7724
    %v7726 = vpop.f32.mrb[0].mxu0
    %v7727 = vpop.f32.mrb[0].mxu0
    %v7728 = vadd.f32 %v7608, %v7727
    %v7729 = vpop.f32.mrb[0].mxu0
    %7730 = vmatprep.mubr.bf16.mxu0 0
    %7731 = vmatmul.mubr.bf16.gmra.mrb[0].mxu0 %v7584
    %v7732 = vpop.f32.mrb[0].mxu0
    %v7733 = vadd.f32 %v7608, %v7732
    %v7734 = vpop.f32.mrb[0].mxu0
    %v7735 = vpop.f32.mrb[0].mxu0
    %v7736 = vadd.f32 %v7608, %v7735
    %v7737 = vpop.f32.mrb[0].mxu0
    %7738 = vmatprep.mubr.bf16.mxu0 0
    %7739 = vmatmul.mubr.bf16.gmra.mrb[0].mxu0 %v7585
    %v7740 = vpop.f32.mrb[0].mxu0
    %v7741 = vadd.f32 %v7608, %v7740
    %v7742 = vpop.f32.mrb[0].mxu0
    %v7743 = vpop.f32.mrb[0].mxu0
    %v7744 = vadd.f32 %v7608, %v7743
    %v7745 = vpop.f32.mrb[0].mxu0
    %7746 = vmatprep.mubr.bf16.mxu0 0
    %7747 = vmatmul.mubr.bf16.gmra.mrb[0].mxu0 %v7586
    %v7748 = vpop.f32.mrb[0].mxu0
    %v7749 = vadd.f32 %v7608, %v7748
    %v7750 = vpop.f32.mrb[0].mxu0
    %v7751 = vpop.f32.mrb[0].mxu0
    %v7752 = vadd.f32 %v7608, %v7751
    %v7753 = vpop.f32.mrb[0].mxu0
    %7754 = vdwg.mxu0
    %v7755 = vadd.f32 %v5592, %v7693
    %v7756 = vadd.f32 %v5593, %v7696
    %v7757 = vadd.f32 %v5594, %v7701
    %v7758 = vadd.f32 %v5595, %v7704
    %v7759 = vadd.f32 %v5596, %v7709
    %v7760 = vadd.f32 %v5597, %v7712
    %v7761 = vadd.f32 %v5598, %v7717
    %v7762 = vadd.f32 %v5599, %v7720
    %v7763 = vadd.f32 %v5600, %v7725
    %v7764 = vadd.f32 %v5601, %v7728
    %v7765 = vadd.f32 %v5602, %v7733
    %v7766 = vadd.f32 %v5603, %v7736
    %v7767 = vadd.f32 %v5604, %v7741
    %v7768 = vadd.f32 %v5605, %v7744
    %v7769 = vadd.f32 %v5606, %v7749
    %v7770 = vadd.f32 %v5607, %v7752
    %v7771 = vmul.f32 %v7755, %v373
    %v7772 = vmul.f32 %v7756, %v374
    %v7773 = vmul.f32 %v7757, %v375
    %v7774 = vmul.f32 %v7758, %v376
    %v7775 = vmul.f32 %v7759, %v377
    %v7776 = vmul.f32 %v7760, %v378
    %v7777 = vmul.f32 %v7761, %v379
    %v7778 = vmul.f32 %v7762, %v380
    %v7779 = vmul.f32 %v7763, %v381
    %v7780 = vmul.f32 %v7764, %v382
    %v7781 = vmul.f32 %v7765, %v383
    %v7782 = vmul.f32 %v7766, %v384
    %v7783 = vmul.f32 %v7767, %v385
    %v7784 = vmul.f32 %v7768, %v386
    %v7785 = vmul.f32 %v7769, %v387
    %v7786 = vmul.f32 %v7770, %v388
    %v7787 = vadd.f32 %v7771, %v7772
    %v7788 = vadd.f32 %v7787, %v7773
    %v7789 = vadd.f32 %v7788, %v7774
    %v7790 = vadd.f32 %v7789, %v7775
    %v7791 = vadd.f32 %v7790, %v7776
    %v7792 = vadd.f32 %v7791, %v7777
    %v7793 = vadd.f32 %v7792, %v7778
    %v7794 = vadd.f32 %v7793, %v7779
    %v7795 = vadd.f32 %v7794, %v7780
    %v7796 = vadd.f32 %v7795, %v7781
    %v7797 = vadd.f32 %v7796, %v7782
    %v7798 = vadd.f32 %v7797, %v7783
    %v7799 = vadd.f32 %v7798, %v7784
    %v7800 = vadd.f32 %v7799, %v7785
    %v7801 = vadd.f32 %v7800, %v7786
    %v7802 = vrot.slane %v7801, 4
    %v7803 = vadd.f32 %v7801, %v7802
    %v7804 = vrot.slane %v7803, 2
    %v7805 = vadd.f32 %v7803, %v7804
    %v7806 = vrot.slane %v7805, 1
    %v7807 = vadd.f32 %v7805, %v7806
    %v7808 = vmul.f32 %v7807, 0.0625
    %v7809 = vld [vmem:[%s125] sm:$0x1]
    %v7810 = vmul.f32 %v7809, %v7808
    %v7812 = vlaneseq
    %v7813 = vshrl.u32 %v7812, 7
    %v7814 = vsub.s32 0, %v7813
    %v7815 = vrot.slane %v7810, %v7814
    %v7817 = vsub.f32 %v7755, %v7815
    %v7818 = vsub.f32 %v7756, %v7815
    %v7819 = vsub.f32 %v7757, %v7815
    %v7820 = vsub.f32 %v7758, %v7815
    %v7821 = vsub.f32 %v7759, %v7815
    %v7822 = vsub.f32 %v7760, %v7815
    %v7823 = vsub.f32 %v7761, %v7815
    %v7824 = vsub.f32 %v7762, %v7815
    %v7825 = vsub.f32 %v7763, %v7815
    %v7826 = vsub.f32 %v7764, %v7815
    %v7827 = vsub.f32 %v7765, %v7815
    %v7828 = vsub.f32 %v7766, %v7815
    %v7829 = vsub.f32 %v7767, %v7815
    %v7830 = vsub.f32 %v7768, %v7815
    %v7831 = vsub.f32 %v7769, %v7815
    %v7832 = vsub.f32 %v7770, %v7815
    %v7833 = vmul.f32 %v7817, %v7817
    %v7834 = vmul.f32 %v7818, %v7818
    %v7835 = vmul.f32 %v7819, %v7819
    %v7836 = vmul.f32 %v7820, %v7820
    %v7837 = vmul.f32 %v7821, %v7821
    %v7838 = vmul.f32 %v7822, %v7822
    %v7839 = vmul.f32 %v7823, %v7823
    %v7840 = vmul.f32 %v7824, %v7824
    %v7841 = vmul.f32 %v7825, %v7825
    %v7842 = vmul.f32 %v7826, %v7826
    %v7843 = vmul.f32 %v7827, %v7827
    %v7844 = vmul.f32 %v7828, %v7828
    %v7845 = vmul.f32 %v7829, %v7829
    %v7846 = vmul.f32 %v7830, %v7830
    %v7847 = vmul.f32 %v7831, %v7831
    %v7848 = vmul.f32 %v7832, %v7832
    %v7849 = vmul.f32 %v7833, %v373
    %v7850 = vmul.f32 %v7834, %v374
    %v7851 = vmul.f32 %v7835, %v375
    %v7852 = vmul.f32 %v7836, %v376
    %v7853 = vmul.f32 %v7837, %v377
    %v7854 = vmul.f32 %v7838, %v378
    %v7855 = vmul.f32 %v7839, %v379
    %v7856 = vmul.f32 %v7840, %v380
    %v7857 = vmul.f32 %v7841, %v381
    %v7858 = vmul.f32 %v7842, %v382
    %v7859 = vmul.f32 %v7843, %v383
    %v7860 = vmul.f32 %v7844, %v384
    %v7861 = vmul.f32 %v7845, %v385
    %v7862 = vmul.f32 %v7846, %v386
    %v7863 = vmul.f32 %v7847, %v387
    %v7864 = vmul.f32 %v7848, %v388
    %v7865 = vadd.f32 %v7849, %v7850
    %v7866 = vadd.f32 %v7865, %v7851
    %v7867 = vadd.f32 %v7866, %v7852
    %v7868 = vadd.f32 %v7867, %v7853
    %v7869 = vadd.f32 %v7868, %v7854
    %v7870 = vadd.f32 %v7869, %v7855
    %v7871 = vadd.f32 %v7870, %v7856
    %v7872 = vadd.f32 %v7871, %v7857
    %v7873 = vadd.f32 %v7872, %v7858
    %v7874 = vadd.f32 %v7873, %v7859
    %v7875 = vadd.f32 %v7874, %v7860
    %v7876 = vadd.f32 %v7875, %v7861
    %v7877 = vadd.f32 %v7876, %v7862
    %v7878 = vadd.f32 %v7877, %v7863
    %v7879 = vadd.f32 %v7878, %v7864
    %v7880 = vrot.slane %v7879, 4
    %v7881 = vadd.f32 %v7879, %v7880
    %v7882 = vrot.slane %v7881, 2
    %v7883 = vadd.f32 %v7881, %v7882
    %v7884 = vrot.slane %v7883, 1
    %v7885 = vadd.f32 %v7883, %v7884
    %v7886 = vmul.f32 %v7885, 0.0625
    %v7887 = vadd.f32 %v7886, 1e-05
    %v7888 = vrsqrt.pop %v7887
    %v7889 = vmul.f32 %v7817, %v7888
    %v7890 = vmul.f32 %v7818, %v7888
    %v7891 = vmul.f32 %v7819, %v7888
    %v7892 = vmul.f32 %v7820, %v7888
    %v7893 = vmul.f32 %v7821, %v7888
    %v7894 = vmul.f32 %v7822, %v7888
    %v7895 = vmul.f32 %v7823, %v7888
    %v7896 = vmul.f32 %v7824, %v7888
    %v7897 = vmul.f32 %v7825, %v7888
    %v7898 = vmul.f32 %v7826, %v7888
    %v7899 = vmul.f32 %v7827, %v7888
    %v7900 = vmul.f32 %v7828, %v7888
    %v7901 = vmul.f32 %v7829, %v7888
    %v7902 = vmul.f32 %v7830, %v7888
    %v7903 = vmul.f32 %v7831, %v7888
    %v7904 = vmul.f32 %v7832, %v7888
    %v7905 = vld [vmem:[%s121] sm:$0x1]
    %v7907 = vlaneseq
    %v7908 = vshrl.u32 %v7907, 7
    %v7909 = vsub.s32 0, %v7908
    %v7910 = vrot.slane %v7905, %v7909
    %v7912 = vmul.f32 %v7889, %v7910
    %v7913 = vmul.f32 %v7890, %v7910
    %v7914 = vmul.f32 %v7891, %v7910
    %v7915 = vmul.f32 %v7892, %v7910
    %v7916 = vmul.f32 %v7893, %v7910
    %v7917 = vmul.f32 %v7894, %v7910
    %v7918 = vmul.f32 %v7895, %v7910
    %v7919 = vmul.f32 %v7896, %v7910
    %v7920 = vmul.f32 %v7897, %v7910
    %v7921 = vmul.f32 %v7898, %v7910
    %v7922 = vmul.f32 %v7899, %v7910
    %v7923 = vmul.f32 %v7900, %v7910
    %v7924 = vmul.f32 %v7901, %v7910
    %v7925 = vmul.f32 %v7902, %v7910
    %v7926 = vmul.f32 %v7903, %v7910
    %v7927 = vmul.f32 %v7904, %v7910
    %v7928 = vld [vmem:[%s123] sm:$0x1]
    %v7930 = vlaneseq
    %v7931 = vshrl.u32 %v7930, 7
    %v7932 = vsub.s32 0, %v7931
    %v7933 = vrot.slane %v7928, %v7932
    %v7935 = vadd.f32 %v7912, %v7933
    %v7936 = vadd.f32 %v7913, %v7933
    %v7937 = vadd.f32 %v7914, %v7933
    %v7938 = vadd.f32 %v7915, %v7933
    %v7939 = vadd.f32 %v7916, %v7933
    %v7940 = vadd.f32 %v7917, %v7933
    %v7941 = vadd.f32 %v7918, %v7933
    %v7942 = vadd.f32 %v7919, %v7933
    %v7943 = vadd.f32 %v7920, %v7933
    %v7944 = vadd.f32 %v7921, %v7933
    %v7945 = vadd.f32 %v7922, %v7933
    %v7946 = vadd.f32 %v7923, %v7933
    %v7947 = vadd.f32 %v7924, %v7933
    %v7948 = vadd.f32 %v7925, %v7933
    %v7949 = vadd.f32 %v7926, %v7933
    %v7950 = vadd.f32 %v7927, %v7933
    %v7951 = vpack.c.bf16 %v7936, %v7935
    %v7952 = vpack.c.bf16 %v7938, %v7937
    %v7953 = vpack.c.bf16 %v7940, %v7939
    %v7954 = vpack.c.bf16 %v7942, %v7941
    %v7955 = vpack.c.bf16 %v7944, %v7943
    %v7956 = vpack.c.bf16 %v7946, %v7945
    %v7957 = vpack.c.bf16 %v7948, %v7947
    %v7958 = vpack.c.bf16 %v7950, %v7949
    %7959 = vmatprep.subr.bf16.mxu0 0
    %7960 = vmatpush1.bf16.msra.mxu0 %v7951
    %7961 = vmatprep.subr.bf16.mxu0 0
    %7962 = vmatpush1.bf16.msra.mxu0 %v7952
    %7963 = vmatprep.subr.bf16.mxu0 0
    %7964 = vmatpush1.bf16.msra.mxu0 %v7953
    %7965 = vmatprep.subr.bf16.mxu0 0
    %7966 = vmatpush1.bf16.msra.mxu0 %v7954
    %7967 = vmatprep.subr.bf16.mxu0 0
    %7968 = vmatpush1.bf16.msra.mxu0 %v7955
    %7969 = vmatprep.subr.bf16.mxu0 0
    %7970 = vmatpush1.bf16.msra.mxu0 %v7956
    %7971 = vmatprep.subr.bf16.mxu0 0
    %7972 = vmatpush1.bf16.msra.mxu0 %v7957
    %7973 = vmatprep.subr.bf16.mxu0 0
    %7974 = vmatpush1.bf16.msra.mxu0 %v7958
    %7975 = vmatprep.subr.bf16.mxu0 0
    %7976 = vmatpush1.bf16.msra.mxu0 0
    %7977 = vmatprep.subr.bf16.mxu0 0
    %7978 = vmatpush1.bf16.msra.mxu0 0
    %7979 = vmatprep.subr.bf16.mxu0 0
    %7980 = vmatpush1.bf16.msra.mxu0 0
    %7981 = vmatprep.subr.bf16.mxu0 0
    %7982 = vmatpush1.bf16.msra.mxu0 0
    %7983 = vmatprep.subr.bf16.mxu0 0
    %7984 = vmatpush1.bf16.msra.mxu0 0
    %7985 = vmatprep.subr.bf16.mxu0 0
    %7986 = vmatpush1.bf16.msra.mxu0 0
    %7987 = vmatprep.subr.bf16.mxu0 0
    %7988 = vmatpush1.bf16.msra.mxu0 0
    %7989 = vmatprep.subr.bf16.mxu0 0
    %7990 = vmatpush1.bf16.msra.mxu0 0
    %7991 = vmatprep.mubr.bf16.mxu0 0
    %7992 = vmatmul.mubr.bf16.gmra.mrb[0].mxu0 %v3045
    %v7993 = vpop.f32.mrb[0].mxu0
    %v7994 = vadd.f32 0.0, %v7993
    %v7995 = vpop.f32.mrb[0].mxu0
    %v7996 = vpop.f32.mrb[0].mxu0
    %v7997 = vadd.f32 0.0, %v7996
    %v7998 = vpop.f32.mrb[0].mxu0
    %7999 = vmatprep.mubr.bf16.mxu0 0
    %8000 = vmatmul.mubr.bf16.gmra.mrb[0].mxu0 %v3046
    %v8001 = vpop.f32.mrb[0].mxu0
    %v8002 = vadd.f32 0.0, %v8001
    %v8003 = vpop.f32.mrb[0].mxu0
    %v8004 = vpop.f32.mrb[0].mxu0
    %v8005 = vadd.f32 0.0, %v8004
    %v8006 = vpop.f32.mrb[0].mxu0
    %8007 = vmatprep.mubr.bf16.mxu0 0
    %8008 = vmatmul.mubr.bf16.gmra.mrb[0].mxu0 %v3047
    %v8009 = vpop.f32.mrb[0].mxu0
    %v8010 = vadd.f32 0.0, %v8009
    %v8011 = vpop.f32.mrb[0].mxu0
    %v8012 = vpop.f32.mrb[0].mxu0
    %v8013 = vadd.f32 0.0, %v8012
    %v8014 = vpop.f32.mrb[0].mxu0
    %8015 = vmatprep.mubr.bf16.mxu0 0
    %8016 = vmatmul.mubr.bf16.gmra.mrb[0].mxu0 %v3048
    %v8017 = vpop.f32.mrb[0].mxu0
    %v8018 = vadd.f32 0.0, %v8017
    %v8019 = vpop.f32.mrb[0].mxu0
    %v8020 = vpop.f32.mrb[0].mxu0
    %v8021 = vadd.f32 0.0, %v8020
    %v8022 = vpop.f32.mrb[0].mxu0
    %8023 = vmatprep.mubr.bf16.mxu0 0
    %8024 = vmatmul.mubr.bf16.gmra.mrb[0].mxu0 %v3049
    %v8025 = vpop.f32.mrb[0].mxu0
    %v8026 = vadd.f32 0.0, %v8025
    %v8027 = vpop.f32.mrb[0].mxu0
    %v8028 = vpop.f32.mrb[0].mxu0
    %v8029 = vadd.f32 0.0, %v8028
    %v8030 = vpop.f32.mrb[0].mxu0
    %8031 = vmatprep.mubr.bf16.mxu0 0
    %8032 = vmatmul.mubr.bf16.gmra.mrb[0].mxu0 %v3050
    %v8033 = vpop.f32.mrb[0].mxu0
    %v8034 = vadd.f32 0.0, %v8033
    %v8035 = vpop.f32.mrb[0].mxu0
    %v8036 = vpop.f32.mrb[0].mxu0
    %v8037 = vadd.f32 0.0, %v8036
    %v8038 = vpop.f32.mrb[0].mxu0
    %8039 = vmatprep.mubr.bf16.mxu0 0
    %8040 = vmatmul.mubr.bf16.gmra.mrb[0].mxu0 %v3051
    %v8041 = vpop.f32.mrb[0].mxu0
    %v8042 = vadd.f32 0.0, %v8041
    %v8043 = vpop.f32.mrb[0].mxu0
    %v8044 = vpop.f32.mrb[0].mxu0
    %v8045 = vadd.f32 0.0, %v8044
    %v8046 = vpop.f32.mrb[0].mxu0
    %8047 = vmatprep.mubr.bf16.mxu0 0
    %8048 = vmatmul.mubr.bf16.gmra.mrb[0].mxu0 %v3052
    %v8049 = vpop.f32.mrb[0].mxu0
    %v8050 = vadd.f32 0.0, %v8049
    %v8051 = vpop.f32.mrb[0].mxu0
    %v8052 = vpop.f32.mrb[0].mxu0
    %v8053 = vadd.f32 0.0, %v8052
    %v8054 = vpop.f32.mrb[0].mxu0
    %8055 = vmatprep.mubr.bf16.mxu0 0
    %8056 = vmatmul.mubr.bf16.gmra.mrb[0].mxu0 %v3053
    %v8057 = vpop.f32.mrb[0].mxu0
    %v8058 = vadd.f32 0.0, %v8057
    %v8059 = vpop.f32.mrb[0].mxu0
    %v8060 = vpop.f32.mrb[0].mxu0
    %v8061 = vadd.f32 0.0, %v8060
    %v8062 = vpop.f32.mrb[0].mxu0
    %8063 = vmatprep.mubr.bf16.mxu0 0
    %8064 = vmatmul.mubr.bf16.gmra.mrb[0].mxu0 %v3054
    %v8065 = vpop.f32.mrb[0].mxu0
    %v8066 = vadd.f32 0.0, %v8065
    %v8067 = vpop.f32.mrb[0].mxu0
    %v8068 = vpop.f32.mrb[0].mxu0
    %v8069 = vadd.f32 0.0, %v8068
    %v8070 = vpop.f32.mrb[0].mxu0
    %8071 = vmatprep.mubr.bf16.mxu0 0
    %8072 = vmatmul.mubr.bf16.gmra.mrb[0].mxu0 %v3055
    %v8073 = vpop.f32.mrb[0].mxu0
    %v8074 = vadd.f32 0.0, %v8073
    %v8075 = vpop.f32.mrb[0].mxu0
    %v8076 = vpop.f32.mrb[0].mxu0
    %v8077 = vadd.f32 0.0, %v8076
    %v8078 = vpop.f32.mrb[0].mxu0
    %8079 = vmatprep.mubr.bf16.mxu0 0
    %8080 = vmatmul.mubr.bf16.gmra.mrb[0].mxu0 %v3056
    %v8081 = vpop.f32.mrb[0].mxu0
    %v8082 = vadd.f32 0.0, %v8081
    %v8083 = vpop.f32.mrb[0].mxu0
    %v8084 = vpop.f32.mrb[0].mxu0
    %v8085 = vadd.f32 0.0, %v8084
    %v8086 = vpop.f32.mrb[0].mxu0
    %8087 = vmatprep.mubr.bf16.mxu0 0
    %8088 = vmatmul.mubr.bf16.gmra.mrb[0].mxu0 %v3057
    %v8089 = vpop.f32.mrb[0].mxu0
    %v8090 = vadd.f32 0.0, %v8089
    %v8091 = vpop.f32.mrb[0].mxu0
    %v8092 = vpop.f32.mrb[0].mxu0
    %v8093 = vadd.f32 0.0, %v8092
    %v8094 = vpop.f32.mrb[0].mxu0
    %8095 = vmatprep.mubr.bf16.mxu0 0
    %8096 = vmatmul.mubr.bf16.gmra.mrb[0].mxu0 %v3058
    %v8097 = vpop.f32.mrb[0].mxu0
    %v8098 = vadd.f32 0.0, %v8097
    %v8099 = vpop.f32.mrb[0].mxu0
    %v8100 = vpop.f32.mrb[0].mxu0
    %v8101 = vadd.f32 0.0, %v8100
    %v8102 = vpop.f32.mrb[0].mxu0
    %8103 = vmatprep.mubr.bf16.mxu0 0
    %8104 = vmatmul.mubr.bf16.gmra.mrb[0].mxu0 %v3059
    %v8105 = vpop.f32.mrb[0].mxu0
    %v8106 = vadd.f32 0.0, %v8105
    %v8107 = vpop.f32.mrb[0].mxu0
    %v8108 = vpop.f32.mrb[0].mxu0
    %v8109 = vadd.f32 0.0, %v8108
    %v8110 = vpop.f32.mrb[0].mxu0
    %8111 = vmatprep.mubr.bf16.mxu0 0
    %8112 = vmatmul.mubr.bf16.gmra.mrb[0].mxu0 %v3060
    %v8113 = vpop.f32.mrb[0].mxu0
    %v8114 = vadd.f32 0.0, %v8113
    %v8115 = vpop.f32.mrb[0].mxu0
    %v8116 = vpop.f32.mrb[0].mxu0
    %v8117 = vadd.f32 0.0, %v8116
    %v8118 = vpop.f32.mrb[0].mxu0
    %8119 = vdwg.mxu0
    %v8120 = vmul.f32 %v7994, %v8058
    %v8121 = vmul.f32 %v7997, %v8061
    %v8122 = vmul.f32 %v8002, %v8066
    %v8123 = vmul.f32 %v8005, %v8069
    %v8124 = vmul.f32 %v8010, %v8074
    %v8125 = vmul.f32 %v8013, %v8077
    %v8126 = vmul.f32 %v8018, %v8082
    %v8127 = vmul.f32 %v8021, %v8085
    %v8128 = vmul.f32 %v8026, %v8090
    %v8129 = vmul.f32 %v8029, %v8093
    %v8130 = vmul.f32 %v8034, %v8098
    %v8131 = vmul.f32 %v8037, %v8101
    %v8132 = vmul.f32 %v8042, %v8106
    %v8133 = vmul.f32 %v8045, %v8109
    %v8134 = vmul.f32 %v8050, %v8114
    %v8135 = vmul.f32 %v8053, %v8117
    %s8136 = sld [smem:[#allocation2 + $0x18]]
    %s8137 = sld [smem:[#allocation2 + $0x19]]
    %s8138 = sld [smem:[#allocation2 + $0x1a]]
    %v8139 = vpack.c.bf16 %v8121, %v8120
    %v8140 = vpack.c.bf16 %v8123, %v8122
    %v8141 = vpack.c.bf16 %v8125, %v8124
    %v8142 = vpack.c.bf16 %v8127, %v8126
    %v8143 = vpack.c.bf16 %v8129, %v8128
    %v8144 = vpack.c.bf16 %v8131, %v8130
    %v8145 = vpack.c.bf16 %v8133, %v8132
    %v8146 = vpack.c.bf16 %v8135, %v8134
    %v8147 = vld [vmem:[%s127] sm:$0xf]
    %v8148 = vld [vmem:[%s127 + $0x4] sm:$0xf]
    %v8149 = vld [vmem:[%s127 + $0x8] sm:$0xf]
    %v8150 = vld [vmem:[%s127 + $0xc] sm:$0xf]
    %v8151 = vld [vmem:[%s127 + $0x10] sm:$0xf]
    %v8152 = vld [vmem:[%s127 + $0x14] sm:$0xf]
    %v8153 = vld [vmem:[%s127 + $0x18] sm:$0xf]
    %v8154 = vld [vmem:[%s127 + $0x1c] sm:$0xf]
    %v8155 = vld [vmem:[%s127 + $0x20] sm:$0xf]
    %v8156 = vld [vmem:[%s127 + $0x24] sm:$0xf]
    %v8157 = vld [vmem:[%s127 + $0x28] sm:$0xf]
    %v8158 = vld [vmem:[%s127 + $0x2c] sm:$0xf]
    %v8159 = vld [vmem:[%s127 + $0x30] sm:$0xf]
    %v8160 = vld [vmem:[%s127 + $0x34] sm:$0xf]
    %v8161 = vld [vmem:[%s127 + $0x38] sm:$0xf]
    %v8162 = vld [vmem:[%s127 + $0x3c] sm:$0xf]
    %v8163 = vld [vmem:[%s129] sm:$0xf]
    %v8164 = vld [vmem:[%s129 + $0x4] sm:$0xf]
    %v8165 = vld [vmem:[%s129 + $0x8] sm:$0xf]
    %v8166 = vld [vmem:[%s129 + $0xc] sm:$0xf]
    %v8167 = vld [vmem:[%s129 + $0x10] sm:$0xf]
    %v8168 = vld [vmem:[%s129 + $0x14] sm:$0xf]
    %v8169 = vld [vmem:[%s129 + $0x18] sm:$0xf]
    %v8170 = vld [vmem:[%s129 + $0x1c] sm:$0xf]
    %v8171 = vld [vmem:[%s129 + $0x20] sm:$0xf]
    %v8172 = vld [vmem:[%s129 + $0x24] sm:$0xf]
    %v8173 = vld [vmem:[%s129 + $0x28] sm:$0xf]
    %v8174 = vld [vmem:[%s129 + $0x2c] sm:$0xf]
    %v8175 = vld [vmem:[%s129 + $0x30] sm:$0xf]
    %v8176 = vld [vmem:[%s129 + $0x34] sm:$0xf]
    %v8177 = vld [vmem:[%s129 + $0x38] sm:$0xf]
    %v8178 = vld [vmem:[%s129 + $0x3c] sm:$0xf]
    %v8195 = vunpack.c.l.b16 %v8163
    %v8196 = vunpack.c.l.b16 %v8164
    %v8197 = vunpack.c.l.b16 %v8165
    %v8198 = vunpack.c.l.b16 %v8166
    %v8199 = vunpack.c.l.b16 %v8167
    %v8200 = vunpack.c.l.b16 %v8168
    %v8201 = vunpack.c.l.b16 %v8169
    %v8202 = vunpack.c.l.b16 %v8170
    %v8203 = vunpack.c.l.b16 %v8171
    %v8204 = vunpack.c.l.b16 %v8172
    %v8205 = vunpack.c.l.b16 %v8173
    %v8206 = vunpack.c.l.b16 %v8174
    %v8207 = vunpack.c.l.b16 %v8175
    %v8208 = vunpack.c.l.b16 %v8176
    %v8209 = vunpack.c.l.b16 %v8177
    %v8210 = vunpack.c.l.b16 %v8178
    %v8211 = vpack.c.b16 %v8196, %v8195
    %v8212 = vpack.c.b16 %v8198, %v8197
    %v8213 = vpack.c.b16 %v8200, %v8199
    %v8214 = vpack.c.b16 %v8202, %v8201
    %v8215 = vpack.c.b16 %v8204, %v8203
    %v8216 = vpack.c.b16 %v8206, %v8205
    %v8217 = vpack.c.b16 %v8208, %v8207
    %v8218 = vpack.c.b16 %v8210, %v8209
    %8227 = vmatprep.subr.bf16.mxu0 0
    %8228 = vmatpush1.bf16.msra.mxu0 %v8211
    %8229 = vmatprep.subr.bf16.mxu0 0
    %8230 = vmatpush1.bf16.msra.mxu0 %v8212
    %8231 = vmatprep.subr.bf16.mxu0 0
    %8232 = vmatpush1.bf16.msra.mxu0 %v8213
    %8233 = vmatprep.subr.bf16.mxu0 0
    %8234 = vmatpush1.bf16.msra.mxu0 %v8214
    %8235 = vmatprep.subr.bf16.mxu0 0
    %8236 = vmatpush1.bf16.msra.mxu0 %v8215
    %8237 = vmatprep.subr.bf16.mxu0 0
    %8238 = vmatpush1.bf16.msra.mxu0 %v8216
    %8239 = vmatprep.subr.bf16.mxu0 0
    %8240 = vmatpush1.bf16.msra.mxu0 %v8217
    %8241 = vmatprep.subr.bf16.mxu0 0
    %8242 = vmatpush1.bf16.msra.mxu0 %v8218
    %8243 = vmatprep.subr.bf16.mxu0 0
    %8244 = vmatpush1.bf16.msra.mxu0 0
    %8245 = vmatprep.subr.bf16.mxu0 0
    %8246 = vmatpush1.bf16.msra.mxu0 0
    %8247 = vmatprep.subr.bf16.mxu0 0
    %8248 = vmatpush1.bf16.msra.mxu0 0
    %8249 = vmatprep.subr.bf16.mxu0 0
    %8250 = vmatpush1.bf16.msra.mxu0 0
    %8251 = vmatprep.subr.bf16.mxu0 0
    %8252 = vmatpush1.bf16.msra.mxu0 0
    %8253 = vmatprep.subr.bf16.mxu0 0
    %8254 = vmatpush1.bf16.msra.mxu0 0
    %8255 = vmatprep.subr.bf16.mxu0 0
    %8256 = vmatpush1.bf16.msra.mxu0 0
    %8257 = vmatprep.subr.bf16.mxu0 0
    %8258 = vmatpush1.bf16.msra.mxu0 0
    %8259 = vmatprep.mubr.bf16.mxu0 0
    %8260 = vmatmul.mubr.bf16.gmra.mrb[0].mxu0 %v2811
    %v8261 = vpop.f32.mrb[0].mxu0
    %v8262 = vadd.f32 0.0, %v8261
    %v8263 = vpop.f32.mrb[0].mxu0
    %v8264 = vpop.f32.mrb[0].mxu0
    %v8265 = vadd.f32 0.0, %v8264
    %v8266 = vpop.f32.mrb[0].mxu0
    %8267 = vmatprep.mubr.bf16.mxu0 0
    %8268 = vmatmul.mubr.bf16.gmra.mrb[0].mxu0 %v2812
    %v8269 = vpop.f32.mrb[0].mxu0
    %v8270 = vadd.f32 0.0, %v8269
    %v8271 = vpop.f32.mrb[0].mxu0
    %v8272 = vpop.f32.mrb[0].mxu0
    %v8273 = vadd.f32 0.0, %v8272
    %v8274 = vpop.f32.mrb[0].mxu0
    %8275 = vmatprep.mubr.bf16.mxu0 0
    %8276 = vmatmul.mubr.bf16.gmra.mrb[0].mxu0 %v2813
    %v8277 = vpop.f32.mrb[0].mxu0
    %v8278 = vadd.f32 0.0, %v8277
    %v8279 = vpop.f32.mrb[0].mxu0
    %v8280 = vpop.f32.mrb[0].mxu0
    %v8281 = vadd.f32 0.0, %v8280
    %v8282 = vpop.f32.mrb[0].mxu0
    %8283 = vmatprep.mubr.bf16.mxu0 0
    %8284 = vmatmul.mubr.bf16.gmra.mrb[0].mxu0 %v2814
    %v8285 = vpop.f32.mrb[0].mxu0
    %v8286 = vadd.f32 0.0, %v8285
    %v8287 = vpop.f32.mrb[0].mxu0
    %v8288 = vpop.f32.mrb[0].mxu0
    %v8289 = vadd.f32 0.0, %v8288
    %v8290 = vpop.f32.mrb[0].mxu0
    %8291 = vmatprep.mubr.bf16.mxu0 0
    %8292 = vmatmul.mubr.bf16.gmra.mrb[0].mxu0 %v2815
    %v8293 = vpop.f32.mrb[0].mxu0
    %v8294 = vadd.f32 0.0, %v8293
    %v8295 = vpop.f32.mrb[0].mxu0
    %v8296 = vpop.f32.mrb[0].mxu0
    %v8297 = vadd.f32 0.0, %v8296
    %v8298 = vpop.f32.mrb[0].mxu0
    %8299 = vmatprep.mubr.bf16.mxu0 0
    %8300 = vmatmul.mubr.bf16.gmra.mrb[0].mxu0 %v2816
    %v8301 = vpop.f32.mrb[0].mxu0
    %v8302 = vadd.f32 0.0, %v8301
    %v8303 = vpop.f32.mrb[0].mxu0
    %v8304 = vpop.f32.mrb[0].mxu0
    %v8305 = vadd.f32 0.0, %v8304
    %v8306 = vpop.f32.mrb[0].mxu0
    %8307 = vmatprep.mubr.bf16.mxu0 0
    %8308 = vmatmul.mubr.bf16.gmra.mrb[0].mxu0 %v2817
    %v8309 = vpop.f32.mrb[0].mxu0
    %v8310 = vadd.f32 0.0, %v8309
    %v8311 = vpop.f32.mrb[0].mxu0
    %v8312 = vpop.f32.mrb[0].mxu0
    %v8313 = vadd.f32 0.0, %v8312
    %v8314 = vpop.f32.mrb[0].mxu0
    %8315 = vmatprep.mubr.bf16.mxu0 0
    %8316 = vmatmul.mubr.bf16.gmra.mrb[0].mxu0 %v2818
    %v8317 = vpop.f32.mrb[0].mxu0
    %v8318 = vadd.f32 0.0, %v8317
    %v8319 = vpop.f32.mrb[0].mxu0
    %v8320 = vpop.f32.mrb[0].mxu0
    %v8321 = vadd.f32 0.0, %v8320
    %v8322 = vpop.f32.mrb[0].mxu0
    %8323 = vdwg.mxu0
    %v8340 = vunpack.c.l.b16 %v8147
    %v8341 = vunpack.c.l.b16 %v8148
    %v8342 = vunpack.c.l.b16 %v8149
    %v8343 = vunpack.c.l.b16 %v8150
    %v8344 = vunpack.c.l.b16 %v8151
    %v8345 = vunpack.c.l.b16 %v8152
    %v8346 = vunpack.c.l.b16 %v8153
    %v8347 = vunpack.c.l.b16 %v8154
    %v8348 = vunpack.c.l.b16 %v8155
    %v8349 = vunpack.c.l.b16 %v8156
    %v8350 = vunpack.c.l.b16 %v8157
    %v8351 = vunpack.c.l.b16 %v8158
    %v8352 = vunpack.c.l.b16 %v8159
    %v8353 = vunpack.c.l.b16 %v8160
    %v8354 = vunpack.c.l.b16 %v8161
    %v8355 = vunpack.c.l.b16 %v8162
    %v8356 = vpack.c.b16 %v8341, %v8340
    %v8357 = vpack.c.b16 %v8343, %v8342
    %v8358 = vpack.c.b16 %v8345, %v8344
    %v8359 = vpack.c.b16 %v8347, %v8346
    %v8360 = vpack.c.b16 %v8349, %v8348
    %v8361 = vpack.c.b16 %v8351, %v8350
    %v8362 = vpack.c.b16 %v8353, %v8352
    %v8363 = vpack.c.b16 %v8355, %v8354
    %8372 = vmatprep.subr.bf16.mxu0 0
    %8373 = vmatpush1.bf16.msra.mxu0 %v8356
    %8374 = vmatprep.subr.bf16.mxu0 0
    %8375 = vmatpush1.bf16.msra.mxu0 %v8357
    %8376 = vmatprep.subr.bf16.mxu0 0
    %8377 = vmatpush1.bf16.msra.mxu0 %v8358
    %8378 = vmatprep.subr.bf16.mxu0 0
    %8379 = vmatpush1.bf16.msra.mxu0 %v8359
    %8380 = vmatprep.subr.bf16.mxu0 0
    %8381 = vmatpush1.bf16.msra.mxu0 %v8360
    %8382 = vmatprep.subr.bf16.mxu0 0
    %8383 = vmatpush1.bf16.msra.mxu0 %v8361
    %8384 = vmatprep.subr.bf16.mxu0 0
    %8385 = vmatpush1.bf16.msra.mxu0 %v8362
    %8386 = vmatprep.subr.bf16.mxu0 0
    %8387 = vmatpush1.bf16.msra.mxu0 %v8363
    %8388 = vmatprep.subr.bf16.mxu0 0
    %8389 = vmatpush1.bf16.msra.mxu0 0
    %8390 = vmatprep.subr.bf16.mxu0 0
    %8391 = vmatpush1.bf16.msra.mxu0 0
    %8392 = vmatprep.subr.bf16.mxu0 0
    %8393 = vmatpush1.bf16.msra.mxu0 0
    %8394 = vmatprep.subr.bf16.mxu0 0
    %8395 = vmatpush1.bf16.msra.mxu0 0
    %8396 = vmatprep.subr.bf16.mxu0 0
    %8397 = vmatpush1.bf16.msra.mxu0 0
    %8398 = vmatprep.subr.bf16.mxu0 0
    %8399 = vmatpush1.bf16.msra.mxu0 0
    %8400 = vmatprep.subr.bf16.mxu0 0
    %8401 = vmatpush1.bf16.msra.mxu0 0
    %8402 = vmatprep.subr.bf16.mxu0 0
    %8403 = vmatpush1.bf16.msra.mxu0 0
    %8404 = vmatprep.mubr.bf16.mxu0 0
    %8405 = vmatmul.mubr.bf16.gmra.mrb[0].mxu0 %v8139
    %v8406 = vpop.f32.mrb[0].mxu0
    %v8407 = vadd.f32 %v8262, %v8406
    %v8408 = vpop.f32.mrb[0].mxu0
    %v8409 = vpop.f32.mrb[0].mxu0
    %v8410 = vadd.f32 %v8265, %v8409
    %v8411 = vpop.f32.mrb[0].mxu0
    %8412 = vmatprep.mubr.bf16.mxu0 0
    %8413 = vmatmul.mubr.bf16.gmra.mrb[0].mxu0 %v8140
    %v8414 = vpop.f32.mrb[0].mxu0
    %v8415 = vadd.f32 %v8270, %v8414
    %v8416 = vpop.f32.mrb[0].mxu0
    %v8417 = vpop.f32.mrb[0].mxu0
    %v8418 = vadd.f32 %v8273, %v8417
    %v8419 = vpop.f32.mrb[0].mxu0
    %8420 = vmatprep.mubr.bf16.mxu0 0
    %8421 = vmatmul.mubr.bf16.gmra.mrb[0].mxu0 %v8141
    %v8422 = vpop.f32.mrb[0].mxu0
    %v8423 = vadd.f32 %v8278, %v8422
    %v8424 = vpop.f32.mrb[0].mxu0
    %v8425 = vpop.f32.mrb[0].mxu0
    %v8426 = vadd.f32 %v8281, %v8425
    %v8427 = vpop.f32.mrb[0].mxu0
    %8428 = vmatprep.mubr.bf16.mxu0 0
    %8429 = vmatmul.mubr.bf16.gmra.mrb[0].mxu0 %v8142
    %v8430 = vpop.f32.mrb[0].mxu0
    %v8431 = vadd.f32 %v8286, %v8430
    %v8432 = vpop.f32.mrb[0].mxu0
    %v8433 = vpop.f32.mrb[0].mxu0
    %v8434 = vadd.f32 %v8289, %v8433
    %v8435 = vpop.f32.mrb[0].mxu0
    %8436 = vmatprep.mubr.bf16.mxu0 0
    %8437 = vmatmul.mubr.bf16.gmra.mrb[0].mxu0 %v8143
    %v8438 = vpop.f32.mrb[0].mxu0
    %v8439 = vadd.f32 %v8294, %v8438
    %v8440 = vpop.f32.mrb[0].mxu0
    %v8441 = vpop.f32.mrb[0].mxu0
    %v8442 = vadd.f32 %v8297, %v8441
    %v8443 = vpop.f32.mrb[0].mxu0
    %8444 = vmatprep.mubr.bf16.mxu0 0
    %8445 = vmatmul.mubr.bf16.gmra.mrb[0].mxu0 %v8144
    %v8446 = vpop.f32.mrb[0].mxu0
    %v8447 = vadd.f32 %v8302, %v8446
    %v8448 = vpop.f32.mrb[0].mxu0
    %v8449 = vpop.f32.mrb[0].mxu0
    %v8450 = vadd.f32 %v8305, %v8449
    %v8451 = vpop.f32.mrb[0].mxu0
    %8452 = vmatprep.mubr.bf16.mxu0 0
    %8453 = vmatmul.mubr.bf16.gmra.mrb[0].mxu0 %v8145
    %v8454 = vpop.f32.mrb[0].mxu0
    %v8455 = vadd.f32 %v8310, %v8454
    %v8456 = vpop.f32.mrb[0].mxu0
    %v8457 = vpop.f32.mrb[0].mxu0
    %v8458 = vadd.f32 %v8313, %v8457
    %v8459 = vpop.f32.mrb[0].mxu0
    %8460 = vmatprep.mubr.bf16.mxu0 0
    %8461 = vmatmul.mubr.bf16.gmra.mrb[0].mxu0 %v8146
    %v8462 = vpop.f32.mrb[0].mxu0
    %v8463 = vadd.f32 %v8318, %v8462
    %v8464 = vpop.f32.mrb[0].mxu0
    %v8465 = vpop.f32.mrb[0].mxu0
    %v8466 = vadd.f32 %v8321, %v8465
    %v8467 = vpop.f32.mrb[0].mxu0
    %8468 = vdwg.mxu0
    %v8469 = vld [vmem:[%s131] sm:$0x1]
    %v8471 = vlaneseq
    %v8472 = vshrl.u32 %v8471, 7
    %v8473 = vsub.s32 0, %v8472
    %v8474 = vrot.slane %v8469, %v8473
    %v8476 = vadd.f32 %v8407, %v8474
    %v8477 = vadd.f32 %v8410, %v8474
    %v8478 = vadd.f32 %v8415, %v8474
    %v8479 = vadd.f32 %v8418, %v8474
    %v8480 = vadd.f32 %v8423, %v8474
    %v8481 = vadd.f32 %v8426, %v8474
    %v8482 = vadd.f32 %v8431, %v8474
    %v8483 = vadd.f32 %v8434, %v8474
    %v8484 = vadd.f32 %v8439, %v8474
    %v8485 = vadd.f32 %v8442, %v8474
    %v8486 = vadd.f32 %v8447, %v8474
    %v8487 = vadd.f32 %v8450, %v8474
    %v8488 = vadd.f32 %v8455, %v8474
    %v8489 = vadd.f32 %v8458, %v8474
    %v8490 = vadd.f32 %v8463, %v8474
    %v8491 = vadd.f32 %v8466, %v8474
    %vm8492 = vcmp.ge.f32.partialorder %v8476, 0.0
    %vm8493 = vcmp.ge.f32.partialorder %v8477, 0.0
    %vm8494 = vcmp.ge.f32.partialorder %v8478, 0.0
    %vm8495 = vcmp.ge.f32.partialorder %v8479, 0.0
    %vm8496 = vcmp.ge.f32.partialorder %v8480, 0.0
    %vm8497 = vcmp.ge.f32.partialorder %v8481, 0.0
    %vm8498 = vcmp.ge.f32.partialorder %v8482, 0.0
    %vm8499 = vcmp.ge.f32.partialorder %v8483, 0.0
    %vm8500 = vcmp.ge.f32.partialorder %v8484, 0.0
    %vm8501 = vcmp.ge.f32.partialorder %v8485, 0.0
    %vm8502 = vcmp.ge.f32.partialorder %v8486, 0.0
    %vm8503 = vcmp.ge.f32.partialorder %v8487, 0.0
    %vm8504 = vcmp.ge.f32.partialorder %v8488, 0.0
    %vm8505 = vcmp.ge.f32.partialorder %v8489, 0.0
    %vm8506 = vcmp.ge.f32.partialorder %v8490, 0.0
    %vm8507 = vcmp.ge.f32.partialorder %v8491, 0.0
    %v8508 = vstv %s8136
    %v8509 = vmul.f32 %v8508, %v8476
    %v8510 = vmul.f32 %v8508, %v8477
    %v8511 = vmul.f32 %v8508, %v8478
    %v8512 = vmul.f32 %v8508, %v8479
    %v8513 = vmul.f32 %v8508, %v8480
    %v8514 = vmul.f32 %v8508, %v8481
    %v8515 = vmul.f32 %v8508, %v8482
    %v8516 = vmul.f32 %v8508, %v8483
    %v8517 = vmul.f32 %v8508, %v8484
    %v8518 = vmul.f32 %v8508, %v8485
    %v8519 = vmul.f32 %v8508, %v8486
    %v8520 = vmul.f32 %v8508, %v8487
    %v8521 = vmul.f32 %v8508, %v8488
    %v8522 = vmul.f32 %v8508, %v8489
    %v8523 = vmul.f32 %v8508, %v8490
    %v8524 = vmul.f32 %v8508, %v8491
    %v8525 = vsel %vm8492, %v8476, %v8509
    %v8526 = vsel %vm8493, %v8477, %v8510
    %v8527 = vsel %vm8494, %v8478, %v8511
    %v8528 = vsel %vm8495, %v8479, %v8512
    %v8529 = vsel %vm8496, %v8480, %v8513
    %v8530 = vsel %vm8497, %v8481, %v8514
    %v8531 = vsel %vm8498, %v8482, %v8515
    %v8532 = vsel %vm8499, %v8483, %v8516
    %v8533 = vsel %vm8500, %v8484, %v8517
    %v8534 = vsel %vm8501, %v8485, %v8518
    %v8535 = vsel %vm8502, %v8486, %v8519
    %v8536 = vsel %vm8503, %v8487, %v8520
    %v8537 = vsel %vm8504, %v8488, %v8521
    %v8538 = vsel %vm8505, %v8489, %v8522
    %v8539 = vsel %vm8506, %v8490, %v8523
    %v8540 = vsel %vm8507, %v8491, %v8524
    %v8541 = vpack.c.bf16 %v8526, %v8525
    %v8542 = vpack.c.bf16 %v8528, %v8527
    %v8543 = vpack.c.bf16 %v8530, %v8529
    %v8544 = vpack.c.bf16 %v8532, %v8531
    %v8545 = vpack.c.bf16 %v8534, %v8533
    %v8546 = vpack.c.bf16 %v8536, %v8535
    %v8547 = vpack.c.bf16 %v8538, %v8537
    %v8548 = vpack.c.bf16 %v8540, %v8539
    %v8549 = vld [vmem:[%s133] sm:$0xf]
    %v8550 = vld [vmem:[%s133 + $0x4] sm:$0xf]
    %v8551 = vld [vmem:[%s133 + $0x8] sm:$0xf]
    %v8552 = vld [vmem:[%s133 + $0xc] sm:$0xf]
    %v8553 = vld [vmem:[%s133 + $0x10] sm:$0xf]
    %v8554 = vld [vmem:[%s133 + $0x14] sm:$0xf]
    %v8555 = vld [vmem:[%s133 + $0x18] sm:$0xf]
    %v8556 = vld [vmem:[%s133 + $0x1c] sm:$0xf]
    %v8557 = vld [vmem:[%s133 + $0x20] sm:$0xf]
    %v8558 = vld [vmem:[%s133 + $0x24] sm:$0xf]
    %v8559 = vld [vmem:[%s133 + $0x28] sm:$0xf]
    %v8560 = vld [vmem:[%s133 + $0x2c] sm:$0xf]
    %v8561 = vld [vmem:[%s133 + $0x30] sm:$0xf]
    %v8562 = vld [vmem:[%s133 + $0x34] sm:$0xf]
    %v8563 = vld [vmem:[%s133 + $0x38] sm:$0xf]
    %v8564 = vld [vmem:[%s133 + $0x3c] sm:$0xf]
    %v8581 = vunpack.c.l.b16 %v8549
    %v8582 = vunpack.c.l.b16 %v8550
    %v8583 = vunpack.c.l.b16 %v8551
    %v8584 = vunpack.c.l.b16 %v8552
    %v8585 = vunpack.c.l.b16 %v8553
    %v8586 = vunpack.c.l.b16 %v8554
    %v8587 = vunpack.c.l.b16 %v8555
    %v8588 = vunpack.c.l.b16 %v8556
    %v8589 = vunpack.c.l.b16 %v8557
    %v8590 = vunpack.c.l.b16 %v8558
    %v8591 = vunpack.c.l.b16 %v8559
    %v8592 = vunpack.c.l.b16 %v8560
    %v8593 = vunpack.c.l.b16 %v8561
    %v8594 = vunpack.c.l.b16 %v8562
    %v8595 = vunpack.c.l.b16 %v8563
    %v8596 = vunpack.c.l.b16 %v8564
    %v8597 = vpack.c.b16 %v8582, %v8581
    %v8598 = vpack.c.b16 %v8584, %v8583
    %v8599 = vpack.c.b16 %v8586, %v8585
    %v8600 = vpack.c.b16 %v8588, %v8587
    %v8601 = vpack.c.b16 %v8590, %v8589
    %v8602 = vpack.c.b16 %v8592, %v8591
    %v8603 = vpack.c.b16 %v8594, %v8593
    %v8604 = vpack.c.b16 %v8596, %v8595
    %8613 = vmatprep.subr.bf16.mxu0 0
    %8614 = vmatpush1.bf16.msra.mxu0 %v8597
    %8615 = vmatprep.subr.bf16.mxu0 0
    %8616 = vmatpush1.bf16.msra.mxu0 %v8598
    %8617 = vmatprep.subr.bf16.mxu0 0
    %8618 = vmatpush1.bf16.msra.mxu0 %v8599
    %8619 = vmatprep.subr.bf16.mxu0 0
    %8620 = vmatpush1.bf16.msra.mxu0 %v8600
    %8621 = vmatprep.subr.bf16.mxu0 0
    %8622 = vmatpush1.bf16.msra.mxu0 %v8601
    %8623 = vmatprep.subr.bf16.mxu0 0
    %8624 = vmatpush1.bf16.msra.mxu0 %v8602
    %8625 = vmatprep.subr.bf16.mxu0 0
    %8626 = vmatpush1.bf16.msra.mxu0 %v8603
    %8627 = vmatprep.subr.bf16.mxu0 0
    %8628 = vmatpush1.bf16.msra.mxu0 %v8604
    %8629 = vmatprep.subr.bf16.mxu0 0
    %8630 = vmatpush1.bf16.msra.mxu0 0
    %8631 = vmatprep.subr.bf16.mxu0 0
    %8632 = vmatpush1.bf16.msra.mxu0 0
    %8633 = vmatprep.subr.bf16.mxu0 0
    %8634 = vmatpush1.bf16.msra.mxu0 0
    %8635 = vmatprep.subr.bf16.mxu0 0
    %8636 = vmatpush1.bf16.msra.mxu0 0
    %8637 = vmatprep.subr.bf16.mxu0 0
    %8638 = vmatpush1.bf16.msra.mxu0 0
    %8639 = vmatprep.subr.bf16.mxu0 0
    %8640 = vmatpush1.bf16.msra.mxu0 0
    %8641 = vmatprep.subr.bf16.mxu0 0
    %8642 = vmatpush1.bf16.msra.mxu0 0
    %8643 = vmatprep.subr.bf16.mxu0 0
    %8644 = vmatpush1.bf16.msra.mxu0 0
    %8645 = vmatprep.mubr.bf16.mxu0 0
    %8646 = vmatmul.mubr.bf16.gmra.mrb[0].mxu0 %v8541
    %v8647 = vpop.f32.mrb[0].mxu0
    %v8648 = vadd.f32 0.0, %v8647
    %v8649 = vpop.f32.mrb[0].mxu0
    %v8650 = vpop.f32.mrb[0].mxu0
    %v8651 = vadd.f32 0.0, %v8650
    %v8652 = vpop.f32.mrb[0].mxu0
    %8653 = vmatprep.mubr.bf16.mxu0 0
    %8654 = vmatmul.mubr.bf16.gmra.mrb[0].mxu0 %v8542
    %v8655 = vpop.f32.mrb[0].mxu0
    %v8656 = vadd.f32 0.0, %v8655
    %v8657 = vpop.f32.mrb[0].mxu0
    %v8658 = vpop.f32.mrb[0].mxu0
    %v8659 = vadd.f32 0.0, %v8658
    %v8660 = vpop.f32.mrb[0].mxu0
    %8661 = vmatprep.mubr.bf16.mxu0 0
    %8662 = vmatmul.mubr.bf16.gmra.mrb[0].mxu0 %v8543
    %v8663 = vpop.f32.mrb[0].mxu0
    %v8664 = vadd.f32 0.0, %v8663
    %v8665 = vpop.f32.mrb[0].mxu0
    %v8666 = vpop.f32.mrb[0].mxu0
    %v8667 = vadd.f32 0.0, %v8666
    %v8668 = vpop.f32.mrb[0].mxu0
    %8669 = vmatprep.mubr.bf16.mxu0 0
    %8670 = vmatmul.mubr.bf16.gmra.mrb[0].mxu0 %v8544
    %v8671 = vpop.f32.mrb[0].mxu0
    %v8672 = vadd.f32 0.0, %v8671
    %v8673 = vpop.f32.mrb[0].mxu0
    %v8674 = vpop.f32.mrb[0].mxu0
    %v8675 = vadd.f32 0.0, %v8674
    %v8676 = vpop.f32.mrb[0].mxu0
    %8677 = vmatprep.mubr.bf16.mxu0 0
    %8678 = vmatmul.mubr.bf16.gmra.mrb[0].mxu0 %v8545
    %v8679 = vpop.f32.mrb[0].mxu0
    %v8680 = vadd.f32 0.0, %v8679
    %v8681 = vpop.f32.mrb[0].mxu0
    %v8682 = vpop.f32.mrb[0].mxu0
    %v8683 = vadd.f32 0.0, %v8682
    %v8684 = vpop.f32.mrb[0].mxu0
    %8685 = vmatprep.mubr.bf16.mxu0 0
    %8686 = vmatmul.mubr.bf16.gmra.mrb[0].mxu0 %v8546
    %v8687 = vpop.f32.mrb[0].mxu0
    %v8688 = vadd.f32 0.0, %v8687
    %v8689 = vpop.f32.mrb[0].mxu0
    %v8690 = vpop.f32.mrb[0].mxu0
    %v8691 = vadd.f32 0.0, %v8690
    %v8692 = vpop.f32.mrb[0].mxu0
    %8693 = vmatprep.mubr.bf16.mxu0 0
    %8694 = vmatmul.mubr.bf16.gmra.mrb[0].mxu0 %v8547
    %v8695 = vpop.f32.mrb[0].mxu0
    %v8696 = vadd.f32 0.0, %v8695
    %v8697 = vpop.f32.mrb[0].mxu0
    %v8698 = vpop.f32.mrb[0].mxu0
    %v8699 = vadd.f32 0.0, %v8698
    %v8700 = vpop.f32.mrb[0].mxu0
    %8701 = vmatprep.mubr.bf16.mxu0 0
    %8702 = vmatmul.mubr.bf16.gmra.mrb[0].mxu0 %v8548
    %v8703 = vpop.f32.mrb[0].mxu0
    %v8704 = vadd.f32 0.0, %v8703
    %v8705 = vpop.f32.mrb[0].mxu0
    %v8706 = vpop.f32.mrb[0].mxu0
    %v8707 = vadd.f32 0.0, %v8706
    %v8708 = vpop.f32.mrb[0].mxu0
    %8709 = vdwg.mxu0
    %vm8710 = vcmp.ge.f32.partialorder %v8648, 0.0
    %vm8711 = vcmp.ge.f32.partialorder %v8651, 0.0
    %vm8712 = vcmp.ge.f32.partialorder %v8656, 0.0
    %vm8713 = vcmp.ge.f32.partialorder %v8659, 0.0
    %vm8714 = vcmp.ge.f32.partialorder %v8664, 0.0
    %vm8715 = vcmp.ge.f32.partialorder %v8667, 0.0
    %vm8716 = vcmp.ge.f32.partialorder %v8672, 0.0
    %vm8717 = vcmp.ge.f32.partialorder %v8675, 0.0
    %vm8718 = vcmp.ge.f32.partialorder %v8680, 0.0
    %vm8719 = vcmp.ge.f32.partialorder %v8683, 0.0
    %vm8720 = vcmp.ge.f32.partialorder %v8688, 0.0
    %vm8721 = vcmp.ge.f32.partialorder %v8691, 0.0
    %vm8722 = vcmp.ge.f32.partialorder %v8696, 0.0
    %vm8723 = vcmp.ge.f32.partialorder %v8699, 0.0
    %vm8724 = vcmp.ge.f32.partialorder %v8704, 0.0
    %vm8725 = vcmp.ge.f32.partialorder %v8707, 0.0
    %v8726 = vstv %s8137
    %v8727 = vmul.f32 %v8726, %v8648
    %v8728 = vmul.f32 %v8726, %v8651
    %v8729 = vmul.f32 %v8726, %v8656
    %v8730 = vmul.f32 %v8726, %v8659
    %v8731 = vmul.f32 %v8726, %v8664
    %v8732 = vmul.f32 %v8726, %v8667
    %v8733 = vmul.f32 %v8726, %v8672
    %v8734 = vmul.f32 %v8726, %v8675
    %v8735 = vmul.f32 %v8726, %v8680
    %v8736 = vmul.f32 %v8726, %v8683
    %v8737 = vmul.f32 %v8726, %v8688
    %v8738 = vmul.f32 %v8726, %v8691
    %v8739 = vmul.f32 %v8726, %v8696
    %v8740 = vmul.f32 %v8726, %v8699
    %v8741 = vmul.f32 %v8726, %v8704
    %v8742 = vmul.f32 %v8726, %v8707
    %v8743 = vsel %vm8710, %v8648, %v8727
    %v8744 = vsel %vm8711, %v8651, %v8728
    %v8745 = vsel %vm8712, %v8656, %v8729
    %v8746 = vsel %vm8713, %v8659, %v8730
    %v8747 = vsel %vm8714, %v8664, %v8731
    %v8748 = vsel %vm8715, %v8667, %v8732
    %v8749 = vsel %vm8716, %v8672, %v8733
    %v8750 = vsel %vm8717, %v8675, %v8734
    %v8751 = vsel %vm8718, %v8680, %v8735
    %v8752 = vsel %vm8719, %v8683, %v8736
    %v8753 = vsel %vm8720, %v8688, %v8737
    %v8754 = vsel %vm8721, %v8691, %v8738
    %v8755 = vsel %vm8722, %v8696, %v8739
    %v8756 = vsel %vm8723, %v8699, %v8740
    %v8757 = vsel %vm8724, %v8704, %v8741
    %v8758 = vsel %vm8725, %v8707, %v8742
    %v8759 = vpack.c.bf16 %v8744, %v8743
    %v8760 = vpack.c.bf16 %v8746, %v8745
    %v8761 = vpack.c.bf16 %v8748, %v8747
    %v8762 = vpack.c.bf16 %v8750, %v8749
    %v8763 = vpack.c.bf16 %v8752, %v8751
    %v8764 = vpack.c.bf16 %v8754, %v8753
    %v8765 = vpack.c.bf16 %v8756, %v8755
    %v8766 = vpack.c.bf16 %v8758, %v8757
    %v8767 = vld [vmem:[%s135] sm:$0xf]
    %v8768 = vld [vmem:[%s135 + $0x4] sm:$0xf]
    %v8769 = vld [vmem:[%s135 + $0x8] sm:$0xf]
    %v8770 = vld [vmem:[%s135 + $0xc] sm:$0xf]
    %v8771 = vld [vmem:[%s135 + $0x10] sm:$0xf]
    %v8772 = vld [vmem:[%s135 + $0x14] sm:$0xf]
    %v8773 = vld [vmem:[%s135 + $0x18] sm:$0xf]
    %v8774 = vld [vmem:[%s135 + $0x1c] sm:$0xf]
    %v8775 = vld [vmem:[%s135 + $0x20] sm:$0xf]
    %v8776 = vld [vmem:[%s135 + $0x24] sm:$0xf]
    %v8777 = vld [vmem:[%s135 + $0x28] sm:$0xf]
    %v8778 = vld [vmem:[%s135 + $0x2c] sm:$0xf]
    %v8779 = vld [vmem:[%s135 + $0x30] sm:$0xf]
    %v8780 = vld [vmem:[%s135 + $0x34] sm:$0xf]
    %v8781 = vld [vmem:[%s135 + $0x38] sm:$0xf]
    %v8782 = vld [vmem:[%s135 + $0x3c] sm:$0xf]
    %v8799 = vunpack.c.l.b16 %v8767
    %v8800 = vunpack.c.l.b16 %v8768
    %v8801 = vunpack.c.l.b16 %v8769
    %v8802 = vunpack.c.l.b16 %v8770
    %v8803 = vunpack.c.l.b16 %v8771
    %v8804 = vunpack.c.l.b16 %v8772
    %v8805 = vunpack.c.l.b16 %v8773
    %v8806 = vunpack.c.l.b16 %v8774
    %v8807 = vunpack.c.l.b16 %v8775
    %v8808 = vunpack.c.l.b16 %v8776
    %v8809 = vunpack.c.l.b16 %v8777
    %v8810 = vunpack.c.l.b16 %v8778
    %v8811 = vunpack.c.l.b16 %v8779
    %v8812 = vunpack.c.l.b16 %v8780
    %v8813 = vunpack.c.l.b16 %v8781
    %v8814 = vunpack.c.l.b16 %v8782
    %v8815 = vpack.c.b16 %v8800, %v8799
    %v8816 = vpack.c.b16 %v8802, %v8801
    %v8817 = vpack.c.b16 %v8804, %v8803
    %v8818 = vpack.c.b16 %v8806, %v8805
    %v8819 = vpack.c.b16 %v8808, %v8807
    %v8820 = vpack.c.b16 %v8810, %v8809
    %v8821 = vpack.c.b16 %v8812, %v8811
    %v8822 = vpack.c.b16 %v8814, %v8813
    %8831 = vmatprep.subr.bf16.mxu0 0
    %8832 = vmatpush1.bf16.msra.mxu0 %v8815
    %8833 = vmatprep.subr.bf16.mxu0 0
    %8834 = vmatpush1.bf16.msra.mxu0 %v8816
    %8835 = vmatprep.subr.bf16.mxu0 0
    %8836 = vmatpush1.bf16.msra.mxu0 %v8817
    %8837 = vmatprep.subr.bf16.mxu0 0
    %8838 = vmatpush1.bf16.msra.mxu0 %v8818
    %8839 = vmatprep.subr.bf16.mxu0 0
    %8840 = vmatpush1.bf16.msra.mxu0 %v8819
    %8841 = vmatprep.subr.bf16.mxu0 0
    %8842 = vmatpush1.bf16.msra.mxu0 %v8820
    %8843 = vmatprep.subr.bf16.mxu0 0
    %8844 = vmatpush1.bf16.msra.mxu0 %v8821
    %8845 = vmatprep.subr.bf16.mxu0 0
    %8846 = vmatpush1.bf16.msra.mxu0 %v8822
    %8847 = vmatprep.subr.bf16.mxu0 0
    %8848 = vmatpush1.bf16.msra.mxu0 0
    %8849 = vmatprep.subr.bf16.mxu0 0
    %8850 = vmatpush1.bf16.msra.mxu0 0
    %8851 = vmatprep.subr.bf16.mxu0 0
    %8852 = vmatpush1.bf16.msra.mxu0 0
    %8853 = vmatprep.subr.bf16.mxu0 0
    %8854 = vmatpush1.bf16.msra.mxu0 0
    %8855 = vmatprep.subr.bf16.mxu0 0
    %8856 = vmatpush1.bf16.msra.mxu0 0
    %8857 = vmatprep.subr.bf16.mxu0 0
    %8858 = vmatpush1.bf16.msra.mxu0 0
    %8859 = vmatprep.subr.bf16.mxu0 0
    %8860 = vmatpush1.bf16.msra.mxu0 0
    %8861 = vmatprep.subr.bf16.mxu0 0
    %8862 = vmatpush1.bf16.msra.mxu0 0
    %8863 = vmatprep.mubr.bf16.mxu0 0
    %8864 = vmatmul.mubr.bf16.gmra.mrb[0].mxu0 %v8759
    %v8865 = vpop.f32.mrb[0].mxu0
    %v8866 = vadd.f32 0.0, %v8865
    %v8867 = vpop.f32.mrb[0].mxu0
    %v8868 = vpop.f32.mrb[0].mxu0
    %v8869 = vadd.f32 0.0, %v8868
    %v8870 = vpop.f32.mrb[0].mxu0
    %8871 = vmatprep.mubr.bf16.mxu0 0
    %8872 = vmatmul.mubr.bf16.gmra.mrb[0].mxu0 %v8760
    %v8873 = vpop.f32.mrb[0].mxu0
    %v8874 = vadd.f32 0.0, %v8873
    %v8875 = vpop.f32.mrb[0].mxu0
    %v8876 = vpop.f32.mrb[0].mxu0
    %v8877 = vadd.f32 0.0, %v8876
    %v8878 = vpop.f32.mrb[0].mxu0
    %8879 = vmatprep.mubr.bf16.mxu0 0
    %8880 = vmatmul.mubr.bf16.gmra.mrb[0].mxu0 %v8761
    %v8881 = vpop.f32.mrb[0].mxu0
    %v8882 = vadd.f32 0.0, %v8881
    %v8883 = vpop.f32.mrb[0].mxu0
    %v8884 = vpop.f32.mrb[0].mxu0
    %v8885 = vadd.f32 0.0, %v8884
    %v8886 = vpop.f32.mrb[0].mxu0
    %8887 = vmatprep.mubr.bf16.mxu0 0
    %8888 = vmatmul.mubr.bf16.gmra.mrb[0].mxu0 %v8762
    %v8889 = vpop.f32.mrb[0].mxu0
    %v8890 = vadd.f32 0.0, %v8889
    %v8891 = vpop.f32.mrb[0].mxu0
    %v8892 = vpop.f32.mrb[0].mxu0
    %v8893 = vadd.f32 0.0, %v8892
    %v8894 = vpop.f32.mrb[0].mxu0
    %8895 = vmatprep.mubr.bf16.mxu0 0
    %8896 = vmatmul.mubr.bf16.gmra.mrb[0].mxu0 %v8763
    %v8897 = vpop.f32.mrb[0].mxu0
    %v8898 = vadd.f32 0.0, %v8897
    %v8899 = vpop.f32.mrb[0].mxu0
    %v8900 = vpop.f32.mrb[0].mxu0
    %v8901 = vadd.f32 0.0, %v8900
    %v8902 = vpop.f32.mrb[0].mxu0
    %8903 = vmatprep.mubr.bf16.mxu0 0
    %8904 = vmatmul.mubr.bf16.gmra.mrb[0].mxu0 %v8764
    %v8905 = vpop.f32.mrb[0].mxu0
    %v8906 = vadd.f32 0.0, %v8905
    %v8907 = vpop.f32.mrb[0].mxu0
    %v8908 = vpop.f32.mrb[0].mxu0
    %v8909 = vadd.f32 0.0, %v8908
    %v8910 = vpop.f32.mrb[0].mxu0
    %8911 = vmatprep.mubr.bf16.mxu0 0
    %8912 = vmatmul.mubr.bf16.gmra.mrb[0].mxu0 %v8765
    %v8913 = vpop.f32.mrb[0].mxu0
    %v8914 = vadd.f32 0.0, %v8913
    %v8915 = vpop.f32.mrb[0].mxu0
    %v8916 = vpop.f32.mrb[0].mxu0
    %v8917 = vadd.f32 0.0, %v8916
    %v8918 = vpop.f32.mrb[0].mxu0
    %8919 = vmatprep.mubr.bf16.mxu0 0
    %8920 = vmatmul.mubr.bf16.gmra.mrb[0].mxu0 %v8766
    %v8921 = vpop.f32.mrb[0].mxu0
    %v8922 = vadd.f32 0.0, %v8921
    %v8923 = vpop.f32.mrb[0].mxu0
    %v8924 = vpop.f32.mrb[0].mxu0
    %v8925 = vadd.f32 0.0, %v8924
    %v8926 = vpop.f32.mrb[0].mxu0
    %8927 = vdwg.mxu0
    %vm8928 = vcmp.ge.f32.partialorder %v8866, 0.0
    %vm8929 = vcmp.ge.f32.partialorder %v8869, 0.0
    %vm8930 = vcmp.ge.f32.partialorder %v8874, 0.0
    %vm8931 = vcmp.ge.f32.partialorder %v8877, 0.0
    %vm8932 = vcmp.ge.f32.partialorder %v8882, 0.0
    %vm8933 = vcmp.ge.f32.partialorder %v8885, 0.0
    %vm8934 = vcmp.ge.f32.partialorder %v8890, 0.0
    %vm8935 = vcmp.ge.f32.partialorder %v8893, 0.0
    %vm8936 = vcmp.ge.f32.partialorder %v8898, 0.0
    %vm8937 = vcmp.ge.f32.partialorder %v8901, 0.0
    %vm8938 = vcmp.ge.f32.partialorder %v8906, 0.0
    %vm8939 = vcmp.ge.f32.partialorder %v8909, 0.0
    %vm8940 = vcmp.ge.f32.partialorder %v8914, 0.0
    %vm8941 = vcmp.ge.f32.partialorder %v8917, 0.0
    %vm8942 = vcmp.ge.f32.partialorder %v8922, 0.0
    %vm8943 = vcmp.ge.f32.partialorder %v8925, 0.0
    %v8944 = vstv %s8138
    %v8945 = vmul.f32 %v8944, %v8866
    %v8946 = vmul.f32 %v8944, %v8869
    %v8947 = vmul.f32 %v8944, %v8874
    %v8948 = vmul.f32 %v8944, %v8877
    %v8949 = vmul.f32 %v8944, %v8882
    %v8950 = vmul.f32 %v8944, %v8885
    %v8951 = vmul.f32 %v8944, %v8890
    %v8952 = vmul.f32 %v8944, %v8893
    %v8953 = vmul.f32 %v8944, %v8898
    %v8954 = vmul.f32 %v8944, %v8901
    %v8955 = vmul.f32 %v8944, %v8906
    %v8956 = vmul.f32 %v8944, %v8909
    %v8957 = vmul.f32 %v8944, %v8914
    %v8958 = vmul.f32 %v8944, %v8917
    %v8959 = vmul.f32 %v8944, %v8922
    %v8960 = vmul.f32 %v8944, %v8925
    %v8961 = vsel %vm8928, %v8866, %v8945
    %v8962 = vsel %vm8929, %v8869, %v8946
    %v8963 = vsel %vm8930, %v8874, %v8947
    %v8964 = vsel %vm8931, %v8877, %v8948
    %v8965 = vsel %vm8932, %v8882, %v8949
    %v8966 = vsel %vm8933, %v8885, %v8950
    %v8967 = vsel %vm8934, %v8890, %v8951
    %v8968 = vsel %vm8935, %v8893, %v8952
    %v8969 = vsel %vm8936, %v8898, %v8953
    %v8970 = vsel %vm8937, %v8901, %v8954
    %v8971 = vsel %vm8938, %v8906, %v8955
    %v8972 = vsel %vm8939, %v8909, %v8956
    %v8973 = vsel %vm8940, %v8914, %v8957
    %v8974 = vsel %vm8941, %v8917, %v8958
    %v8975 = vsel %vm8942, %v8922, %v8959
    %v8976 = vsel %vm8943, %v8925, %v8960
    %v8977 = vpack.c.bf16 %v8962, %v8961
    %v8978 = vpack.c.bf16 %v8964, %v8963
    %v8979 = vpack.c.bf16 %v8966, %v8965
    %v8980 = vpack.c.bf16 %v8968, %v8967
    %v8981 = vpack.c.bf16 %v8970, %v8969
    %v8982 = vpack.c.bf16 %v8972, %v8971
    %v8983 = vpack.c.bf16 %v8974, %v8973
    %v8984 = vpack.c.bf16 %v8976, %v8975
    %v8985 = vld [vmem:[%s137] sm:$0xf]
    %v8986 = vld [vmem:[%s137 + $0x4] sm:$0xf]
    %v8987 = vld [vmem:[%s137 + $0x8] sm:$0xf]
    %v8988 = vld [vmem:[%s137 + $0xc] sm:$0xf]
    %v8989 = vld [vmem:[%s137 + $0x10] sm:$0xf]
    %v8990 = vld [vmem:[%s137 + $0x14] sm:$0xf]
    %v8991 = vld [vmem:[%s137 + $0x18] sm:$0xf]
    %v8992 = vld [vmem:[%s137 + $0x1c] sm:$0xf]
    %v8993 = vld [vmem:[%s137 + $0x20] sm:$0xf]
    %v8994 = vld [vmem:[%s137 + $0x24] sm:$0xf]
    %v8995 = vld [vmem:[%s137 + $0x28] sm:$0xf]
    %v8996 = vld [vmem:[%s137 + $0x2c] sm:$0xf]
    %v8997 = vld [vmem:[%s137 + $0x30] sm:$0xf]
    %v8998 = vld [vmem:[%s137 + $0x34] sm:$0xf]
    %v8999 = vld [vmem:[%s137 + $0x38] sm:$0xf]
    %v9000 = vld [vmem:[%s137 + $0x3c] sm:$0xf]
    %v9001 = vld [vmem:[%s139] sm:$0x1]
    %v9003 = vlaneseq
    %v9004 = vshrl.u32 %v9003, 7
    %v9005 = vsub.s32 0, %v9004
    %v9006 = vrot.slane %v9001, %v9005
    %v9024 = vunpack.c.l.b16 %v8985
    %v9025 = vunpack.c.l.b16 %v8986
    %v9026 = vunpack.c.l.b16 %v8987
    %v9027 = vunpack.c.l.b16 %v8988
    %v9028 = vunpack.c.l.b16 %v8989
    %v9029 = vunpack.c.l.b16 %v8990
    %v9030 = vunpack.c.l.b16 %v8991
    %v9031 = vunpack.c.l.b16 %v8992
    %v9032 = vunpack.c.l.b16 %v8993
    %v9033 = vunpack.c.l.b16 %v8994
    %v9034 = vunpack.c.l.b16 %v8995
    %v9035 = vunpack.c.l.b16 %v8996
    %v9036 = vunpack.c.l.b16 %v8997
    %v9037 = vunpack.c.l.b16 %v8998
    %v9038 = vunpack.c.l.b16 %v8999
    %v9039 = vunpack.c.l.b16 %v9000
    %v9040 = vpack.c.b16 %v9025, %v9024
    %v9041 = vpack.c.b16 %v9027, %v9026
    %v9042 = vpack.c.b16 %v9029, %v9028
    %v9043 = vpack.c.b16 %v9031, %v9030
    %v9044 = vpack.c.b16 %v9033, %v9032
    %v9045 = vpack.c.b16 %v9035, %v9034
    %v9046 = vpack.c.b16 %v9037, %v9036
    %v9047 = vpack.c.b16 %v9039, %v9038
    %9056 = vmatprep.subr.bf16.mxu0 0
    %9057 = vmatpush1.bf16.msra.mxu0 %v9040
    %9058 = vmatprep.subr.bf16.mxu0 0
    %9059 = vmatpush1.bf16.msra.mxu0 %v9041
    %9060 = vmatprep.subr.bf16.mxu0 0
    %9061 = vmatpush1.bf16.msra.mxu0 %v9042
    %9062 = vmatprep.subr.bf16.mxu0 0
    %9063 = vmatpush1.bf16.msra.mxu0 %v9043
    %9064 = vmatprep.subr.bf16.mxu0 0
    %9065 = vmatpush1.bf16.msra.mxu0 %v9044
    %9066 = vmatprep.subr.bf16.mxu0 0
    %9067 = vmatpush1.bf16.msra.mxu0 %v9045
    %9068 = vmatprep.subr.bf16.mxu0 0
    %9069 = vmatpush1.bf16.msra.mxu0 %v9046
    %9070 = vmatprep.subr.bf16.mxu0 0
    %9071 = vmatpush1.bf16.msra.mxu0 %v9047
    %9072 = vmatprep.subr.bf16.mxu0 0
    %9073 = vmatpush1.bf16.msra.mxu0 0
    %9074 = vmatprep.subr.bf16.mxu0 0
    %9075 = vmatpush1.bf16.msra.mxu0 0
    %9076 = vmatprep.subr.bf16.mxu0 0
    %9077 = vmatpush1.bf16.msra.mxu0 0
    %9078 = vmatprep.subr.bf16.mxu0 0
    %9079 = vmatpush1.bf16.msra.mxu0 0
    %9080 = vmatprep.subr.bf16.mxu0 0
    %9081 = vmatpush1.bf16.msra.mxu0 0
    %9082 = vmatprep.subr.bf16.mxu0 0
    %9083 = vmatpush1.bf16.msra.mxu0 0
    %9084 = vmatprep.subr.bf16.mxu0 0
    %9085 = vmatpush1.bf16.msra.mxu0 0
    %9086 = vmatprep.subr.bf16.mxu0 0
    %9087 = vmatpush1.bf16.msra.mxu0 0
    %9088 = vmatprep.mubr.bf16.mxu0 0
    %9089 = vmatmul.mubr.bf16.gmra.mrb[0].mxu0 %v8977
    %v9090 = vpop.f32.mrb[0].mxu0
    %v9091 = vadd.f32 %v9006, %v9090
    %v9092 = vpop.f32.mrb[0].mxu0
    %v9093 = vpop.f32.mrb[0].mxu0
    %v9094 = vadd.f32 %v9006, %v9093
    %v9095 = vpop.f32.mrb[0].mxu0
    %9096 = vmatprep.mubr.bf16.mxu0 0
    %9097 = vmatmul.mubr.bf16.gmra.mrb[0].mxu0 %v8978
    %v9098 = vpop.f32.mrb[0].mxu0
    %v9099 = vadd.f32 %v9006, %v9098
    %v9100 = vpop.f32.mrb[0].mxu0
    %v9101 = vpop.f32.mrb[0].mxu0
    %v9102 = vadd.f32 %v9006, %v9101
    %v9103 = vpop.f32.mrb[0].mxu0
    %9104 = vmatprep.mubr.bf16.mxu0 0
    %9105 = vmatmul.mubr.bf16.gmra.mrb[0].mxu0 %v8979
    %v9106 = vpop.f32.mrb[0].mxu0
    %v9107 = vadd.f32 %v9006, %v9106
    %v9108 = vpop.f32.mrb[0].mxu0
    %v9109 = vpop.f32.mrb[0].mxu0
    %v9110 = vadd.f32 %v9006, %v9109
    %v9111 = vpop.f32.mrb[0].mxu0
    %9112 = vmatprep.mubr.bf16.mxu0 0
    %9113 = vmatmul.mubr.bf16.gmra.mrb[0].mxu0 %v8980
    %v9114 = vpop.f32.mrb[0].mxu0
    %v9115 = vadd.f32 %v9006, %v9114
    %v9116 = vpop.f32.mrb[0].mxu0
    %v9117 = vpop.f32.mrb[0].mxu0
    %v9118 = vadd.f32 %v9006, %v9117
    %v9119 = vpop.f32.mrb[0].mxu0
    %9120 = vmatprep.mubr.bf16.mxu0 0
    %9121 = vmatmul.mubr.bf16.gmra.mrb[0].mxu0 %v8981
    %v9122 = vpop.f32.mrb[0].mxu0
    %v9123 = vadd.f32 %v9006, %v9122
    %v9124 = vpop.f32.mrb[0].mxu0
    %v9125 = vpop.f32.mrb[0].mxu0
    %v9126 = vadd.f32 %v9006, %v9125
    %v9127 = vpop.f32.mrb[0].mxu0
    %9128 = vmatprep.mubr.bf16.mxu0 0
    %9129 = vmatmul.mubr.bf16.gmra.mrb[0].mxu0 %v8982
    %v9130 = vpop.f32.mrb[0].mxu0
    %v9131 = vadd.f32 %v9006, %v9130
    %v9132 = vpop.f32.mrb[0].mxu0
    %v9133 = vpop.f32.mrb[0].mxu0
    %v9134 = vadd.f32 %v9006, %v9133
    %v9135 = vpop.f32.mrb[0].mxu0
    %9136 = vmatprep.mubr.bf16.mxu0 0
    %9137 = vmatmul.mubr.bf16.gmra.mrb[0].mxu0 %v8983
    %v9138 = vpop.f32.mrb[0].mxu0
    %v9139 = vadd.f32 %v9006, %v9138
    %v9140 = vpop.f32.mrb[0].mxu0
    %v9141 = vpop.f32.mrb[0].mxu0
    %v9142 = vadd.f32 %v9006, %v9141
    %v9143 = vpop.f32.mrb[0].mxu0
    %9144 = vmatprep.mubr.bf16.mxu0 0
    %9145 = vmatmul.mubr.bf16.gmra.mrb[0].mxu0 %v8984
    %v9146 = vpop.f32.mrb[0].mxu0
    %v9147 = vadd.f32 %v9006, %v9146
    %v9148 = vpop.f32.mrb[0].mxu0
    %v9149 = vpop.f32.mrb[0].mxu0
    %v9150 = vadd.f32 %v9006, %v9149
    %v9151 = vpop.f32.mrb[0].mxu0
    %9152 = vdwg.mxu0
    %v9153 = vpack.c.bf16 %v9094, %v9091
    %v9154 = vpack.c.bf16 %v9102, %v9099
    %v9155 = vpack.c.bf16 %v9110, %v9107
    %v9156 = vpack.c.bf16 %v9118, %v9115
    %v9157 = vpack.c.bf16 %v9126, %v9123
    %v9158 = vpack.c.bf16 %v9134, %v9131
    %v9159 = vpack.c.bf16 %v9142, %v9139
    %v9160 = vpack.c.bf16 %v9150, %v9147
    %9161 = vmatprep.subr.bf16.mxu0 0
    %9162 = vmatpush1.bf16.msra.mxu0 %v9153
    %9163 = vmatprep.subr.bf16.mxu0 0
    %9164 = vmatpush1.bf16.msra.mxu0 %v9154
    %9165 = vmatprep.subr.bf16.mxu0 0
    %9166 = vmatpush1.bf16.msra.mxu0 %v9155
    %9167 = vmatprep.subr.bf16.mxu0 0
    %9168 = vmatpush1.bf16.msra.mxu0 %v9156
    %9169 = vmatprep.subr.bf16.mxu0 0
    %9170 = vmatpush1.bf16.msra.mxu0 %v9157
    %9171 = vmatprep.subr.bf16.mxu0 0
    %9172 = vmatpush1.bf16.msra.mxu0 %v9158
    %9173 = vmatprep.subr.bf16.mxu0 0
    %9174 = vmatpush1.bf16.msra.mxu0 %v9159
    %9175 = vmatprep.subr.bf16.mxu0 0
    %9176 = vmatpush1.bf16.msra.mxu0 %v9160
    %9177 = vmatprep.subr.bf16.mxu0 0
    %9178 = vmatpush1.bf16.msra.mxu0 0
    %9179 = vmatprep.subr.bf16.mxu0 0
    %9180 = vmatpush1.bf16.msra.mxu0 0
    %9181 = vmatprep.subr.bf16.mxu0 0
    %9182 = vmatpush1.bf16.msra.mxu0 0
    %9183 = vmatprep.subr.bf16.mxu0 0
    %9184 = vmatpush1.bf16.msra.mxu0 0
    %9185 = vmatprep.subr.bf16.mxu0 0
    %9186 = vmatpush1.bf16.msra.mxu0 0
    %9187 = vmatprep.subr.bf16.mxu0 0
    %9188 = vmatpush1.bf16.msra.mxu0 0
    %9189 = vmatprep.subr.bf16.mxu0 0
    %9190 = vmatpush1.bf16.msra.mxu0 0
    %9191 = vmatprep.subr.bf16.mxu0 0
    %9192 = vmatpush1.bf16.msra.mxu0 0
    %9193 = vmatprep.mubr.bf16.mxu0 0
    %9194 = vmatmul.mubr.bf16.gmra.mrb[0].mxu0 %v3093
    %v9195 = vpop.f32.mrb[0].mxu0
    %v9196 = vadd.f32 0.0, %v9195
    %v9197 = vpop.f32.mrb[0].mxu0
    %v9198 = vpop.f32.mrb[0].mxu0
    %v9199 = vadd.f32 0.0, %v9198
    %v9200 = vpop.f32.mrb[0].mxu0
    %9201 = vmatprep.mubr.bf16.mxu0 0
    %9202 = vmatmul.mubr.bf16.gmra.mrb[0].mxu0 %v3094
    %v9203 = vpop.f32.mrb[0].mxu0
    %v9204 = vadd.f32 0.0, %v9203
    %v9205 = vpop.f32.mrb[0].mxu0
    %v9206 = vpop.f32.mrb[0].mxu0
    %v9207 = vadd.f32 0.0, %v9206
    %v9208 = vpop.f32.mrb[0].mxu0
    %9209 = vmatprep.mubr.bf16.mxu0 0
    %9210 = vmatmul.mubr.bf16.gmra.mrb[0].mxu0 %v3095
    %v9211 = vpop.f32.mrb[0].mxu0
    %v9212 = vadd.f32 0.0, %v9211
    %v9213 = vpop.f32.mrb[0].mxu0
    %v9214 = vpop.f32.mrb[0].mxu0
    %v9215 = vadd.f32 0.0, %v9214
    %v9216 = vpop.f32.mrb[0].mxu0
    %9217 = vmatprep.mubr.bf16.mxu0 0
    %9218 = vmatmul.mubr.bf16.gmra.mrb[0].mxu0 %v3096
    %v9219 = vpop.f32.mrb[0].mxu0
    %v9220 = vadd.f32 0.0, %v9219
    %v9221 = vpop.f32.mrb[0].mxu0
    %v9222 = vpop.f32.mrb[0].mxu0
    %v9223 = vadd.f32 0.0, %v9222
    %v9224 = vpop.f32.mrb[0].mxu0
    %9225 = vmatprep.mubr.bf16.mxu0 0
    %9226 = vmatmul.mubr.bf16.gmra.mrb[0].mxu0 %v3097
    %v9227 = vpop.f32.mrb[0].mxu0
    %v9228 = vadd.f32 0.0, %v9227
    %v9229 = vpop.f32.mrb[0].mxu0
    %v9230 = vpop.f32.mrb[0].mxu0
    %v9231 = vadd.f32 0.0, %v9230
    %v9232 = vpop.f32.mrb[0].mxu0
    %9233 = vmatprep.mubr.bf16.mxu0 0
    %9234 = vmatmul.mubr.bf16.gmra.mrb[0].mxu0 %v3098
    %v9235 = vpop.f32.mrb[0].mxu0
    %v9236 = vadd.f32 0.0, %v9235
    %v9237 = vpop.f32.mrb[0].mxu0
    %v9238 = vpop.f32.mrb[0].mxu0
    %v9239 = vadd.f32 0.0, %v9238
    %v9240 = vpop.f32.mrb[0].mxu0
    %9241 = vmatprep.mubr.bf16.mxu0 0
    %9242 = vmatmul.mubr.bf16.gmra.mrb[0].mxu0 %v3099
    %v9243 = vpop.f32.mrb[0].mxu0
    %v9244 = vadd.f32 0.0, %v9243
    %v9245 = vpop.f32.mrb[0].mxu0
    %v9246 = vpop.f32.mrb[0].mxu0
    %v9247 = vadd.f32 0.0, %v9246
    %v9248 = vpop.f32.mrb[0].mxu0
    %9249 = vmatprep.mubr.bf16.mxu0 0
    %9250 = vmatmul.mubr.bf16.gmra.mrb[0].mxu0 %v3100
    %v9251 = vpop.f32.mrb[0].mxu0
    %v9252 = vadd.f32 0.0, %v9251
    %v9253 = vpop.f32.mrb[0].mxu0
    %v9254 = vpop.f32.mrb[0].mxu0
    %v9255 = vadd.f32 0.0, %v9254
    %v9256 = vpop.f32.mrb[0].mxu0
    %9257 = vdwg.mxu0
    %s9258 = sld [smem:[#allocation2 + $0x1b]]
    %s9259 = sld [smem:[#allocation2 + $0x1c]]
    %s9260 = sld [smem:[#allocation2 + $0x1d]]
    %v9261 = vpack.c.bf16 %v9199, %v9196
    %v9262 = vpack.c.bf16 %v9207, %v9204
    %v9263 = vpack.c.bf16 %v9215, %v9212
    %v9264 = vpack.c.bf16 %v9223, %v9220
    %v9265 = vpack.c.bf16 %v9231, %v9228
    %v9266 = vpack.c.bf16 %v9239, %v9236
    %v9267 = vpack.c.bf16 %v9247, %v9244
    %v9268 = vpack.c.bf16 %v9255, %v9252
    %v9269 = vld [vmem:[%s141] sm:$0xf]
    %v9270 = vld [vmem:[%s141 + $0x4] sm:$0xf]
    %v9271 = vld [vmem:[%s141 + $0x8] sm:$0xf]
    %v9272 = vld [vmem:[%s141 + $0xc] sm:$0xf]
    %v9273 = vld [vmem:[%s141 + $0x10] sm:$0xf]
    %v9274 = vld [vmem:[%s141 + $0x14] sm:$0xf]
    %v9275 = vld [vmem:[%s141 + $0x18] sm:$0xf]
    %v9276 = vld [vmem:[%s141 + $0x1c] sm:$0xf]
    %v9277 = vld [vmem:[%s141 + $0x20] sm:$0xf]
    %v9278 = vld [vmem:[%s141 + $0x24] sm:$0xf]
    %v9279 = vld [vmem:[%s141 + $0x28] sm:$0xf]
    %v9280 = vld [vmem:[%s141 + $0x2c] sm:$0xf]
    %v9281 = vld [vmem:[%s141 + $0x30] sm:$0xf]
    %v9282 = vld [vmem:[%s141 + $0x34] sm:$0xf]
    %v9283 = vld [vmem:[%s141 + $0x38] sm:$0xf]
    %v9284 = vld [vmem:[%s141 + $0x3c] sm:$0xf]
    %v9285 = vld [vmem:[%s143] sm:$0x1]
    %v9287 = vlaneseq
    %v9288 = vshrl.u32 %v9287, 7
    %v9289 = vsub.s32 0, %v9288
    %v9290 = vrot.slane %v9285, %v9289
    %v9308 = vunpack.c.l.b16 %v9269
    %v9309 = vunpack.c.l.b16 %v9270
    %v9310 = vunpack.c.l.b16 %v9271
    %v9311 = vunpack.c.l.b16 %v9272
    %v9312 = vunpack.c.l.b16 %v9273
    %v9313 = vunpack.c.l.b16 %v9274
    %v9314 = vunpack.c.l.b16 %v9275
    %v9315 = vunpack.c.l.b16 %v9276
    %v9316 = vunpack.c.l.b16 %v9277
    %v9317 = vunpack.c.l.b16 %v9278
    %v9318 = vunpack.c.l.b16 %v9279
    %v9319 = vunpack.c.l.b16 %v9280
    %v9320 = vunpack.c.l.b16 %v9281
    %v9321 = vunpack.c.l.b16 %v9282
    %v9322 = vunpack.c.l.b16 %v9283
    %v9323 = vunpack.c.l.b16 %v9284
    %v9324 = vpack.c.b16 %v9309, %v9308
    %v9325 = vpack.c.b16 %v9311, %v9310
    %v9326 = vpack.c.b16 %v9313, %v9312
    %v9327 = vpack.c.b16 %v9315, %v9314
    %v9328 = vpack.c.b16 %v9317, %v9316
    %v9329 = vpack.c.b16 %v9319, %v9318
    %v9330 = vpack.c.b16 %v9321, %v9320
    %v9331 = vpack.c.b16 %v9323, %v9322
    %9340 = vmatprep.subr.bf16.mxu0 0
    %9341 = vmatpush1.bf16.msra.mxu0 %v9324
    %9342 = vmatprep.subr.bf16.mxu0 0
    %9343 = vmatpush1.bf16.msra.mxu0 %v9325
    %9344 = vmatprep.subr.bf16.mxu0 0
    %9345 = vmatpush1.bf16.msra.mxu0 %v9326
    %9346 = vmatprep.subr.bf16.mxu0 0
    %9347 = vmatpush1.bf16.msra.mxu0 %v9327
    %9348 = vmatprep.subr.bf16.mxu0 0
    %9349 = vmatpush1.bf16.msra.mxu0 %v9328
    %9350 = vmatprep.subr.bf16.mxu0 0
    %9351 = vmatpush1.bf16.msra.mxu0 %v9329
    %9352 = vmatprep.subr.bf16.mxu0 0
    %9353 = vmatpush1.bf16.msra.mxu0 %v9330
    %9354 = vmatprep.subr.bf16.mxu0 0
    %9355 = vmatpush1.bf16.msra.mxu0 %v9331
    %9356 = vmatprep.subr.bf16.mxu0 0
    %9357 = vmatpush1.bf16.msra.mxu0 0
    %9358 = vmatprep.subr.bf16.mxu0 0
    %9359 = vmatpush1.bf16.msra.mxu0 0
    %9360 = vmatprep.subr.bf16.mxu0 0
    %9361 = vmatpush1.bf16.msra.mxu0 0
    %9362 = vmatprep.subr.bf16.mxu0 0
    %9363 = vmatpush1.bf16.msra.mxu0 0
    %9364 = vmatprep.subr.bf16.mxu0 0
    %9365 = vmatpush1.bf16.msra.mxu0 0
    %9366 = vmatprep.subr.bf16.mxu0 0
    %9367 = vmatpush1.bf16.msra.mxu0 0
    %9368 = vmatprep.subr.bf16.mxu0 0
    %9369 = vmatpush1.bf16.msra.mxu0 0
    %9370 = vmatprep.subr.bf16.mxu0 0
    %9371 = vmatpush1.bf16.msra.mxu0 0
    %9372 = vmatprep.mubr.bf16.mxu0 0
    %9373 = vmatmul.mubr.bf16.gmra.mrb[0].mxu0 %v9261
    %v9374 = vpop.f32.mrb[0].mxu0
    %v9375 = vadd.f32 %v9290, %v9374
    %v9376 = vpop.f32.mrb[0].mxu0
    %v9377 = vpop.f32.mrb[0].mxu0
    %v9378 = vadd.f32 %v9290, %v9377
    %v9379 = vpop.f32.mrb[0].mxu0
    %9380 = vmatprep.mubr.bf16.mxu0 0
    %9381 = vmatmul.mubr.bf16.gmra.mrb[0].mxu0 %v9262
    %v9382 = vpop.f32.mrb[0].mxu0
    %v9383 = vadd.f32 %v9290, %v9382
    %v9384 = vpop.f32.mrb[0].mxu0
    %v9385 = vpop.f32.mrb[0].mxu0
    %v9386 = vadd.f32 %v9290, %v9385
    %v9387 = vpop.f32.mrb[0].mxu0
    %9388 = vmatprep.mubr.bf16.mxu0 0
    %9389 = vmatmul.mubr.bf16.gmra.mrb[0].mxu0 %v9263
    %v9390 = vpop.f32.mrb[0].mxu0
    %v9391 = vadd.f32 %v9290, %v9390
    %v9392 = vpop.f32.mrb[0].mxu0
    %v9393 = vpop.f32.mrb[0].mxu0
    %v9394 = vadd.f32 %v9290, %v9393
    %v9395 = vpop.f32.mrb[0].mxu0
    %9396 = vmatprep.mubr.bf16.mxu0 0
    %9397 = vmatmul.mubr.bf16.gmra.mrb[0].mxu0 %v9264
    %v9398 = vpop.f32.mrb[0].mxu0
    %v9399 = vadd.f32 %v9290, %v9398
    %v9400 = vpop.f32.mrb[0].mxu0
    %v9401 = vpop.f32.mrb[0].mxu0
    %v9402 = vadd.f32 %v9290, %v9401
    %v9403 = vpop.f32.mrb[0].mxu0
    %9404 = vmatprep.mubr.bf16.mxu0 0
    %9405 = vmatmul.mubr.bf16.gmra.mrb[0].mxu0 %v9265
    %v9406 = vpop.f32.mrb[0].mxu0
    %v9407 = vadd.f32 %v9290, %v9406
    %v9408 = vpop.f32.mrb[0].mxu0
    %v9409 = vpop.f32.mrb[0].mxu0
    %v9410 = vadd.f32 %v9290, %v9409
    %v9411 = vpop.f32.mrb[0].mxu0
    %9412 = vmatprep.mubr.bf16.mxu0 0
    %9413 = vmatmul.mubr.bf16.gmra.mrb[0].mxu0 %v9266
    %v9414 = vpop.f32.mrb[0].mxu0
    %v9415 = vadd.f32 %v9290, %v9414
    %v9416 = vpop.f32.mrb[0].mxu0
    %v9417 = vpop.f32.mrb[0].mxu0
    %v9418 = vadd.f32 %v9290, %v9417
    %v9419 = vpop.f32.mrb[0].mxu0
    %9420 = vmatprep.mubr.bf16.mxu0 0
    %9421 = vmatmul.mubr.bf16.gmra.mrb[0].mxu0 %v9267
    %v9422 = vpop.f32.mrb[0].mxu0
    %v9423 = vadd.f32 %v9290, %v9422
    %v9424 = vpop.f32.mrb[0].mxu0
    %v9425 = vpop.f32.mrb[0].mxu0
    %v9426 = vadd.f32 %v9290, %v9425
    %v9427 = vpop.f32.mrb[0].mxu0
    %9428 = vmatprep.mubr.bf16.mxu0 0
    %9429 = vmatmul.mubr.bf16.gmra.mrb[0].mxu0 %v9268
    %v9430 = vpop.f32.mrb[0].mxu0
    %v9431 = vadd.f32 %v9290, %v9430
    %v9432 = vpop.f32.mrb[0].mxu0
    %v9433 = vpop.f32.mrb[0].mxu0
    %v9434 = vadd.f32 %v9290, %v9433
    %v9435 = vpop.f32.mrb[0].mxu0
    %9436 = vdwg.mxu0
    %vm9437 = vcmp.ge.f32.partialorder %v9375, 0.0
    %vm9438 = vcmp.ge.f32.partialorder %v9378, 0.0
    %vm9439 = vcmp.ge.f32.partialorder %v9383, 0.0
    %vm9440 = vcmp.ge.f32.partialorder %v9386, 0.0
    %vm9441 = vcmp.ge.f32.partialorder %v9391, 0.0
    %vm9442 = vcmp.ge.f32.partialorder %v9394, 0.0
    %vm9443 = vcmp.ge.f32.partialorder %v9399, 0.0
    %vm9444 = vcmp.ge.f32.partialorder %v9402, 0.0
    %vm9445 = vcmp.ge.f32.partialorder %v9407, 0.0
    %vm9446 = vcmp.ge.f32.partialorder %v9410, 0.0
    %vm9447 = vcmp.ge.f32.partialorder %v9415, 0.0
    %vm9448 = vcmp.ge.f32.partialorder %v9418, 0.0
    %vm9449 = vcmp.ge.f32.partialorder %v9423, 0.0
    %vm9450 = vcmp.ge.f32.partialorder %v9426, 0.0
    %vm9451 = vcmp.ge.f32.partialorder %v9431, 0.0
    %vm9452 = vcmp.ge.f32.partialorder %v9434, 0.0
    %v9453 = vstv %s9258
    %v9454 = vmul.f32 %v9453, %v9375
    %v9455 = vmul.f32 %v9453, %v9378
    %v9456 = vmul.f32 %v9453, %v9383
    %v9457 = vmul.f32 %v9453, %v9386
    %v9458 = vmul.f32 %v9453, %v9391
    %v9459 = vmul.f32 %v9453, %v9394
    %v9460 = vmul.f32 %v9453, %v9399
    %v9461 = vmul.f32 %v9453, %v9402
    %v9462 = vmul.f32 %v9453, %v9407
    %v9463 = vmul.f32 %v9453, %v9410
    %v9464 = vmul.f32 %v9453, %v9415
    %v9465 = vmul.f32 %v9453, %v9418
    %v9466 = vmul.f32 %v9453, %v9423
    %v9467 = vmul.f32 %v9453, %v9426
    %v9468 = vmul.f32 %v9453, %v9431
    %v9469 = vmul.f32 %v9453, %v9434
    %v9470 = vsel %vm9437, %v9375, %v9454
    %v9471 = vsel %vm9438, %v9378, %v9455
    %v9472 = vsel %vm9439, %v9383, %v9456
    %v9473 = vsel %vm9440, %v9386, %v9457
    %v9474 = vsel %vm9441, %v9391, %v9458
    %v9475 = vsel %vm9442, %v9394, %v9459
    %v9476 = vsel %vm9443, %v9399, %v9460
    %v9477 = vsel %vm9444, %v9402, %v9461
    %v9478 = vsel %vm9445, %v9407, %v9462
    %v9479 = vsel %vm9446, %v9410, %v9463
    %v9480 = vsel %vm9447, %v9415, %v9464
    %v9481 = vsel %vm9448, %v9418, %v9465
    %v9482 = vsel %vm9449, %v9423, %v9466
    %v9483 = vsel %vm9450, %v9426, %v9467
    %v9484 = vsel %vm9451, %v9431, %v9468
    %v9485 = vsel %vm9452, %v9434, %v9469
    %v9486 = vpack.c.bf16 %v9471, %v9470
    %v9487 = vpack.c.bf16 %v9473, %v9472
    %v9488 = vpack.c.bf16 %v9475, %v9474
    %v9489 = vpack.c.bf16 %v9477, %v9476
    %v9490 = vpack.c.bf16 %v9479, %v9478
    %v9491 = vpack.c.bf16 %v9481, %v9480
    %v9492 = vpack.c.bf16 %v9483, %v9482
    %v9493 = vpack.c.bf16 %v9485, %v9484
    %v9494 = vld [vmem:[%s145] sm:$0xf]
    %v9495 = vld [vmem:[%s145 + $0x4] sm:$0xf]
    %v9496 = vld [vmem:[%s145 + $0x8] sm:$0xf]
    %v9497 = vld [vmem:[%s145 + $0xc] sm:$0xf]
    %v9498 = vld [vmem:[%s145 + $0x10] sm:$0xf]
    %v9499 = vld [vmem:[%s145 + $0x14] sm:$0xf]
    %v9500 = vld [vmem:[%s145 + $0x18] sm:$0xf]
    %v9501 = vld [vmem:[%s145 + $0x1c] sm:$0xf]
    %v9502 = vld [vmem:[%s145 + $0x20] sm:$0xf]
    %v9503 = vld [vmem:[%s145 + $0x24] sm:$0xf]
    %v9504 = vld [vmem:[%s145 + $0x28] sm:$0xf]
    %v9505 = vld [vmem:[%s145 + $0x2c] sm:$0xf]
    %v9506 = vld [vmem:[%s145 + $0x30] sm:$0xf]
    %v9507 = vld [vmem:[%s145 + $0x34] sm:$0xf]
    %v9508 = vld [vmem:[%s145 + $0x38] sm:$0xf]
    %v9509 = vld [vmem:[%s145 + $0x3c] sm:$0xf]
    %v9526 = vunpack.c.l.b16 %v9494
    %v9527 = vunpack.c.l.b16 %v9495
    %v9528 = vunpack.c.l.b16 %v9496
    %v9529 = vunpack.c.l.b16 %v9497
    %v9530 = vunpack.c.l.b16 %v9498
    %v9531 = vunpack.c.l.b16 %v9499
    %v9532 = vunpack.c.l.b16 %v9500
    %v9533 = vunpack.c.l.b16 %v9501
    %v9534 = vunpack.c.l.b16 %v9502
    %v9535 = vunpack.c.l.b16 %v9503
    %v9536 = vunpack.c.l.b16 %v9504
    %v9537 = vunpack.c.l.b16 %v9505
    %v9538 = vunpack.c.l.b16 %v9506
    %v9539 = vunpack.c.l.b16 %v9507
    %v9540 = vunpack.c.l.b16 %v9508
    %v9541 = vunpack.c.l.b16 %v9509
    %v9542 = vpack.c.b16 %v9527, %v9526
    %v9543 = vpack.c.b16 %v9529, %v9528
    %v9544 = vpack.c.b16 %v9531, %v9530
    %v9545 = vpack.c.b16 %v9533, %v9532
    %v9546 = vpack.c.b16 %v9535, %v9534
    %v9547 = vpack.c.b16 %v9537, %v9536
    %v9548 = vpack.c.b16 %v9539, %v9538
    %v9549 = vpack.c.b16 %v9541, %v9540
    %9558 = vmatprep.subr.bf16.mxu0 0
    %9559 = vmatpush1.bf16.msra.mxu0 %v9542
    %9560 = vmatprep.subr.bf16.mxu0 0
    %9561 = vmatpush1.bf16.msra.mxu0 %v9543
    %9562 = vmatprep.subr.bf16.mxu0 0
    %9563 = vmatpush1.bf16.msra.mxu0 %v9544
    %9564 = vmatprep.subr.bf16.mxu0 0
    %9565 = vmatpush1.bf16.msra.mxu0 %v9545
    %9566 = vmatprep.subr.bf16.mxu0 0
    %9567 = vmatpush1.bf16.msra.mxu0 %v9546
    %9568 = vmatprep.subr.bf16.mxu0 0
    %9569 = vmatpush1.bf16.msra.mxu0 %v9547
    %9570 = vmatprep.subr.bf16.mxu0 0
    %9571 = vmatpush1.bf16.msra.mxu0 %v9548
    %9572 = vmatprep.subr.bf16.mxu0 0
    %9573 = vmatpush1.bf16.msra.mxu0 %v9549
    %9574 = vmatprep.subr.bf16.mxu0 0
    %9575 = vmatpush1.bf16.msra.mxu0 0
    %9576 = vmatprep.subr.bf16.mxu0 0
    %9577 = vmatpush1.bf16.msra.mxu0 0
    %9578 = vmatprep.subr.bf16.mxu0 0
    %9579 = vmatpush1.bf16.msra.mxu0 0
    %9580 = vmatprep.subr.bf16.mxu0 0
    %9581 = vmatpush1.bf16.msra.mxu0 0
    %9582 = vmatprep.subr.bf16.mxu0 0
    %9583 = vmatpush1.bf16.msra.mxu0 0
    %9584 = vmatprep.subr.bf16.mxu0 0
    %9585 = vmatpush1.bf16.msra.mxu0 0
    %9586 = vmatprep.subr.bf16.mxu0 0
    %9587 = vmatpush1.bf16.msra.mxu0 0
    %9588 = vmatprep.subr.bf16.mxu0 0
    %9589 = vmatpush1.bf16.msra.mxu0 0
    %9590 = vmatprep.mubr.bf16.mxu0 0
    %9591 = vmatmul.mubr.bf16.gmra.mrb[0].mxu0 %v9486
    %v9592 = vpop.f32.mrb[0].mxu0
    %v9593 = vadd.f32 0.0, %v9592
    %v9594 = vpop.f32.mrb[0].mxu0
    %v9595 = vpop.f32.mrb[0].mxu0
    %v9596 = vadd.f32 0.0, %v9595
    %v9597 = vpop.f32.mrb[0].mxu0
    %9598 = vmatprep.mubr.bf16.mxu0 0
    %9599 = vmatmul.mubr.bf16.gmra.mrb[0].mxu0 %v9487
    %v9600 = vpop.f32.mrb[0].mxu0
    %v9601 = vadd.f32 0.0, %v9600
    %v9602 = vpop.f32.mrb[0].mxu0
    %v9603 = vpop.f32.mrb[0].mxu0
    %v9604 = vadd.f32 0.0, %v9603
    %v9605 = vpop.f32.mrb[0].mxu0
    %9606 = vmatprep.mubr.bf16.mxu0 0
    %9607 = vmatmul.mubr.bf16.gmra.mrb[0].mxu0 %v9488
    %v9608 = vpop.f32.mrb[0].mxu0
    %v9609 = vadd.f32 0.0, %v9608
    %v9610 = vpop.f32.mrb[0].mxu0
    %v9611 = vpop.f32.mrb[0].mxu0
    %v9612 = vadd.f32 0.0, %v9611
    %v9613 = vpop.f32.mrb[0].mxu0
    %9614 = vmatprep.mubr.bf16.mxu0 0
    %9615 = vmatmul.mubr.bf16.gmra.mrb[0].mxu0 %v9489
    %v9616 = vpop.f32.mrb[0].mxu0
    %v9617 = vadd.f32 0.0, %v9616
    %v9618 = vpop.f32.mrb[0].mxu0
    %v9619 = vpop.f32.mrb[0].mxu0
    %v9620 = vadd.f32 0.0, %v9619
    %v9621 = vpop.f32.mrb[0].mxu0
    %9622 = vmatprep.mubr.bf16.mxu0 0
    %9623 = vmatmul.mubr.bf16.gmra.mrb[0].mxu0 %v9490
    %v9624 = vpop.f32.mrb[0].mxu0
    %v9625 = vadd.f32 0.0, %v9624
    %v9626 = vpop.f32.mrb[0].mxu0
    %v9627 = vpop.f32.mrb[0].mxu0
    %v9628 = vadd.f32 0.0, %v9627
    %v9629 = vpop.f32.mrb[0].mxu0
    %9630 = vmatprep.mubr.bf16.mxu0 0
    %9631 = vmatmul.mubr.bf16.gmra.mrb[0].mxu0 %v9491
    %v9632 = vpop.f32.mrb[0].mxu0
    %v9633 = vadd.f32 0.0, %v9632
    %v9634 = vpop.f32.mrb[0].mxu0
    %v9635 = vpop.f32.mrb[0].mxu0
    %v9636 = vadd.f32 0.0, %v9635
    %v9637 = vpop.f32.mrb[0].mxu0
    %9638 = vmatprep.mubr.bf16.mxu0 0
    %9639 = vmatmul.mubr.bf16.gmra.mrb[0].mxu0 %v9492
    %v9640 = vpop.f32.mrb[0].mxu0
    %v9641 = vadd.f32 0.0, %v9640
    %v9642 = vpop.f32.mrb[0].mxu0
    %v9643 = vpop.f32.mrb[0].mxu0
    %v9644 = vadd.f32 0.0, %v9643
    %v9645 = vpop.f32.mrb[0].mxu0
    %9646 = vmatprep.mubr.bf16.mxu0 0
    %9647 = vmatmul.mubr.bf16.gmra.mrb[0].mxu0 %v9493
    %v9648 = vpop.f32.mrb[0].mxu0
    %v9649 = vadd.f32 0.0, %v9648
    %v9650 = vpop.f32.mrb[0].mxu0
    %v9651 = vpop.f32.mrb[0].mxu0
    %v9652 = vadd.f32 0.0, %v9651
    %v9653 = vpop.f32.mrb[0].mxu0
    %9654 = vdwg.mxu0
    %vm9655 = vcmp.ge.f32.partialorder %v9593, 0.0
    %vm9656 = vcmp.ge.f32.partialorder %v9596, 0.0
    %vm9657 = vcmp.ge.f32.partialorder %v9601, 0.0
    %vm9658 = vcmp.ge.f32.partialorder %v9604, 0.0
    %vm9659 = vcmp.ge.f32.partialorder %v9609, 0.0
    %vm9660 = vcmp.ge.f32.partialorder %v9612, 0.0
    %vm9661 = vcmp.ge.f32.partialorder %v9617, 0.0
    %vm9662 = vcmp.ge.f32.partialorder %v9620, 0.0
    %vm9663 = vcmp.ge.f32.partialorder %v9625, 0.0
    %vm9664 = vcmp.ge.f32.partialorder %v9628, 0.0
    %vm9665 = vcmp.ge.f32.partialorder %v9633, 0.0
    %vm9666 = vcmp.ge.f32.partialorder %v9636, 0.0
    %vm9667 = vcmp.ge.f32.partialorder %v9641, 0.0
    %vm9668 = vcmp.ge.f32.partialorder %v9644, 0.0
    %vm9669 = vcmp.ge.f32.partialorder %v9649, 0.0
    %vm9670 = vcmp.ge.f32.partialorder %v9652, 0.0
    %v9671 = vstv %s9259
    %v9672 = vmul.f32 %v9671, %v9593
    %v9673 = vmul.f32 %v9671, %v9596
    %v9674 = vmul.f32 %v9671, %v9601
    %v9675 = vmul.f32 %v9671, %v9604
    %v9676 = vmul.f32 %v9671, %v9609
    %v9677 = vmul.f32 %v9671, %v9612
    %v9678 = vmul.f32 %v9671, %v9617
    %v9679 = vmul.f32 %v9671, %v9620
    %v9680 = vmul.f32 %v9671, %v9625
    %v9681 = vmul.f32 %v9671, %v9628
    %v9682 = vmul.f32 %v9671, %v9633
    %v9683 = vmul.f32 %v9671, %v9636
    %v9684 = vmul.f32 %v9671, %v9641
    %v9685 = vmul.f32 %v9671, %v9644
    %v9686 = vmul.f32 %v9671, %v9649
    %v9687 = vmul.f32 %v9671, %v9652
    %v9688 = vsel %vm9655, %v9593, %v9672
    %v9689 = vsel %vm9656, %v9596, %v9673
    %v9690 = vsel %vm9657, %v9601, %v9674
    %v9691 = vsel %vm9658, %v9604, %v9675
    %v9692 = vsel %vm9659, %v9609, %v9676
    %v9693 = vsel %vm9660, %v9612, %v9677
    %v9694 = vsel %vm9661, %v9617, %v9678
    %v9695 = vsel %vm9662, %v9620, %v9679
    %v9696 = vsel %vm9663, %v9625, %v9680
    %v9697 = vsel %vm9664, %v9628, %v9681
    %v9698 = vsel %vm9665, %v9633, %v9682
    %v9699 = vsel %vm9666, %v9636, %v9683
    %v9700 = vsel %vm9667, %v9641, %v9684
    %v9701 = vsel %vm9668, %v9644, %v9685
    %v9702 = vsel %vm9669, %v9649, %v9686
    %v9703 = vsel %vm9670, %v9652, %v9687
    %v9704 = vpack.c.bf16 %v9689, %v9688
    %v9705 = vpack.c.bf16 %v9691, %v9690
    %v9706 = vpack.c.bf16 %v9693, %v9692
    %v9707 = vpack.c.bf16 %v9695, %v9694
    %v9708 = vpack.c.bf16 %v9697, %v9696
    %v9709 = vpack.c.bf16 %v9699, %v9698
    %v9710 = vpack.c.bf16 %v9701, %v9700
    %v9711 = vpack.c.bf16 %v9703, %v9702
    %v9712 = vld [vmem:[%s147] sm:$0xf]
    %v9713 = vld [vmem:[%s147 + $0x4] sm:$0xf]
    %v9714 = vld [vmem:[%s147 + $0x8] sm:$0xf]
    %v9715 = vld [vmem:[%s147 + $0xc] sm:$0xf]
    %v9716 = vld [vmem:[%s147 + $0x10] sm:$0xf]
    %v9717 = vld [vmem:[%s147 + $0x14] sm:$0xf]
    %v9718 = vld [vmem:[%s147 + $0x18] sm:$0xf]
    %v9719 = vld [vmem:[%s147 + $0x1c] sm:$0xf]
    %v9720 = vld [vmem:[%s147 + $0x20] sm:$0xf]
    %v9721 = vld [vmem:[%s147 + $0x24] sm:$0xf]
    %v9722 = vld [vmem:[%s147 + $0x28] sm:$0xf]
    %v9723 = vld [vmem:[%s147 + $0x2c] sm:$0xf]
    %v9724 = vld [vmem:[%s147 + $0x30] sm:$0xf]
    %v9725 = vld [vmem:[%s147 + $0x34] sm:$0xf]
    %v9726 = vld [vmem:[%s147 + $0x38] sm:$0xf]
    %v9727 = vld [vmem:[%s147 + $0x3c] sm:$0xf]
    %v9744 = vunpack.c.l.b16 %v9712
    %v9745 = vunpack.c.l.b16 %v9713
    %v9746 = vunpack.c.l.b16 %v9714
    %v9747 = vunpack.c.l.b16 %v9715
    %v9748 = vunpack.c.l.b16 %v9716
    %v9749 = vunpack.c.l.b16 %v9717
    %v9750 = vunpack.c.l.b16 %v9718
    %v9751 = vunpack.c.l.b16 %v9719
    %v9752 = vunpack.c.l.b16 %v9720
    %v9753 = vunpack.c.l.b16 %v9721
    %v9754 = vunpack.c.l.b16 %v9722
    %v9755 = vunpack.c.l.b16 %v9723
    %v9756 = vunpack.c.l.b16 %v9724
    %v9757 = vunpack.c.l.b16 %v9725
    %v9758 = vunpack.c.l.b16 %v9726
    %v9759 = vunpack.c.l.b16 %v9727
    %v9760 = vpack.c.b16 %v9745, %v9744
    %v9761 = vpack.c.b16 %v9747, %v9746
    %v9762 = vpack.c.b16 %v9749, %v9748
    %v9763 = vpack.c.b16 %v9751, %v9750
    %v9764 = vpack.c.b16 %v9753, %v9752
    %v9765 = vpack.c.b16 %v9755, %v9754
    %v9766 = vpack.c.b16 %v9757, %v9756
    %v9767 = vpack.c.b16 %v9759, %v9758
    %9776 = vmatprep.subr.bf16.mxu0 0
    %9777 = vmatpush1.bf16.msra.mxu0 %v9760
    %9778 = vmatprep.subr.bf16.mxu0 0
    %9779 = vmatpush1.bf16.msra.mxu0 %v9761
    %9780 = vmatprep.subr.bf16.mxu0 0
    %9781 = vmatpush1.bf16.msra.mxu0 %v9762
    %9782 = vmatprep.subr.bf16.mxu0 0
    %9783 = vmatpush1.bf16.msra.mxu0 %v9763
    %9784 = vmatprep.subr.bf16.mxu0 0
    %9785 = vmatpush1.bf16.msra.mxu0 %v9764
    %9786 = vmatprep.subr.bf16.mxu0 0
    %9787 = vmatpush1.bf16.msra.mxu0 %v9765
    %9788 = vmatprep.subr.bf16.mxu0 0
    %9789 = vmatpush1.bf16.msra.mxu0 %v9766
    %9790 = vmatprep.subr.bf16.mxu0 0
    %9791 = vmatpush1.bf16.msra.mxu0 %v9767
    %9792 = vmatprep.subr.bf16.mxu0 0
    %9793 = vmatpush1.bf16.msra.mxu0 0
    %9794 = vmatprep.subr.bf16.mxu0 0
    %9795 = vmatpush1.bf16.msra.mxu0 0
    %9796 = vmatprep.subr.bf16.mxu0 0
    %9797 = vmatpush1.bf16.msra.mxu0 0
    %9798 = vmatprep.subr.bf16.mxu0 0
    %9799 = vmatpush1.bf16.msra.mxu0 0
    %9800 = vmatprep.subr.bf16.mxu0 0
    %9801 = vmatpush1.bf16.msra.mxu0 0
    %9802 = vmatprep.subr.bf16.mxu0 0
    %9803 = vmatpush1.bf16.msra.mxu0 0
    %9804 = vmatprep.subr.bf16.mxu0 0
    %9805 = vmatpush1.bf16.msra.mxu0 0
    %9806 = vmatprep.subr.bf16.mxu0 0
    %9807 = vmatpush1.bf16.msra.mxu0 0
    %9808 = vmatprep.mubr.bf16.mxu0 0
    %9809 = vmatmul.mubr.bf16.gmra.mrb[0].mxu0 %v9704
    %v9810 = vpop.f32.mrb[0].mxu0
    %v9811 = vadd.f32 0.0, %v9810
    %v9812 = vpop.f32.mrb[0].mxu0
    %v9813 = vpop.f32.mrb[0].mxu0
    %v9814 = vadd.f32 0.0, %v9813
    %v9815 = vpop.f32.mrb[0].mxu0
    %9816 = vmatprep.mubr.bf16.mxu0 0
    %9817 = vmatmul.mubr.bf16.gmra.mrb[0].mxu0 %v9705
    %v9818 = vpop.f32.mrb[0].mxu0
    %v9819 = vadd.f32 0.0, %v9818
    %v9820 = vpop.f32.mrb[0].mxu0
    %v9821 = vpop.f32.mrb[0].mxu0
    %v9822 = vadd.f32 0.0, %v9821
    %v9823 = vpop.f32.mrb[0].mxu0
    %9824 = vmatprep.mubr.bf16.mxu0 0
    %9825 = vmatmul.mubr.bf16.gmra.mrb[0].mxu0 %v9706
    %v9826 = vpop.f32.mrb[0].mxu0
    %v9827 = vadd.f32 0.0, %v9826
    %v9828 = vpop.f32.mrb[0].mxu0
    %v9829 = vpop.f32.mrb[0].mxu0
    %v9830 = vadd.f32 0.0, %v9829
    %v9831 = vpop.f32.mrb[0].mxu0
    %9832 = vmatprep.mubr.bf16.mxu0 0
    %9833 = vmatmul.mubr.bf16.gmra.mrb[0].mxu0 %v9707
    %v9834 = vpop.f32.mrb[0].mxu0
    %v9835 = vadd.f32 0.0, %v9834
    %v9836 = vpop.f32.mrb[0].mxu0
    %v9837 = vpop.f32.mrb[0].mxu0
    %v9838 = vadd.f32 0.0, %v9837
    %v9839 = vpop.f32.mrb[0].mxu0
    %9840 = vmatprep.mubr.bf16.mxu0 0
    %9841 = vmatmul.mubr.bf16.gmra.mrb[0].mxu0 %v9708
    %v9842 = vpop.f32.mrb[0].mxu0
    %v9843 = vadd.f32 0.0, %v9842
    %v9844 = vpop.f32.mrb[0].mxu0
    %v9845 = vpop.f32.mrb[0].mxu0
    %v9846 = vadd.f32 0.0, %v9845
    %v9847 = vpop.f32.mrb[0].mxu0
    %9848 = vmatprep.mubr.bf16.mxu0 0
    %9849 = vmatmul.mubr.bf16.gmra.mrb[0].mxu0 %v9709
    %v9850 = vpop.f32.mrb[0].mxu0
    %v9851 = vadd.f32 0.0, %v9850
    %v9852 = vpop.f32.mrb[0].mxu0
    %v9853 = vpop.f32.mrb[0].mxu0
    %v9854 = vadd.f32 0.0, %v9853
    %v9855 = vpop.f32.mrb[0].mxu0
    %9856 = vmatprep.mubr.bf16.mxu0 0
    %9857 = vmatmul.mubr.bf16.gmra.mrb[0].mxu0 %v9710
    %v9858 = vpop.f32.mrb[0].mxu0
    %v9859 = vadd.f32 0.0, %v9858
    %v9860 = vpop.f32.mrb[0].mxu0
    %v9861 = vpop.f32.mrb[0].mxu0
    %v9862 = vadd.f32 0.0, %v9861
    %v9863 = vpop.f32.mrb[0].mxu0
    %9864 = vmatprep.mubr.bf16.mxu0 0
    %9865 = vmatmul.mubr.bf16.gmra.mrb[0].mxu0 %v9711
    %v9866 = vpop.f32.mrb[0].mxu0
    %v9867 = vadd.f32 0.0, %v9866
    %v9868 = vpop.f32.mrb[0].mxu0
    %v9869 = vpop.f32.mrb[0].mxu0
    %v9870 = vadd.f32 0.0, %v9869
    %v9871 = vpop.f32.mrb[0].mxu0
    %9872 = vdwg.mxu0
    %vm9873 = vcmp.ge.f32.partialorder %v9811, 0.0
    %vm9874 = vcmp.ge.f32.partialorder %v9814, 0.0
    %vm9875 = vcmp.ge.f32.partialorder %v9819, 0.0
    %vm9876 = vcmp.ge.f32.partialorder %v9822, 0.0
    %vm9877 = vcmp.ge.f32.partialorder %v9827, 0.0
    %vm9878 = vcmp.ge.f32.partialorder %v9830, 0.0
    %vm9879 = vcmp.ge.f32.partialorder %v9835, 0.0
    %vm9880 = vcmp.ge.f32.partialorder %v9838, 0.0
    %vm9881 = vcmp.ge.f32.partialorder %v9843, 0.0
    %vm9882 = vcmp.ge.f32.partialorder %v9846, 0.0
    %vm9883 = vcmp.ge.f32.partialorder %v9851, 0.0
    %vm9884 = vcmp.ge.f32.partialorder %v9854, 0.0
    %vm9885 = vcmp.ge.f32.partialorder %v9859, 0.0
    %vm9886 = vcmp.ge.f32.partialorder %v9862, 0.0
    %vm9887 = vcmp.ge.f32.partialorder %v9867, 0.0
    %vm9888 = vcmp.ge.f32.partialorder %v9870, 0.0
    %v9889 = vstv %s9260
    %v9890 = vmul.f32 %v9889, %v9811
    %v9891 = vmul.f32 %v9889, %v9814
    %v9892 = vmul.f32 %v9889, %v9819
    %v9893 = vmul.f32 %v9889, %v9822
    %v9894 = vmul.f32 %v9889, %v9827
    %v9895 = vmul.f32 %v9889, %v9830
    %v9896 = vmul.f32 %v9889, %v9835
    %v9897 = vmul.f32 %v9889, %v9838
    %v9898 = vmul.f32 %v9889, %v9843
    %v9899 = vmul.f32 %v9889, %v9846
    %v9900 = vmul.f32 %v9889, %v9851
    %v9901 = vmul.f32 %v9889, %v9854
    %v9902 = vmul.f32 %v9889, %v9859
    %v9903 = vmul.f32 %v9889, %v9862
    %v9904 = vmul.f32 %v9889, %v9867
    %v9905 = vmul.f32 %v9889, %v9870
    %v9906 = vsel %vm9873, %v9811, %v9890
    %v9907 = vsel %vm9874, %v9814, %v9891
    %v9908 = vsel %vm9875, %v9819, %v9892
    %v9909 = vsel %vm9876, %v9822, %v9893
    %v9910 = vsel %vm9877, %v9827, %v9894
    %v9911 = vsel %vm9878, %v9830, %v9895
    %v9912 = vsel %vm9879, %v9835, %v9896
    %v9913 = vsel %vm9880, %v9838, %v9897
    %v9914 = vsel %vm9881, %v9843, %v9898
    %v9915 = vsel %vm9882, %v9846, %v9899
    %v9916 = vsel %vm9883, %v9851, %v9900
    %v9917 = vsel %vm9884, %v9854, %v9901
    %v9918 = vsel %vm9885, %v9859, %v9902
    %v9919 = vsel %vm9886, %v9862, %v9903
    %v9920 = vsel %vm9887, %v9867, %v9904
    %v9921 = vsel %vm9888, %v9870, %v9905
    %v9922 = vpack.c.bf16 %v9907, %v9906
    %v9923 = vpack.c.bf16 %v9909, %v9908
    %v9924 = vpack.c.bf16 %v9911, %v9910
    %v9925 = vpack.c.bf16 %v9913, %v9912
    %v9926 = vpack.c.bf16 %v9915, %v9914
    %v9927 = vpack.c.bf16 %v9917, %v9916
    %v9928 = vpack.c.bf16 %v9919, %v9918
    %v9929 = vpack.c.bf16 %v9921, %v9920
    %v9930 = vld [vmem:[%s149] sm:$0xf]
    %v9931 = vld [vmem:[%s149 + $0x4] sm:$0xf]
    %v9932 = vld [vmem:[%s149 + $0x8] sm:$0xf]
    %v9933 = vld [vmem:[%s149 + $0xc] sm:$0xf]
    %v9934 = vld [vmem:[%s149 + $0x10] sm:$0xf]
    %v9935 = vld [vmem:[%s149 + $0x14] sm:$0xf]
    %v9936 = vld [vmem:[%s149 + $0x18] sm:$0xf]
    %v9937 = vld [vmem:[%s149 + $0x1c] sm:$0xf]
    %v9938 = vld [vmem:[%s149 + $0x20] sm:$0xf]
    %v9939 = vld [vmem:[%s149 + $0x24] sm:$0xf]
    %v9940 = vld [vmem:[%s149 + $0x28] sm:$0xf]
    %v9941 = vld [vmem:[%s149 + $0x2c] sm:$0xf]
    %v9942 = vld [vmem:[%s149 + $0x30] sm:$0xf]
    %v9943 = vld [vmem:[%s149 + $0x34] sm:$0xf]
    %v9944 = vld [vmem:[%s149 + $0x38] sm:$0xf]
    %v9945 = vld [vmem:[%s149 + $0x3c] sm:$0xf]
    %v9946 = vld [vmem:[%s151] sm:$0x1]
    %v9948 = vlaneseq
    %v9949 = vshrl.u32 %v9948, 7
    %v9950 = vsub.s32 0, %v9949
    %v9951 = vrot.slane %v9946, %v9950
    %v9969 = vunpack.c.l.b16 %v9930
    %v9970 = vunpack.c.l.b16 %v9931
    %v9971 = vunpack.c.l.b16 %v9932
    %v9972 = vunpack.c.l.b16 %v9933
    %v9973 = vunpack.c.l.b16 %v9934
    %v9974 = vunpack.c.l.b16 %v9935
    %v9975 = vunpack.c.l.b16 %v9936
    %v9976 = vunpack.c.l.b16 %v9937
    %v9977 = vunpack.c.l.b16 %v9938
    %v9978 = vunpack.c.l.b16 %v9939
    %v9979 = vunpack.c.l.b16 %v9940
    %v9980 = vunpack.c.l.b16 %v9941
    %v9981 = vunpack.c.l.b16 %v9942
    %v9982 = vunpack.c.l.b16 %v9943
    %v9983 = vunpack.c.l.b16 %v9944
    %v9984 = vunpack.c.l.b16 %v9945
    %v9985 = vpack.c.b16 %v9970, %v9969
    %v9986 = vpack.c.b16 %v9972, %v9971
    %v9987 = vpack.c.b16 %v9974, %v9973
    %v9988 = vpack.c.b16 %v9976, %v9975
    %v9989 = vpack.c.b16 %v9978, %v9977
    %v9990 = vpack.c.b16 %v9980, %v9979
    %v9991 = vpack.c.b16 %v9982, %v9981
    %v9992 = vpack.c.b16 %v9984, %v9983
    %10001 = vmatprep.subr.bf16.mxu0 0
    %10002 = vmatpush1.bf16.msra.mxu0 %v9985
    %10003 = vmatprep.subr.bf16.mxu0 0
    %10004 = vmatpush1.bf16.msra.mxu0 %v9986
    %10005 = vmatprep.subr.bf16.mxu0 0
    %10006 = vmatpush1.bf16.msra.mxu0 %v9987
    %10007 = vmatprep.subr.bf16.mxu0 0
    %10008 = vmatpush1.bf16.msra.mxu0 %v9988
    %10009 = vmatprep.subr.bf16.mxu0 0
    %10010 = vmatpush1.bf16.msra.mxu0 %v9989
    %10011 = vmatprep.subr.bf16.mxu0 0
    %10012 = vmatpush1.bf16.msra.mxu0 %v9990
    %10013 = vmatprep.subr.bf16.mxu0 0
    %10014 = vmatpush1.bf16.msra.mxu0 %v9991
    %10015 = vmatprep.subr.bf16.mxu0 0
    %10016 = vmatpush1.bf16.msra.mxu0 %v9992
    %10017 = vmatprep.subr.bf16.mxu0 0
    %10018 = vmatpush1.bf16.msra.mxu0 0
    %10019 = vmatprep.subr.bf16.mxu0 0
    %10020 = vmatpush1.bf16.msra.mxu0 0
    %10021 = vmatprep.subr.bf16.mxu0 0
    %10022 = vmatpush1.bf16.msra.mxu0 0
    %10023 = vmatprep.subr.bf16.mxu0 0
    %10024 = vmatpush1.bf16.msra.mxu0 0
    %10025 = vmatprep.subr.bf16.mxu0 0
    %10026 = vmatpush1.bf16.msra.mxu0 0
    %10027 = vmatprep.subr.bf16.mxu0 0
    %10028 = vmatpush1.bf16.msra.mxu0 0
    %10029 = vmatprep.subr.bf16.mxu0 0
    %10030 = vmatpush1.bf16.msra.mxu0 0
    %10031 = vmatprep.subr.bf16.mxu0 0
    %10032 = vmatpush1.bf16.msra.mxu0 0
    %10033 = vmatprep.mubr.bf16.mxu0 0
    %10034 = vmatmul.mubr.bf16.gmra.mrb[0].mxu0 %v9922
    %v10035 = vpop.f32.mrb[0].mxu0
    %v10036 = vadd.f32 %v9951, %v10035
    %v10037 = vpop.f32.mrb[0].mxu0
    %v10038 = vpop.f32.mrb[0].mxu0
    %v10039 = vadd.f32 %v9951, %v10038
    %v10040 = vpop.f32.mrb[0].mxu0
    %10041 = vmatprep.mubr.bf16.mxu0 0
    %10042 = vmatmul.mubr.bf16.gmra.mrb[0].mxu0 %v9923
    %v10043 = vpop.f32.mrb[0].mxu0
    %v10044 = vadd.f32 %v9951, %v10043
    %v10045 = vpop.f32.mrb[0].mxu0
    %v10046 = vpop.f32.mrb[0].mxu0
    %v10047 = vadd.f32 %v9951, %v10046
    %v10048 = vpop.f32.mrb[0].mxu0
    %10049 = vmatprep.mubr.bf16.mxu0 0
    %10050 = vmatmul.mubr.bf16.gmra.mrb[0].mxu0 %v9924
    %v10051 = vpop.f32.mrb[0].mxu0
    %v10052 = vadd.f32 %v9951, %v10051
    %v10053 = vpop.f32.mrb[0].mxu0
    %v10054 = vpop.f32.mrb[0].mxu0
    %v10055 = vadd.f32 %v9951, %v10054
    %v10056 = vpop.f32.mrb[0].mxu0
    %10057 = vmatprep.mubr.bf16.mxu0 0
    %10058 = vmatmul.mubr.bf16.gmra.mrb[0].mxu0 %v9925
    %v10059 = vpop.f32.mrb[0].mxu0
    %v10060 = vadd.f32 %v9951, %v10059
    %v10061 = vpop.f32.mrb[0].mxu0
    %v10062 = vpop.f32.mrb[0].mxu0
    %v10063 = vadd.f32 %v9951, %v10062
    %v10064 = vpop.f32.mrb[0].mxu0
    %10065 = vmatprep.mubr.bf16.mxu0 0
    %10066 = vmatmul.mubr.bf16.gmra.mrb[0].mxu0 %v9926
    %v10067 = vpop.f32.mrb[0].mxu0
    %v10068 = vadd.f32 %v9951, %v10067
    %v10069 = vpop.f32.mrb[0].mxu0
    %v10070 = vpop.f32.mrb[0].mxu0
    %v10071 = vadd.f32 %v9951, %v10070
    %v10072 = vpop.f32.mrb[0].mxu0
    %10073 = vmatprep.mubr.bf16.mxu0 0
    %10074 = vmatmul.mubr.bf16.gmra.mrb[0].mxu0 %v9927
    %v10075 = vpop.f32.mrb[0].mxu0
    %v10076 = vadd.f32 %v9951, %v10075
    %v10077 = vpop.f32.mrb[0].mxu0
    %v10078 = vpop.f32.mrb[0].mxu0
    %v10079 = vadd.f32 %v9951, %v10078
    %v10080 = vpop.f32.mrb[0].mxu0
    %10081 = vmatprep.mubr.bf16.mxu0 0
    %10082 = vmatmul.mubr.bf16.gmra.mrb[0].mxu0 %v9928
    %v10083 = vpop.f32.mrb[0].mxu0
    %v10084 = vadd.f32 %v9951, %v10083
    %v10085 = vpop.f32.mrb[0].mxu0
    %v10086 = vpop.f32.mrb[0].mxu0
    %v10087 = vadd.f32 %v9951, %v10086
    %v10088 = vpop.f32.mrb[0].mxu0
    %10089 = vmatprep.mubr.bf16.mxu0 0
    %10090 = vmatmul.mubr.bf16.gmra.mrb[0].mxu0 %v9929
    %v10091 = vpop.f32.mrb[0].mxu0
    %v10092 = vadd.f32 %v9951, %v10091
    %v10093 = vpop.f32.mrb[0].mxu0
    %v10094 = vpop.f32.mrb[0].mxu0
    %v10095 = vadd.f32 %v9951, %v10094
    %v10096 = vpop.f32.mrb[0].mxu0
    %10097 = vdwg.mxu0
    %v10098 = vadd.f32 %v7935, %v10036
    %v10099 = vadd.f32 %v7936, %v10039
    %v10100 = vadd.f32 %v7937, %v10044
    %v10101 = vadd.f32 %v7938, %v10047
    %v10102 = vadd.f32 %v7939, %v10052
    %v10103 = vadd.f32 %v7940, %v10055
    %v10104 = vadd.f32 %v7941, %v10060
    %v10105 = vadd.f32 %v7942, %v10063
    %v10106 = vadd.f32 %v7943, %v10068
    %v10107 = vadd.f32 %v7944, %v10071
    %v10108 = vadd.f32 %v7945, %v10076
    %v10109 = vadd.f32 %v7946, %v10079
    %v10110 = vadd.f32 %v7947, %v10084
    %v10111 = vadd.f32 %v7948, %v10087
    %v10112 = vadd.f32 %v7949, %v10092
    %v10113 = vadd.f32 %v7950, %v10095
    %s10114 = sld [smem:[#allocation2 + $0x9]]
    %s10115 = sld [smem:[#allocation2 + $0xa]]
    %s10116 = sld [smem:[#allocation2 + $0xb]]
    %v10117 = vpack.c.bf16 %v10099, %v10098
    %v10118 = vpack.c.bf16 %v10101, %v10100
    %v10119 = vpack.c.bf16 %v10103, %v10102
    %v10120 = vpack.c.bf16 %v10105, %v10104
    %v10121 = vpack.c.bf16 %v10107, %v10106
    %v10122 = vpack.c.bf16 %v10109, %v10108
    %v10123 = vpack.c.bf16 %v10111, %v10110
    %v10124 = vpack.c.bf16 %v10113, %v10112
    %v10125 = vld [vmem:[%s45] sm:$0xf]
    %v10126 = vld [vmem:[%s45 + $0x4] sm:$0xf]
    %v10127 = vld [vmem:[%s45 + $0x8] sm:$0xf]
    %v10128 = vld [vmem:[%s45 + $0xc] sm:$0xf]
    %v10129 = vld [vmem:[%s45 + $0x10] sm:$0xf]
    %v10130 = vld [vmem:[%s45 + $0x14] sm:$0xf]
    %v10131 = vld [vmem:[%s45 + $0x18] sm:$0xf]
    %v10132 = vld [vmem:[%s45 + $0x1c] sm:$0xf]
    %v10133 = vld [vmem:[%s45 + $0x20] sm:$0xf]
    %v10134 = vld [vmem:[%s45 + $0x24] sm:$0xf]
    %v10135 = vld [vmem:[%s45 + $0x28] sm:$0xf]
    %v10136 = vld [vmem:[%s45 + $0x2c] sm:$0xf]
    %v10137 = vld [vmem:[%s45 + $0x30] sm:$0xf]
    %v10138 = vld [vmem:[%s45 + $0x34] sm:$0xf]
    %v10139 = vld [vmem:[%s45 + $0x38] sm:$0xf]
    %v10140 = vld [vmem:[%s45 + $0x3c] sm:$0xf]
    %v10141 = vld [vmem:[%s47] sm:$0x1]
    %v10143 = vlaneseq
    %v10144 = vshrl.u32 %v10143, 7
    %v10145 = vsub.s32 0, %v10144
    %v10146 = vrot.slane %v10141, %v10145
    %v10164 = vunpack.c.l.b16 %v10125
    %v10165 = vunpack.c.l.b16 %v10126
    %v10166 = vunpack.c.l.b16 %v10127
    %v10167 = vunpack.c.l.b16 %v10128
    %v10168 = vunpack.c.l.b16 %v10129
    %v10169 = vunpack.c.l.b16 %v10130
    %v10170 = vunpack.c.l.b16 %v10131
    %v10171 = vunpack.c.l.b16 %v10132
    %v10172 = vunpack.c.l.b16 %v10133
    %v10173 = vunpack.c.l.b16 %v10134
    %v10174 = vunpack.c.l.b16 %v10135
    %v10175 = vunpack.c.l.b16 %v10136
    %v10176 = vunpack.c.l.b16 %v10137
    %v10177 = vunpack.c.l.b16 %v10138
    %v10178 = vunpack.c.l.b16 %v10139
    %v10179 = vunpack.c.l.b16 %v10140
    %v10180 = vpack.c.b16 %v10165, %v10164
    %v10181 = vpack.c.b16 %v10167, %v10166
    %v10182 = vpack.c.b16 %v10169, %v10168
    %v10183 = vpack.c.b16 %v10171, %v10170
    %v10184 = vpack.c.b16 %v10173, %v10172
    %v10185 = vpack.c.b16 %v10175, %v10174
    %v10186 = vpack.c.b16 %v10177, %v10176
    %v10187 = vpack.c.b16 %v10179, %v10178
    %10196 = vmatprep.subr.bf16.mxu0 0
    %10197 = vmatpush1.bf16.msra.mxu0 %v10180
    %10198 = vmatprep.subr.bf16.mxu0 0
    %10199 = vmatpush1.bf16.msra.mxu0 %v10181
    %10200 = vmatprep.subr.bf16.mxu0 0
    %10201 = vmatpush1.bf16.msra.mxu0 %v10182
    %10202 = vmatprep.subr.bf16.mxu0 0
    %10203 = vmatpush1.bf16.msra.mxu0 %v10183
    %10204 = vmatprep.subr.bf16.mxu0 0
    %10205 = vmatpush1.bf16.msra.mxu0 %v10184
    %10206 = vmatprep.subr.bf16.mxu0 0
    %10207 = vmatpush1.bf16.msra.mxu0 %v10185
    %10208 = vmatprep.subr.bf16.mxu0 0
    %10209 = vmatpush1.bf16.msra.mxu0 %v10186
    %10210 = vmatprep.subr.bf16.mxu0 0
    %10211 = vmatpush1.bf16.msra.mxu0 %v10187
    %10212 = vmatprep.subr.bf16.mxu0 0
    %10213 = vmatpush1.bf16.msra.mxu0 0
    %10214 = vmatprep.subr.bf16.mxu0 0
    %10215 = vmatpush1.bf16.msra.mxu0 0
    %10216 = vmatprep.subr.bf16.mxu0 0
    %10217 = vmatpush1.bf16.msra.mxu0 0
    %10218 = vmatprep.subr.bf16.mxu0 0
    %10219 = vmatpush1.bf16.msra.mxu0 0
    %10220 = vmatprep.subr.bf16.mxu0 0
    %10221 = vmatpush1.bf16.msra.mxu0 0
    %10222 = vmatprep.subr.bf16.mxu0 0
    %10223 = vmatpush1.bf16.msra.mxu0 0
    %10224 = vmatprep.subr.bf16.mxu0 0
    %10225 = vmatpush1.bf16.msra.mxu0 0
    %10226 = vmatprep.subr.bf16.mxu0 0
    %10227 = vmatpush1.bf16.msra.mxu0 0
    %10228 = vmatprep.mubr.bf16.mxu0 0
    %10229 = vmatmul.mubr.bf16.gmra.mrb[0].mxu0 %v10117
    %v10230 = vpop.f32.mrb[0].mxu0
    %v10231 = vadd.f32 %v10146, %v10230
    %v10232 = vpop.f32.mrb[0].mxu0
    %v10233 = vpop.f32.mrb[0].mxu0
    %v10234 = vadd.f32 %v10146, %v10233
    %v10235 = vpop.f32.mrb[0].mxu0
    %10236 = vmatprep.mubr.bf16.mxu0 0
    %10237 = vmatmul.mubr.bf16.gmra.mrb[0].mxu0 %v10118
    %v10238 = vpop.f32.mrb[0].mxu0
    %v10239 = vadd.f32 %v10146, %v10238
    %v10240 = vpop.f32.mrb[0].mxu0
    %v10241 = vpop.f32.mrb[0].mxu0
    %v10242 = vadd.f32 %v10146, %v10241
    %v10243 = vpop.f32.mrb[0].mxu0
    %10244 = vmatprep.mubr.bf16.mxu0 0
    %10245 = vmatmul.mubr.bf16.gmra.mrb[0].mxu0 %v10119
    %v10246 = vpop.f32.mrb[0].mxu0
    %v10247 = vadd.f32 %v10146, %v10246
    %v10248 = vpop.f32.mrb[0].mxu0
    %v10249 = vpop.f32.mrb[0].mxu0
    %v10250 = vadd.f32 %v10146, %v10249
    %v10251 = vpop.f32.mrb[0].mxu0
    %10252 = vmatprep.mubr.bf16.mxu0 0
    %10253 = vmatmul.mubr.bf16.gmra.mrb[0].mxu0 %v10120
    %v10254 = vpop.f32.mrb[0].mxu0
    %v10255 = vadd.f32 %v10146, %v10254
    %v10256 = vpop.f32.mrb[0].mxu0
    %v10257 = vpop.f32.mrb[0].mxu0
    %v10258 = vadd.f32 %v10146, %v10257
    %v10259 = vpop.f32.mrb[0].mxu0
    %10260 = vmatprep.mubr.bf16.mxu0 0
    %10261 = vmatmul.mubr.bf16.gmra.mrb[0].mxu0 %v10121
    %v10262 = vpop.f32.mrb[0].mxu0
    %v10263 = vadd.f32 %v10146, %v10262
    %v10264 = vpop.f32.mrb[0].mxu0
    %v10265 = vpop.f32.mrb[0].mxu0
    %v10266 = vadd.f32 %v10146, %v10265
    %v10267 = vpop.f32.mrb[0].mxu0
    %10268 = vmatprep.mubr.bf16.mxu0 0
    %10269 = vmatmul.mubr.bf16.gmra.mrb[0].mxu0 %v10122
    %v10270 = vpop.f32.mrb[0].mxu0
    %v10271 = vadd.f32 %v10146, %v10270
    %v10272 = vpop.f32.mrb[0].mxu0
    %v10273 = vpop.f32.mrb[0].mxu0
    %v10274 = vadd.f32 %v10146, %v10273
    %v10275 = vpop.f32.mrb[0].mxu0
    %10276 = vmatprep.mubr.bf16.mxu0 0
    %10277 = vmatmul.mubr.bf16.gmra.mrb[0].mxu0 %v10123
    %v10278 = vpop.f32.mrb[0].mxu0
    %v10279 = vadd.f32 %v10146, %v10278
    %v10280 = vpop.f32.mrb[0].mxu0
    %v10281 = vpop.f32.mrb[0].mxu0
    %v10282 = vadd.f32 %v10146, %v10281
    %v10283 = vpop.f32.mrb[0].mxu0
    %10284 = vmatprep.mubr.bf16.mxu0 0
    %10285 = vmatmul.mubr.bf16.gmra.mrb[0].mxu0 %v10124
    %v10286 = vpop.f32.mrb[0].mxu0
    %v10287 = vadd.f32 %v10146, %v10286
    %v10288 = vpop.f32.mrb[0].mxu0
    %v10289 = vpop.f32.mrb[0].mxu0
    %v10290 = vadd.f32 %v10146, %v10289
    %v10291 = vpop.f32.mrb[0].mxu0
    %10292 = vdwg.mxu0
    %vm10293 = vcmp.ge.f32.partialorder %v10231, 0.0
    %vm10294 = vcmp.ge.f32.partialorder %v10234, 0.0
    %vm10295 = vcmp.ge.f32.partialorder %v10239, 0.0
    %vm10296 = vcmp.ge.f32.partialorder %v10242, 0.0
    %vm10297 = vcmp.ge.f32.partialorder %v10247, 0.0
    %vm10298 = vcmp.ge.f32.partialorder %v10250, 0.0
    %vm10299 = vcmp.ge.f32.partialorder %v10255, 0.0
    %vm10300 = vcmp.ge.f32.partialorder %v10258, 0.0
    %vm10301 = vcmp.ge.f32.partialorder %v10263, 0.0
    %vm10302 = vcmp.ge.f32.partialorder %v10266, 0.0
    %vm10303 = vcmp.ge.f32.partialorder %v10271, 0.0
    %vm10304 = vcmp.ge.f32.partialorder %v10274, 0.0
    %vm10305 = vcmp.ge.f32.partialorder %v10279, 0.0
    %vm10306 = vcmp.ge.f32.partialorder %v10282, 0.0
    %vm10307 = vcmp.ge.f32.partialorder %v10287, 0.0
    %vm10308 = vcmp.ge.f32.partialorder %v10290, 0.0
    %v10309 = vstv %s10114
    %v10310 = vmul.f32 %v10309, %v10231
    %v10311 = vmul.f32 %v10309, %v10234
    %v10312 = vmul.f32 %v10309, %v10239
    %v10313 = vmul.f32 %v10309, %v10242
    %v10314 = vmul.f32 %v10309, %v10247
    %v10315 = vmul.f32 %v10309, %v10250
    %v10316 = vmul.f32 %v10309, %v10255
    %v10317 = vmul.f32 %v10309, %v10258
    %v10318 = vmul.f32 %v10309, %v10263
    %v10319 = vmul.f32 %v10309, %v10266
    %v10320 = vmul.f32 %v10309, %v10271
    %v10321 = vmul.f32 %v10309, %v10274
    %v10322 = vmul.f32 %v10309, %v10279
    %v10323 = vmul.f32 %v10309, %v10282
    %v10324 = vmul.f32 %v10309, %v10287
    %v10325 = vmul.f32 %v10309, %v10290
    %v10326 = vsel %vm10293, %v10231, %v10310
    %v10327 = vsel %vm10294, %v10234, %v10311
    %v10328 = vsel %vm10295, %v10239, %v10312
    %v10329 = vsel %vm10296, %v10242, %v10313
    %v10330 = vsel %vm10297, %v10247, %v10314
    %v10331 = vsel %vm10298, %v10250, %v10315
    %v10332 = vsel %vm10299, %v10255, %v10316
    %v10333 = vsel %vm10300, %v10258, %v10317
    %v10334 = vsel %vm10301, %v10263, %v10318
    %v10335 = vsel %vm10302, %v10266, %v10319
    %v10336 = vsel %vm10303, %v10271, %v10320
    %v10337 = vsel %vm10304, %v10274, %v10321
    %v10338 = vsel %vm10305, %v10279, %v10322
    %v10339 = vsel %vm10306, %v10282, %v10323
    %v10340 = vsel %vm10307, %v10287, %v10324
    %v10341 = vsel %vm10308, %v10290, %v10325
    %v10342 = vpack.c.bf16 %v10327, %v10326
    %v10343 = vpack.c.bf16 %v10329, %v10328
    %v10344 = vpack.c.bf16 %v10331, %v10330
    %v10345 = vpack.c.bf16 %v10333, %v10332
    %v10346 = vpack.c.bf16 %v10335, %v10334
    %v10347 = vpack.c.bf16 %v10337, %v10336
    %v10348 = vpack.c.bf16 %v10339, %v10338
    %v10349 = vpack.c.bf16 %v10341, %v10340
    %v10350 = vld [vmem:[%s49] sm:$0xf]
    %v10351 = vld [vmem:[%s49 + $0x4] sm:$0xf]
    %v10352 = vld [vmem:[%s49 + $0x8] sm:$0xf]
    %v10353 = vld [vmem:[%s49 + $0xc] sm:$0xf]
    %v10354 = vld [vmem:[%s49 + $0x10] sm:$0xf]
    %v10355 = vld [vmem:[%s49 + $0x14] sm:$0xf]
    %v10356 = vld [vmem:[%s49 + $0x18] sm:$0xf]
    %v10357 = vld [vmem:[%s49 + $0x1c] sm:$0xf]
    %v10358 = vld [vmem:[%s49 + $0x20] sm:$0xf]
    %v10359 = vld [vmem:[%s49 + $0x24] sm:$0xf]
    %v10360 = vld [vmem:[%s49 + $0x28] sm:$0xf]
    %v10361 = vld [vmem:[%s49 + $0x2c] sm:$0xf]
    %v10362 = vld [vmem:[%s49 + $0x30] sm:$0xf]
    %v10363 = vld [vmem:[%s49 + $0x34] sm:$0xf]
    %v10364 = vld [vmem:[%s49 + $0x38] sm:$0xf]
    %v10365 = vld [vmem:[%s49 + $0x3c] sm:$0xf]
    %v10382 = vunpack.c.l.b16 %v10350
    %v10383 = vunpack.c.l.b16 %v10351
    %v10384 = vunpack.c.l.b16 %v10352
    %v10385 = vunpack.c.l.b16 %v10353
    %v10386 = vunpack.c.l.b16 %v10354
    %v10387 = vunpack.c.l.b16 %v10355
    %v10388 = vunpack.c.l.b16 %v10356
    %v10389 = vunpack.c.l.b16 %v10357
    %v10390 = vunpack.c.l.b16 %v10358
    %v10391 = vunpack.c.l.b16 %v10359
    %v10392 = vunpack.c.l.b16 %v10360
    %v10393 = vunpack.c.l.b16 %v10361
    %v10394 = vunpack.c.l.b16 %v10362
    %v10395 = vunpack.c.l.b16 %v10363
    %v10396 = vunpack.c.l.b16 %v10364
    %v10397 = vunpack.c.l.b16 %v10365
    %v10398 = vpack.c.b16 %v10383, %v10382
    %v10399 = vpack.c.b16 %v10385, %v10384
    %v10400 = vpack.c.b16 %v10387, %v10386
    %v10401 = vpack.c.b16 %v10389, %v10388
    %v10402 = vpack.c.b16 %v10391, %v10390
    %v10403 = vpack.c.b16 %v10393, %v10392
    %v10404 = vpack.c.b16 %v10395, %v10394
    %v10405 = vpack.c.b16 %v10397, %v10396
    %10414 = vmatprep.subr.bf16.mxu0 0
    %10415 = vmatpush1.bf16.msra.mxu0 %v10398
    %10416 = vmatprep.subr.bf16.mxu0 0
    %10417 = vmatpush1.bf16.msra.mxu0 %v10399
    %10418 = vmatprep.subr.bf16.mxu0 0
    %10419 = vmatpush1.bf16.msra.mxu0 %v10400
    %10420 = vmatprep.subr.bf16.mxu0 0
    %10421 = vmatpush1.bf16.msra.mxu0 %v10401
    %10422 = vmatprep.subr.bf16.mxu0 0
    %10423 = vmatpush1.bf16.msra.mxu0 %v10402
    %10424 = vmatprep.subr.bf16.mxu0 0
    %10425 = vmatpush1.bf16.msra.mxu0 %v10403
    %10426 = vmatprep.subr.bf16.mxu0 0
    %10427 = vmatpush1.bf16.msra.mxu0 %v10404
    %10428 = vmatprep.subr.bf16.mxu0 0
    %10429 = vmatpush1.bf16.msra.mxu0 %v10405
    %10430 = vmatprep.subr.bf16.mxu0 0
    %10431 = vmatpush1.bf16.msra.mxu0 0
    %10432 = vmatprep.subr.bf16.mxu0 0
    %10433 = vmatpush1.bf16.msra.mxu0 0
    %10434 = vmatprep.subr.bf16.mxu0 0
    %10435 = vmatpush1.bf16.msra.mxu0 0
    %10436 = vmatprep.subr.bf16.mxu0 0
    %10437 = vmatpush1.bf16.msra.mxu0 0
    %10438 = vmatprep.subr.bf16.mxu0 0
    %10439 = vmatpush1.bf16.msra.mxu0 0
    %10440 = vmatprep.subr.bf16.mxu0 0
    %10441 = vmatpush1.bf16.msra.mxu0 0
    %10442 = vmatprep.subr.bf16.mxu0 0
    %10443 = vmatpush1.bf16.msra.mxu0 0
    %10444 = vmatprep.subr.bf16.mxu0 0
    %10445 = vmatpush1.bf16.msra.mxu0 0
    %10446 = vmatprep.mubr.bf16.mxu0 0
    %10447 = vmatmul.mubr.bf16.gmra.mrb[0].mxu0 %v10342
    %v10448 = vpop.f32.mrb[0].mxu0
    %v10449 = vadd.f32 0.0, %v10448
    %v10450 = vpop.f32.mrb[0].mxu0
    %v10451 = vpop.f32.mrb[0].mxu0
    %v10452 = vadd.f32 0.0, %v10451
    %v10453 = vpop.f32.mrb[0].mxu0
    %10454 = vmatprep.mubr.bf16.mxu0 0
    %10455 = vmatmul.mubr.bf16.gmra.mrb[0].mxu0 %v10343
    %v10456 = vpop.f32.mrb[0].mxu0
    %v10457 = vadd.f32 0.0, %v10456
    %v10458 = vpop.f32.mrb[0].mxu0
    %v10459 = vpop.f32.mrb[0].mxu0
    %v10460 = vadd.f32 0.0, %v10459
    %v10461 = vpop.f32.mrb[0].mxu0
    %10462 = vmatprep.mubr.bf16.mxu0 0
    %10463 = vmatmul.mubr.bf16.gmra.mrb[0].mxu0 %v10344
    %v10464 = vpop.f32.mrb[0].mxu0
    %v10465 = vadd.f32 0.0, %v10464
    %v10466 = vpop.f32.mrb[0].mxu0
    %v10467 = vpop.f32.mrb[0].mxu0
    %v10468 = vadd.f32 0.0, %v10467
    %v10469 = vpop.f32.mrb[0].mxu0
    %10470 = vmatprep.mubr.bf16.mxu0 0
    %10471 = vmatmul.mubr.bf16.gmra.mrb[0].mxu0 %v10345
    %v10472 = vpop.f32.mrb[0].mxu0
    %v10473 = vadd.f32 0.0, %v10472
    %v10474 = vpop.f32.mrb[0].mxu0
    %v10475 = vpop.f32.mrb[0].mxu0
    %v10476 = vadd.f32 0.0, %v10475
    %v10477 = vpop.f32.mrb[0].mxu0
    %10478 = vmatprep.mubr.bf16.mxu0 0
    %10479 = vmatmul.mubr.bf16.gmra.mrb[0].mxu0 %v10346
    %v10480 = vpop.f32.mrb[0].mxu0
    %v10481 = vadd.f32 0.0, %v10480
    %v10482 = vpop.f32.mrb[0].mxu0
    %v10483 = vpop.f32.mrb[0].mxu0
    %v10484 = vadd.f32 0.0, %v10483
    %v10485 = vpop.f32.mrb[0].mxu0
    %10486 = vmatprep.mubr.bf16.mxu0 0
    %10487 = vmatmul.mubr.bf16.gmra.mrb[0].mxu0 %v10347
    %v10488 = vpop.f32.mrb[0].mxu0
    %v10489 = vadd.f32 0.0, %v10488
    %v10490 = vpop.f32.mrb[0].mxu0
    %v10491 = vpop.f32.mrb[0].mxu0
    %v10492 = vadd.f32 0.0, %v10491
    %v10493 = vpop.f32.mrb[0].mxu0
    %10494 = vmatprep.mubr.bf16.mxu0 0
    %10495 = vmatmul.mubr.bf16.gmra.mrb[0].mxu0 %v10348
    %v10496 = vpop.f32.mrb[0].mxu0
    %v10497 = vadd.f32 0.0, %v10496
    %v10498 = vpop.f32.mrb[0].mxu0
    %v10499 = vpop.f32.mrb[0].mxu0
    %v10500 = vadd.f32 0.0, %v10499
    %v10501 = vpop.f32.mrb[0].mxu0
    %10502 = vmatprep.mubr.bf16.mxu0 0
    %10503 = vmatmul.mubr.bf16.gmra.mrb[0].mxu0 %v10349
    %v10504 = vpop.f32.mrb[0].mxu0
    %v10505 = vadd.f32 0.0, %v10504
    %v10506 = vpop.f32.mrb[0].mxu0
    %v10507 = vpop.f32.mrb[0].mxu0
    %v10508 = vadd.f32 0.0, %v10507
    %v10509 = vpop.f32.mrb[0].mxu0
    %10510 = vdwg.mxu0
    %vm10511 = vcmp.ge.f32.partialorder %v10449, 0.0
    %vm10512 = vcmp.ge.f32.partialorder %v10452, 0.0
    %vm10513 = vcmp.ge.f32.partialorder %v10457, 0.0
    %vm10514 = vcmp.ge.f32.partialorder %v10460, 0.0
    %vm10515 = vcmp.ge.f32.partialorder %v10465, 0.0
    %vm10516 = vcmp.ge.f32.partialorder %v10468, 0.0
    %vm10517 = vcmp.ge.f32.partialorder %v10473, 0.0
    %vm10518 = vcmp.ge.f32.partialorder %v10476, 0.0
    %vm10519 = vcmp.ge.f32.partialorder %v10481, 0.0
    %vm10520 = vcmp.ge.f32.partialorder %v10484, 0.0
    %vm10521 = vcmp.ge.f32.partialorder %v10489, 0.0
    %vm10522 = vcmp.ge.f32.partialorder %v10492, 0.0
    %vm10523 = vcmp.ge.f32.partialorder %v10497, 0.0
    %vm10524 = vcmp.ge.f32.partialorder %v10500, 0.0
    %vm10525 = vcmp.ge.f32.partialorder %v10505, 0.0
    %vm10526 = vcmp.ge.f32.partialorder %v10508, 0.0
    %v10527 = vstv %s10115
    %v10528 = vmul.f32 %v10527, %v10449
    %v10529 = vmul.f32 %v10527, %v10452
    %v10530 = vmul.f32 %v10527, %v10457
    %v10531 = vmul.f32 %v10527, %v10460
    %v10532 = vmul.f32 %v10527, %v10465
    %v10533 = vmul.f32 %v10527, %v10468
    %v10534 = vmul.f32 %v10527, %v10473
    %v10535 = vmul.f32 %v10527, %v10476
    %v10536 = vmul.f32 %v10527, %v10481
    %v10537 = vmul.f32 %v10527, %v10484
    %v10538 = vmul.f32 %v10527, %v10489
    %v10539 = vmul.f32 %v10527, %v10492
    %v10540 = vmul.f32 %v10527, %v10497
    %v10541 = vmul.f32 %v10527, %v10500
    %v10542 = vmul.f32 %v10527, %v10505
    %v10543 = vmul.f32 %v10527, %v10508
    %v10544 = vsel %vm10511, %v10449, %v10528
    %v10545 = vsel %vm10512, %v10452, %v10529
    %v10546 = vsel %vm10513, %v10457, %v10530
    %v10547 = vsel %vm10514, %v10460, %v10531
    %v10548 = vsel %vm10515, %v10465, %v10532
    %v10549 = vsel %vm10516, %v10468, %v10533
    %v10550 = vsel %vm10517, %v10473, %v10534
    %v10551 = vsel %vm10518, %v10476, %v10535
    %v10552 = vsel %vm10519, %v10481, %v10536
    %v10553 = vsel %vm10520, %v10484, %v10537
    %v10554 = vsel %vm10521, %v10489, %v10538
    %v10555 = vsel %vm10522, %v10492, %v10539
    %v10556 = vsel %vm10523, %v10497, %v10540
    %v10557 = vsel %vm10524, %v10500, %v10541
    %v10558 = vsel %vm10525, %v10505, %v10542
    %v10559 = vsel %vm10526, %v10508, %v10543
    %v10560 = vpack.c.bf16 %v10545, %v10544
    %v10561 = vpack.c.bf16 %v10547, %v10546
    %v10562 = vpack.c.bf16 %v10549, %v10548
    %v10563 = vpack.c.bf16 %v10551, %v10550
    %v10564 = vpack.c.bf16 %v10553, %v10552
    %v10565 = vpack.c.bf16 %v10555, %v10554
    %v10566 = vpack.c.bf16 %v10557, %v10556
    %v10567 = vpack.c.bf16 %v10559, %v10558
    %v10568 = vld [vmem:[%s51] sm:$0xf]
    %v10569 = vld [vmem:[%s51 + $0x4] sm:$0xf]
    %v10570 = vld [vmem:[%s51 + $0x8] sm:$0xf]
    %v10571 = vld [vmem:[%s51 + $0xc] sm:$0xf]
    %v10572 = vld [vmem:[%s51 + $0x10] sm:$0xf]
    %v10573 = vld [vmem:[%s51 + $0x14] sm:$0xf]
    %v10574 = vld [vmem:[%s51 + $0x18] sm:$0xf]
    %v10575 = vld [vmem:[%s51 + $0x1c] sm:$0xf]
    %v10576 = vld [vmem:[%s51 + $0x20] sm:$0xf]
    %v10577 = vld [vmem:[%s51 + $0x24] sm:$0xf]
    %v10578 = vld [vmem:[%s51 + $0x28] sm:$0xf]
    %v10579 = vld [vmem:[%s51 + $0x2c] sm:$0xf]
    %v10580 = vld [vmem:[%s51 + $0x30] sm:$0xf]
    %v10581 = vld [vmem:[%s51 + $0x34] sm:$0xf]
    %v10582 = vld [vmem:[%s51 + $0x38] sm:$0xf]
    %v10583 = vld [vmem:[%s51 + $0x3c] sm:$0xf]
    %v10600 = vunpack.c.l.b16 %v10568
    %v10601 = vunpack.c.l.b16 %v10569
    %v10602 = vunpack.c.l.b16 %v10570
    %v10603 = vunpack.c.l.b16 %v10571
    %v10604 = vunpack.c.l.b16 %v10572
    %v10605 = vunpack.c.l.b16 %v10573
    %v10606 = vunpack.c.l.b16 %v10574
    %v10607 = vunpack.c.l.b16 %v10575
    %v10608 = vunpack.c.l.b16 %v10576
    %v10609 = vunpack.c.l.b16 %v10577
    %v10610 = vunpack.c.l.b16 %v10578
    %v10611 = vunpack.c.l.b16 %v10579
    %v10612 = vunpack.c.l.b16 %v10580
    %v10613 = vunpack.c.l.b16 %v10581
    %v10614 = vunpack.c.l.b16 %v10582
    %v10615 = vunpack.c.l.b16 %v10583
    %v10616 = vpack.c.b16 %v10601, %v10600
    %v10617 = vpack.c.b16 %v10603, %v10602
    %v10618 = vpack.c.b16 %v10605, %v10604
    %v10619 = vpack.c.b16 %v10607, %v10606
    %v10620 = vpack.c.b16 %v10609, %v10608
    %v10621 = vpack.c.b16 %v10611, %v10610
    %v10622 = vpack.c.b16 %v10613, %v10612
    %v10623 = vpack.c.b16 %v10615, %v10614
    %10632 = vmatprep.subr.bf16.mxu0 0
    %10633 = vmatpush1.bf16.msra.mxu0 %v10616
    %10634 = vmatprep.subr.bf16.mxu0 0
    %10635 = vmatpush1.bf16.msra.mxu0 %v10617
    %10636 = vmatprep.subr.bf16.mxu0 0
    %10637 = vmatpush1.bf16.msra.mxu0 %v10618
    %10638 = vmatprep.subr.bf16.mxu0 0
    %10639 = vmatpush1.bf16.msra.mxu0 %v10619
    %10640 = vmatprep.subr.bf16.mxu0 0
    %10641 = vmatpush1.bf16.msra.mxu0 %v10620
    %10642 = vmatprep.subr.bf16.mxu0 0
    %10643 = vmatpush1.bf16.msra.mxu0 %v10621
    %10644 = vmatprep.subr.bf16.mxu0 0
    %10645 = vmatpush1.bf16.msra.mxu0 %v10622
    %10646 = vmatprep.subr.bf16.mxu0 0
    %10647 = vmatpush1.bf16.msra.mxu0 %v10623
    %10648 = vmatprep.subr.bf16.mxu0 0
    %10649 = vmatpush1.bf16.msra.mxu0 0
    %10650 = vmatprep.subr.bf16.mxu0 0
    %10651 = vmatpush1.bf16.msra.mxu0 0
    %10652 = vmatprep.subr.bf16.mxu0 0
    %10653 = vmatpush1.bf16.msra.mxu0 0
    %10654 = vmatprep.subr.bf16.mxu0 0
    %10655 = vmatpush1.bf16.msra.mxu0 0
    %10656 = vmatprep.subr.bf16.mxu0 0
    %10657 = vmatpush1.bf16.msra.mxu0 0
    %10658 = vmatprep.subr.bf16.mxu0 0
    %10659 = vmatpush1.bf16.msra.mxu0 0
    %10660 = vmatprep.subr.bf16.mxu0 0
    %10661 = vmatpush1.bf16.msra.mxu0 0
    %10662 = vmatprep.subr.bf16.mxu0 0
    %10663 = vmatpush1.bf16.msra.mxu0 0
    %10664 = vmatprep.mubr.bf16.mxu0 0
    %10665 = vmatmul.mubr.bf16.gmra.mrb[0].mxu0 %v10560
    %v10666 = vpop.f32.mrb[0].mxu0
    %v10667 = vadd.f32 0.0, %v10666
    %v10668 = vpop.f32.mrb[0].mxu0
    %v10669 = vpop.f32.mrb[0].mxu0
    %v10670 = vadd.f32 0.0, %v10669
    %v10671 = vpop.f32.mrb[0].mxu0
    %10672 = vmatprep.mubr.bf16.mxu0 0
    %10673 = vmatmul.mubr.bf16.gmra.mrb[0].mxu0 %v10561
    %v10674 = vpop.f32.mrb[0].mxu0
    %v10675 = vadd.f32 0.0, %v10674
    %v10676 = vpop.f32.mrb[0].mxu0
    %v10677 = vpop.f32.mrb[0].mxu0
    %v10678 = vadd.f32 0.0, %v10677
    %v10679 = vpop.f32.mrb[0].mxu0
    %10680 = vmatprep.mubr.bf16.mxu0 0
    %10681 = vmatmul.mubr.bf16.gmra.mrb[0].mxu0 %v10562
    %v10682 = vpop.f32.mrb[0].mxu0
    %v10683 = vadd.f32 0.0, %v10682
    %v10684 = vpop.f32.mrb[0].mxu0
    %v10685 = vpop.f32.mrb[0].mxu0
    %v10686 = vadd.f32 0.0, %v10685
    %v10687 = vpop.f32.mrb[0].mxu0
    %10688 = vmatprep.mubr.bf16.mxu0 0
    %10689 = vmatmul.mubr.bf16.gmra.mrb[0].mxu0 %v10563
    %v10690 = vpop.f32.mrb[0].mxu0
    %v10691 = vadd.f32 0.0, %v10690
    %v10692 = vpop.f32.mrb[0].mxu0
    %v10693 = vpop.f32.mrb[0].mxu0
    %v10694 = vadd.f32 0.0, %v10693
    %v10695 = vpop.f32.mrb[0].mxu0
    %10696 = vmatprep.mubr.bf16.mxu0 0
    %10697 = vmatmul.mubr.bf16.gmra.mrb[0].mxu0 %v10564
    %v10698 = vpop.f32.mrb[0].mxu0
    %v10699 = vadd.f32 0.0, %v10698
    %v10700 = vpop.f32.mrb[0].mxu0
    %v10701 = vpop.f32.mrb[0].mxu0
    %v10702 = vadd.f32 0.0, %v10701
    %v10703 = vpop.f32.mrb[0].mxu0
    %10704 = vmatprep.mubr.bf16.mxu0 0
    %10705 = vmatmul.mubr.bf16.gmra.mrb[0].mxu0 %v10565
    %v10706 = vpop.f32.mrb[0].mxu0
    %v10707 = vadd.f32 0.0, %v10706
    %v10708 = vpop.f32.mrb[0].mxu0
    %v10709 = vpop.f32.mrb[0].mxu0
    %v10710 = vadd.f32 0.0, %v10709
    %v10711 = vpop.f32.mrb[0].mxu0
    %10712 = vmatprep.mubr.bf16.mxu0 0
    %10713 = vmatmul.mubr.bf16.gmra.mrb[0].mxu0 %v10566
    %v10714 = vpop.f32.mrb[0].mxu0
    %v10715 = vadd.f32 0.0, %v10714
    %v10716 = vpop.f32.mrb[0].mxu0
    %v10717 = vpop.f32.mrb[0].mxu0
    %v10718 = vadd.f32 0.0, %v10717
    %v10719 = vpop.f32.mrb[0].mxu0
    %10720 = vmatprep.mubr.bf16.mxu0 0
    %10721 = vmatmul.mubr.bf16.gmra.mrb[0].mxu0 %v10567
    %v10722 = vpop.f32.mrb[0].mxu0
    %v10723 = vadd.f32 0.0, %v10722
    %v10724 = vpop.f32.mrb[0].mxu0
    %v10725 = vpop.f32.mrb[0].mxu0
    %v10726 = vadd.f32 0.0, %v10725
    %v10727 = vpop.f32.mrb[0].mxu0
    %10728 = vdwg.mxu0
    %vm10729 = vcmp.ge.f32.partialorder %v10667, 0.0
    %vm10730 = vcmp.ge.f32.partialorder %v10670, 0.0
    %vm10731 = vcmp.ge.f32.partialorder %v10675, 0.0
    %vm10732 = vcmp.ge.f32.partialorder %v10678, 0.0
    %vm10733 = vcmp.ge.f32.partialorder %v10683, 0.0
    %vm10734 = vcmp.ge.f32.partialorder %v10686, 0.0
    %vm10735 = vcmp.ge.f32.partialorder %v10691, 0.0
    %vm10736 = vcmp.ge.f32.partialorder %v10694, 0.0
    %vm10737 = vcmp.ge.f32.partialorder %v10699, 0.0
    %vm10738 = vcmp.ge.f32.partialorder %v10702, 0.0
    %vm10739 = vcmp.ge.f32.partialorder %v10707, 0.0
    %vm10740 = vcmp.ge.f32.partialorder %v10710, 0.0
    %vm10741 = vcmp.ge.f32.partialorder %v10715, 0.0
    %vm10742 = vcmp.ge.f32.partialorder %v10718, 0.0
    %vm10743 = vcmp.ge.f32.partialorder %v10723, 0.0
    %vm10744 = vcmp.ge.f32.partialorder %v10726, 0.0
    %v10745 = vstv %s10116
    %v10746 = vmul.f32 %v10745, %v10667
    %v10747 = vmul.f32 %v10745, %v10670
    %v10748 = vmul.f32 %v10745, %v10675
    %v10749 = vmul.f32 %v10745, %v10678
    %v10750 = vmul.f32 %v10745, %v10683
    %v10751 = vmul.f32 %v10745, %v10686
    %v10752 = vmul.f32 %v10745, %v10691
    %v10753 = vmul.f32 %v10745, %v10694
    %v10754 = vmul.f32 %v10745, %v10699
    %v10755 = vmul.f32 %v10745, %v10702
    %v10756 = vmul.f32 %v10745, %v10707
    %v10757 = vmul.f32 %v10745, %v10710
    %v10758 = vmul.f32 %v10745, %v10715
    %v10759 = vmul.f32 %v10745, %v10718
    %v10760 = vmul.f32 %v10745, %v10723
    %v10761 = vmul.f32 %v10745, %v10726
    %v10762 = vsel %vm10729, %v10667, %v10746
    %v10763 = vsel %vm10730, %v10670, %v10747
    %v10764 = vsel %vm10731, %v10675, %v10748
    %v10765 = vsel %vm10732, %v10678, %v10749
    %v10766 = vsel %vm10733, %v10683, %v10750
    %v10767 = vsel %vm10734, %v10686, %v10751
    %v10768 = vsel %vm10735, %v10691, %v10752
    %v10769 = vsel %vm10736, %v10694, %v10753
    %v10770 = vsel %vm10737, %v10699, %v10754
    %v10771 = vsel %vm10738, %v10702, %v10755
    %v10772 = vsel %vm10739, %v10707, %v10756
    %v10773 = vsel %vm10740, %v10710, %v10757
    %v10774 = vsel %vm10741, %v10715, %v10758
    %v10775 = vsel %vm10742, %v10718, %v10759
    %v10776 = vsel %vm10743, %v10723, %v10760
    %v10777 = vsel %vm10744, %v10726, %v10761
    %v10778 = vpack.c.bf16 %v10763, %v10762
    %v10779 = vpack.c.bf16 %v10765, %v10764
    %v10780 = vpack.c.bf16 %v10767, %v10766
    %v10781 = vpack.c.bf16 %v10769, %v10768
    %v10782 = vpack.c.bf16 %v10771, %v10770
    %v10783 = vpack.c.bf16 %v10773, %v10772
    %v10784 = vpack.c.bf16 %v10775, %v10774
    %v10785 = vpack.c.bf16 %v10777, %v10776
    %v10786 = vld [vmem:[%s53] sm:$0xf]
    %v10787 = vld [vmem:[%s53 + $0x4] sm:$0xf]
    %v10788 = vld [vmem:[%s53 + $0x8] sm:$0xf]
    %v10789 = vld [vmem:[%s53 + $0xc] sm:$0xf]
    %v10790 = vld [vmem:[%s53 + $0x10] sm:$0xf]
    %v10791 = vld [vmem:[%s53 + $0x14] sm:$0xf]
    %v10792 = vld [vmem:[%s53 + $0x18] sm:$0xf]
    %v10793 = vld [vmem:[%s53 + $0x1c] sm:$0xf]
    %v10794 = vld [vmem:[%s53 + $0x20] sm:$0xf]
    %v10795 = vld [vmem:[%s53 + $0x24] sm:$0xf]
    %v10796 = vld [vmem:[%s53 + $0x28] sm:$0xf]
    %v10797 = vld [vmem:[%s53 + $0x2c] sm:$0xf]
    %v10798 = vld [vmem:[%s53 + $0x30] sm:$0xf]
    %v10799 = vld [vmem:[%s53 + $0x34] sm:$0xf]
    %v10800 = vld [vmem:[%s53 + $0x38] sm:$0xf]
    %v10801 = vld [vmem:[%s53 + $0x3c] sm:$0xf]
    %v10802 = vld [vmem:[%s55] sm:$0x1]
    %v10804 = vlaneseq
    %v10805 = vshrl.u32 %v10804, 7
    %v10806 = vsub.s32 0, %v10805
    %v10807 = vrot.slane %v10802, %v10806
    %v10825 = vunpack.c.l.b16 %v10786
    %v10826 = vunpack.c.l.b16 %v10787
    %v10827 = vunpack.c.l.b16 %v10788
    %v10828 = vunpack.c.l.b16 %v10789
    %v10829 = vunpack.c.l.b16 %v10790
    %v10830 = vunpack.c.l.b16 %v10791
    %v10831 = vunpack.c.l.b16 %v10792
    %v10832 = vunpack.c.l.b16 %v10793
    %v10833 = vunpack.c.l.b16 %v10794
    %v10834 = vunpack.c.l.b16 %v10795
    %v10835 = vunpack.c.l.b16 %v10796
    %v10836 = vunpack.c.l.b16 %v10797
    %v10837 = vunpack.c.l.b16 %v10798
    %v10838 = vunpack.c.l.b16 %v10799
    %v10839 = vunpack.c.l.b16 %v10800
    %v10840 = vunpack.c.l.b16 %v10801
    %v10841 = vpack.c.b16 %v10826, %v10825
    %v10842 = vpack.c.b16 %v10828, %v10827
    %v10843 = vpack.c.b16 %v10830, %v10829
    %v10844 = vpack.c.b16 %v10832, %v10831
    %v10845 = vpack.c.b16 %v10834, %v10833
    %v10846 = vpack.c.b16 %v10836, %v10835
    %v10847 = vpack.c.b16 %v10838, %v10837
    %v10848 = vpack.c.b16 %v10840, %v10839
    %10857 = vmatprep.subr.bf16.mxu0 0
    %10858 = vmatpush1.bf16.msra.mxu0 %v10841
    %10859 = vmatprep.subr.bf16.mxu0 0
    %10860 = vmatpush1.bf16.msra.mxu0 %v10842
    %10861 = vmatprep.subr.bf16.mxu0 0
    %10862 = vmatpush1.bf16.msra.mxu0 %v10843
    %10863 = vmatprep.subr.bf16.mxu0 0
    %10864 = vmatpush1.bf16.msra.mxu0 %v10844
    %10865 = vmatprep.subr.bf16.mxu0 0
    %10866 = vmatpush1.bf16.msra.mxu0 %v10845
    %10867 = vmatprep.subr.bf16.mxu0 0
    %10868 = vmatpush1.bf16.msra.mxu0 %v10846
    %10869 = vmatprep.subr.bf16.mxu0 0
    %10870 = vmatpush1.bf16.msra.mxu0 %v10847
    %10871 = vmatprep.subr.bf16.mxu0 0
    %10872 = vmatpush1.bf16.msra.mxu0 %v10848
    %10873 = vmatprep.subr.bf16.mxu0 0
    %10874 = vmatpush1.bf16.msra.mxu0 0
    %10875 = vmatprep.subr.bf16.mxu0 0
    %10876 = vmatpush1.bf16.msra.mxu0 0
    %10877 = vmatprep.subr.bf16.mxu0 0
    %10878 = vmatpush1.bf16.msra.mxu0 0
    %10879 = vmatprep.subr.bf16.mxu0 0
    %10880 = vmatpush1.bf16.msra.mxu0 0
    %10881 = vmatprep.subr.bf16.mxu0 0
    %10882 = vmatpush1.bf16.msra.mxu0 0
    %10883 = vmatprep.subr.bf16.mxu0 0
    %10884 = vmatpush1.bf16.msra.mxu0 0
    %10885 = vmatprep.subr.bf16.mxu0 0
    %10886 = vmatpush1.bf16.msra.mxu0 0
    %10887 = vmatprep.subr.bf16.mxu0 0
    %10888 = vmatpush1.bf16.msra.mxu0 0
    %10889 = vmatprep.mubr.bf16.mxu0 0
    %10890 = vmatmul.mubr.bf16.gmra.mrb[0].mxu0 %v10778
    %v10891 = vpop.f32.mrb[0].mxu0
    %v10892 = vadd.f32 %v10807, %v10891
    %v10893 = vpop.f32.mrb[0].mxu0
    %v10894 = vpop.f32.mrb[0].mxu0
    %v10895 = vadd.f32 %v10807, %v10894
    %v10896 = vpop.f32.mrb[0].mxu0
    %10897 = vmatprep.mubr.bf16.mxu0 0
    %10898 = vmatmul.mubr.bf16.gmra.mrb[0].mxu0 %v10779
    %v10899 = vpop.f32.mrb[0].mxu0
    %v10900 = vadd.f32 %v10807, %v10899
    %v10901 = vpop.f32.mrb[0].mxu0
    %v10902 = vpop.f32.mrb[0].mxu0
    %v10903 = vadd.f32 %v10807, %v10902
    %v10904 = vpop.f32.mrb[0].mxu0
    %10905 = vmatprep.mubr.bf16.mxu0 0
    %10906 = vmatmul.mubr.bf16.gmra.mrb[0].mxu0 %v10780
    %v10907 = vpop.f32.mrb[0].mxu0
    %v10908 = vadd.f32 %v10807, %v10907
    %v10909 = vpop.f32.mrb[0].mxu0
    %v10910 = vpop.f32.mrb[0].mxu0
    %v10911 = vadd.f32 %v10807, %v10910
    %v10912 = vpop.f32.mrb[0].mxu0
    %10913 = vmatprep.mubr.bf16.mxu0 0
    %10914 = vmatmul.mubr.bf16.gmra.mrb[0].mxu0 %v10781
    %v10915 = vpop.f32.mrb[0].mxu0
    %v10916 = vadd.f32 %v10807, %v10915
    %v10917 = vpop.f32.mrb[0].mxu0
    %v10918 = vpop.f32.mrb[0].mxu0
    %v10919 = vadd.f32 %v10807, %v10918
    %v10920 = vpop.f32.mrb[0].mxu0
    %10921 = vmatprep.mubr.bf16.mxu0 0
    %10922 = vmatmul.mubr.bf16.gmra.mrb[0].mxu0 %v10782
    %v10923 = vpop.f32.mrb[0].mxu0
    %v10924 = vadd.f32 %v10807, %v10923
    %v10925 = vpop.f32.mrb[0].mxu0
    %v10926 = vpop.f32.mrb[0].mxu0
    %v10927 = vadd.f32 %v10807, %v10926
    %v10928 = vpop.f32.mrb[0].mxu0
    %10929 = vmatprep.mubr.bf16.mxu0 0
    %10930 = vmatmul.mubr.bf16.gmra.mrb[0].mxu0 %v10783
    %v10931 = vpop.f32.mrb[0].mxu0
    %v10932 = vadd.f32 %v10807, %v10931
    %v10933 = vpop.f32.mrb[0].mxu0
    %v10934 = vpop.f32.mrb[0].mxu0
    %v10935 = vadd.f32 %v10807, %v10934
    %v10936 = vpop.f32.mrb[0].mxu0
    %10937 = vmatprep.mubr.bf16.mxu0 0
    %10938 = vmatmul.mubr.bf16.gmra.mrb[0].mxu0 %v10784
    %v10939 = vpop.f32.mrb[0].mxu0
    %v10940 = vadd.f32 %v10807, %v10939
    %v10941 = vpop.f32.mrb[0].mxu0
    %v10942 = vpop.f32.mrb[0].mxu0
    %v10943 = vadd.f32 %v10807, %v10942
    %v10944 = vpop.f32.mrb[0].mxu0
    %10945 = vmatprep.mubr.bf16.mxu0 0
    %10946 = vmatmul.mubr.bf16.gmra.mrb[0].mxu0 %v10785
    %v10947 = vpop.f32.mrb[0].mxu0
    %v10948 = vadd.f32 %v10807, %v10947
    %v10949 = vpop.f32.mrb[0].mxu0
    %v10950 = vpop.f32.mrb[0].mxu0
    %v10951 = vadd.f32 %v10807, %v10950
    %v10952 = vpop.f32.mrb[0].mxu0
    %10953 = vdwg.mxu0
    %10954 = vst [vmem:[%s153] sm:$0xff] %v10892
    %10955 = vst [vmem:[%s153 + $0x8] sm:$0xff] %v10895
    %10956 = vst [vmem:[%s153 + $0x10] sm:$0xff] %v10900
    %10957 = vst [vmem:[%s153 + $0x18] sm:$0xff] %v10903
    %10958 = vst [vmem:[%s153 + $0x20] sm:$0xff] %v10908
    %10959 = vst [vmem:[%s153 + $0x28] sm:$0xff] %v10911
    %10960 = vst [vmem:[%s153 + $0x30] sm:$0xff] %v10916
    %10961 = vst [vmem:[%s153 + $0x38] sm:$0xff] %v10919
    %10962 = vst [vmem:[%s153 + $0x40] sm:$0xff] %v10924
    %10963 = vst [vmem:[%s153 + $0x48] sm:$0xff] %v10927
    %10964 = vst [vmem:[%s153 + $0x50] sm:$0xff] %v10932
    %10965 = vst [vmem:[%s153 + $0x58] sm:$0xff] %v10935
    %10966 = vst [vmem:[%s153 + $0x60] sm:$0xff] %v10940
    %10967 = vst [vmem:[%s153 + $0x68] sm:$0xff] %v10943
    %10968 = vst [vmem:[%s153 + $0x70] sm:$0xff] %v10948
    %10969 = vst [vmem:[%s153 + $0x78] sm:$0xff] %v10951
    // Predicated region
    $region310: #{gnn_forward.1} parent=1 // pred_check
      _
    $region311: #{gnn_forward.1} parent=1 // pred_check_branch
      %10971 = sbr.rel (0) target = $region313
    $region312: #{gnn_forward.1} parent=1 // pred_region
      _
    $region313: #{gnn_forward.1} parent=1 // pred_fallthru
      _
    // Predicated region
    $region314: #{gnn_forward.1} parent=1 // pred_check
      _
    $region315: #{gnn_forward.1} parent=1 // pred_check_branch
      %10973 = sbr.rel (0) target = $region317
    $region316: #{gnn_forward.1} parent=1 // pred_region
      _
    $region317: #{gnn_forward.1} parent=1 // pred_fallthru
      _
    %10974 = vsyncpa [#allocation3], 1

</llo_original>
